<compile_context>
chip_gen: v7x
topology: tpu7x:2x2x1
jax: 0.10.0
libtpu: 0.0.40
codegen_flags: <defaults>
</compile_context>

<pallas_src>
import functools

import jax
import jax.numpy as jnp
from jax import lax
from jax.experimental import pallas as pl
from jax.experimental.pallas import tpu as pltpu

W_DTYPE = jnp.bfloat16   # weights stored & fed to the MXU as bf16
F32 = jnp.float32

_TAPS = tuple((oy, ox) for oy in (-1, 0, 1) for ox in (-1, 0, 1))


# ----------------------------------------------------------------------------
# In-kernel helpers
# ----------------------------------------------------------------------------
def _conv3(x, tap_masks, w, b, img_w):
    """3x3 'same' conv on a (Cin, HW) f32 activation via in-VMEM im2col.

    The 9 shifted copies (pltpu.roll along lanes; border/wrapped taps zeroed
    by the precomputed masks) are stacked along the sublane axis into a
    (9*Cin, HW) bf16 slab and multiplied by a single (Cout, 9*Cin) bf16
    weight on the MXU.  Returns (Cout, HW) f32.
    """
    hw = x.shape[1]
    taps = []
    for t, (oy, ox) in enumerate(_TAPS):
        s = oy * img_w + ox
        if s == 0:
            taps.append(x)                       # center tap: mask is all-ones
        else:
            xs = pltpu.roll(x, (-s) % hw, axis=1)
            taps.append(xs * tap_masks[t])
    xcat = jnp.concatenate(taps, axis=0).astype(W_DTYPE)       # (9*Cin, HW)
    return jnp.dot(w, xcat, preferred_element_type=F32) + b


def _res_group(y, gw_ref, gb_ref, gi, tap_masks, img_w, nb, res_scale):
    """One My_ResidualGroup, fully in VMEM/vregs.

    TODO(synk): common.My_Block source unavailable; assumed EDSR-style ResBlock
    (conv3x3 -> ReLU -> conv3x3) * res_scale + identity (PReLU approx by ReLU).
    """
    x0 = y
    for j in range(nb):
        h = _conv3(y, tap_masks, gw_ref[gi, 2 * j], gb_ref[gi, 2 * j], img_w)
        h = jnp.maximum(h, 0.0)
        r = _conv3(h, tap_masks, gw_ref[gi, 2 * j + 1], gb_ref[gi, 2 * j + 1],
                   img_w)
        y = y + res_scale * r
    r = _conv3(y, tap_masks, gw_ref[gi, 2 * nb], gb_ref[gi, 2 * nb], img_w)
    return x0 + r


# ----------------------------------------------------------------------------
# Fused kernels
# ----------------------------------------------------------------------------
def _msdn_body_kernel(x_ref, mean_ref, m_ref,
                      hw_ref, hb_ref, gw_ref, gb_ref, fw_ref, fb_ref,
                      qkvw_ref, qkvb_ref, aow_ref, aob_ref, flw_ref, flb_ref,
                      btw_ref, btb_ref, upw_ref, upb_ref,
                      o_ref, *, img_w, ng, nb, res_scale):
    m = m_ref[...]
    tap_masks = [m[t:t + 1, :] for t in range(9)]   # hoisted once per kernel

    # sub_mean prologue (MeanShift sign=-1, std=1)
    x = x_ref[...] - mean_ref[...]

    # head conv (n_colors -> n_feats); padded input channels carry zero weights
    y = _conv3(x, tap_masks, hw_ref[...], hb_ref[...], img_w)
    res_head = y

    # first half of the residual groups
    group_out = []
    for gi in range(ng // 2):
        y = _res_group(y, gw_ref, gb_ref, gi, tap_masks, img_w, nb, res_scale)
        group_out.append(y)

    # fusion 1x1 over the channel concat == sum of per-group (nf, nf) matmuls
    half1 = fb_ref[...]
    for gi in range(ng // 2):
        half1 = half1 + jnp.dot(fw_ref[gi], group_out[gi].astype(W_DTYPE),
                                preferred_element_type=F32)

    # body[ng//2]: non-local attention block.
    # TODO(synk): common.attention_block (multi-patchsize [3,5,7,9] non-local)
    # source unavailable; single-scale embedded-Gaussian non-local residual.
    # NOTE: dense (HW, HW) scores are fine at HW=256; for much larger HW
    # (especially v7x's 64 MiB VMEM) switch to a KV-tiled online-softmax.
    a_bf = half1.astype(W_DTYPE)
    q = jnp.dot(qkvw_ref[0], a_bf, preferred_element_type=F32) + qkvb_ref[0]
    k = jnp.dot(qkvw_ref[1], a_bf, preferred_element_type=F32) + qkvb_ref[1]
    v = jnp.dot(qkvw_ref[2], a_bf, preferred_element_type=F32) + qkvb_ref[2]
    s = jnp.dot(q.T.astype(W_DTYPE), k.astype(W_DTYPE),
                preferred_element_type=F32)                      # (HW, HW)
    s = s - jnp.max(s, axis=-1, keepdims=True)
    p = jnp.exp(s)
    p = p * pl.reciprocal(jnp.sum(p, axis=-1, keepdims=True), approx=True)
    o = lax.dot_general(v.astype(W_DTYPE), p.astype(W_DTYPE),
                        (((1,), (1,)), ((), ())),
                        preferred_element_type=F32)              # (Cp, HW), no p.T
    attn = jnp.dot(aow_ref[...], o.astype(W_DTYPE),
                   preferred_element_type=F32) + aob_ref[...]
    msnlab = half1 + res_scale * attn

    # second half of the residual groups with fusion_list re-injection
    post = msnlab
    for idx in range(ng // 2):
        if idx > 0:
            fl = idx - 1
            post = (jnp.dot(flw_ref[fl, 0], post.astype(W_DTYPE),
                            preferred_element_type=F32)
                    + jnp.dot(flw_ref[fl, 1], msnlab.astype(W_DTYPE),
                              preferred_element_type=F32)
                    + flb_ref[fl])
        post = _res_group(post, gw_ref, gb_ref, ng // 2 + idx,
                          tap_masks, img_w, nb, res_scale)

    # trailing body conv + global residual, then upsampler conv (nf -> 4*nf)
    res = res_head + _conv3(post, tap_masks, btw_ref[...], btb_ref[...], img_w)
    up = _conv3(res, tap_masks, upw_ref[...], upb_ref[...], img_w)
    o_ref[...] = up.astype(o_ref.dtype)


def _msdn_tail_kernel(t_ref, m_ref, w_ref, b_ref, mean_ref, o_ref, *, img_w):
    m = m_ref[...]
    tap_masks = [m[t:t + 1, :] for t in range(9)]
    y = _conv3(t_ref[...], tap_masks, w_ref[...], b_ref[...], img_w)
    o_ref[...] = (y + mean_ref[...]).astype(o_ref.dtype)    # add_mean epilogue


# ----------------------------------------------------------------------------
# pallas_call wrappers
# ----------------------------------------------------------------------------
def _const_specs(arrs):
    # full-array blocks with constant index maps -> stay VMEM resident
    return [pl.BlockSpec(a.shape, lambda i, nd=a.ndim: (0,) * nd) for a in arrs]


def msdn_body_call(x_pad, mean_sub, masks, params, *, img_w, hw, nf, ng, nb,
                   res_scale):
    cin, M = x_pad.shape
    n = M // hw
    cp = params["qkv_w"].shape[1]
    consts = [mean_sub, masks,
              params["head_w"], params["head_b"],
              params["groups_w"], params["groups_b"],
              params["fusion_w"], params["fusion_b"],
              params["qkv_w"], params["qkv_b"],
              params["attn_out_w"], params["attn_out_b"],
              params["fusion_list_w"], params["fusion_list_b"],
              params["body_tail_w"], params["body_tail_b"],
              params["up_w"], params["up_b"]]

    c3 = lambda ci, co: 2 * co * 9 * ci * hw
    flops = (c3(cin, nf) + ng * (2 * nb + 1) * c3(nf, nf)
             + (ng // 2) * 2 * nf * nf * hw
             + max(0, ng // 2 - 1) * 4 * nf * nf * hw
             + 6 * cp * nf * hw + 4 * cp * hw * hw + 2 * nf * cp * hw
             + c3(nf, nf) + c3(nf, 4 * nf)) * n
    transc = n * hw * hw
    byt = (x_pad.size * 4 + n * hw * 4 * nf * 4
           + sum(a.size * a.dtype.itemsize for a in consts))

    return pl.pallas_call(
        functools.partial(_msdn_body_kernel, img_w=img_w, ng=ng, nb=nb,
                          res_scale=res_scale),
        out_shape=jax.ShapeDtypeStruct((4 * nf, M), F32),
        grid=(n,),
        in_specs=[pl.BlockSpec((cin, hw), lambda i: (0, i))] + _const_specs(consts),
        out_specs=pl.BlockSpec((4 * nf, hw), lambda i: (0, i)),
        compiler_params=pltpu.CompilerParams(dimension_semantics=("parallel",)),
        cost_estimate=pl.CostEstimate(flops=int(flops),
                                      transcendentals=int(transc),
                                      bytes_accessed=int(byt)),
    )(x_pad, *consts)


def msdn_tail_call(t, masks2, mean_add, params, *, img_w, hw, nc):
    nf, M = t.shape
    n = M // hw
    consts = [masks2, params["tail_w"], params["tail_b"], mean_add]
    flops = n * 2 * nc * 9 * nf * hw
    byt = (t.size * 4 + n * hw * nc * 4
           + sum(a.size * a.dtype.itemsize for a in consts))
    return pl.pallas_call(
        functools.partial(_msdn_tail_kernel, img_w=img_w),
        out_shape=jax.ShapeDtypeStruct((nc, M), F32),
        grid=(n,),
        in_specs=[pl.BlockSpec((nf, hw), lambda i: (0, i))] + _const_specs(consts),
        out_specs=pl.BlockSpec((nc, hw), lambda i: (0, i)),
        compiler_params=pltpu.CompilerParams(dimension_semantics=("parallel",)),
        cost_estimate=pl.CostEstimate(flops=int(flops), transcendentals=0,
                                      bytes_accessed=int(byt)),
    )(t, *consts)


# ----------------------------------------------------------------------------
# Pure-JAX glue (cheap layout ops only)
# ----------------------------------------------------------------------------
def make_taps_mask(H, W):
    """(9, H*W) f32 validity masks for the 9 conv taps (zero-padding borders)."""
    idx = jnp.arange(H * W, dtype=jnp.int32)
    y = idx // W
    x = idx % W
    rows = []
    for oy, ox in _TAPS:
        ok = (y + oy >= 0) & (y + oy < H) & (x + ox >= 0) & (x + ox < W)
        rows.append(ok)
    return jnp.stack(rows, axis=0).astype(F32)


def pixel_shuffle(x, N, H, W, r):
    """(C*r*r, N*H*W) -> (C, N*(H*r)*(W*r)), PyTorch PixelShuffle semantics."""
    C4, _ = x.shape
    c = C4 // (r * r)
    x = x.reshape(c, r, r, N, H, W)
    x = jnp.transpose(x, (0, 3, 4, 1, 5, 2))        # (c, N, H, r, W, r)
    return x.reshape(c, N * H * r * W * r)


# ----------------------------------------------------------------------------
# Model forward
# ----------------------------------------------------------------------------
def msdn_forward(params, x_nchw, cfg):
    N, nc, H, W = x_nchw.shape
    nf = cfg["n_feats"]
    ng = cfg["n_resgroups"]
    nb = cfg["n_resblocks"]
    rs = cfg["res_scale"]
    scale = cfg["scale"]
    rgb_range = cfg["rgb_range"]
    hw = H * W
    cin_pad = ((nc + 7) // 8) * 8

    mean = jnp.array([0.4025, 0.4482, 0.4264], F32).reshape(3, 1) * rgb_range
    mean_sub = jnp.concatenate([mean, jnp.zeros((cin_pad - nc, 1), F32)], axis=0)

    # NCHW -> channels-first lane-dense (C, N*H*W); pad channels to a full
    # 8-row sublane tile (padded rows get zero weights in the head conv).
    x = jnp.transpose(x_nchw, (1, 0, 2, 3)).reshape(nc, N * hw).astype(F32)
    x = jnp.concatenate([x, jnp.zeros((cin_pad - nc, N * hw), F32)], axis=0)

    masks = make_taps_mask(H, W)
    up = msdn_body_call(x, mean_sub, masks, params, img_w=W, hw=hw, nf=nf,
                        ng=ng, nb=nb, res_scale=rs)

    # PixelShuffle between the two fused kernels (one small HBM round trip).
    # TODO(synk): fold into the up-conv output stores to avoid this relayout.
    t = pixel_shuffle(up, N, H, W, scale)
    H2, W2 = H * scale, W * scale
    masks2 = make_taps_mask(H2, W2)
    y = msdn_tail_call(t, masks2, mean, params, img_w=W2, hw=H2 * W2, nc=nc)

    out = y.reshape(nc, N, H2, W2)
    return jnp.transpose(out, (1, 0, 2, 3))         # back to NCHW, f32


# ----------------------------------------------------------------------------
# Deterministic parameter initialization (synthetic; module __init__ gives shapes)
# ----------------------------------------------------------------------------
def init_msdn_params(key, cfg):
    nf = cfg["n_feats"]
    nc = cfg["n_colors"]
    ng = cfg["n_resgroups"]
    nb = cfg["n_resblocks"]
    scale = cfg["scale"]
    assert scale == 2, "Upsampler implemented for scale=2 (conv + PixelShuffle(2))"
    cin_pad = ((nc + 7) // 8) * 8
    cp = max(nf // 2, 1)

    keys = iter(jax.random.split(key, 512))

    def w(shape, fan_in):
        return (jax.random.normal(next(keys), shape, F32)
                * (1.0 / float(fan_in) ** 0.5)).astype(W_DTYPE)

    def b(n):
        return jax.random.normal(next(keys), (n, 1), F32) * 0.01

    def conv3_w(cin, cout, pad_to=None):
        # im2col layout: column k = tap * Cin + cin (taps in _TAPS order)
        wt = (jax.random.normal(next(keys), (cout, 9, cin), F32)
              * (1.0 / float(9 * cin) ** 0.5))
        if pad_to is not None and pad_to > cin:
            wt = jnp.concatenate(
                [wt, jnp.zeros((cout, 9, pad_to - cin), F32)], axis=2)
            cin = pad_to
        return wt.reshape(cout, 9 * cin).astype(W_DTYPE)

    p = {}
    p["head_w"] = conv3_w(nc, nf, pad_to=cin_pad)
    p["head_b"] = b(nf)
    p["groups_w"] = jnp.stack(
        [jnp.stack([conv3_w(nf, nf) for _ in range(2 * nb + 1)])
         for _ in range(ng)])                                   # (ng,2nb+1,nf,9nf)
    p["groups_b"] = jnp.stack(
        [jnp.stack([b(nf) for _ in range(2 * nb + 1)]) for _ in range(ng)])
    p["fusion_w"] = w((ng // 2, nf, nf), nf * ng // 2)          # concat split per group
    p["fusion_b"] = b(nf)
    p["qkv_w"] = w((3, cp, nf), nf)                             # theta / phi / g
    p["qkv_b"] = jnp.stack([b(cp) for _ in range(3)])
    p["attn_out_w"] = w((nf, cp), cp)
    p["attn_out_b"] = b(nf)
    nfl = max(1, ng // 2 - 1)
    p["fusion_list_w"] = w((nfl, 2, nf, nf), 2 * nf)
    p["fusion_list_b"] = jnp.stack([b(nf) for _ in range(nfl)])
    p["body_tail_w"] = conv3_w(nf, nf)
    p["body_tail_b"] = b(nf)
    p["up_w"] = conv3_w(nf, nf * scale * scale)
    p["up_b"] = b(nf * scale * scale)
    p["tail_w"] = conv3_w(nf, nc)
    p["tail_b"] = b(nc)
    return p


# ----------------------------------------------------------------------------
# Main
# ----------------------------------------------------------------------------
if __name__ == "__main__":
    cfg = {
        "n_resgroups": 4,
        "n_resblocks": 2,
        "n_feats": 8,
        "n_colors": 3,
        "scale": 2,
        "res_scale": 1.0,
        "rgb_range": 1.0,
    }

    key = jax.random.PRNGKey(0)
    pkey, xkey = jax.random.split(key)
    params = init_msdn_params(pkey, cfg)

    # Input mimics PyTorch NCHW: (batch=2, channels=3, H=16, W=16)
    x = jax.random.uniform(xkey, (2, 3, 16, 16), jnp.float32)

    fwd = jax.jit(functools.partial(msdn_forward, cfg=cfg))
    y = jax.block_until_ready(fwd(params, x))

    assert y.shape == (2, 3, 32, 32), y.shape
    assert bool(jnp.all(jnp.isfinite(y)))
    print("KERNEL_OK")
</pallas_src>

<mosaic_0001>
module attributes {stable_mosaic.version = 11 : i64} {
  func.func @_msdn_body_kernel(%arg0: i32, %arg1: memref<8x256xf32, #tpu.memory_space<vmem>>, %arg2: memref<8x1xf32, #tpu.memory_space<vmem>>, %arg3: memref<9x256xf32, #tpu.memory_space<vmem>>, %arg4: memref<8x72xbf16, #tpu.memory_space<vmem>>, %arg5: memref<8x1xf32, #tpu.memory_space<vmem>>, %arg6: memref<4x5x8x72xbf16, #tpu.memory_space<vmem>>, %arg7: memref<4x5x8x1xf32, #tpu.memory_space<vmem>>, %arg8: memref<2x8x8xbf16, #tpu.memory_space<vmem>>, %arg9: memref<8x1xf32, #tpu.memory_space<vmem>>, %arg10: memref<3x4x8xbf16, #tpu.memory_space<vmem>>, %arg11: memref<3x4x1xf32, #tpu.memory_space<vmem>>, %arg12: memref<8x4xbf16, #tpu.memory_space<vmem>>, %arg13: memref<8x1xf32, #tpu.memory_space<vmem>>, %arg14: memref<1x2x8x8xbf16, #tpu.memory_space<vmem>>, %arg15: memref<1x8x1xf32, #tpu.memory_space<vmem>>, %arg16: memref<8x72xbf16, #tpu.memory_space<vmem>>, %arg17: memref<8x1xf32, #tpu.memory_space<vmem>>, %arg18: memref<32x72xbf16, #tpu.memory_space<vmem>>, %arg19: memref<32x1xf32, #tpu.memory_space<vmem>>, %arg20: memref<32x256xf32, #tpu.memory_space<vmem>>) attributes {dimension_semantics = [#tpu.dimension_semantics<parallel>], iteration_bounds = array<i64: 2>, scalar_prefetch = 0 : i64, scratch_operands = 0 : i64, tpu.core_type = #tpu.core_type<tc>, window_params = [{transform_indices = @transform_0, window_bounds = array<i64: 8, 256>}, {pipeline_mode = #tpu.pipeline_mode<synchronous>, transform_indices = @transform_1, window_bounds = array<i64: 8, 1>}, {pipeline_mode = #tpu.pipeline_mode<synchronous>, transform_indices = @transform_2, window_bounds = array<i64: 9, 256>}, {pipeline_mode = #tpu.pipeline_mode<synchronous>, transform_indices = @transform_3, window_bounds = array<i64: 8, 72>}, {pipeline_mode = #tpu.pipeline_mode<synchronous>, transform_indices = @transform_4, window_bounds = array<i64: 8, 1>}, {pipeline_mode = #tpu.pipeline_mode<synchronous>, transform_indices = @transform_5, window_bounds = array<i64: 4, 5, 8, 72>}, {pipeline_mode = #tpu.pipeline_mode<synchronous>, transform_indices = @transform_6, window_bounds = array<i64: 4, 5, 8, 1>}, {pipeline_mode = #tpu.pipeline_mode<synchronous>, transform_indices = @transform_7, window_bounds = array<i64: 2, 8, 8>}, {pipeline_mode = #tpu.pipeline_mode<synchronous>, transform_indices = @transform_8, window_bounds = array<i64: 8, 1>}, {pipeline_mode = #tpu.pipeline_mode<synchronous>, transform_indices = @transform_9, window_bounds = array<i64: 3, 4, 8>}, {pipeline_mode = #tpu.pipeline_mode<synchronous>, transform_indices = @transform_10, window_bounds = array<i64: 3, 4, 1>}, {pipeline_mode = #tpu.pipeline_mode<synchronous>, transform_indices = @transform_11, window_bounds = array<i64: 8, 4>}, {pipeline_mode = #tpu.pipeline_mode<synchronous>, transform_indices = @transform_12, window_bounds = array<i64: 8, 1>}, {pipeline_mode = #tpu.pipeline_mode<synchronous>, transform_indices = @transform_13, window_bounds = array<i64: 1, 2, 8, 8>}, {pipeline_mode = #tpu.pipeline_mode<synchronous>, transform_indices = @transform_14, window_bounds = array<i64: 1, 8, 1>}, {pipeline_mode = #tpu.pipeline_mode<synchronous>, transform_indices = @transform_15, window_bounds = array<i64: 8, 72>}, {pipeline_mode = #tpu.pipeline_mode<synchronous>, transform_indices = @transform_16, window_bounds = array<i64: 8, 1>}, {pipeline_mode = #tpu.pipeline_mode<synchronous>, transform_indices = @transform_17, window_bounds = array<i64: 32, 72>}, {pipeline_mode = #tpu.pipeline_mode<synchronous>, transform_indices = @transform_18, window_bounds = array<i64: 32, 1>}, {transform_indices = @transform_19, window_bounds = array<i64: 32, 256>}]} {
    %c0 = arith.constant 0 : index
    %c0_0 = arith.constant 0 : index
    %0 = vector.load %arg3[%c0, %c0_0] : memref<9x256xf32, #tpu.memory_space<vmem>>, vector<9x256xf32>
    %1 = vector.extract_strided_slice %0 {offsets = [0, 0], sizes = [1, 256], strides = [1, 1]} : vector<9x256xf32> to vector<1x256xf32>
    %2 = vector.extract_strided_slice %0 {offsets = [1, 0], sizes = [1, 256], strides = [1, 1]} : vector<9x256xf32> to vector<1x256xf32>
    %3 = vector.extract_strided_slice %0 {offsets = [2, 0], sizes = [1, 256], strides = [1, 1]} : vector<9x256xf32> to vector<1x256xf32>
    %4 = vector.extract_strided_slice %0 {offsets = [3, 0], sizes = [1, 256], strides = [1, 1]} : vector<9x256xf32> to vector<1x256xf32>
    %5 = vector.extract_strided_slice %0 {offsets = [5, 0], sizes = [1, 256], strides = [1, 1]} : vector<9x256xf32> to vector<1x256xf32>
    %6 = vector.extract_strided_slice %0 {offsets = [6, 0], sizes = [1, 256], strides = [1, 1]} : vector<9x256xf32> to vector<1x256xf32>
    %7 = vector.extract_strided_slice %0 {offsets = [7, 0], sizes = [1, 256], strides = [1, 1]} : vector<9x256xf32> to vector<1x256xf32>
    %8 = vector.extract_strided_slice %0 {offsets = [8, 0], sizes = [1, 256], strides = [1, 1]} : vector<9x256xf32> to vector<1x256xf32>
    %c0_1 = arith.constant 0 : index
    %c0_2 = arith.constant 0 : index
    %9 = vector.load %arg1[%c0_1, %c0_2] : memref<8x256xf32, #tpu.memory_space<vmem>>, vector<8x256xf32>
    %c0_3 = arith.constant 0 : index
    %c0_4 = arith.constant 0 : index
    %10 = vector.load %arg2[%c0_3, %c0_4] : memref<8x1xf32, #tpu.memory_space<vmem>>, vector<8x1xf32>
    %11 = vector.broadcast %10 : vector<8x1xf32> to vector<8x256xf32>
    %12 = arith.subf %9, %11 : vector<8x256xf32>
    %c0_5 = arith.constant 0 : index
    %c0_6 = arith.constant 0 : index
    %13 = vector.load %arg4[%c0_5, %c0_6] : memref<8x72xbf16, #tpu.memory_space<vmem>>, vector<8x72xbf16>
    %c0_7 = arith.constant 0 : index
    %c0_8 = arith.constant 0 : index
    %14 = vector.load %arg5[%c0_7, %c0_8] : memref<8x1xf32, #tpu.memory_space<vmem>>, vector<8x1xf32>
    %c17_i32 = arith.constant 17 : i32
    %15 = tpu.dynamic_rotate %12 by %c17_i32 dim 1 : vector<8x256xf32>, i32 -> vector<8x256xf32>
    %16 = vector.broadcast %1 : vector<1x256xf32> to vector<8x256xf32>
    %17 = arith.mulf %15, %16 : vector<8x256xf32>
    %c16_i32 = arith.constant 16 : i32
    %18 = tpu.dynamic_rotate %12 by %c16_i32 dim 1 : vector<8x256xf32>, i32 -> vector<8x256xf32>
    %19 = vector.broadcast %2 : vector<1x256xf32> to vector<8x256xf32>
    %20 = arith.mulf %18, %19 : vector<8x256xf32>
    %c15_i32 = arith.constant 15 : i32
    %21 = tpu.dynamic_rotate %12 by %c15_i32 dim 1 : vector<8x256xf32>, i32 -> vector<8x256xf32>
    %22 = vector.broadcast %3 : vector<1x256xf32> to vector<8x256xf32>
    %23 = arith.mulf %21, %22 : vector<8x256xf32>
    %c1_i32 = arith.constant 1 : i32
    %24 = tpu.dynamic_rotate %12 by %c1_i32 dim 1 : vector<8x256xf32>, i32 -> vector<8x256xf32>
    %25 = vector.broadcast %4 : vector<1x256xf32> to vector<8x256xf32>
    %26 = arith.mulf %24, %25 : vector<8x256xf32>
    %c255_i32 = arith.constant 255 : i32
    %27 = tpu.dynamic_rotate %12 by %c255_i32 dim 1 : vector<8x256xf32>, i32 -> vector<8x256xf32>
    %28 = vector.broadcast %5 : vector<1x256xf32> to vector<8x256xf32>
    %29 = arith.mulf %27, %28 : vector<8x256xf32>
    %c241_i32 = arith.constant 241 : i32
    %30 = tpu.dynamic_rotate %12 by %c241_i32 dim 1 : vector<8x256xf32>, i32 -> vector<8x256xf32>
    %31 = vector.broadcast %6 : vector<1x256xf32> to vector<8x256xf32>
    %32 = arith.mulf %30, %31 : vector<8x256xf32>
    %c240_i32 = arith.constant 240 : i32
    %33 = tpu.dynamic_rotate %12 by %c240_i32 dim 1 : vector<8x256xf32>, i32 -> vector<8x256xf32>
    %34 = vector.broadcast %7 : vector<1x256xf32> to vector<8x256xf32>
    %35 = arith.mulf %33, %34 : vector<8x256xf32>
    %c239_i32 = arith.constant 239 : i32
    %36 = tpu.dynamic_rotate %12 by %c239_i32 dim 1 : vector<8x256xf32>, i32 -> vector<8x256xf32>
    %37 = vector.broadcast %8 : vector<1x256xf32> to vector<8x256xf32>
    %38 = arith.mulf %36, %37 : vector<8x256xf32>
    %39 = tpu.concatenate %17, %20, %23, %26, %12, %29, %32, %35, %38 in 0 : vector<8x256xf32>, vector<8x256xf32>, vector<8x256xf32>, vector<8x256xf32>, vector<8x256xf32>, vector<8x256xf32>, vector<8x256xf32>, vector<8x256xf32>, vector<8x256xf32> -> vector<72x256xf32>
    %40 = arith.truncf %39 : vector<72x256xf32> to vector<72x256xbf16>
    %cst = arith.constant dense<0.000000e+00> : vector<8x256xf32>
    %41 = tpu.matmul %13, %40, %cst {dimension_numbers = #tpu.dot_dimension_numbers<[1], [0], [0], [1], [0, 0, 1, 1], [], []>} : vector<8x72xbf16>, vector<72x256xbf16>, vector<8x256xf32> -> vector<8x256xf32>
    %42 = vector.broadcast %14 : vector<8x1xf32> to vector<8x256xf32>
    %43 = arith.addf %41, %42 : vector<8x256xf32>
    %c0_9 = arith.constant 0 : index
    %c0_10 = arith.constant 0 : index
    %c0_11 = arith.constant 0 : index
    %c0_12 = arith.constant 0 : index
    %44 = vector.load %arg6[%c0_9, %c0_10, %c0_11, %c0_12] : memref<4x5x8x72xbf16, #tpu.memory_space<vmem>>, vector<1x1x8x72xbf16>
    %45 = vector.shape_cast %44 : vector<1x1x8x72xbf16> to vector<8x72xbf16>
    %c0_13 = arith.constant 0 : index
    %c0_14 = arith.constant 0 : index
    %c0_15 = arith.constant 0 : index
    %c0_16 = arith.constant 0 : index
    %46 = vector.load %arg7[%c0_13, %c0_14, %c0_15, %c0_16] : memref<4x5x8x1xf32, #tpu.memory_space<vmem>>, vector<1x1x8x1xf32>
    %47 = vector.shape_cast %46 : vector<1x1x8x1xf32> to vector<8x1xf32>
    %c17_i32_17 = arith.constant 17 : i32
    %48 = tpu.dynamic_rotate %43 by %c17_i32_17 dim 1 : vector<8x256xf32>, i32 -> vector<8x256xf32>
    %49 = vector.broadcast %1 : vector<1x256xf32> to vector<8x256xf32>
    %50 = arith.mulf %48, %49 : vector<8x256xf32>
    %c16_i32_18 = arith.constant 16 : i32
    %51 = tpu.dynamic_rotate %43 by %c16_i32_18 dim 1 : vector<8x256xf32>, i32 -> vector<8x256xf32>
    %52 = vector.broadcast %2 : vector<1x256xf32> to vector<8x256xf32>
    %53 = arith.mulf %51, %52 : vector<8x256xf32>
    %c15_i32_19 = arith.constant 15 : i32
    %54 = tpu.dynamic_rotate %43 by %c15_i32_19 dim 1 : vector<8x256xf32>, i32 -> vector<8x256xf32>
    %55 = vector.broadcast %3 : vector<1x256xf32> to vector<8x256xf32>
    %56 = arith.mulf %54, %55 : vector<8x256xf32>
    %c1_i32_20 = arith.constant 1 : i32
    %57 = tpu.dynamic_rotate %43 by %c1_i32_20 dim 1 : vector<8x256xf32>, i32 -> vector<8x256xf32>
    %58 = vector.broadcast %4 : vector<1x256xf32> to vector<8x256xf32>
    %59 = arith.mulf %57, %58 : vector<8x256xf32>
    %c255_i32_21 = arith.constant 255 : i32
    %60 = tpu.dynamic_rotate %43 by %c255_i32_21 dim 1 : vector<8x256xf32>, i32 -> vector<8x256xf32>
    %61 = vector.broadcast %5 : vector<1x256xf32> to vector<8x256xf32>
    %62 = arith.mulf %60, %61 : vector<8x256xf32>
    %c241_i32_22 = arith.constant 241 : i32
    %63 = tpu.dynamic_rotate %43 by %c241_i32_22 dim 1 : vector<8x256xf32>, i32 -> vector<8x256xf32>
    %64 = vector.broadcast %6 : vector<1x256xf32> to vector<8x256xf32>
    %65 = arith.mulf %63, %64 : vector<8x256xf32>
    %c240_i32_23 = arith.constant 240 : i32
    %66 = tpu.dynamic_rotate %43 by %c240_i32_23 dim 1 : vector<8x256xf32>, i32 -> vector<8x256xf32>
    %67 = vector.broadcast %7 : vector<1x256xf32> to vector<8x256xf32>
    %68 = arith.mulf %66, %67 : vector<8x256xf32>
    %c239_i32_24 = arith.constant 239 : i32
    %69 = tpu.dynamic_rotate %43 by %c239_i32_24 dim 1 : vector<8x256xf32>, i32 -> vector<8x256xf32>
    %70 = vector.broadcast %8 : vector<1x256xf32> to vector<8x256xf32>
    %71 = arith.mulf %69, %70 : vector<8x256xf32>
    %72 = tpu.concatenate %50, %53, %56, %59, %43, %62, %65, %68, %71 in 0 : vector<8x256xf32>, vector<8x256xf32>, vector<8x256xf32>, vector<8x256xf32>, vector<8x256xf32>, vector<8x256xf32>, vector<8x256xf32>, vector<8x256xf32>, vector<8x256xf32> -> vector<72x256xf32>
    %73 = arith.truncf %72 : vector<72x256xf32> to vector<72x256xbf16>
    %cst_25 = arith.constant dense<0.000000e+00> : vector<8x256xf32>
    %74 = tpu.matmul %45, %73, %cst_25 {dimension_numbers = #tpu.dot_dimension_numbers<[1], [0], [0], [1], [0, 0, 1, 1], [], []>} : vector<8x72xbf16>, vector<72x256xbf16>, vector<8x256xf32> -> vector<8x256xf32>
    %75 = vector.broadcast %47 : vector<8x1xf32> to vector<8x256xf32>
    %76 = arith.addf %74, %75 : vector<8x256xf32>
    %cst_26 = arith.constant 0.000000e+00 : f32
    %77 = vector.broadcast %cst_26 : f32 to vector<8x256xf32>
    %78 = arith.maximumf %76, %77 : vector<8x256xf32>
    %c0_27 = arith.constant 0 : index
    %c1 = arith.constant 1 : index
    %c0_28 = arith.constant 0 : index
    %c0_29 = arith.constant 0 : index
    %79 = vector.load %arg6[%c0_27, %c1, %c0_28, %c0_29] : memref<4x5x8x72xbf16, #tpu.memory_space<vmem>>, vector<1x1x8x72xbf16>
    %80 = vector.shape_cast %79 : vector<1x1x8x72xbf16> to vector<8x72xbf16>
    %c0_30 = arith.constant 0 : index
    %c1_31 = arith.constant 1 : index
    %c0_32 = arith.constant 0 : index
    %c0_33 = arith.constant 0 : index
    %81 = vector.load %arg7[%c0_30, %c1_31, %c0_32, %c0_33] : memref<4x5x8x1xf32, #tpu.memory_space<vmem>>, vector<1x1x8x1xf32>
    %82 = vector.shape_cast %81 : vector<1x1x8x1xf32> to vector<8x1xf32>
    %c17_i32_34 = arith.constant 17 : i32
    %83 = tpu.dynamic_rotate %78 by %c17_i32_34 dim 1 : vector<8x256xf32>, i32 -> vector<8x256xf32>
    %84 = vector.broadcast %1 : vector<1x256xf32> to vector<8x256xf32>
    %85 = arith.mulf %83, %84 : vector<8x256xf32>
    %c16_i32_35 = arith.constant 16 : i32
    %86 = tpu.dynamic_rotate %78 by %c16_i32_35 dim 1 : vector<8x256xf32>, i32 -> vector<8x256xf32>
    %87 = vector.broadcast %2 : vector<1x256xf32> to vector<8x256xf32>
    %88 = arith.mulf %86, %87 : vector<8x256xf32>
    %c15_i32_36 = arith.constant 15 : i32
    %89 = tpu.dynamic_rotate %78 by %c15_i32_36 dim 1 : vector<8x256xf32>, i32 -> vector<8x256xf32>
    %90 = vector.broadcast %3 : vector<1x256xf32> to vector<8x256xf32>
    %91 = arith.mulf %89, %90 : vector<8x256xf32>
    %c1_i32_37 = arith.constant 1 : i32
    %92 = tpu.dynamic_rotate %78 by %c1_i32_37 dim 1 : vector<8x256xf32>, i32 -> vector<8x256xf32>
    %93 = vector.broadcast %4 : vector<1x256xf32> to vector<8x256xf32>
    %94 = arith.mulf %92, %93 : vector<8x256xf32>
    %c255_i32_38 = arith.constant 255 : i32
    %95 = tpu.dynamic_rotate %78 by %c255_i32_38 dim 1 : vector<8x256xf32>, i32 -> vector<8x256xf32>
    %96 = vector.broadcast %5 : vector<1x256xf32> to vector<8x256xf32>
    %97 = arith.mulf %95, %96 : vector<8x256xf32>
    %c241_i32_39 = arith.constant 241 : i32
    %98 = tpu.dynamic_rotate %78 by %c241_i32_39 dim 1 : vector<8x256xf32>, i32 -> vector<8x256xf32>
    %99 = vector.broadcast %6 : vector<1x256xf32> to vector<8x256xf32>
    %100 = arith.mulf %98, %99 : vector<8x256xf32>
    %c240_i32_40 = arith.constant 240 : i32
    %101 = tpu.dynamic_rotate %78 by %c240_i32_40 dim 1 : vector<8x256xf32>, i32 -> vector<8x256xf32>
    %102 = vector.broadcast %7 : vector<1x256xf32> to vector<8x256xf32>
    %103 = arith.mulf %101, %102 : vector<8x256xf32>
    %c239_i32_41 = arith.constant 239 : i32
    %104 = tpu.dynamic_rotate %78 by %c239_i32_41 dim 1 : vector<8x256xf32>, i32 -> vector<8x256xf32>
    %105 = vector.broadcast %8 : vector<1x256xf32> to vector<8x256xf32>
    %106 = arith.mulf %104, %105 : vector<8x256xf32>
    %107 = tpu.concatenate %85, %88, %91, %94, %78, %97, %100, %103, %106 in 0 : vector<8x256xf32>, vector<8x256xf32>, vector<8x256xf32>, vector<8x256xf32>, vector<8x256xf32>, vector<8x256xf32>, vector<8x256xf32>, vector<8x256xf32>, vector<8x256xf32> -> vector<72x256xf32>
    %108 = arith.truncf %107 : vector<72x256xf32> to vector<72x256xbf16>
    %cst_42 = arith.constant dense<0.000000e+00> : vector<8x256xf32>
    %109 = tpu.matmul %80, %108, %cst_42 {dimension_numbers = #tpu.dot_dimension_numbers<[1], [0], [0], [1], [0, 0, 1, 1], [], []>} : vector<8x72xbf16>, vector<72x256xbf16>, vector<8x256xf32> -> vector<8x256xf32>
    %110 = vector.broadcast %82 : vector<8x1xf32> to vector<8x256xf32>
    %111 = arith.addf %109, %110 : vector<8x256xf32>
    %cst_43 = arith.constant 1.000000e+00 : f32
    %112 = vector.broadcast %cst_43 : f32 to vector<8x256xf32>
    %113 = arith.mulf %112, %111 : vector<8x256xf32>
    %114 = arith.addf %43, %113 : vector<8x256xf32>
    %c0_44 = arith.constant 0 : index
    %c2 = arith.constant 2 : index
    %c0_45 = arith.constant 0 : index
    %c0_46 = arith.constant 0 : index
    %115 = vector.load %arg6[%c0_44, %c2, %c0_45, %c0_46] : memref<4x5x8x72xbf16, #tpu.memory_space<vmem>>, vector<1x1x8x72xbf16>
    %116 = vector.shape_cast %115 : vector<1x1x8x72xbf16> to vector<8x72xbf16>
    %c0_47 = arith.constant 0 : index
    %c2_48 = arith.constant 2 : index
    %c0_49 = arith.constant 0 : index
    %c0_50 = arith.constant 0 : index
    %117 = vector.load %arg7[%c0_47, %c2_48, %c0_49, %c0_50] : memref<4x5x8x1xf32, #tpu.memory_space<vmem>>, vector<1x1x8x1xf32>
    %118 = vector.shape_cast %117 : vector<1x1x8x1xf32> to vector<8x1xf32>
    %c17_i32_51 = arith.constant 17 : i32
    %119 = tpu.dynamic_rotate %114 by %c17_i32_51 dim 1 : vector<8x256xf32>, i32 -> vector<8x256xf32>
    %120 = vector.broadcast %1 : vector<1x256xf32> to vector<8x256xf32>
    %121 = arith.mulf %119, %120 : vector<8x256xf32>
    %c16_i32_52 = arith.constant 16 : i32
    %122 = tpu.dynamic_rotate %114 by %c16_i32_52 dim 1 : vector<8x256xf32>, i32 -> vector<8x256xf32>
    %123 = vector.broadcast %2 : vector<1x256xf32> to vector<8x256xf32>
    %124 = arith.mulf %122, %123 : vector<8x256xf32>
    %c15_i32_53 = arith.constant 15 : i32
    %125 = tpu.dynamic_rotate %114 by %c15_i32_53 dim 1 : vector<8x256xf32>, i32 -> vector<8x256xf32>
    %126 = vector.broadcast %3 : vector<1x256xf32> to vector<8x256xf32>
    %127 = arith.mulf %125, %126 : vector<8x256xf32>
    %c1_i32_54 = arith.constant 1 : i32
    %128 = tpu.dynamic_rotate %114 by %c1_i32_54 dim 1 : vector<8x256xf32>, i32 -> vector<8x256xf32>
    %129 = vector.broadcast %4 : vector<1x256xf32> to vector<8x256xf32>
    %130 = arith.mulf %128, %129 : vector<8x256xf32>
    %c255_i32_55 = arith.constant 255 : i32
    %131 = tpu.dynamic_rotate %114 by %c255_i32_55 dim 1 : vector<8x256xf32>, i32 -> vector<8x256xf32>
    %132 = vector.broadcast %5 : vector<1x256xf32> to vector<8x256xf32>
    %133 = arith.mulf %131, %132 : vector<8x256xf32>
    %c241_i32_56 = arith.constant 241 : i32
    %134 = tpu.dynamic_rotate %114 by %c241_i32_56 dim 1 : vector<8x256xf32>, i32 -> vector<8x256xf32>
    %135 = vector.broadcast %6 : vector<1x256xf32> to vector<8x256xf32>
    %136 = arith.mulf %134, %135 : vector<8x256xf32>
    %c240_i32_57 = arith.constant 240 : i32
    %137 = tpu.dynamic_rotate %114 by %c240_i32_57 dim 1 : vector<8x256xf32>, i32 -> vector<8x256xf32>
    %138 = vector.broadcast %7 : vector<1x256xf32> to vector<8x256xf32>
    %139 = arith.mulf %137, %138 : vector<8x256xf32>
    %c239_i32_58 = arith.constant 239 : i32
    %140 = tpu.dynamic_rotate %114 by %c239_i32_58 dim 1 : vector<8x256xf32>, i32 -> vector<8x256xf32>
    %141 = vector.broadcast %8 : vector<1x256xf32> to vector<8x256xf32>
    %142 = arith.mulf %140, %141 : vector<8x256xf32>
    %143 = tpu.concatenate %121, %124, %127, %130, %114, %133, %136, %139, %142 in 0 : vector<8x256xf32>, vector<8x256xf32>, vector<8x256xf32>, vector<8x256xf32>, vector<8x256xf32>, vector<8x256xf32>, vector<8x256xf32>, vector<8x256xf32>, vector<8x256xf32> -> vector<72x256xf32>
    %144 = arith.truncf %143 : vector<72x256xf32> to vector<72x256xbf16>
    %cst_59 = arith.constant dense<0.000000e+00> : vector<8x256xf32>
    %145 = tpu.matmul %116, %144, %cst_59 {dimension_numbers = #tpu.dot_dimension_numbers<[1], [0], [0], [1], [0, 0, 1, 1], [], []>} : vector<8x72xbf16>, vector<72x256xbf16>, vector<8x256xf32> -> vector<8x256xf32>
    %146 = vector.broadcast %118 : vector<8x1xf32> to vector<8x256xf32>
    %147 = arith.addf %145, %146 : vector<8x256xf32>
    %cst_60 = arith.constant 0.000000e+00 : f32
    %148 = vector.broadcast %cst_60 : f32 to vector<8x256xf32>
    %149 = arith.maximumf %147, %148 : vector<8x256xf32>
    %c0_61 = arith.constant 0 : index
    %c3 = arith.constant 3 : index
    %c0_62 = arith.constant 0 : index
    %c0_63 = arith.constant 0 : index
    %150 = vector.load %arg6[%c0_61, %c3, %c0_62, %c0_63] : memref<4x5x8x72xbf16, #tpu.memory_space<vmem>>, vector<1x1x8x72xbf16>
    %151 = vector.shape_cast %150 : vector<1x1x8x72xbf16> to vector<8x72xbf16>
    %c0_64 = arith.constant 0 : index
    %c3_65 = arith.constant 3 : index
    %c0_66 = arith.constant 0 : index
    %c0_67 = arith.constant 0 : index
    %152 = vector.load %arg7[%c0_64, %c3_65, %c0_66, %c0_67] : memref<4x5x8x1xf32, #tpu.memory_space<vmem>>, vector<1x1x8x1xf32>
    %153 = vector.shape_cast %152 : vector<1x1x8x1xf32> to vector<8x1xf32>
    %c17_i32_68 = arith.constant 17 : i32
    %154 = tpu.dynamic_rotate %149 by %c17_i32_68 dim 1 : vector<8x256xf32>, i32 -> vector<8x256xf32>
    %155 = vector.broadcast %1 : vector<1x256xf32> to vector<8x256xf32>
    %156 = arith.mulf %154, %155 : vector<8x256xf32>
    %c16_i32_69 = arith.constant 16 : i32
    %157 = tpu.dynamic_rotate %149 by %c16_i32_69 dim 1 : vector<8x256xf32>, i32 -> vector<8x256xf32>
    %158 = vector.broadcast %2 : vector<1x256xf32> to vector<8x256xf32>
    %159 = arith.mulf %157, %158 : vector<8x256xf32>
    %c15_i32_70 = arith.constant 15 : i32
    %160 = tpu.dynamic_rotate %149 by %c15_i32_70 dim 1 : vector<8x256xf32>, i32 -> vector<8x256xf32>
    %161 = vector.broadcast %3 : vector<1x256xf32> to vector<8x256xf32>
    %162 = arith.mulf %160, %161 : vector<8x256xf32>
    %c1_i32_71 = arith.constant 1 : i32
    %163 = tpu.dynamic_rotate %149 by %c1_i32_71 dim 1 : vector<8x256xf32>, i32 -> vector<8x256xf32>
    %164 = vector.broadcast %4 : vector<1x256xf32> to vector<8x256xf32>
    %165 = arith.mulf %163, %164 : vector<8x256xf32>
    %c255_i32_72 = arith.constant 255 : i32
    %166 = tpu.dynamic_rotate %149 by %c255_i32_72 dim 1 : vector<8x256xf32>, i32 -> vector<8x256xf32>
    %167 = vector.broadcast %5 : vector<1x256xf32> to vector<8x256xf32>
    %168 = arith.mulf %166, %167 : vector<8x256xf32>
    %c241_i32_73 = arith.constant 241 : i32
    %169 = tpu.dynamic_rotate %149 by %c241_i32_73 dim 1 : vector<8x256xf32>, i32 -> vector<8x256xf32>
    %170 = vector.broadcast %6 : vector<1x256xf32> to vector<8x256xf32>
    %171 = arith.mulf %169, %170 : vector<8x256xf32>
    %c240_i32_74 = arith.constant 240 : i32
    %172 = tpu.dynamic_rotate %149 by %c240_i32_74 dim 1 : vector<8x256xf32>, i32 -> vector<8x256xf32>
    %173 = vector.broadcast %7 : vector<1x256xf32> to vector<8x256xf32>
    %174 = arith.mulf %172, %173 : vector<8x256xf32>
    %c239_i32_75 = arith.constant 239 : i32
    %175 = tpu.dynamic_rotate %149 by %c239_i32_75 dim 1 : vector<8x256xf32>, i32 -> vector<8x256xf32>
    %176 = vector.broadcast %8 : vector<1x256xf32> to vector<8x256xf32>
    %177 = arith.mulf %175, %176 : vector<8x256xf32>
    %178 = tpu.concatenate %156, %159, %162, %165, %149, %168, %171, %174, %177 in 0 : vector<8x256xf32>, vector<8x256xf32>, vector<8x256xf32>, vector<8x256xf32>, vector<8x256xf32>, vector<8x256xf32>, vector<8x256xf32>, vector<8x256xf32>, vector<8x256xf32> -> vector<72x256xf32>
    %179 = arith.truncf %178 : vector<72x256xf32> to vector<72x256xbf16>
    %cst_76 = arith.constant dense<0.000000e+00> : vector<8x256xf32>
    %180 = tpu.matmul %151, %179, %cst_76 {dimension_numbers = #tpu.dot_dimension_numbers<[1], [0], [0], [1], [0, 0, 1, 1], [], []>} : vector<8x72xbf16>, vector<72x256xbf16>, vector<8x256xf32> -> vector<8x256xf32>
    %181 = vector.broadcast %153 : vector<8x1xf32> to vector<8x256xf32>
    %182 = arith.addf %180, %181 : vector<8x256xf32>
    %cst_77 = arith.constant 1.000000e+00 : f32
    %183 = vector.broadcast %cst_77 : f32 to vector<8x256xf32>
    %184 = arith.mulf %183, %182 : vector<8x256xf32>
    %185 = arith.addf %114, %184 : vector<8x256xf32>
    %c0_78 = arith.constant 0 : index
    %c4 = arith.constant 4 : index
    %c0_79 = arith.constant 0 : index
    %c0_80 = arith.constant 0 : index
    %186 = vector.load %arg6[%c0_78, %c4, %c0_79, %c0_80] : memref<4x5x8x72xbf16, #tpu.memory_space<vmem>>, vector<1x1x8x72xbf16>
    %187 = vector.shape_cast %186 : vector<1x1x8x72xbf16> to vector<8x72xbf16>
    %c0_81 = arith.constant 0 : index
    %c4_82 = arith.constant 4 : index
    %c0_83 = arith.constant 0 : index
    %c0_84 = arith.constant 0 : index
    %188 = vector.load %arg7[%c0_81, %c4_82, %c0_83, %c0_84] : memref<4x5x8x1xf32, #tpu.memory_space<vmem>>, vector<1x1x8x1xf32>
    %189 = vector.shape_cast %188 : vector<1x1x8x1xf32> to vector<8x1xf32>
    %c17_i32_85 = arith.constant 17 : i32
    %190 = tpu.dynamic_rotate %185 by %c17_i32_85 dim 1 : vector<8x256xf32>, i32 -> vector<8x256xf32>
    %191 = vector.broadcast %1 : vector<1x256xf32> to vector<8x256xf32>
    %192 = arith.mulf %190, %191 : vector<8x256xf32>
    %c16_i32_86 = arith.constant 16 : i32
    %193 = tpu.dynamic_rotate %185 by %c16_i32_86 dim 1 : vector<8x256xf32>, i32 -> vector<8x256xf32>
    %194 = vector.broadcast %2 : vector<1x256xf32> to vector<8x256xf32>
    %195 = arith.mulf %193, %194 : vector<8x256xf32>
    %c15_i32_87 = arith.constant 15 : i32
    %196 = tpu.dynamic_rotate %185 by %c15_i32_87 dim 1 : vector<8x256xf32>, i32 -> vector<8x256xf32>
    %197 = vector.broadcast %3 : vector<1x256xf32> to vector<8x256xf32>
    %198 = arith.mulf %196, %197 : vector<8x256xf32>
    %c1_i32_88 = arith.constant 1 : i32
    %199 = tpu.dynamic_rotate %185 by %c1_i32_88 dim 1 : vector<8x256xf32>, i32 -> vector<8x256xf32>
    %200 = vector.broadcast %4 : vector<1x256xf32> to vector<8x256xf32>
    %201 = arith.mulf %199, %200 : vector<8x256xf32>
    %c255_i32_89 = arith.constant 255 : i32
    %202 = tpu.dynamic_rotate %185 by %c255_i32_89 dim 1 : vector<8x256xf32>, i32 -> vector<8x256xf32>
    %203 = vector.broadcast %5 : vector<1x256xf32> to vector<8x256xf32>
    %204 = arith.mulf %202, %203 : vector<8x256xf32>
    %c241_i32_90 = arith.constant 241 : i32
    %205 = tpu.dynamic_rotate %185 by %c241_i32_90 dim 1 : vector<8x256xf32>, i32 -> vector<8x256xf32>
    %206 = vector.broadcast %6 : vector<1x256xf32> to vector<8x256xf32>
    %207 = arith.mulf %205, %206 : vector<8x256xf32>
    %c240_i32_91 = arith.constant 240 : i32
    %208 = tpu.dynamic_rotate %185 by %c240_i32_91 dim 1 : vector<8x256xf32>, i32 -> vector<8x256xf32>
    %209 = vector.broadcast %7 : vector<1x256xf32> to vector<8x256xf32>
    %210 = arith.mulf %208, %209 : vector<8x256xf32>
    %c239_i32_92 = arith.constant 239 : i32
    %211 = tpu.dynamic_rotate %185 by %c239_i32_92 dim 1 : vector<8x256xf32>, i32 -> vector<8x256xf32>
    %212 = vector.broadcast %8 : vector<1x256xf32> to vector<8x256xf32>
    %213 = arith.mulf %211, %212 : vector<8x256xf32>
    %214 = tpu.concatenate %192, %195, %198, %201, %185, %204, %207, %210, %213 in 0 : vector<8x256xf32>, vector<8x256xf32>, vector<8x256xf32>, vector<8x256xf32>, vector<8x256xf32>, vector<8x256xf32>, vector<8x256xf32>, vector<8x256xf32>, vector<8x256xf32> -> vector<72x256xf32>
    %215 = arith.truncf %214 : vector<72x256xf32> to vector<72x256xbf16>
    %cst_93 = arith.constant dense<0.000000e+00> : vector<8x256xf32>
    %216 = tpu.matmul %187, %215, %cst_93 {dimension_numbers = #tpu.dot_dimension_numbers<[1], [0], [0], [1], [0, 0, 1, 1], [], []>} : vector<8x72xbf16>, vector<72x256xbf16>, vector<8x256xf32> -> vector<8x256xf32>
    %217 = vector.broadcast %189 : vector<8x1xf32> to vector<8x256xf32>
    %218 = arith.addf %216, %217 : vector<8x256xf32>
    %219 = arith.addf %43, %218 : vector<8x256xf32>
    %c1_94 = arith.constant 1 : index
    %c0_95 = arith.constant 0 : index
    %c0_96 = arith.constant 0 : index
    %c0_97 = arith.constant 0 : index
    %220 = vector.load %arg6[%c1_94, %c0_95, %c0_96, %c0_97] : memref<4x5x8x72xbf16, #tpu.memory_space<vmem>>, vector<1x1x8x72xbf16>
    %221 = vector.shape_cast %220 : vector<1x1x8x72xbf16> to vector<8x72xbf16>
    %c1_98 = arith.constant 1 : index
    %c0_99 = arith.constant 0 : index
    %c0_100 = arith.constant 0 : index
    %c0_101 = arith.constant 0 : index
    %222 = vector.load %arg7[%c1_98, %c0_99, %c0_100, %c0_101] : memref<4x5x8x1xf32, #tpu.memory_space<vmem>>, vector<1x1x8x1xf32>
    %223 = vector.shape_cast %222 : vector<1x1x8x1xf32> to vector<8x1xf32>
    %c17_i32_102 = arith.constant 17 : i32
    %224 = tpu.dynamic_rotate %219 by %c17_i32_102 dim 1 : vector<8x256xf32>, i32 -> vector<8x256xf32>
    %225 = vector.broadcast %1 : vector<1x256xf32> to vector<8x256xf32>
    %226 = arith.mulf %224, %225 : vector<8x256xf32>
    %c16_i32_103 = arith.constant 16 : i32
    %227 = tpu.dynamic_rotate %219 by %c16_i32_103 dim 1 : vector<8x256xf32>, i32 -> vector<8x256xf32>
    %228 = vector.broadcast %2 : vector<1x256xf32> to vector<8x256xf32>
    %229 = arith.mulf %227, %228 : vector<8x256xf32>
    %c15_i32_104 = arith.constant 15 : i32
    %230 = tpu.dynamic_rotate %219 by %c15_i32_104 dim 1 : vector<8x256xf32>, i32 -> vector<8x256xf32>
    %231 = vector.broadcast %3 : vector<1x256xf32> to vector<8x256xf32>
    %232 = arith.mulf %230, %231 : vector<8x256xf32>
    %c1_i32_105 = arith.constant 1 : i32
    %233 = tpu.dynamic_rotate %219 by %c1_i32_105 dim 1 : vector<8x256xf32>, i32 -> vector<8x256xf32>
    %234 = vector.broadcast %4 : vector<1x256xf32> to vector<8x256xf32>
    %235 = arith.mulf %233, %234 : vector<8x256xf32>
    %c255_i32_106 = arith.constant 255 : i32
    %236 = tpu.dynamic_rotate %219 by %c255_i32_106 dim 1 : vector<8x256xf32>, i32 -> vector<8x256xf32>
    %237 = vector.broadcast %5 : vector<1x256xf32> to vector<8x256xf32>
    %238 = arith.mulf %236, %237 : vector<8x256xf32>
    %c241_i32_107 = arith.constant 241 : i32
    %239 = tpu.dynamic_rotate %219 by %c241_i32_107 dim 1 : vector<8x256xf32>, i32 -> vector<8x256xf32>
    %240 = vector.broadcast %6 : vector<1x256xf32> to vector<8x256xf32>
    %241 = arith.mulf %239, %240 : vector<8x256xf32>
    %c240_i32_108 = arith.constant 240 : i32
    %242 = tpu.dynamic_rotate %219 by %c240_i32_108 dim 1 : vector<8x256xf32>, i32 -> vector<8x256xf32>
    %243 = vector.broadcast %7 : vector<1x256xf32> to vector<8x256xf32>
    %244 = arith.mulf %242, %243 : vector<8x256xf32>
    %c239_i32_109 = arith.constant 239 : i32
    %245 = tpu.dynamic_rotate %219 by %c239_i32_109 dim 1 : vector<8x256xf32>, i32 -> vector<8x256xf32>
    %246 = vector.broadcast %8 : vector<1x256xf32> to vector<8x256xf32>
    %247 = arith.mulf %245, %246 : vector<8x256xf32>
    %248 = tpu.concatenate %226, %229, %232, %235, %219, %238, %241, %244, %247 in 0 : vector<8x256xf32>, vector<8x256xf32>, vector<8x256xf32>, vector<8x256xf32>, vector<8x256xf32>, vector<8x256xf32>, vector<8x256xf32>, vector<8x256xf32>, vector<8x256xf32> -> vector<72x256xf32>
    %249 = arith.truncf %248 : vector<72x256xf32> to vector<72x256xbf16>
    %cst_110 = arith.constant dense<0.000000e+00> : vector<8x256xf32>
    %250 = tpu.matmul %221, %249, %cst_110 {dimension_numbers = #tpu.dot_dimension_numbers<[1], [0], [0], [1], [0, 0, 1, 1], [], []>} : vector<8x72xbf16>, vector<72x256xbf16>, vector<8x256xf32> -> vector<8x256xf32>
    %251 = vector.broadcast %223 : vector<8x1xf32> to vector<8x256xf32>
    %252 = arith.addf %250, %251 : vector<8x256xf32>
    %cst_111 = arith.constant 0.000000e+00 : f32
    %253 = vector.broadcast %cst_111 : f32 to vector<8x256xf32>
    %254 = arith.maximumf %252, %253 : vector<8x256xf32>
    %c1_112 = arith.constant 1 : index
    %c1_113 = arith.constant 1 : index
    %c0_114 = arith.constant 0 : index
    %c0_115 = arith.constant 0 : index
    %255 = vector.load %arg6[%c1_112, %c1_113, %c0_114, %c0_115] : memref<4x5x8x72xbf16, #tpu.memory_space<vmem>>, vector<1x1x8x72xbf16>
    %256 = vector.shape_cast %255 : vector<1x1x8x72xbf16> to vector<8x72xbf16>
    %c1_116 = arith.constant 1 : index
    %c1_117 = arith.constant 1 : index
    %c0_118 = arith.constant 0 : index
    %c0_119 = arith.constant 0 : index
    %257 = vector.load %arg7[%c1_116, %c1_117, %c0_118, %c0_119] : memref<4x5x8x1xf32, #tpu.memory_space<vmem>>, vector<1x1x8x1xf32>
    %258 = vector.shape_cast %257 : vector<1x1x8x1xf32> to vector<8x1xf32>
    %c17_i32_120 = arith.constant 17 : i32
    %259 = tpu.dynamic_rotate %254 by %c17_i32_120 dim 1 : vector<8x256xf32>, i32 -> vector<8x256xf32>
    %260 = vector.broadcast %1 : vector<1x256xf32> to vector<8x256xf32>
    %261 = arith.mulf %259, %260 : vector<8x256xf32>
    %c16_i32_121 = arith.constant 16 : i32
    %262 = tpu.dynamic_rotate %254 by %c16_i32_121 dim 1 : vector<8x256xf32>, i32 -> vector<8x256xf32>
    %263 = vector.broadcast %2 : vector<1x256xf32> to vector<8x256xf32>
    %264 = arith.mulf %262, %263 : vector<8x256xf32>
    %c15_i32_122 = arith.constant 15 : i32
    %265 = tpu.dynamic_rotate %254 by %c15_i32_122 dim 1 : vector<8x256xf32>, i32 -> vector<8x256xf32>
    %266 = vector.broadcast %3 : vector<1x256xf32> to vector<8x256xf32>
    %267 = arith.mulf %265, %266 : vector<8x256xf32>
    %c1_i32_123 = arith.constant 1 : i32
    %268 = tpu.dynamic_rotate %254 by %c1_i32_123 dim 1 : vector<8x256xf32>, i32 -> vector<8x256xf32>
    %269 = vector.broadcast %4 : vector<1x256xf32> to vector<8x256xf32>
    %270 = arith.mulf %268, %269 : vector<8x256xf32>
    %c255_i32_124 = arith.constant 255 : i32
    %271 = tpu.dynamic_rotate %254 by %c255_i32_124 dim 1 : vector<8x256xf32>, i32 -> vector<8x256xf32>
    %272 = vector.broadcast %5 : vector<1x256xf32> to vector<8x256xf32>
    %273 = arith.mulf %271, %272 : vector<8x256xf32>
    %c241_i32_125 = arith.constant 241 : i32
    %274 = tpu.dynamic_rotate %254 by %c241_i32_125 dim 1 : vector<8x256xf32>, i32 -> vector<8x256xf32>
    %275 = vector.broadcast %6 : vector<1x256xf32> to vector<8x256xf32>
    %276 = arith.mulf %274, %275 : vector<8x256xf32>
    %c240_i32_126 = arith.constant 240 : i32
    %277 = tpu.dynamic_rotate %254 by %c240_i32_126 dim 1 : vector<8x256xf32>, i32 -> vector<8x256xf32>
    %278 = vector.broadcast %7 : vector<1x256xf32> to vector<8x256xf32>
    %279 = arith.mulf %277, %278 : vector<8x256xf32>
    %c239_i32_127 = arith.constant 239 : i32
    %280 = tpu.dynamic_rotate %254 by %c239_i32_127 dim 1 : vector<8x256xf32>, i32 -> vector<8x256xf32>
    %281 = vector.broadcast %8 : vector<1x256xf32> to vector<8x256xf32>
    %282 = arith.mulf %280, %281 : vector<8x256xf32>
    %283 = tpu.concatenate %261, %264, %267, %270, %254, %273, %276, %279, %282 in 0 : vector<8x256xf32>, vector<8x256xf32>, vector<8x256xf32>, vector<8x256xf32>, vector<8x256xf32>, vector<8x256xf32>, vector<8x256xf32>, vector<8x256xf32>, vector<8x256xf32> -> vector<72x256xf32>
    %284 = arith.truncf %283 : vector<72x256xf32> to vector<72x256xbf16>
    %cst_128 = arith.constant dense<0.000000e+00> : vector<8x256xf32>
    %285 = tpu.matmul %256, %284, %cst_128 {dimension_numbers = #tpu.dot_dimension_numbers<[1], [0], [0], [1], [0, 0, 1, 1], [], []>} : vector<8x72xbf16>, vector<72x256xbf16>, vector<8x256xf32> -> vector<8x256xf32>
    %286 = vector.broadcast %258 : vector<8x1xf32> to vector<8x256xf32>
    %287 = arith.addf %285, %286 : vector<8x256xf32>
    %cst_129 = arith.constant 1.000000e+00 : f32
    %288 = vector.broadcast %cst_129 : f32 to vector<8x256xf32>
    %289 = arith.mulf %288, %287 : vector<8x256xf32>
    %290 = arith.addf %219, %289 : vector<8x256xf32>
    %c1_130 = arith.constant 1 : index
    %c2_131 = arith.constant 2 : index
    %c0_132 = arith.constant 0 : index
    %c0_133 = arith.constant 0 : index
    %291 = vector.load %arg6[%c1_130, %c2_131, %c0_132, %c0_133] : memref<4x5x8x72xbf16, #tpu.memory_space<vmem>>, vector<1x1x8x72xbf16>
    %292 = vector.shape_cast %291 : vector<1x1x8x72xbf16> to vector<8x72xbf16>
    %c1_134 = arith.constant 1 : index
    %c2_135 = arith.constant 2 : index
    %c0_136 = arith.constant 0 : index
    %c0_137 = arith.constant 0 : index
    %293 = vector.load %arg7[%c1_134, %c2_135, %c0_136, %c0_137] : memref<4x5x8x1xf32, #tpu.memory_space<vmem>>, vector<1x1x8x1xf32>
    %294 = vector.shape_cast %293 : vector<1x1x8x1xf32> to vector<8x1xf32>
    %c17_i32_138 = arith.constant 17 : i32
    %295 = tpu.dynamic_rotate %290 by %c17_i32_138 dim 1 : vector<8x256xf32>, i32 -> vector<8x256xf32>
    %296 = vector.broadcast %1 : vector<1x256xf32> to vector<8x256xf32>
    %297 = arith.mulf %295, %296 : vector<8x256xf32>
    %c16_i32_139 = arith.constant 16 : i32
    %298 = tpu.dynamic_rotate %290 by %c16_i32_139 dim 1 : vector<8x256xf32>, i32 -> vector<8x256xf32>
    %299 = vector.broadcast %2 : vector<1x256xf32> to vector<8x256xf32>
    %300 = arith.mulf %298, %299 : vector<8x256xf32>
    %c15_i32_140 = arith.constant 15 : i32
    %301 = tpu.dynamic_rotate %290 by %c15_i32_140 dim 1 : vector<8x256xf32>, i32 -> vector<8x256xf32>
    %302 = vector.broadcast %3 : vector<1x256xf32> to vector<8x256xf32>
    %303 = arith.mulf %301, %302 : vector<8x256xf32>
    %c1_i32_141 = arith.constant 1 : i32
    %304 = tpu.dynamic_rotate %290 by %c1_i32_141 dim 1 : vector<8x256xf32>, i32 -> vector<8x256xf32>
    %305 = vector.broadcast %4 : vector<1x256xf32> to vector<8x256xf32>
    %306 = arith.mulf %304, %305 : vector<8x256xf32>
    %c255_i32_142 = arith.constant 255 : i32
    %307 = tpu.dynamic_rotate %290 by %c255_i32_142 dim 1 : vector<8x256xf32>, i32 -> vector<8x256xf32>
    %308 = vector.broadcast %5 : vector<1x256xf32> to vector<8x256xf32>
    %309 = arith.mulf %307, %308 : vector<8x256xf32>
    %c241_i32_143 = arith.constant 241 : i32
    %310 = tpu.dynamic_rotate %290 by %c241_i32_143 dim 1 : vector<8x256xf32>, i32 -> vector<8x256xf32>
    %311 = vector.broadcast %6 : vector<1x256xf32> to vector<8x256xf32>
    %312 = arith.mulf %310, %311 : vector<8x256xf32>
    %c240_i32_144 = arith.constant 240 : i32
    %313 = tpu.dynamic_rotate %290 by %c240_i32_144 dim 1 : vector<8x256xf32>, i32 -> vector<8x256xf32>
    %314 = vector.broadcast %7 : vector<1x256xf32> to vector<8x256xf32>
    %315 = arith.mulf %313, %314 : vector<8x256xf32>
    %c239_i32_145 = arith.constant 239 : i32
    %316 = tpu.dynamic_rotate %290 by %c239_i32_145 dim 1 : vector<8x256xf32>, i32 -> vector<8x256xf32>
    %317 = vector.broadcast %8 : vector<1x256xf32> to vector<8x256xf32>
    %318 = arith.mulf %316, %317 : vector<8x256xf32>
    %319 = tpu.concatenate %297, %300, %303, %306, %290, %309, %312, %315, %318 in 0 : vector<8x256xf32>, vector<8x256xf32>, vector<8x256xf32>, vector<8x256xf32>, vector<8x256xf32>, vector<8x256xf32>, vector<8x256xf32>, vector<8x256xf32>, vector<8x256xf32> -> vector<72x256xf32>
    %320 = arith.truncf %319 : vector<72x256xf32> to vector<72x256xbf16>
    %cst_146 = arith.constant dense<0.000000e+00> : vector<8x256xf32>
    %321 = tpu.matmul %292, %320, %cst_146 {dimension_numbers = #tpu.dot_dimension_numbers<[1], [0], [0], [1], [0, 0, 1, 1], [], []>} : vector<8x72xbf16>, vector<72x256xbf16>, vector<8x256xf32> -> vector<8x256xf32>
    %322 = vector.broadcast %294 : vector<8x1xf32> to vector<8x256xf32>
    %323 = arith.addf %321, %322 : vector<8x256xf32>
    %cst_147 = arith.constant 0.000000e+00 : f32
    %324 = vector.broadcast %cst_147 : f32 to vector<8x256xf32>
    %325 = arith.maximumf %323, %324 : vector<8x256xf32>
    %c1_148 = arith.constant 1 : index
    %c3_149 = arith.constant 3 : index
    %c0_150 = arith.constant 0 : index
    %c0_151 = arith.constant 0 : index
    %326 = vector.load %arg6[%c1_148, %c3_149, %c0_150, %c0_151] : memref<4x5x8x72xbf16, #tpu.memory_space<vmem>>, vector<1x1x8x72xbf16>
    %327 = vector.shape_cast %326 : vector<1x1x8x72xbf16> to vector<8x72xbf16>
    %c1_152 = arith.constant 1 : index
    %c3_153 = arith.constant 3 : index
    %c0_154 = arith.constant 0 : index
    %c0_155 = arith.constant 0 : index
    %328 = vector.load %arg7[%c1_152, %c3_153, %c0_154, %c0_155] : memref<4x5x8x1xf32, #tpu.memory_space<vmem>>, vector<1x1x8x1xf32>
    %329 = vector.shape_cast %328 : vector<1x1x8x1xf32> to vector<8x1xf32>
    %c17_i32_156 = arith.constant 17 : i32
    %330 = tpu.dynamic_rotate %325 by %c17_i32_156 dim 1 : vector<8x256xf32>, i32 -> vector<8x256xf32>
    %331 = vector.broadcast %1 : vector<1x256xf32> to vector<8x256xf32>
    %332 = arith.mulf %330, %331 : vector<8x256xf32>
    %c16_i32_157 = arith.constant 16 : i32
    %333 = tpu.dynamic_rotate %325 by %c16_i32_157 dim 1 : vector<8x256xf32>, i32 -> vector<8x256xf32>
    %334 = vector.broadcast %2 : vector<1x256xf32> to vector<8x256xf32>
    %335 = arith.mulf %333, %334 : vector<8x256xf32>
    %c15_i32_158 = arith.constant 15 : i32
    %336 = tpu.dynamic_rotate %325 by %c15_i32_158 dim 1 : vector<8x256xf32>, i32 -> vector<8x256xf32>
    %337 = vector.broadcast %3 : vector<1x256xf32> to vector<8x256xf32>
    %338 = arith.mulf %336, %337 : vector<8x256xf32>
    %c1_i32_159 = arith.constant 1 : i32
    %339 = tpu.dynamic_rotate %325 by %c1_i32_159 dim 1 : vector<8x256xf32>, i32 -> vector<8x256xf32>
    %340 = vector.broadcast %4 : vector<1x256xf32> to vector<8x256xf32>
    %341 = arith.mulf %339, %340 : vector<8x256xf32>
    %c255_i32_160 = arith.constant 255 : i32
    %342 = tpu.dynamic_rotate %325 by %c255_i32_160 dim 1 : vector<8x256xf32>, i32 -> vector<8x256xf32>
    %343 = vector.broadcast %5 : vector<1x256xf32> to vector<8x256xf32>
    %344 = arith.mulf %342, %343 : vector<8x256xf32>
    %c241_i32_161 = arith.constant 241 : i32
    %345 = tpu.dynamic_rotate %325 by %c241_i32_161 dim 1 : vector<8x256xf32>, i32 -> vector<8x256xf32>
    %346 = vector.broadcast %6 : vector<1x256xf32> to vector<8x256xf32>
    %347 = arith.mulf %345, %346 : vector<8x256xf32>
    %c240_i32_162 = arith.constant 240 : i32
    %348 = tpu.dynamic_rotate %325 by %c240_i32_162 dim 1 : vector<8x256xf32>, i32 -> vector<8x256xf32>
    %349 = vector.broadcast %7 : vector<1x256xf32> to vector<8x256xf32>
    %350 = arith.mulf %348, %349 : vector<8x256xf32>
    %c239_i32_163 = arith.constant 239 : i32
    %351 = tpu.dynamic_rotate %325 by %c239_i32_163 dim 1 : vector<8x256xf32>, i32 -> vector<8x256xf32>
    %352 = vector.broadcast %8 : vector<1x256xf32> to vector<8x256xf32>
    %353 = arith.mulf %351, %352 : vector<8x256xf32>
    %354 = tpu.concatenate %332, %335, %338, %341, %325, %344, %347, %350, %353 in 0 : vector<8x256xf32>, vector<8x256xf32>, vector<8x256xf32>, vector<8x256xf32>, vector<8x256xf32>, vector<8x256xf32>, vector<8x256xf32>, vector<8x256xf32>, vector<8x256xf32> -> vector<72x256xf32>
    %355 = arith.truncf %354 : vector<72x256xf32> to vector<72x256xbf16>
    %cst_164 = arith.constant dense<0.000000e+00> : vector<8x256xf32>
    %356 = tpu.matmul %327, %355, %cst_164 {dimension_numbers = #tpu.dot_dimension_numbers<[1], [0], [0], [1], [0, 0, 1, 1], [], []>} : vector<8x72xbf16>, vector<72x256xbf16>, vector<8x256xf32> -> vector<8x256xf32>
    %357 = vector.broadcast %329 : vector<8x1xf32> to vector<8x256xf32>
    %358 = arith.addf %356, %357 : vector<8x256xf32>
    %cst_165 = arith.constant 1.000000e+00 : f32
    %359 = vector.broadcast %cst_165 : f32 to vector<8x256xf32>
    %360 = arith.mulf %359, %358 : vector<8x256xf32>
    %361 = arith.addf %290, %360 : vector<8x256xf32>
    %c1_166 = arith.constant 1 : index
    %c4_167 = arith.constant 4 : index
    %c0_168 = arith.constant 0 : index
    %c0_169 = arith.constant 0 : index
    %362 = vector.load %arg6[%c1_166, %c4_167, %c0_168, %c0_169] : memref<4x5x8x72xbf16, #tpu.memory_space<vmem>>, vector<1x1x8x72xbf16>
    %363 = vector.shape_cast %362 : vector<1x1x8x72xbf16> to vector<8x72xbf16>
    %c1_170 = arith.constant 1 : index
    %c4_171 = arith.constant 4 : index
    %c0_172 = arith.constant 0 : index
    %c0_173 = arith.constant 0 : index
    %364 = vector.load %arg7[%c1_170, %c4_171, %c0_172, %c0_173] : memref<4x5x8x1xf32, #tpu.memory_space<vmem>>, vector<1x1x8x1xf32>
    %365 = vector.shape_cast %364 : vector<1x1x8x1xf32> to vector<8x1xf32>
    %c17_i32_174 = arith.constant 17 : i32
    %366 = tpu.dynamic_rotate %361 by %c17_i32_174 dim 1 : vector<8x256xf32>, i32 -> vector<8x256xf32>
    %367 = vector.broadcast %1 : vector<1x256xf32> to vector<8x256xf32>
    %368 = arith.mulf %366, %367 : vector<8x256xf32>
    %c16_i32_175 = arith.constant 16 : i32
    %369 = tpu.dynamic_rotate %361 by %c16_i32_175 dim 1 : vector<8x256xf32>, i32 -> vector<8x256xf32>
    %370 = vector.broadcast %2 : vector<1x256xf32> to vector<8x256xf32>
    %371 = arith.mulf %369, %370 : vector<8x256xf32>
    %c15_i32_176 = arith.constant 15 : i32
    %372 = tpu.dynamic_rotate %361 by %c15_i32_176 dim 1 : vector<8x256xf32>, i32 -> vector<8x256xf32>
    %373 = vector.broadcast %3 : vector<1x256xf32> to vector<8x256xf32>
    %374 = arith.mulf %372, %373 : vector<8x256xf32>
    %c1_i32_177 = arith.constant 1 : i32
    %375 = tpu.dynamic_rotate %361 by %c1_i32_177 dim 1 : vector<8x256xf32>, i32 -> vector<8x256xf32>
    %376 = vector.broadcast %4 : vector<1x256xf32> to vector<8x256xf32>
    %377 = arith.mulf %375, %376 : vector<8x256xf32>
    %c255_i32_178 = arith.constant 255 : i32
    %378 = tpu.dynamic_rotate %361 by %c255_i32_178 dim 1 : vector<8x256xf32>, i32 -> vector<8x256xf32>
    %379 = vector.broadcast %5 : vector<1x256xf32> to vector<8x256xf32>
    %380 = arith.mulf %378, %379 : vector<8x256xf32>
    %c241_i32_179 = arith.constant 241 : i32
    %381 = tpu.dynamic_rotate %361 by %c241_i32_179 dim 1 : vector<8x256xf32>, i32 -> vector<8x256xf32>
    %382 = vector.broadcast %6 : vector<1x256xf32> to vector<8x256xf32>
    %383 = arith.mulf %381, %382 : vector<8x256xf32>
    %c240_i32_180 = arith.constant 240 : i32
    %384 = tpu.dynamic_rotate %361 by %c240_i32_180 dim 1 : vector<8x256xf32>, i32 -> vector<8x256xf32>
    %385 = vector.broadcast %7 : vector<1x256xf32> to vector<8x256xf32>
    %386 = arith.mulf %384, %385 : vector<8x256xf32>
    %c239_i32_181 = arith.constant 239 : i32
    %387 = tpu.dynamic_rotate %361 by %c239_i32_181 dim 1 : vector<8x256xf32>, i32 -> vector<8x256xf32>
    %388 = vector.broadcast %8 : vector<1x256xf32> to vector<8x256xf32>
    %389 = arith.mulf %387, %388 : vector<8x256xf32>
    %390 = tpu.concatenate %368, %371, %374, %377, %361, %380, %383, %386, %389 in 0 : vector<8x256xf32>, vector<8x256xf32>, vector<8x256xf32>, vector<8x256xf32>, vector<8x256xf32>, vector<8x256xf32>, vector<8x256xf32>, vector<8x256xf32>, vector<8x256xf32> -> vector<72x256xf32>
    %391 = arith.truncf %390 : vector<72x256xf32> to vector<72x256xbf16>
    %cst_182 = arith.constant dense<0.000000e+00> : vector<8x256xf32>
    %392 = tpu.matmul %363, %391, %cst_182 {dimension_numbers = #tpu.dot_dimension_numbers<[1], [0], [0], [1], [0, 0, 1, 1], [], []>} : vector<8x72xbf16>, vector<72x256xbf16>, vector<8x256xf32> -> vector<8x256xf32>
    %393 = vector.broadcast %365 : vector<8x1xf32> to vector<8x256xf32>
    %394 = arith.addf %392, %393 : vector<8x256xf32>
    %395 = arith.addf %219, %394 : vector<8x256xf32>
    %c0_183 = arith.constant 0 : index
    %c0_184 = arith.constant 0 : index
    %396 = vector.load %arg9[%c0_183, %c0_184] : memref<8x1xf32, #tpu.memory_space<vmem>>, vector<8x1xf32>
    %c0_185 = arith.constant 0 : index
    %c0_186 = arith.constant 0 : index
    %c0_187 = arith.constant 0 : index
    %397 = vector.load %arg8[%c0_185, %c0_186, %c0_187] : memref<2x8x8xbf16, #tpu.memory_space<vmem>>, vector<1x8x8xbf16>
    %398 = vector.shape_cast %397 : vector<1x8x8xbf16> to vector<8x8xbf16>
    %399 = arith.truncf %219 : vector<8x256xf32> to vector<8x256xbf16>
    %cst_188 = arith.constant dense<0.000000e+00> : vector<8x256xf32>
    %400 = tpu.matmul %398, %399, %cst_188 {dimension_numbers = #tpu.dot_dimension_numbers<[1], [0], [0], [1], [0, 0, 1, 1], [], []>} : vector<8x8xbf16>, vector<8x256xbf16>, vector<8x256xf32> -> vector<8x256xf32>
    %401 = vector.broadcast %396 : vector<8x1xf32> to vector<8x256xf32>
    %402 = arith.addf %401, %400 : vector<8x256xf32>
    %c1_189 = arith.constant 1 : index
    %c0_190 = arith.constant 0 : index
    %c0_191 = arith.constant 0 : index
    %403 = vector.load %arg8[%c1_189, %c0_190, %c0_191] : memref<2x8x8xbf16, #tpu.memory_space<vmem>>, vector<1x8x8xbf16>
    %404 = vector.shape_cast %403 : vector<1x8x8xbf16> to vector<8x8xbf16>
    %405 = arith.truncf %395 : vector<8x256xf32> to vector<8x256xbf16>
    %cst_192 = arith.constant dense<0.000000e+00> : vector<8x256xf32>
    %406 = tpu.matmul %404, %405, %cst_192 {dimension_numbers = #tpu.dot_dimension_numbers<[1], [0], [0], [1], [0, 0, 1, 1], [], []>} : vector<8x8xbf16>, vector<8x256xbf16>, vector<8x256xf32> -> vector<8x256xf32>
    %407 = arith.addf %402, %406 : vector<8x256xf32>
    %408 = arith.truncf %407 : vector<8x256xf32> to vector<8x256xbf16>
    %c0_193 = arith.constant 0 : index
    %c0_194 = arith.constant 0 : index
    %c0_195 = arith.constant 0 : index
    %409 = vector.load %arg10[%c0_193, %c0_194, %c0_195] : memref<3x4x8xbf16, #tpu.memory_space<vmem>>, vector<1x4x8xbf16>
    %410 = vector.shape_cast %409 : vector<1x4x8xbf16> to vector<4x8xbf16>
    %cst_196 = arith.constant dense<0.000000e+00> : vector<4x256xf32>
    %411 = tpu.matmul %410, %408, %cst_196 {dimension_numbers = #tpu.dot_dimension_numbers<[1], [0], [0], [1], [0, 0, 1, 1], [], []>} : vector<4x8xbf16>, vector<8x256xbf16>, vector<4x256xf32> -> vector<4x256xf32>
    %c0_197 = arith.constant 0 : index
    %c0_198 = arith.constant 0 : index
    %c0_199 = arith.constant 0 : index
    %412 = vector.load %arg11[%c0_197, %c0_198, %c0_199] : memref<3x4x1xf32, #tpu.memory_space<vmem>>, vector<1x4x1xf32>
    %413 = vector.shape_cast %412 : vector<1x4x1xf32> to vector<4x1xf32>
    %414 = vector.broadcast %413 : vector<4x1xf32> to vector<4x256xf32>
    %415 = arith.addf %411, %414 : vector<4x256xf32>
    %c1_200 = arith.constant 1 : index
    %c0_201 = arith.constant 0 : index
    %c0_202 = arith.constant 0 : index
    %416 = vector.load %arg10[%c1_200, %c0_201, %c0_202] : memref<3x4x8xbf16, #tpu.memory_space<vmem>>, vector<1x4x8xbf16>
    %417 = vector.shape_cast %416 : vector<1x4x8xbf16> to vector<4x8xbf16>
    %cst_203 = arith.constant dense<0.000000e+00> : vector<4x256xf32>
    %418 = tpu.matmul %417, %408, %cst_203 {dimension_numbers = #tpu.dot_dimension_numbers<[1], [0], [0], [1], [0, 0, 1, 1], [], []>} : vector<4x8xbf16>, vector<8x256xbf16>, vector<4x256xf32> -> vector<4x256xf32>
    %c1_204 = arith.constant 1 : index
    %c0_205 = arith.constant 0 : index
    %c0_206 = arith.constant 0 : index
    %419 = vector.load %arg11[%c1_204, %c0_205, %c0_206] : memref<3x4x1xf32, #tpu.memory_space<vmem>>, vector<1x4x1xf32>
    %420 = vector.shape_cast %419 : vector<1x4x1xf32> to vector<4x1xf32>
    %421 = vector.broadcast %420 : vector<4x1xf32> to vector<4x256xf32>
    %422 = arith.addf %418, %421 : vector<4x256xf32>
    %c2_207 = arith.constant 2 : index
    %c0_208 = arith.constant 0 : index
    %c0_209 = arith.constant 0 : index
    %423 = vector.load %arg10[%c2_207, %c0_208, %c0_209] : memref<3x4x8xbf16, #tpu.memory_space<vmem>>, vector<1x4x8xbf16>
    %424 = vector.shape_cast %423 : vector<1x4x8xbf16> to vector<4x8xbf16>
    %cst_210 = arith.constant dense<0.000000e+00> : vector<4x256xf32>
    %425 = tpu.matmul %424, %408, %cst_210 {dimension_numbers = #tpu.dot_dimension_numbers<[1], [0], [0], [1], [0, 0, 1, 1], [], []>} : vector<4x8xbf16>, vector<8x256xbf16>, vector<4x256xf32> -> vector<4x256xf32>
    %c2_211 = arith.constant 2 : index
    %c0_212 = arith.constant 0 : index
    %c0_213 = arith.constant 0 : index
    %426 = vector.load %arg11[%c2_211, %c0_212, %c0_213] : memref<3x4x1xf32, #tpu.memory_space<vmem>>, vector<1x4x1xf32>
    %427 = vector.shape_cast %426 : vector<1x4x1xf32> to vector<4x1xf32>
    %428 = vector.broadcast %427 : vector<4x1xf32> to vector<4x256xf32>
    %429 = arith.addf %425, %428 : vector<4x256xf32>
    %430 = tpu.transpose %415, [1, 0] : vector<4x256xf32> -> vector<256x4xf32>
    %431 = arith.truncf %430 : vector<256x4xf32> to vector<256x4xbf16>
    %432 = arith.truncf %422 : vector<4x256xf32> to vector<4x256xbf16>
    %cst_214 = arith.constant dense<0.000000e+00> : vector<256x256xf32>
    %433 = tpu.matmul %431, %432, %cst_214 {dimension_numbers = #tpu.dot_dimension_numbers<[1], [0], [0], [1], [0, 0, 1, 1], [], []>} : vector<256x4xbf16>, vector<4x256xbf16>, vector<256x256xf32> -> vector<256x256xf32>
    %cst_215 = arith.constant dense<0xFF800000> : vector<256xf32>
    %434 = vector.multi_reduction <maximumf>, %433, %cst_215 [1] : vector<256x256xf32> to vector<256xf32>
    %435 = vector.shape_cast %434 : vector<256xf32> to vector<256x1xf32>
    %436 = vector.broadcast %435 : vector<256x1xf32> to vector<256x256xf32>
    %437 = arith.subf %433, %436 : vector<256x256xf32>
    %438 = math.exp %437 : vector<256x256xf32>
    %cst_216 = arith.constant dense<0.000000e+00> : vector<256xf32>
    %439 = vector.multi_reduction <add>, %438, %cst_216 [1] : vector<256x256xf32> to vector<256xf32>
    %440 = vector.shape_cast %439 : vector<256xf32> to vector<256x1xf32>
    %441 = tpu.reciprocal %440 {approx = true} : vector<256x1xf32> -> vector<256x1xf32>
    %442 = vector.broadcast %441 : vector<256x1xf32> to vector<256x256xf32>
    %443 = arith.mulf %438, %442 : vector<256x256xf32>
    %444 = arith.truncf %429 : vector<4x256xf32> to vector<4x256xbf16>
    %445 = arith.truncf %443 : vector<256x256xf32> to vector<256x256xbf16>
    %cst_217 = arith.constant dense<0.000000e+00> : vector<4x256xf32>
    %446 = tpu.matmul %444, %445, %cst_217 {dimension_numbers = #tpu.dot_dimension_numbers<[1], [1], [0], [0], [0, 0, 1, 0], [], []>} : vector<4x256xbf16>, vector<256x256xbf16>, vector<4x256xf32> -> vector<4x256xf32>
    %c0_218 = arith.constant 0 : index
    %c0_219 = arith.constant 0 : index
    %447 = vector.load %arg12[%c0_218, %c0_219] : memref<8x4xbf16, #tpu.memory_space<vmem>>, vector<8x4xbf16>
    %448 = arith.truncf %446 : vector<4x256xf32> to vector<4x256xbf16>
    %cst_220 = arith.constant dense<0.000000e+00> : vector<8x256xf32>
    %449 = tpu.matmul %447, %448, %cst_220 {dimension_numbers = #tpu.dot_dimension_numbers<[1], [0], [0], [1], [0, 0, 1, 1], [], []>} : vector<8x4xbf16>, vector<4x256xbf16>, vector<8x256xf32> -> vector<8x256xf32>
    %c0_221 = arith.constant 0 : index
    %c0_222 = arith.constant 0 : index
    %450 = vector.load %arg13[%c0_221, %c0_222] : memref<8x1xf32, #tpu.memory_space<vmem>>, vector<8x1xf32>
    %451 = vector.broadcast %450 : vector<8x1xf32> to vector<8x256xf32>
    %452 = arith.addf %449, %451 : vector<8x256xf32>
    %cst_223 = arith.constant 1.000000e+00 : f32
    %453 = vector.broadcast %cst_223 : f32 to vector<8x256xf32>
    %454 = arith.mulf %453, %452 : vector<8x256xf32>
    %455 = arith.addf %407, %454 : vector<8x256xf32>
    %c2_224 = arith.constant 2 : index
    %c0_225 = arith.constant 0 : index
    %c0_226 = arith.constant 0 : index
    %c0_227 = arith.constant 0 : index
    %456 = vector.load %arg6[%c2_224, %c0_225, %c0_226, %c0_227] : memref<4x5x8x72xbf16, #tpu.memory_space<vmem>>, vector<1x1x8x72xbf16>
    %457 = vector.shape_cast %456 : vector<1x1x8x72xbf16> to vector<8x72xbf16>
    %c2_228 = arith.constant 2 : index
    %c0_229 = arith.constant 0 : index
    %c0_230 = arith.constant 0 : index
    %c0_231 = arith.constant 0 : index
    %458 = vector.load %arg7[%c2_228, %c0_229, %c0_230, %c0_231] : memref<4x5x8x1xf32, #tpu.memory_space<vmem>>, vector<1x1x8x1xf32>
    %459 = vector.shape_cast %458 : vector<1x1x8x1xf32> to vector<8x1xf32>
    %c17_i32_232 = arith.constant 17 : i32
    %460 = tpu.dynamic_rotate %455 by %c17_i32_232 dim 1 : vector<8x256xf32>, i32 -> vector<8x256xf32>
    %461 = vector.broadcast %1 : vector<1x256xf32> to vector<8x256xf32>
    %462 = arith.mulf %460, %461 : vector<8x256xf32>
    %c16_i32_233 = arith.constant 16 : i32
    %463 = tpu.dynamic_rotate %455 by %c16_i32_233 dim 1 : vector<8x256xf32>, i32 -> vector<8x256xf32>
    %464 = vector.broadcast %2 : vector<1x256xf32> to vector<8x256xf32>
    %465 = arith.mulf %463, %464 : vector<8x256xf32>
    %c15_i32_234 = arith.constant 15 : i32
    %466 = tpu.dynamic_rotate %455 by %c15_i32_234 dim 1 : vector<8x256xf32>, i32 -> vector<8x256xf32>
    %467 = vector.broadcast %3 : vector<1x256xf32> to vector<8x256xf32>
    %468 = arith.mulf %466, %467 : vector<8x256xf32>
    %c1_i32_235 = arith.constant 1 : i32
    %469 = tpu.dynamic_rotate %455 by %c1_i32_235 dim 1 : vector<8x256xf32>, i32 -> vector<8x256xf32>
    %470 = vector.broadcast %4 : vector<1x256xf32> to vector<8x256xf32>
    %471 = arith.mulf %469, %470 : vector<8x256xf32>
    %c255_i32_236 = arith.constant 255 : i32
    %472 = tpu.dynamic_rotate %455 by %c255_i32_236 dim 1 : vector<8x256xf32>, i32 -> vector<8x256xf32>
    %473 = vector.broadcast %5 : vector<1x256xf32> to vector<8x256xf32>
    %474 = arith.mulf %472, %473 : vector<8x256xf32>
    %c241_i32_237 = arith.constant 241 : i32
    %475 = tpu.dynamic_rotate %455 by %c241_i32_237 dim 1 : vector<8x256xf32>, i32 -> vector<8x256xf32>
    %476 = vector.broadcast %6 : vector<1x256xf32> to vector<8x256xf32>
    %477 = arith.mulf %475, %476 : vector<8x256xf32>
    %c240_i32_238 = arith.constant 240 : i32
    %478 = tpu.dynamic_rotate %455 by %c240_i32_238 dim 1 : vector<8x256xf32>, i32 -> vector<8x256xf32>
    %479 = vector.broadcast %7 : vector<1x256xf32> to vector<8x256xf32>
    %480 = arith.mulf %478, %479 : vector<8x256xf32>
    %c239_i32_239 = arith.constant 239 : i32
    %481 = tpu.dynamic_rotate %455 by %c239_i32_239 dim 1 : vector<8x256xf32>, i32 -> vector<8x256xf32>
    %482 = vector.broadcast %8 : vector<1x256xf32> to vector<8x256xf32>
    %483 = arith.mulf %481, %482 : vector<8x256xf32>
    %484 = tpu.concatenate %462, %465, %468, %471, %455, %474, %477, %480, %483 in 0 : vector<8x256xf32>, vector<8x256xf32>, vector<8x256xf32>, vector<8x256xf32>, vector<8x256xf32>, vector<8x256xf32>, vector<8x256xf32>, vector<8x256xf32>, vector<8x256xf32> -> vector<72x256xf32>
    %485 = arith.truncf %484 : vector<72x256xf32> to vector<72x256xbf16>
    %cst_240 = arith.constant dense<0.000000e+00> : vector<8x256xf32>
    %486 = tpu.matmul %457, %485, %cst_240 {dimension_numbers = #tpu.dot_dimension_numbers<[1], [0], [0], [1], [0, 0, 1, 1], [], []>} : vector<8x72xbf16>, vector<72x256xbf16>, vector<8x256xf32> -> vector<8x256xf32>
    %487 = vector.broadcast %459 : vector<8x1xf32> to vector<8x256xf32>
    %488 = arith.addf %486, %487 : vector<8x256xf32>
    %cst_241 = arith.constant 0.000000e+00 : f32
    %489 = vector.broadcast %cst_241 : f32 to vector<8x256xf32>
    %490 = arith.maximumf %488, %489 : vector<8x256xf32>
    %c2_242 = arith.constant 2 : index
    %c1_243 = arith.constant 1 : index
    %c0_244 = arith.constant 0 : index
    %c0_245 = arith.constant 0 : index
    %491 = vector.load %arg6[%c2_242, %c1_243, %c0_244, %c0_245] : memref<4x5x8x72xbf16, #tpu.memory_space<vmem>>, vector<1x1x8x72xbf16>
    %492 = vector.shape_cast %491 : vector<1x1x8x72xbf16> to vector<8x72xbf16>
    %c2_246 = arith.constant 2 : index
    %c1_247 = arith.constant 1 : index
    %c0_248 = arith.constant 0 : index
    %c0_249 = arith.constant 0 : index
    %493 = vector.load %arg7[%c2_246, %c1_247, %c0_248, %c0_249] : memref<4x5x8x1xf32, #tpu.memory_space<vmem>>, vector<1x1x8x1xf32>
    %494 = vector.shape_cast %493 : vector<1x1x8x1xf32> to vector<8x1xf32>
    %c17_i32_250 = arith.constant 17 : i32
    %495 = tpu.dynamic_rotate %490 by %c17_i32_250 dim 1 : vector<8x256xf32>, i32 -> vector<8x256xf32>
    %496 = vector.broadcast %1 : vector<1x256xf32> to vector<8x256xf32>
    %497 = arith.mulf %495, %496 : vector<8x256xf32>
    %c16_i32_251 = arith.constant 16 : i32
    %498 = tpu.dynamic_rotate %490 by %c16_i32_251 dim 1 : vector<8x256xf32>, i32 -> vector<8x256xf32>
    %499 = vector.broadcast %2 : vector<1x256xf32> to vector<8x256xf32>
    %500 = arith.mulf %498, %499 : vector<8x256xf32>
    %c15_i32_252 = arith.constant 15 : i32
    %501 = tpu.dynamic_rotate %490 by %c15_i32_252 dim 1 : vector<8x256xf32>, i32 -> vector<8x256xf32>
    %502 = vector.broadcast %3 : vector<1x256xf32> to vector<8x256xf32>
    %503 = arith.mulf %501, %502 : vector<8x256xf32>
    %c1_i32_253 = arith.constant 1 : i32
    %504 = tpu.dynamic_rotate %490 by %c1_i32_253 dim 1 : vector<8x256xf32>, i32 -> vector<8x256xf32>
    %505 = vector.broadcast %4 : vector<1x256xf32> to vector<8x256xf32>
    %506 = arith.mulf %504, %505 : vector<8x256xf32>
    %c255_i32_254 = arith.constant 255 : i32
    %507 = tpu.dynamic_rotate %490 by %c255_i32_254 dim 1 : vector<8x256xf32>, i32 -> vector<8x256xf32>
    %508 = vector.broadcast %5 : vector<1x256xf32> to vector<8x256xf32>
    %509 = arith.mulf %507, %508 : vector<8x256xf32>
    %c241_i32_255 = arith.constant 241 : i32
    %510 = tpu.dynamic_rotate %490 by %c241_i32_255 dim 1 : vector<8x256xf32>, i32 -> vector<8x256xf32>
    %511 = vector.broadcast %6 : vector<1x256xf32> to vector<8x256xf32>
    %512 = arith.mulf %510, %511 : vector<8x256xf32>
    %c240_i32_256 = arith.constant 240 : i32
    %513 = tpu.dynamic_rotate %490 by %c240_i32_256 dim 1 : vector<8x256xf32>, i32 -> vector<8x256xf32>
    %514 = vector.broadcast %7 : vector<1x256xf32> to vector<8x256xf32>
    %515 = arith.mulf %513, %514 : vector<8x256xf32>
    %c239_i32_257 = arith.constant 239 : i32
    %516 = tpu.dynamic_rotate %490 by %c239_i32_257 dim 1 : vector<8x256xf32>, i32 -> vector<8x256xf32>
    %517 = vector.broadcast %8 : vector<1x256xf32> to vector<8x256xf32>
    %518 = arith.mulf %516, %517 : vector<8x256xf32>
    %519 = tpu.concatenate %497, %500, %503, %506, %490, %509, %512, %515, %518 in 0 : vector<8x256xf32>, vector<8x256xf32>, vector<8x256xf32>, vector<8x256xf32>, vector<8x256xf32>, vector<8x256xf32>, vector<8x256xf32>, vector<8x256xf32>, vector<8x256xf32> -> vector<72x256xf32>
    %520 = arith.truncf %519 : vector<72x256xf32> to vector<72x256xbf16>
    %cst_258 = arith.constant dense<0.000000e+00> : vector<8x256xf32>
    %521 = tpu.matmul %492, %520, %cst_258 {dimension_numbers = #tpu.dot_dimension_numbers<[1], [0], [0], [1], [0, 0, 1, 1], [], []>} : vector<8x72xbf16>, vector<72x256xbf16>, vector<8x256xf32> -> vector<8x256xf32>
    %522 = vector.broadcast %494 : vector<8x1xf32> to vector<8x256xf32>
    %523 = arith.addf %521, %522 : vector<8x256xf32>
    %cst_259 = arith.constant 1.000000e+00 : f32
    %524 = vector.broadcast %cst_259 : f32 to vector<8x256xf32>
    %525 = arith.mulf %524, %523 : vector<8x256xf32>
    %526 = arith.addf %455, %525 : vector<8x256xf32>
    %c2_260 = arith.constant 2 : index
    %c2_261 = arith.constant 2 : index
    %c0_262 = arith.constant 0 : index
    %c0_263 = arith.constant 0 : index
    %527 = vector.load %arg6[%c2_260, %c2_261, %c0_262, %c0_263] : memref<4x5x8x72xbf16, #tpu.memory_space<vmem>>, vector<1x1x8x72xbf16>
    %528 = vector.shape_cast %527 : vector<1x1x8x72xbf16> to vector<8x72xbf16>
    %c2_264 = arith.constant 2 : index
    %c2_265 = arith.constant 2 : index
    %c0_266 = arith.constant 0 : index
    %c0_267 = arith.constant 0 : index
    %529 = vector.load %arg7[%c2_264, %c2_265, %c0_266, %c0_267] : memref<4x5x8x1xf32, #tpu.memory_space<vmem>>, vector<1x1x8x1xf32>
    %530 = vector.shape_cast %529 : vector<1x1x8x1xf32> to vector<8x1xf32>
    %c17_i32_268 = arith.constant 17 : i32
    %531 = tpu.dynamic_rotate %526 by %c17_i32_268 dim 1 : vector<8x256xf32>, i32 -> vector<8x256xf32>
    %532 = vector.broadcast %1 : vector<1x256xf32> to vector<8x256xf32>
    %533 = arith.mulf %531, %532 : vector<8x256xf32>
    %c16_i32_269 = arith.constant 16 : i32
    %534 = tpu.dynamic_rotate %526 by %c16_i32_269 dim 1 : vector<8x256xf32>, i32 -> vector<8x256xf32>
    %535 = vector.broadcast %2 : vector<1x256xf32> to vector<8x256xf32>
    %536 = arith.mulf %534, %535 : vector<8x256xf32>
    %c15_i32_270 = arith.constant 15 : i32
    %537 = tpu.dynamic_rotate %526 by %c15_i32_270 dim 1 : vector<8x256xf32>, i32 -> vector<8x256xf32>
    %538 = vector.broadcast %3 : vector<1x256xf32> to vector<8x256xf32>
    %539 = arith.mulf %537, %538 : vector<8x256xf32>
    %c1_i32_271 = arith.constant 1 : i32
    %540 = tpu.dynamic_rotate %526 by %c1_i32_271 dim 1 : vector<8x256xf32>, i32 -> vector<8x256xf32>
    %541 = vector.broadcast %4 : vector<1x256xf32> to vector<8x256xf32>
    %542 = arith.mulf %540, %541 : vector<8x256xf32>
    %c255_i32_272 = arith.constant 255 : i32
    %543 = tpu.dynamic_rotate %526 by %c255_i32_272 dim 1 : vector<8x256xf32>, i32 -> vector<8x256xf32>
    %544 = vector.broadcast %5 : vector<1x256xf32> to vector<8x256xf32>
    %545 = arith.mulf %543, %544 : vector<8x256xf32>
    %c241_i32_273 = arith.constant 241 : i32
    %546 = tpu.dynamic_rotate %526 by %c241_i32_273 dim 1 : vector<8x256xf32>, i32 -> vector<8x256xf32>
    %547 = vector.broadcast %6 : vector<1x256xf32> to vector<8x256xf32>
    %548 = arith.mulf %546, %547 : vector<8x256xf32>
    %c240_i32_274 = arith.constant 240 : i32
    %549 = tpu.dynamic_rotate %526 by %c240_i32_274 dim 1 : vector<8x256xf32>, i32 -> vector<8x256xf32>
    %550 = vector.broadcast %7 : vector<1x256xf32> to vector<8x256xf32>
    %551 = arith.mulf %549, %550 : vector<8x256xf32>
    %c239_i32_275 = arith.constant 239 : i32
    %552 = tpu.dynamic_rotate %526 by %c239_i32_275 dim 1 : vector<8x256xf32>, i32 -> vector<8x256xf32>
    %553 = vector.broadcast %8 : vector<1x256xf32> to vector<8x256xf32>
    %554 = arith.mulf %552, %553 : vector<8x256xf32>
    %555 = tpu.concatenate %533, %536, %539, %542, %526, %545, %548, %551, %554 in 0 : vector<8x256xf32>, vector<8x256xf32>, vector<8x256xf32>, vector<8x256xf32>, vector<8x256xf32>, vector<8x256xf32>, vector<8x256xf32>, vector<8x256xf32>, vector<8x256xf32> -> vector<72x256xf32>
    %556 = arith.truncf %555 : vector<72x256xf32> to vector<72x256xbf16>
    %cst_276 = arith.constant dense<0.000000e+00> : vector<8x256xf32>
    %557 = tpu.matmul %528, %556, %cst_276 {dimension_numbers = #tpu.dot_dimension_numbers<[1], [0], [0], [1], [0, 0, 1, 1], [], []>} : vector<8x72xbf16>, vector<72x256xbf16>, vector<8x256xf32> -> vector<8x256xf32>
    %558 = vector.broadcast %530 : vector<8x1xf32> to vector<8x256xf32>
    %559 = arith.addf %557, %558 : vector<8x256xf32>
    %cst_277 = arith.constant 0.000000e+00 : f32
    %560 = vector.broadcast %cst_277 : f32 to vector<8x256xf32>
    %561 = arith.maximumf %559, %560 : vector<8x256xf32>
    %c2_278 = arith.constant 2 : index
    %c3_279 = arith.constant 3 : index
    %c0_280 = arith.constant 0 : index
    %c0_281 = arith.constant 0 : index
    %562 = vector.load %arg6[%c2_278, %c3_279, %c0_280, %c0_281] : memref<4x5x8x72xbf16, #tpu.memory_space<vmem>>, vector<1x1x8x72xbf16>
    %563 = vector.shape_cast %562 : vector<1x1x8x72xbf16> to vector<8x72xbf16>
    %c2_282 = arith.constant 2 : index
    %c3_283 = arith.constant 3 : index
    %c0_284 = arith.constant 0 : index
    %c0_285 = arith.constant 0 : index
    %564 = vector.load %arg7[%c2_282, %c3_283, %c0_284, %c0_285] : memref<4x5x8x1xf32, #tpu.memory_space<vmem>>, vector<1x1x8x1xf32>
    %565 = vector.shape_cast %564 : vector<1x1x8x1xf32> to vector<8x1xf32>
    %c17_i32_286 = arith.constant 17 : i32
    %566 = tpu.dynamic_rotate %561 by %c17_i32_286 dim 1 : vector<8x256xf32>, i32 -> vector<8x256xf32>
    %567 = vector.broadcast %1 : vector<1x256xf32> to vector<8x256xf32>
    %568 = arith.mulf %566, %567 : vector<8x256xf32>
    %c16_i32_287 = arith.constant 16 : i32
    %569 = tpu.dynamic_rotate %561 by %c16_i32_287 dim 1 : vector<8x256xf32>, i32 -> vector<8x256xf32>
    %570 = vector.broadcast %2 : vector<1x256xf32> to vector<8x256xf32>
    %571 = arith.mulf %569, %570 : vector<8x256xf32>
    %c15_i32_288 = arith.constant 15 : i32
    %572 = tpu.dynamic_rotate %561 by %c15_i32_288 dim 1 : vector<8x256xf32>, i32 -> vector<8x256xf32>
    %573 = vector.broadcast %3 : vector<1x256xf32> to vector<8x256xf32>
    %574 = arith.mulf %572, %573 : vector<8x256xf32>
    %c1_i32_289 = arith.constant 1 : i32
    %575 = tpu.dynamic_rotate %561 by %c1_i32_289 dim 1 : vector<8x256xf32>, i32 -> vector<8x256xf32>
    %576 = vector.broadcast %4 : vector<1x256xf32> to vector<8x256xf32>
    %577 = arith.mulf %575, %576 : vector<8x256xf32>
    %c255_i32_290 = arith.constant 255 : i32
    %578 = tpu.dynamic_rotate %561 by %c255_i32_290 dim 1 : vector<8x256xf32>, i32 -> vector<8x256xf32>
    %579 = vector.broadcast %5 : vector<1x256xf32> to vector<8x256xf32>
    %580 = arith.mulf %578, %579 : vector<8x256xf32>
    %c241_i32_291 = arith.constant 241 : i32
    %581 = tpu.dynamic_rotate %561 by %c241_i32_291 dim 1 : vector<8x256xf32>, i32 -> vector<8x256xf32>
    %582 = vector.broadcast %6 : vector<1x256xf32> to vector<8x256xf32>
    %583 = arith.mulf %581, %582 : vector<8x256xf32>
    %c240_i32_292 = arith.constant 240 : i32
    %584 = tpu.dynamic_rotate %561 by %c240_i32_292 dim 1 : vector<8x256xf32>, i32 -> vector<8x256xf32>
    %585 = vector.broadcast %7 : vector<1x256xf32> to vector<8x256xf32>
    %586 = arith.mulf %584, %585 : vector<8x256xf32>
    %c239_i32_293 = arith.constant 239 : i32
    %587 = tpu.dynamic_rotate %561 by %c239_i32_293 dim 1 : vector<8x256xf32>, i32 -> vector<8x256xf32>
    %588 = vector.broadcast %8 : vector<1x256xf32> to vector<8x256xf32>
    %589 = arith.mulf %587, %588 : vector<8x256xf32>
    %590 = tpu.concatenate %568, %571, %574, %577, %561, %580, %583, %586, %589 in 0 : vector<8x256xf32>, vector<8x256xf32>, vector<8x256xf32>, vector<8x256xf32>, vector<8x256xf32>, vector<8x256xf32>, vector<8x256xf32>, vector<8x256xf32>, vector<8x256xf32> -> vector<72x256xf32>
    %591 = arith.truncf %590 : vector<72x256xf32> to vector<72x256xbf16>
    %cst_294 = arith.constant dense<0.000000e+00> : vector<8x256xf32>
    %592 = tpu.matmul %563, %591, %cst_294 {dimension_numbers = #tpu.dot_dimension_numbers<[1], [0], [0], [1], [0, 0, 1, 1], [], []>} : vector<8x72xbf16>, vector<72x256xbf16>, vector<8x256xf32> -> vector<8x256xf32>
    %593 = vector.broadcast %565 : vector<8x1xf32> to vector<8x256xf32>
    %594 = arith.addf %592, %593 : vector<8x256xf32>
    %cst_295 = arith.constant 1.000000e+00 : f32
    %595 = vector.broadcast %cst_295 : f32 to vector<8x256xf32>
    %596 = arith.mulf %595, %594 : vector<8x256xf32>
    %597 = arith.addf %526, %596 : vector<8x256xf32>
    %c2_296 = arith.constant 2 : index
    %c4_297 = arith.constant 4 : index
    %c0_298 = arith.constant 0 : index
    %c0_299 = arith.constant 0 : index
    %598 = vector.load %arg6[%c2_296, %c4_297, %c0_298, %c0_299] : memref<4x5x8x72xbf16, #tpu.memory_space<vmem>>, vector<1x1x8x72xbf16>
    %599 = vector.shape_cast %598 : vector<1x1x8x72xbf16> to vector<8x72xbf16>
    %c2_300 = arith.constant 2 : index
    %c4_301 = arith.constant 4 : index
    %c0_302 = arith.constant 0 : index
    %c0_303 = arith.constant 0 : index
    %600 = vector.load %arg7[%c2_300, %c4_301, %c0_302, %c0_303] : memref<4x5x8x1xf32, #tpu.memory_space<vmem>>, vector<1x1x8x1xf32>
    %601 = vector.shape_cast %600 : vector<1x1x8x1xf32> to vector<8x1xf32>
    %c17_i32_304 = arith.constant 17 : i32
    %602 = tpu.dynamic_rotate %597 by %c17_i32_304 dim 1 : vector<8x256xf32>, i32 -> vector<8x256xf32>
    %603 = vector.broadcast %1 : vector<1x256xf32> to vector<8x256xf32>
    %604 = arith.mulf %602, %603 : vector<8x256xf32>
    %c16_i32_305 = arith.constant 16 : i32
    %605 = tpu.dynamic_rotate %597 by %c16_i32_305 dim 1 : vector<8x256xf32>, i32 -> vector<8x256xf32>
    %606 = vector.broadcast %2 : vector<1x256xf32> to vector<8x256xf32>
    %607 = arith.mulf %605, %606 : vector<8x256xf32>
    %c15_i32_306 = arith.constant 15 : i32
    %608 = tpu.dynamic_rotate %597 by %c15_i32_306 dim 1 : vector<8x256xf32>, i32 -> vector<8x256xf32>
    %609 = vector.broadcast %3 : vector<1x256xf32> to vector<8x256xf32>
    %610 = arith.mulf %608, %609 : vector<8x256xf32>
    %c1_i32_307 = arith.constant 1 : i32
    %611 = tpu.dynamic_rotate %597 by %c1_i32_307 dim 1 : vector<8x256xf32>, i32 -> vector<8x256xf32>
    %612 = vector.broadcast %4 : vector<1x256xf32> to vector<8x256xf32>
    %613 = arith.mulf %611, %612 : vector<8x256xf32>
    %c255_i32_308 = arith.constant 255 : i32
    %614 = tpu.dynamic_rotate %597 by %c255_i32_308 dim 1 : vector<8x256xf32>, i32 -> vector<8x256xf32>
    %615 = vector.broadcast %5 : vector<1x256xf32> to vector<8x256xf32>
    %616 = arith.mulf %614, %615 : vector<8x256xf32>
    %c241_i32_309 = arith.constant 241 : i32
    %617 = tpu.dynamic_rotate %597 by %c241_i32_309 dim 1 : vector<8x256xf32>, i32 -> vector<8x256xf32>
    %618 = vector.broadcast %6 : vector<1x256xf32> to vector<8x256xf32>
    %619 = arith.mulf %617, %618 : vector<8x256xf32>
    %c240_i32_310 = arith.constant 240 : i32
    %620 = tpu.dynamic_rotate %597 by %c240_i32_310 dim 1 : vector<8x256xf32>, i32 -> vector<8x256xf32>
    %621 = vector.broadcast %7 : vector<1x256xf32> to vector<8x256xf32>
    %622 = arith.mulf %620, %621 : vector<8x256xf32>
    %c239_i32_311 = arith.constant 239 : i32
    %623 = tpu.dynamic_rotate %597 by %c239_i32_311 dim 1 : vector<8x256xf32>, i32 -> vector<8x256xf32>
    %624 = vector.broadcast %8 : vector<1x256xf32> to vector<8x256xf32>
    %625 = arith.mulf %623, %624 : vector<8x256xf32>
    %626 = tpu.concatenate %604, %607, %610, %613, %597, %616, %619, %622, %625 in 0 : vector<8x256xf32>, vector<8x256xf32>, vector<8x256xf32>, vector<8x256xf32>, vector<8x256xf32>, vector<8x256xf32>, vector<8x256xf32>, vector<8x256xf32>, vector<8x256xf32> -> vector<72x256xf32>
    %627 = arith.truncf %626 : vector<72x256xf32> to vector<72x256xbf16>
    %cst_312 = arith.constant dense<0.000000e+00> : vector<8x256xf32>
    %628 = tpu.matmul %599, %627, %cst_312 {dimension_numbers = #tpu.dot_dimension_numbers<[1], [0], [0], [1], [0, 0, 1, 1], [], []>} : vector<8x72xbf16>, vector<72x256xbf16>, vector<8x256xf32> -> vector<8x256xf32>
    %629 = vector.broadcast %601 : vector<8x1xf32> to vector<8x256xf32>
    %630 = arith.addf %628, %629 : vector<8x256xf32>
    %631 = arith.addf %455, %630 : vector<8x256xf32>
    %c0_313 = arith.constant 0 : index
    %c0_314 = arith.constant 0 : index
    %c0_315 = arith.constant 0 : index
    %c0_316 = arith.constant 0 : index
    %632 = vector.load %arg14[%c0_313, %c0_314, %c0_315, %c0_316] : memref<1x2x8x8xbf16, #tpu.memory_space<vmem>>, vector<1x1x8x8xbf16>
    %633 = vector.shape_cast %632 : vector<1x1x8x8xbf16> to vector<8x8xbf16>
    %634 = arith.truncf %631 : vector<8x256xf32> to vector<8x256xbf16>
    %cst_317 = arith.constant dense<0.000000e+00> : vector<8x256xf32>
    %635 = tpu.matmul %633, %634, %cst_317 {dimension_numbers = #tpu.dot_dimension_numbers<[1], [0], [0], [1], [0, 0, 1, 1], [], []>} : vector<8x8xbf16>, vector<8x256xbf16>, vector<8x256xf32> -> vector<8x256xf32>
    %c0_318 = arith.constant 0 : index
    %c1_319 = arith.constant 1 : index
    %c0_320 = arith.constant 0 : index
    %c0_321 = arith.constant 0 : index
    %636 = vector.load %arg14[%c0_318, %c1_319, %c0_320, %c0_321] : memref<1x2x8x8xbf16, #tpu.memory_space<vmem>>, vector<1x1x8x8xbf16>
    %637 = vector.shape_cast %636 : vector<1x1x8x8xbf16> to vector<8x8xbf16>
    %638 = arith.truncf %455 : vector<8x256xf32> to vector<8x256xbf16>
    %cst_322 = arith.constant dense<0.000000e+00> : vector<8x256xf32>
    %639 = tpu.matmul %637, %638, %cst_322 {dimension_numbers = #tpu.dot_dimension_numbers<[1], [0], [0], [1], [0, 0, 1, 1], [], []>} : vector<8x8xbf16>, vector<8x256xbf16>, vector<8x256xf32> -> vector<8x256xf32>
    %640 = arith.addf %635, %639 : vector<8x256xf32>
    %c0_323 = arith.constant 0 : index
    %c0_324 = arith.constant 0 : index
    %c0_325 = arith.constant 0 : index
    %641 = vector.load %arg15[%c0_323, %c0_324, %c0_325] : memref<1x8x1xf32, #tpu.memory_space<vmem>>, vector<1x8x1xf32>
    %642 = vector.shape_cast %641 : vector<1x8x1xf32> to vector<8x1xf32>
    %643 = vector.broadcast %642 : vector<8x1xf32> to vector<8x256xf32>
    %644 = arith.addf %640, %643 : vector<8x256xf32>
    %c3_326 = arith.constant 3 : index
    %c0_327 = arith.constant 0 : index
    %c0_328 = arith.constant 0 : index
    %c0_329 = arith.constant 0 : index
    %645 = vector.load %arg6[%c3_326, %c0_327, %c0_328, %c0_329] : memref<4x5x8x72xbf16, #tpu.memory_space<vmem>>, vector<1x1x8x72xbf16>
    %646 = vector.shape_cast %645 : vector<1x1x8x72xbf16> to vector<8x72xbf16>
    %c3_330 = arith.constant 3 : index
    %c0_331 = arith.constant 0 : index
    %c0_332 = arith.constant 0 : index
    %c0_333 = arith.constant 0 : index
    %647 = vector.load %arg7[%c3_330, %c0_331, %c0_332, %c0_333] : memref<4x5x8x1xf32, #tpu.memory_space<vmem>>, vector<1x1x8x1xf32>
    %648 = vector.shape_cast %647 : vector<1x1x8x1xf32> to vector<8x1xf32>
    %c17_i32_334 = arith.constant 17 : i32
    %649 = tpu.dynamic_rotate %644 by %c17_i32_334 dim 1 : vector<8x256xf32>, i32 -> vector<8x256xf32>
    %650 = vector.broadcast %1 : vector<1x256xf32> to vector<8x256xf32>
    %651 = arith.mulf %649, %650 : vector<8x256xf32>
    %c16_i32_335 = arith.constant 16 : i32
    %652 = tpu.dynamic_rotate %644 by %c16_i32_335 dim 1 : vector<8x256xf32>, i32 -> vector<8x256xf32>
    %653 = vector.broadcast %2 : vector<1x256xf32> to vector<8x256xf32>
    %654 = arith.mulf %652, %653 : vector<8x256xf32>
    %c15_i32_336 = arith.constant 15 : i32
    %655 = tpu.dynamic_rotate %644 by %c15_i32_336 dim 1 : vector<8x256xf32>, i32 -> vector<8x256xf32>
    %656 = vector.broadcast %3 : vector<1x256xf32> to vector<8x256xf32>
    %657 = arith.mulf %655, %656 : vector<8x256xf32>
    %c1_i32_337 = arith.constant 1 : i32
    %658 = tpu.dynamic_rotate %644 by %c1_i32_337 dim 1 : vector<8x256xf32>, i32 -> vector<8x256xf32>
    %659 = vector.broadcast %4 : vector<1x256xf32> to vector<8x256xf32>
    %660 = arith.mulf %658, %659 : vector<8x256xf32>
    %c255_i32_338 = arith.constant 255 : i32
    %661 = tpu.dynamic_rotate %644 by %c255_i32_338 dim 1 : vector<8x256xf32>, i32 -> vector<8x256xf32>
    %662 = vector.broadcast %5 : vector<1x256xf32> to vector<8x256xf32>
    %663 = arith.mulf %661, %662 : vector<8x256xf32>
    %c241_i32_339 = arith.constant 241 : i32
    %664 = tpu.dynamic_rotate %644 by %c241_i32_339 dim 1 : vector<8x256xf32>, i32 -> vector<8x256xf32>
    %665 = vector.broadcast %6 : vector<1x256xf32> to vector<8x256xf32>
    %666 = arith.mulf %664, %665 : vector<8x256xf32>
    %c240_i32_340 = arith.constant 240 : i32
    %667 = tpu.dynamic_rotate %644 by %c240_i32_340 dim 1 : vector<8x256xf32>, i32 -> vector<8x256xf32>
    %668 = vector.broadcast %7 : vector<1x256xf32> to vector<8x256xf32>
    %669 = arith.mulf %667, %668 : vector<8x256xf32>
    %c239_i32_341 = arith.constant 239 : i32
    %670 = tpu.dynamic_rotate %644 by %c239_i32_341 dim 1 : vector<8x256xf32>, i32 -> vector<8x256xf32>
    %671 = vector.broadcast %8 : vector<1x256xf32> to vector<8x256xf32>
    %672 = arith.mulf %670, %671 : vector<8x256xf32>
    %673 = tpu.concatenate %651, %654, %657, %660, %644, %663, %666, %669, %672 in 0 : vector<8x256xf32>, vector<8x256xf32>, vector<8x256xf32>, vector<8x256xf32>, vector<8x256xf32>, vector<8x256xf32>, vector<8x256xf32>, vector<8x256xf32>, vector<8x256xf32> -> vector<72x256xf32>
    %674 = arith.truncf %673 : vector<72x256xf32> to vector<72x256xbf16>
    %cst_342 = arith.constant dense<0.000000e+00> : vector<8x256xf32>
    %675 = tpu.matmul %646, %674, %cst_342 {dimension_numbers = #tpu.dot_dimension_numbers<[1], [0], [0], [1], [0, 0, 1, 1], [], []>} : vector<8x72xbf16>, vector<72x256xbf16>, vector<8x256xf32> -> vector<8x256xf32>
    %676 = vector.broadcast %648 : vector<8x1xf32> to vector<8x256xf32>
    %677 = arith.addf %675, %676 : vector<8x256xf32>
    %cst_343 = arith.constant 0.000000e+00 : f32
    %678 = vector.broadcast %cst_343 : f32 to vector<8x256xf32>
    %679 = arith.maximumf %677, %678 : vector<8x256xf32>
    %c3_344 = arith.constant 3 : index
    %c1_345 = arith.constant 1 : index
    %c0_346 = arith.constant 0 : index
    %c0_347 = arith.constant 0 : index
    %680 = vector.load %arg6[%c3_344, %c1_345, %c0_346, %c0_347] : memref<4x5x8x72xbf16, #tpu.memory_space<vmem>>, vector<1x1x8x72xbf16>
    %681 = vector.shape_cast %680 : vector<1x1x8x72xbf16> to vector<8x72xbf16>
    %c3_348 = arith.constant 3 : index
    %c1_349 = arith.constant 1 : index
    %c0_350 = arith.constant 0 : index
    %c0_351 = arith.constant 0 : index
    %682 = vector.load %arg7[%c3_348, %c1_349, %c0_350, %c0_351] : memref<4x5x8x1xf32, #tpu.memory_space<vmem>>, vector<1x1x8x1xf32>
    %683 = vector.shape_cast %682 : vector<1x1x8x1xf32> to vector<8x1xf32>
    %c17_i32_352 = arith.constant 17 : i32
    %684 = tpu.dynamic_rotate %679 by %c17_i32_352 dim 1 : vector<8x256xf32>, i32 -> vector<8x256xf32>
    %685 = vector.broadcast %1 : vector<1x256xf32> to vector<8x256xf32>
    %686 = arith.mulf %684, %685 : vector<8x256xf32>
    %c16_i32_353 = arith.constant 16 : i32
    %687 = tpu.dynamic_rotate %679 by %c16_i32_353 dim 1 : vector<8x256xf32>, i32 -> vector<8x256xf32>
    %688 = vector.broadcast %2 : vector<1x256xf32> to vector<8x256xf32>
    %689 = arith.mulf %687, %688 : vector<8x256xf32>
    %c15_i32_354 = arith.constant 15 : i32
    %690 = tpu.dynamic_rotate %679 by %c15_i32_354 dim 1 : vector<8x256xf32>, i32 -> vector<8x256xf32>
    %691 = vector.broadcast %3 : vector<1x256xf32> to vector<8x256xf32>
    %692 = arith.mulf %690, %691 : vector<8x256xf32>
    %c1_i32_355 = arith.constant 1 : i32
    %693 = tpu.dynamic_rotate %679 by %c1_i32_355 dim 1 : vector<8x256xf32>, i32 -> vector<8x256xf32>
    %694 = vector.broadcast %4 : vector<1x256xf32> to vector<8x256xf32>
    %695 = arith.mulf %693, %694 : vector<8x256xf32>
    %c255_i32_356 = arith.constant 255 : i32
    %696 = tpu.dynamic_rotate %679 by %c255_i32_356 dim 1 : vector<8x256xf32>, i32 -> vector<8x256xf32>
    %697 = vector.broadcast %5 : vector<1x256xf32> to vector<8x256xf32>
    %698 = arith.mulf %696, %697 : vector<8x256xf32>
    %c241_i32_357 = arith.constant 241 : i32
    %699 = tpu.dynamic_rotate %679 by %c241_i32_357 dim 1 : vector<8x256xf32>, i32 -> vector<8x256xf32>
    %700 = vector.broadcast %6 : vector<1x256xf32> to vector<8x256xf32>
    %701 = arith.mulf %699, %700 : vector<8x256xf32>
    %c240_i32_358 = arith.constant 240 : i32
    %702 = tpu.dynamic_rotate %679 by %c240_i32_358 dim 1 : vector<8x256xf32>, i32 -> vector<8x256xf32>
    %703 = vector.broadcast %7 : vector<1x256xf32> to vector<8x256xf32>
    %704 = arith.mulf %702, %703 : vector<8x256xf32>
    %c239_i32_359 = arith.constant 239 : i32
    %705 = tpu.dynamic_rotate %679 by %c239_i32_359 dim 1 : vector<8x256xf32>, i32 -> vector<8x256xf32>
    %706 = vector.broadcast %8 : vector<1x256xf32> to vector<8x256xf32>
    %707 = arith.mulf %705, %706 : vector<8x256xf32>
    %708 = tpu.concatenate %686, %689, %692, %695, %679, %698, %701, %704, %707 in 0 : vector<8x256xf32>, vector<8x256xf32>, vector<8x256xf32>, vector<8x256xf32>, vector<8x256xf32>, vector<8x256xf32>, vector<8x256xf32>, vector<8x256xf32>, vector<8x256xf32> -> vector<72x256xf32>
    %709 = arith.truncf %708 : vector<72x256xf32> to vector<72x256xbf16>
    %cst_360 = arith.constant dense<0.000000e+00> : vector<8x256xf32>
    %710 = tpu.matmul %681, %709, %cst_360 {dimension_numbers = #tpu.dot_dimension_numbers<[1], [0], [0], [1], [0, 0, 1, 1], [], []>} : vector<8x72xbf16>, vector<72x256xbf16>, vector<8x256xf32> -> vector<8x256xf32>
    %711 = vector.broadcast %683 : vector<8x1xf32> to vector<8x256xf32>
    %712 = arith.addf %710, %711 : vector<8x256xf32>
    %cst_361 = arith.constant 1.000000e+00 : f32
    %713 = vector.broadcast %cst_361 : f32 to vector<8x256xf32>
    %714 = arith.mulf %713, %712 : vector<8x256xf32>
    %715 = arith.addf %644, %714 : vector<8x256xf32>
    %c3_362 = arith.constant 3 : index
    %c2_363 = arith.constant 2 : index
    %c0_364 = arith.constant 0 : index
    %c0_365 = arith.constant 0 : index
    %716 = vector.load %arg6[%c3_362, %c2_363, %c0_364, %c0_365] : memref<4x5x8x72xbf16, #tpu.memory_space<vmem>>, vector<1x1x8x72xbf16>
    %717 = vector.shape_cast %716 : vector<1x1x8x72xbf16> to vector<8x72xbf16>
    %c3_366 = arith.constant 3 : index
    %c2_367 = arith.constant 2 : index
    %c0_368 = arith.constant 0 : index
    %c0_369 = arith.constant 0 : index
    %718 = vector.load %arg7[%c3_366, %c2_367, %c0_368, %c0_369] : memref<4x5x8x1xf32, #tpu.memory_space<vmem>>, vector<1x1x8x1xf32>
    %719 = vector.shape_cast %718 : vector<1x1x8x1xf32> to vector<8x1xf32>
    %c17_i32_370 = arith.constant 17 : i32
    %720 = tpu.dynamic_rotate %715 by %c17_i32_370 dim 1 : vector<8x256xf32>, i32 -> vector<8x256xf32>
    %721 = vector.broadcast %1 : vector<1x256xf32> to vector<8x256xf32>
    %722 = arith.mulf %720, %721 : vector<8x256xf32>
    %c16_i32_371 = arith.constant 16 : i32
    %723 = tpu.dynamic_rotate %715 by %c16_i32_371 dim 1 : vector<8x256xf32>, i32 -> vector<8x256xf32>
    %724 = vector.broadcast %2 : vector<1x256xf32> to vector<8x256xf32>
    %725 = arith.mulf %723, %724 : vector<8x256xf32>
    %c15_i32_372 = arith.constant 15 : i32
    %726 = tpu.dynamic_rotate %715 by %c15_i32_372 dim 1 : vector<8x256xf32>, i32 -> vector<8x256xf32>
    %727 = vector.broadcast %3 : vector<1x256xf32> to vector<8x256xf32>
    %728 = arith.mulf %726, %727 : vector<8x256xf32>
    %c1_i32_373 = arith.constant 1 : i32
    %729 = tpu.dynamic_rotate %715 by %c1_i32_373 dim 1 : vector<8x256xf32>, i32 -> vector<8x256xf32>
    %730 = vector.broadcast %4 : vector<1x256xf32> to vector<8x256xf32>
    %731 = arith.mulf %729, %730 : vector<8x256xf32>
    %c255_i32_374 = arith.constant 255 : i32
    %732 = tpu.dynamic_rotate %715 by %c255_i32_374 dim 1 : vector<8x256xf32>, i32 -> vector<8x256xf32>
    %733 = vector.broadcast %5 : vector<1x256xf32> to vector<8x256xf32>
    %734 = arith.mulf %732, %733 : vector<8x256xf32>
    %c241_i32_375 = arith.constant 241 : i32
    %735 = tpu.dynamic_rotate %715 by %c241_i32_375 dim 1 : vector<8x256xf32>, i32 -> vector<8x256xf32>
    %736 = vector.broadcast %6 : vector<1x256xf32> to vector<8x256xf32>
    %737 = arith.mulf %735, %736 : vector<8x256xf32>
    %c240_i32_376 = arith.constant 240 : i32
    %738 = tpu.dynamic_rotate %715 by %c240_i32_376 dim 1 : vector<8x256xf32>, i32 -> vector<8x256xf32>
    %739 = vector.broadcast %7 : vector<1x256xf32> to vector<8x256xf32>
    %740 = arith.mulf %738, %739 : vector<8x256xf32>
    %c239_i32_377 = arith.constant 239 : i32
    %741 = tpu.dynamic_rotate %715 by %c239_i32_377 dim 1 : vector<8x256xf32>, i32 -> vector<8x256xf32>
    %742 = vector.broadcast %8 : vector<1x256xf32> to vector<8x256xf32>
    %743 = arith.mulf %741, %742 : vector<8x256xf32>
    %744 = tpu.concatenate %722, %725, %728, %731, %715, %734, %737, %740, %743 in 0 : vector<8x256xf32>, vector<8x256xf32>, vector<8x256xf32>, vector<8x256xf32>, vector<8x256xf32>, vector<8x256xf32>, vector<8x256xf32>, vector<8x256xf32>, vector<8x256xf32> -> vector<72x256xf32>
    %745 = arith.truncf %744 : vector<72x256xf32> to vector<72x256xbf16>
    %cst_378 = arith.constant dense<0.000000e+00> : vector<8x256xf32>
    %746 = tpu.matmul %717, %745, %cst_378 {dimension_numbers = #tpu.dot_dimension_numbers<[1], [0], [0], [1], [0, 0, 1, 1], [], []>} : vector<8x72xbf16>, vector<72x256xbf16>, vector<8x256xf32> -> vector<8x256xf32>
    %747 = vector.broadcast %719 : vector<8x1xf32> to vector<8x256xf32>
    %748 = arith.addf %746, %747 : vector<8x256xf32>
    %cst_379 = arith.constant 0.000000e+00 : f32
    %749 = vector.broadcast %cst_379 : f32 to vector<8x256xf32>
    %750 = arith.maximumf %748, %749 : vector<8x256xf32>
    %c3_380 = arith.constant 3 : index
    %c3_381 = arith.constant 3 : index
    %c0_382 = arith.constant 0 : index
    %c0_383 = arith.constant 0 : index
    %751 = vector.load %arg6[%c3_380, %c3_381, %c0_382, %c0_383] : memref<4x5x8x72xbf16, #tpu.memory_space<vmem>>, vector<1x1x8x72xbf16>
    %752 = vector.shape_cast %751 : vector<1x1x8x72xbf16> to vector<8x72xbf16>
    %c3_384 = arith.constant 3 : index
    %c3_385 = arith.constant 3 : index
    %c0_386 = arith.constant 0 : index
    %c0_387 = arith.constant 0 : index
    %753 = vector.load %arg7[%c3_384, %c3_385, %c0_386, %c0_387] : memref<4x5x8x1xf32, #tpu.memory_space<vmem>>, vector<1x1x8x1xf32>
    %754 = vector.shape_cast %753 : vector<1x1x8x1xf32> to vector<8x1xf32>
    %c17_i32_388 = arith.constant 17 : i32
    %755 = tpu.dynamic_rotate %750 by %c17_i32_388 dim 1 : vector<8x256xf32>, i32 -> vector<8x256xf32>
    %756 = vector.broadcast %1 : vector<1x256xf32> to vector<8x256xf32>
    %757 = arith.mulf %755, %756 : vector<8x256xf32>
    %c16_i32_389 = arith.constant 16 : i32
    %758 = tpu.dynamic_rotate %750 by %c16_i32_389 dim 1 : vector<8x256xf32>, i32 -> vector<8x256xf32>
    %759 = vector.broadcast %2 : vector<1x256xf32> to vector<8x256xf32>
    %760 = arith.mulf %758, %759 : vector<8x256xf32>
    %c15_i32_390 = arith.constant 15 : i32
    %761 = tpu.dynamic_rotate %750 by %c15_i32_390 dim 1 : vector<8x256xf32>, i32 -> vector<8x256xf32>
    %762 = vector.broadcast %3 : vector<1x256xf32> to vector<8x256xf32>
    %763 = arith.mulf %761, %762 : vector<8x256xf32>
    %c1_i32_391 = arith.constant 1 : i32
    %764 = tpu.dynamic_rotate %750 by %c1_i32_391 dim 1 : vector<8x256xf32>, i32 -> vector<8x256xf32>
    %765 = vector.broadcast %4 : vector<1x256xf32> to vector<8x256xf32>
    %766 = arith.mulf %764, %765 : vector<8x256xf32>
    %c255_i32_392 = arith.constant 255 : i32
    %767 = tpu.dynamic_rotate %750 by %c255_i32_392 dim 1 : vector<8x256xf32>, i32 -> vector<8x256xf32>
    %768 = vector.broadcast %5 : vector<1x256xf32> to vector<8x256xf32>
    %769 = arith.mulf %767, %768 : vector<8x256xf32>
    %c241_i32_393 = arith.constant 241 : i32
    %770 = tpu.dynamic_rotate %750 by %c241_i32_393 dim 1 : vector<8x256xf32>, i32 -> vector<8x256xf32>
    %771 = vector.broadcast %6 : vector<1x256xf32> to vector<8x256xf32>
    %772 = arith.mulf %770, %771 : vector<8x256xf32>
    %c240_i32_394 = arith.constant 240 : i32
    %773 = tpu.dynamic_rotate %750 by %c240_i32_394 dim 1 : vector<8x256xf32>, i32 -> vector<8x256xf32>
    %774 = vector.broadcast %7 : vector<1x256xf32> to vector<8x256xf32>
    %775 = arith.mulf %773, %774 : vector<8x256xf32>
    %c239_i32_395 = arith.constant 239 : i32
    %776 = tpu.dynamic_rotate %750 by %c239_i32_395 dim 1 : vector<8x256xf32>, i32 -> vector<8x256xf32>
    %777 = vector.broadcast %8 : vector<1x256xf32> to vector<8x256xf32>
    %778 = arith.mulf %776, %777 : vector<8x256xf32>
    %779 = tpu.concatenate %757, %760, %763, %766, %750, %769, %772, %775, %778 in 0 : vector<8x256xf32>, vector<8x256xf32>, vector<8x256xf32>, vector<8x256xf32>, vector<8x256xf32>, vector<8x256xf32>, vector<8x256xf32>, vector<8x256xf32>, vector<8x256xf32> -> vector<72x256xf32>
    %780 = arith.truncf %779 : vector<72x256xf32> to vector<72x256xbf16>
    %cst_396 = arith.constant dense<0.000000e+00> : vector<8x256xf32>
    %781 = tpu.matmul %752, %780, %cst_396 {dimension_numbers = #tpu.dot_dimension_numbers<[1], [0], [0], [1], [0, 0, 1, 1], [], []>} : vector<8x72xbf16>, vector<72x256xbf16>, vector<8x256xf32> -> vector<8x256xf32>
    %782 = vector.broadcast %754 : vector<8x1xf32> to vector<8x256xf32>
    %783 = arith.addf %781, %782 : vector<8x256xf32>
    %cst_397 = arith.constant 1.000000e+00 : f32
    %784 = vector.broadcast %cst_397 : f32 to vector<8x256xf32>
    %785 = arith.mulf %784, %783 : vector<8x256xf32>
    %786 = arith.addf %715, %785 : vector<8x256xf32>
    %c3_398 = arith.constant 3 : index
    %c4_399 = arith.constant 4 : index
    %c0_400 = arith.constant 0 : index
    %c0_401 = arith.constant 0 : index
    %787 = vector.load %arg6[%c3_398, %c4_399, %c0_400, %c0_401] : memref<4x5x8x72xbf16, #tpu.memory_space<vmem>>, vector<1x1x8x72xbf16>
    %788 = vector.shape_cast %787 : vector<1x1x8x72xbf16> to vector<8x72xbf16>
    %c3_402 = arith.constant 3 : index
    %c4_403 = arith.constant 4 : index
    %c0_404 = arith.constant 0 : index
    %c0_405 = arith.constant 0 : index
    %789 = vector.load %arg7[%c3_402, %c4_403, %c0_404, %c0_405] : memref<4x5x8x1xf32, #tpu.memory_space<vmem>>, vector<1x1x8x1xf32>
    %790 = vector.shape_cast %789 : vector<1x1x8x1xf32> to vector<8x1xf32>
    %c17_i32_406 = arith.constant 17 : i32
    %791 = tpu.dynamic_rotate %786 by %c17_i32_406 dim 1 : vector<8x256xf32>, i32 -> vector<8x256xf32>
    %792 = vector.broadcast %1 : vector<1x256xf32> to vector<8x256xf32>
    %793 = arith.mulf %791, %792 : vector<8x256xf32>
    %c16_i32_407 = arith.constant 16 : i32
    %794 = tpu.dynamic_rotate %786 by %c16_i32_407 dim 1 : vector<8x256xf32>, i32 -> vector<8x256xf32>
    %795 = vector.broadcast %2 : vector<1x256xf32> to vector<8x256xf32>
    %796 = arith.mulf %794, %795 : vector<8x256xf32>
    %c15_i32_408 = arith.constant 15 : i32
    %797 = tpu.dynamic_rotate %786 by %c15_i32_408 dim 1 : vector<8x256xf32>, i32 -> vector<8x256xf32>
    %798 = vector.broadcast %3 : vector<1x256xf32> to vector<8x256xf32>
    %799 = arith.mulf %797, %798 : vector<8x256xf32>
    %c1_i32_409 = arith.constant 1 : i32
    %800 = tpu.dynamic_rotate %786 by %c1_i32_409 dim 1 : vector<8x256xf32>, i32 -> vector<8x256xf32>
    %801 = vector.broadcast %4 : vector<1x256xf32> to vector<8x256xf32>
    %802 = arith.mulf %800, %801 : vector<8x256xf32>
    %c255_i32_410 = arith.constant 255 : i32
    %803 = tpu.dynamic_rotate %786 by %c255_i32_410 dim 1 : vector<8x256xf32>, i32 -> vector<8x256xf32>
    %804 = vector.broadcast %5 : vector<1x256xf32> to vector<8x256xf32>
    %805 = arith.mulf %803, %804 : vector<8x256xf32>
    %c241_i32_411 = arith.constant 241 : i32
    %806 = tpu.dynamic_rotate %786 by %c241_i32_411 dim 1 : vector<8x256xf32>, i32 -> vector<8x256xf32>
    %807 = vector.broadcast %6 : vector<1x256xf32> to vector<8x256xf32>
    %808 = arith.mulf %806, %807 : vector<8x256xf32>
    %c240_i32_412 = arith.constant 240 : i32
    %809 = tpu.dynamic_rotate %786 by %c240_i32_412 dim 1 : vector<8x256xf32>, i32 -> vector<8x256xf32>
    %810 = vector.broadcast %7 : vector<1x256xf32> to vector<8x256xf32>
    %811 = arith.mulf %809, %810 : vector<8x256xf32>
    %c239_i32_413 = arith.constant 239 : i32
    %812 = tpu.dynamic_rotate %786 by %c239_i32_413 dim 1 : vector<8x256xf32>, i32 -> vector<8x256xf32>
    %813 = vector.broadcast %8 : vector<1x256xf32> to vector<8x256xf32>
    %814 = arith.mulf %812, %813 : vector<8x256xf32>
    %815 = tpu.concatenate %793, %796, %799, %802, %786, %805, %808, %811, %814 in 0 : vector<8x256xf32>, vector<8x256xf32>, vector<8x256xf32>, vector<8x256xf32>, vector<8x256xf32>, vector<8x256xf32>, vector<8x256xf32>, vector<8x256xf32>, vector<8x256xf32> -> vector<72x256xf32>
    %816 = arith.truncf %815 : vector<72x256xf32> to vector<72x256xbf16>
    %cst_414 = arith.constant dense<0.000000e+00> : vector<8x256xf32>
    %817 = tpu.matmul %788, %816, %cst_414 {dimension_numbers = #tpu.dot_dimension_numbers<[1], [0], [0], [1], [0, 0, 1, 1], [], []>} : vector<8x72xbf16>, vector<72x256xbf16>, vector<8x256xf32> -> vector<8x256xf32>
    %818 = vector.broadcast %790 : vector<8x1xf32> to vector<8x256xf32>
    %819 = arith.addf %817, %818 : vector<8x256xf32>
    %820 = arith.addf %644, %819 : vector<8x256xf32>
    %c0_415 = arith.constant 0 : index
    %c0_416 = arith.constant 0 : index
    %821 = vector.load %arg16[%c0_415, %c0_416] : memref<8x72xbf16, #tpu.memory_space<vmem>>, vector<8x72xbf16>
    %c0_417 = arith.constant 0 : index
    %c0_418 = arith.constant 0 : index
    %822 = vector.load %arg17[%c0_417, %c0_418] : memref<8x1xf32, #tpu.memory_space<vmem>>, vector<8x1xf32>
    %c17_i32_419 = arith.constant 17 : i32
    %823 = tpu.dynamic_rotate %820 by %c17_i32_419 dim 1 : vector<8x256xf32>, i32 -> vector<8x256xf32>
    %824 = vector.broadcast %1 : vector<1x256xf32> to vector<8x256xf32>
    %825 = arith.mulf %823, %824 : vector<8x256xf32>
    %c16_i32_420 = arith.constant 16 : i32
    %826 = tpu.dynamic_rotate %820 by %c16_i32_420 dim 1 : vector<8x256xf32>, i32 -> vector<8x256xf32>
    %827 = vector.broadcast %2 : vector<1x256xf32> to vector<8x256xf32>
    %828 = arith.mulf %826, %827 : vector<8x256xf32>
    %c15_i32_421 = arith.constant 15 : i32
    %829 = tpu.dynamic_rotate %820 by %c15_i32_421 dim 1 : vector<8x256xf32>, i32 -> vector<8x256xf32>
    %830 = vector.broadcast %3 : vector<1x256xf32> to vector<8x256xf32>
    %831 = arith.mulf %829, %830 : vector<8x256xf32>
    %c1_i32_422 = arith.constant 1 : i32
    %832 = tpu.dynamic_rotate %820 by %c1_i32_422 dim 1 : vector<8x256xf32>, i32 -> vector<8x256xf32>
    %833 = vector.broadcast %4 : vector<1x256xf32> to vector<8x256xf32>
    %834 = arith.mulf %832, %833 : vector<8x256xf32>
    %c255_i32_423 = arith.constant 255 : i32
    %835 = tpu.dynamic_rotate %820 by %c255_i32_423 dim 1 : vector<8x256xf32>, i32 -> vector<8x256xf32>
    %836 = vector.broadcast %5 : vector<1x256xf32> to vector<8x256xf32>
    %837 = arith.mulf %835, %836 : vector<8x256xf32>
    %c241_i32_424 = arith.constant 241 : i32
    %838 = tpu.dynamic_rotate %820 by %c241_i32_424 dim 1 : vector<8x256xf32>, i32 -> vector<8x256xf32>
    %839 = vector.broadcast %6 : vector<1x256xf32> to vector<8x256xf32>
    %840 = arith.mulf %838, %839 : vector<8x256xf32>
    %c240_i32_425 = arith.constant 240 : i32
    %841 = tpu.dynamic_rotate %820 by %c240_i32_425 dim 1 : vector<8x256xf32>, i32 -> vector<8x256xf32>
    %842 = vector.broadcast %7 : vector<1x256xf32> to vector<8x256xf32>
    %843 = arith.mulf %841, %842 : vector<8x256xf32>
    %c239_i32_426 = arith.constant 239 : i32
    %844 = tpu.dynamic_rotate %820 by %c239_i32_426 dim 1 : vector<8x256xf32>, i32 -> vector<8x256xf32>
    %845 = vector.broadcast %8 : vector<1x256xf32> to vector<8x256xf32>
    %846 = arith.mulf %844, %845 : vector<8x256xf32>
    %847 = tpu.concatenate %825, %828, %831, %834, %820, %837, %840, %843, %846 in 0 : vector<8x256xf32>, vector<8x256xf32>, vector<8x256xf32>, vector<8x256xf32>, vector<8x256xf32>, vector<8x256xf32>, vector<8x256xf32>, vector<8x256xf32>, vector<8x256xf32> -> vector<72x256xf32>
    %848 = arith.truncf %847 : vector<72x256xf32> to vector<72x256xbf16>
    %cst_427 = arith.constant dense<0.000000e+00> : vector<8x256xf32>
    %849 = tpu.matmul %821, %848, %cst_427 {dimension_numbers = #tpu.dot_dimension_numbers<[1], [0], [0], [1], [0, 0, 1, 1], [], []>} : vector<8x72xbf16>, vector<72x256xbf16>, vector<8x256xf32> -> vector<8x256xf32>
    %850 = vector.broadcast %822 : vector<8x1xf32> to vector<8x256xf32>
    %851 = arith.addf %849, %850 : vector<8x256xf32>
    %852 = arith.addf %43, %851 : vector<8x256xf32>
    %c0_428 = arith.constant 0 : index
    %c0_429 = arith.constant 0 : index
    %853 = vector.load %arg18[%c0_428, %c0_429] : memref<32x72xbf16, #tpu.memory_space<vmem>>, vector<32x72xbf16>
    %c0_430 = arith.constant 0 : index
    %c0_431 = arith.constant 0 : index
    %854 = vector.load %arg19[%c0_430, %c0_431] : memref<32x1xf32, #tpu.memory_space<vmem>>, vector<32x1xf32>
    %c17_i32_432 = arith.constant 17 : i32
    %855 = tpu.dynamic_rotate %852 by %c17_i32_432 dim 1 : vector<8x256xf32>, i32 -> vector<8x256xf32>
    %856 = vector.broadcast %1 : vector<1x256xf32> to vector<8x256xf32>
    %857 = arith.mulf %855, %856 : vector<8x256xf32>
    %c16_i32_433 = arith.constant 16 : i32
    %858 = tpu.dynamic_rotate %852 by %c16_i32_433 dim 1 : vector<8x256xf32>, i32 -> vector<8x256xf32>
    %859 = vector.broadcast %2 : vector<1x256xf32> to vector<8x256xf32>
    %860 = arith.mulf %858, %859 : vector<8x256xf32>
    %c15_i32_434 = arith.constant 15 : i32
    %861 = tpu.dynamic_rotate %852 by %c15_i32_434 dim 1 : vector<8x256xf32>, i32 -> vector<8x256xf32>
    %862 = vector.broadcast %3 : vector<1x256xf32> to vector<8x256xf32>
    %863 = arith.mulf %861, %862 : vector<8x256xf32>
    %c1_i32_435 = arith.constant 1 : i32
    %864 = tpu.dynamic_rotate %852 by %c1_i32_435 dim 1 : vector<8x256xf32>, i32 -> vector<8x256xf32>
    %865 = vector.broadcast %4 : vector<1x256xf32> to vector<8x256xf32>
    %866 = arith.mulf %864, %865 : vector<8x256xf32>
    %c255_i32_436 = arith.constant 255 : i32
    %867 = tpu.dynamic_rotate %852 by %c255_i32_436 dim 1 : vector<8x256xf32>, i32 -> vector<8x256xf32>
    %868 = vector.broadcast %5 : vector<1x256xf32> to vector<8x256xf32>
    %869 = arith.mulf %867, %868 : vector<8x256xf32>
    %c241_i32_437 = arith.constant 241 : i32
    %870 = tpu.dynamic_rotate %852 by %c241_i32_437 dim 1 : vector<8x256xf32>, i32 -> vector<8x256xf32>
    %871 = vector.broadcast %6 : vector<1x256xf32> to vector<8x256xf32>
    %872 = arith.mulf %870, %871 : vector<8x256xf32>
    %c240_i32_438 = arith.constant 240 : i32
    %873 = tpu.dynamic_rotate %852 by %c240_i32_438 dim 1 : vector<8x256xf32>, i32 -> vector<8x256xf32>
    %874 = vector.broadcast %7 : vector<1x256xf32> to vector<8x256xf32>
    %875 = arith.mulf %873, %874 : vector<8x256xf32>
    %c239_i32_439 = arith.constant 239 : i32
    %876 = tpu.dynamic_rotate %852 by %c239_i32_439 dim 1 : vector<8x256xf32>, i32 -> vector<8x256xf32>
    %877 = vector.broadcast %8 : vector<1x256xf32> to vector<8x256xf32>
    %878 = arith.mulf %876, %877 : vector<8x256xf32>
    %879 = tpu.concatenate %857, %860, %863, %866, %852, %869, %872, %875, %878 in 0 : vector<8x256xf32>, vector<8x256xf32>, vector<8x256xf32>, vector<8x256xf32>, vector<8x256xf32>, vector<8x256xf32>, vector<8x256xf32>, vector<8x256xf32>, vector<8x256xf32> -> vector<72x256xf32>
    %880 = arith.truncf %879 : vector<72x256xf32> to vector<72x256xbf16>
    %cst_440 = arith.constant dense<0.000000e+00> : vector<32x256xf32>
    %881 = tpu.matmul %853, %880, %cst_440 {dimension_numbers = #tpu.dot_dimension_numbers<[1], [0], [0], [1], [0, 0, 1, 1], [], []>} : vector<32x72xbf16>, vector<72x256xbf16>, vector<32x256xf32> -> vector<32x256xf32>
    %882 = vector.broadcast %854 : vector<32x1xf32> to vector<32x256xf32>
    %883 = arith.addf %881, %882 : vector<32x256xf32>
    %c0_441 = arith.constant 0 : index
    %c0_442 = arith.constant 0 : index
    %884 = vector.load %arg20[%c0_441, %c0_442] : memref<32x256xf32, #tpu.memory_space<vmem>>, vector<32x256xf32>
    tpu.vector_store %arg20[%c0_441, %c0_442], %883 {strides = array<i32>} : memref<32x256xf32, #tpu.memory_space<vmem>>, vector<32x256xf32>,
    return
  }
  func.func @transform_0(%arg0: i32) -> (i32, i32) {
    %c0_i32 = arith.constant 0 : i32
    %c0_i32_0 = arith.constant 0 : i32
    return %c0_i32, %arg0 : i32, i32
  }
  func.func @transform_1(%arg0: i32) -> (i32, i32) {
    %c0_i32 = arith.constant 0 : i32
    %c0_i32_0 = arith.constant 0 : i32
    %c0_i32_1 = arith.constant 0 : i32
    return %c0_i32, %c0_i32_0 : i32, i32
  }
  func.func @transform_2(%arg0: i32) -> (i32, i32) {
    %c0_i32 = arith.constant 0 : i32
    %c0_i32_0 = arith.constant 0 : i32
    %c0_i32_1 = arith.constant 0 : i32
    return %c0_i32, %c0_i32_0 : i32, i32
  }
  func.func @transform_3(%arg0: i32) -> (i32, i32) {
    %c0_i32 = arith.constant 0 : i32
    %c0_i32_0 = arith.constant 0 : i32
    %c0_i32_1 = arith.constant 0 : i32
    return %c0_i32, %c0_i32_0 : i32, i32
  }
  func.func @transform_4(%arg0: i32) -> (i32, i32) {
    %c0_i32 = arith.constant 0 : i32
    %c0_i32_0 = arith.constant 0 : i32
    %c0_i32_1 = arith.constant 0 : i32
    return %c0_i32, %c0_i32_0 : i32, i32
  }
  func.func @transform_5(%arg0: i32) -> (i32, i32, i32, i32) {
    %c0_i32 = arith.constant 0 : i32
    %c0_i32_0 = arith.constant 0 : i32
    %c0_i32_1 = arith.constant 0 : i32
    %c0_i32_2 = arith.constant 0 : i32
    %c0_i32_3 = arith.constant 0 : i32
    return %c0_i32, %c0_i32_0, %c0_i32_1, %c0_i32_2 : i32, i32, i32, i32
  }
  func.func @transform_6(%arg0: i32) -> (i32, i32, i32, i32) {
    %c0_i32 = arith.constant 0 : i32
    %c0_i32_0 = arith.constant 0 : i32
    %c0_i32_1 = arith.constant 0 : i32
    %c0_i32_2 = arith.constant 0 : i32
    %c0_i32_3 = arith.constant 0 : i32
    return %c0_i32, %c0_i32_0, %c0_i32_1, %c0_i32_2 : i32, i32, i32, i32
  }
  func.func @transform_7(%arg0: i32) -> (i32, i32, i32) {
    %c0_i32 = arith.constant 0 : i32
    %c0_i32_0 = arith.constant 0 : i32
    %c0_i32_1 = arith.constant 0 : i32
    %c0_i32_2 = arith.constant 0 : i32
    return %c0_i32, %c0_i32_0, %c0_i32_1 : i32, i32, i32
  }
  func.func @transform_8(%arg0: i32) -> (i32, i32) {
    %c0_i32 = arith.constant 0 : i32
    %c0_i32_0 = arith.constant 0 : i32
    %c0_i32_1 = arith.constant 0 : i32
    return %c0_i32, %c0_i32_0 : i32, i32
  }
  func.func @transform_9(%arg0: i32) -> (i32, i32, i32) {
    %c0_i32 = arith.constant 0 : i32
    %c0_i32_0 = arith.constant 0 : i32
    %c0_i32_1 = arith.constant 0 : i32
    %c0_i32_2 = arith.constant 0 : i32
    return %c0_i32, %c0_i32_0, %c0_i32_1 : i32, i32, i32
  }
  func.func @transform_10(%arg0: i32) -> (i32, i32, i32) {
    %c0_i32 = arith.constant 0 : i32
    %c0_i32_0 = arith.constant 0 : i32
    %c0_i32_1 = arith.constant 0 : i32
    %c0_i32_2 = arith.constant 0 : i32
    return %c0_i32, %c0_i32_0, %c0_i32_1 : i32, i32, i32
  }
  func.func @transform_11(%arg0: i32) -> (i32, i32) {
    %c0_i32 = arith.constant 0 : i32
    %c0_i32_0 = arith.constant 0 : i32
    %c0_i32_1 = arith.constant 0 : i32
    return %c0_i32, %c0_i32_0 : i32, i32
  }
  func.func @transform_12(%arg0: i32) -> (i32, i32) {
    %c0_i32 = arith.constant 0 : i32
    %c0_i32_0 = arith.constant 0 : i32
    %c0_i32_1 = arith.constant 0 : i32
    return %c0_i32, %c0_i32_0 : i32, i32
  }
  func.func @transform_13(%arg0: i32) -> (i32, i32, i32, i32) {
    %c0_i32 = arith.constant 0 : i32
    %c0_i32_0 = arith.constant 0 : i32
    %c0_i32_1 = arith.constant 0 : i32
    %c0_i32_2 = arith.constant 0 : i32
    %c0_i32_3 = arith.constant 0 : i32
    return %c0_i32, %c0_i32_0, %c0_i32_1, %c0_i32_2 : i32, i32, i32, i32
  }
  func.func @transform_14(%arg0: i32) -> (i32, i32, i32) {
    %c0_i32 = arith.constant 0 : i32
    %c0_i32_0 = arith.constant 0 : i32
    %c0_i32_1 = arith.constant 0 : i32
    %c0_i32_2 = arith.constant 0 : i32
    return %c0_i32, %c0_i32_0, %c0_i32_1 : i32, i32, i32
  }
  func.func @transform_15(%arg0: i32) -> (i32, i32) {
    %c0_i32 = arith.constant 0 : i32
    %c0_i32_0 = arith.constant 0 : i32
    %c0_i32_1 = arith.constant 0 : i32
    return %c0_i32, %c0_i32_0 : i32, i32
  }
  func.func @transform_16(%arg0: i32) -> (i32, i32) {
    %c0_i32 = arith.constant 0 : i32
    %c0_i32_0 = arith.constant 0 : i32
    %c0_i32_1 = arith.constant 0 : i32
    return %c0_i32, %c0_i32_0 : i32, i32
  }
  func.func @transform_17(%arg0: i32) -> (i32, i32) {
    %c0_i32 = arith.constant 0 : i32
    %c0_i32_0 = arith.constant 0 : i32
    %c0_i32_1 = arith.constant 0 : i32
    return %c0_i32, %c0_i32_0 : i32, i32
  }
  func.func @transform_18(%arg0: i32) -> (i32, i32) {
    %c0_i32 = arith.constant 0 : i32
    %c0_i32_0 = arith.constant 0 : i32
    %c0_i32_1 = arith.constant 0 : i32
    return %c0_i32, %c0_i32_0 : i32, i32
  }
  func.func @transform_19(%arg0: i32) -> (i32, i32) {
    %c0_i32 = arith.constant 0 : i32
    %c0_i32_0 = arith.constant 0 : i32
    return %c0_i32, %arg0 : i32, i32
  }
}

module attributes {stable_mosaic.version = 11 : i64} {
  func.func @_msdn_tail_kernel(%arg0: i32, %arg1: memref<8x1024xf32, #tpu.memory_space<vmem>>, %arg2: memref<9x1024xf32, #tpu.memory_space<vmem>>, %arg3: memref<3x72xbf16, #tpu.memory_space<vmem>>, %arg4: memref<3x1xf32, #tpu.memory_space<vmem>>, %arg5: memref<3x1xf32, #tpu.memory_space<vmem>>, %arg6: memref<3x1024xf32, #tpu.memory_space<vmem>>) attributes {dimension_semantics = [#tpu.dimension_semantics<parallel>], iteration_bounds = array<i64: 2>, scalar_prefetch = 0 : i64, scratch_operands = 0 : i64, tpu.core_type = #tpu.core_type<tc>, window_params = [{transform_indices = @transform_0, window_bounds = array<i64: 8, 1024>}, {pipeline_mode = #tpu.pipeline_mode<synchronous>, transform_indices = @transform_1, window_bounds = array<i64: 9, 1024>}, {pipeline_mode = #tpu.pipeline_mode<synchronous>, transform_indices = @transform_2, window_bounds = array<i64: 3, 72>}, {pipeline_mode = #tpu.pipeline_mode<synchronous>, transform_indices = @transform_3, window_bounds = array<i64: 3, 1>}, {pipeline_mode = #tpu.pipeline_mode<synchronous>, transform_indices = @transform_4, window_bounds = array<i64: 3, 1>}, {transform_indices = @transform_5, window_bounds = array<i64: 3, 1024>}]} {
    %c0 = arith.constant 0 : index
    %c0_0 = arith.constant 0 : index
    %0 = vector.load %arg2[%c0, %c0_0] : memref<9x1024xf32, #tpu.memory_space<vmem>>, vector<9x1024xf32>
    %1 = vector.extract_strided_slice %0 {offsets = [0, 0], sizes = [1, 1024], strides = [1, 1]} : vector<9x1024xf32> to vector<1x1024xf32>
    %2 = vector.extract_strided_slice %0 {offsets = [1, 0], sizes = [1, 1024], strides = [1, 1]} : vector<9x1024xf32> to vector<1x1024xf32>
    %3 = vector.extract_strided_slice %0 {offsets = [2, 0], sizes = [1, 1024], strides = [1, 1]} : vector<9x1024xf32> to vector<1x1024xf32>
    %4 = vector.extract_strided_slice %0 {offsets = [3, 0], sizes = [1, 1024], strides = [1, 1]} : vector<9x1024xf32> to vector<1x1024xf32>
    %5 = vector.extract_strided_slice %0 {offsets = [5, 0], sizes = [1, 1024], strides = [1, 1]} : vector<9x1024xf32> to vector<1x1024xf32>
    %6 = vector.extract_strided_slice %0 {offsets = [6, 0], sizes = [1, 1024], strides = [1, 1]} : vector<9x1024xf32> to vector<1x1024xf32>
    %7 = vector.extract_strided_slice %0 {offsets = [7, 0], sizes = [1, 1024], strides = [1, 1]} : vector<9x1024xf32> to vector<1x1024xf32>
    %8 = vector.extract_strided_slice %0 {offsets = [8, 0], sizes = [1, 1024], strides = [1, 1]} : vector<9x1024xf32> to vector<1x1024xf32>
    %c0_1 = arith.constant 0 : index
    %c0_2 = arith.constant 0 : index
    %9 = vector.load %arg1[%c0_1, %c0_2] : memref<8x1024xf32, #tpu.memory_space<vmem>>, vector<8x1024xf32>
    %c0_3 = arith.constant 0 : index
    %c0_4 = arith.constant 0 : index
    %10 = vector.load %arg3[%c0_3, %c0_4] : memref<3x72xbf16, #tpu.memory_space<vmem>>, vector<3x72xbf16>
    %c0_5 = arith.constant 0 : index
    %c0_6 = arith.constant 0 : index
    %11 = vector.load %arg4[%c0_5, %c0_6] : memref<3x1xf32, #tpu.memory_space<vmem>>, vector<3x1xf32>
    %c33_i32 = arith.constant 33 : i32
    %12 = tpu.dynamic_rotate %9 by %c33_i32 dim 1 : vector<8x1024xf32>, i32 -> vector<8x1024xf32>
    %13 = vector.broadcast %1 : vector<1x1024xf32> to vector<8x1024xf32>
    %14 = arith.mulf %12, %13 : vector<8x1024xf32>
    %c32_i32 = arith.constant 32 : i32
    %15 = tpu.dynamic_rotate %9 by %c32_i32 dim 1 : vector<8x1024xf32>, i32 -> vector<8x1024xf32>
    %16 = vector.broadcast %2 : vector<1x1024xf32> to vector<8x1024xf32>
    %17 = arith.mulf %15, %16 : vector<8x1024xf32>
    %c31_i32 = arith.constant 31 : i32
    %18 = tpu.dynamic_rotate %9 by %c31_i32 dim 1 : vector<8x1024xf32>, i32 -> vector<8x1024xf32>
    %19 = vector.broadcast %3 : vector<1x1024xf32> to vector<8x1024xf32>
    %20 = arith.mulf %18, %19 : vector<8x1024xf32>
    %c1_i32 = arith.constant 1 : i32
    %21 = tpu.dynamic_rotate %9 by %c1_i32 dim 1 : vector<8x1024xf32>, i32 -> vector<8x1024xf32>
    %22 = vector.broadcast %4 : vector<1x1024xf32> to vector<8x1024xf32>
    %23 = arith.mulf %21, %22 : vector<8x1024xf32>
    %c1023_i32 = arith.constant 1023 : i32
    %24 = tpu.dynamic_rotate %9 by %c1023_i32 dim 1 : vector<8x1024xf32>, i32 -> vector<8x1024xf32>
    %25 = vector.broadcast %5 : vector<1x1024xf32> to vector<8x1024xf32>
    %26 = arith.mulf %24, %25 : vector<8x1024xf32>
    %c993_i32 = arith.constant 993 : i32
    %27 = tpu.dynamic_rotate %9 by %c993_i32 dim 1 : vector<8x1024xf32>, i32 -> vector<8x1024xf32>
    %28 = vector.broadcast %6 : vector<1x1024xf32> to vector<8x1024xf32>
    %29 = arith.mulf %27, %28 : vector<8x1024xf32>
    %c992_i32 = arith.constant 992 : i32
    %30 = tpu.dynamic_rotate %9 by %c992_i32 dim 1 : vector<8x1024xf32>, i32 -> vector<8x1024xf32>
    %31 = vector.broadcast %7 : vector<1x1024xf32> to vector<8x1024xf32>
    %32 = arith.mulf %30, %31 : vector<8x1024xf32>
    %c991_i32 = arith.constant 991 : i32
    %33 = tpu.dynamic_rotate %9 by %c991_i32 dim 1 : vector<8x1024xf32>, i32 -> vector<8x1024xf32>
    %34 = vector.broadcast %8 : vector<1x1024xf32> to vector<8x1024xf32>
    %35 = arith.mulf %33, %34 : vector<8x1024xf32>
    %36 = tpu.concatenate %14, %17, %20, %23, %9, %26, %29, %32, %35 in 0 : vector<8x1024xf32>, vector<8x1024xf32>, vector<8x1024xf32>, vector<8x1024xf32>, vector<8x1024xf32>, vector<8x1024xf32>, vector<8x1024xf32>, vector<8x1024xf32>, vector<8x1024xf32> -> vector<72x1024xf32>
    %37 = arith.truncf %36 : vector<72x1024xf32> to vector<72x1024xbf16>
    %cst = arith.constant dense<0.000000e+00> : vector<3x1024xf32>
    %38 = tpu.matmul %10, %37, %cst {dimension_numbers = #tpu.dot_dimension_numbers<[1], [0], [0], [1], [0, 0, 1, 1], [], []>} : vector<3x72xbf16>, vector<72x1024xbf16>, vector<3x1024xf32> -> vector<3x1024xf32>
    %39 = vector.broadcast %11 : vector<3x1xf32> to vector<3x1024xf32>
    %40 = arith.addf %38, %39 : vector<3x1024xf32>
    %c0_7 = arith.constant 0 : index
    %c0_8 = arith.constant 0 : index
    %41 = vector.load %arg5[%c0_7, %c0_8] : memref<3x1xf32, #tpu.memory_space<vmem>>, vector<3x1xf32>
    %42 = vector.broadcast %41 : vector<3x1xf32> to vector<3x1024xf32>
    %43 = arith.addf %40, %42 : vector<3x1024xf32>
    %c0_9 = arith.constant 0 : index
    %c0_10 = arith.constant 0 : index
    %44 = vector.load %arg6[%c0_9, %c0_10] : memref<3x1024xf32, #tpu.memory_space<vmem>>, vector<3x1024xf32>
    tpu.vector_store %arg6[%c0_9, %c0_10], %43 {strides = array<i32>} : memref<3x1024xf32, #tpu.memory_space<vmem>>, vector<3x1024xf32>,
    return
  }
  func.func @transform_0(%arg0: i32) -> (i32, i32) {
    %c0_i32 = arith.constant 0 : i32
    %c0_i32_0 = arith.constant 0 : i32
    return %c0_i32, %arg0 : i32, i32
  }
  func.func @transform_1(%arg0: i32) -> (i32, i32) {
    %c0_i32 = arith.constant 0 : i32
    %c0_i32_0 = arith.constant 0 : i32
    %c0_i32_1 = arith.constant 0 : i32
    return %c0_i32, %c0_i32_0 : i32, i32
  }
  func.func @transform_2(%arg0: i32) -> (i32, i32) {
    %c0_i32 = arith.constant 0 : i32
    %c0_i32_0 = arith.constant 0 : i32
    %c0_i32_1 = arith.constant 0 : i32
    return %c0_i32, %c0_i32_0 : i32, i32
  }
  func.func @transform_3(%arg0: i32) -> (i32, i32) {
    %c0_i32 = arith.constant 0 : i32
    %c0_i32_0 = arith.constant 0 : i32
    %c0_i32_1 = arith.constant 0 : i32
    return %c0_i32, %c0_i32_0 : i32, i32
  }
  func.func @transform_4(%arg0: i32) -> (i32, i32) {
    %c0_i32 = arith.constant 0 : i32
    %c0_i32_0 = arith.constant 0 : i32
    %c0_i32_1 = arith.constant 0 : i32
    return %c0_i32, %c0_i32_0 : i32, i32
  }
  func.func @transform_5(%arg0: i32) -> (i32, i32) {
    %c0_i32 = arith.constant 0 : i32
    %c0_i32_0 = arith.constant 0 : i32
    return %c0_i32, %arg0 : i32, i32
  }
}

</mosaic_0001>

<llo_original>
// kernel: msdn_forward.3
$region0: #{msdn_forward.3}
  #allocation0 [shape = 'u32[]', space=smem, size = 0x4, offset = 0x4, fixed_abs, tag = 'smem constant byte address 0x4 - core index']
  #allocation1 [shape = 'u32[144,128]{1,0:T(1,128)}', space=vmem, size = 0x12000, scoped, tag = 'internal scratch']
  %s0 = inlined_call_operand.vmem [shape: f32[8,2048], index: 0, kind: input, shape index: {}]
  %s1 = inlined_call_operand.vmem [shape: f32[9,1024], index: 1, kind: input, shape index: {}]
  %s2 = inlined_call_operand.vmem [shape: bf16[3,72], index: 2, kind: input, shape index: {}]
  %s3 = inlined_call_operand.vmem [shape: f32[3,1], index: 3, kind: input, shape index: {}]
  %s4 = inlined_call_operand.vmem [shape: f32[3,1], index: 4, kind: input, shape index: {}]
  %s5 = inlined_call_operand.vmem [shape: f32[3,2048], index: 5, kind: output, shape index: {}]
  %s6 = sld [smem:[#allocation0]]
  $region53: #{msdn_forward.3} parent=0
    _
  %s8 = ssub.s32 1, %s6
  %s9 = scalar_select 0, %s8, %s6
  loop: start=0, step=1, limit=4
  $region2: #{msdn_forward.3} parent=0 // loop_pre_header
    _
  $region3: #{msdn_forward.3} parent=0 // loop_header
    %s11 = sphi 0, %s15
    %p12 = scmp.ge.s32.totalorder %s11, 4
    %s21 = sphi 0, %s23
    %s24 = sphi 0, %s21
    %s25 = sphi 0, %s24
    %s41 = sphi 0, %s25
    %s45 = sphi 0, %s45
    %s47 = sphi 0, %s45
    %s48 = sphi 0, %s47
    %s62 = sphi 0, %s48
    %s66 = sphi 0, %s66
    %s68 = sphi 0, %s66
    %s69 = sphi 0, %s68
    %s83 = sphi 0, %s69
    %s87 = sphi 0, %s87
    %s89 = sphi 0, %s87
    %s90 = sphi 0, %s89
    %s104 = sphi 0, %s90
    %s108 = sphi 0, %s108
    %s110 = sphi 0, %s108
    %s111 = sphi 0, %s110
    %s125 = sphi 0, %s111
    %s131 = sphi 0, %s133
    %s134 = sphi 0, %s131
    %s135 = sphi 0, %s134
    %s151 = sphi 0, %s135
  $region4: #{msdn_forward.3} parent=0 // loop_header_branch
    %14 = sbr.rel (%p12) target = $region8
  $region5: #{msdn_forward.3} parent=0 // loop_body
    %s16 = ssub.s32 %s11, 1
    %s17 = ssub.s32 %s11, 2
    %s18 = sadd.s32 %s11, 1
    %s19 = ssub.s32 %s11, %s18
    %p20 = scmp.eq.s32.totalorder %s19, 0
    %s22 = sadd.s32 %s21, 1
    %s23 = scalar_select %p20, %s21, %s22
    %p26 = pneg %p20
    %p27 = scmp.eq.s32.totalorder %s11, 1
    %p28 = por %p26, %p27
    %p29 = scmp.ne.s32.totalorder %s21, %s24
    %p30 = scmp.eq.s32.totalorder %s11, 0
    %p31 = por %p29, %p30
    %p32 = scmp.ne.s32.totalorder %s21, %s24
    %p33 = scmp.eq.s32.totalorder %s16, 1
    %p34 = por %p32, %p33
    %p35 = scmp.ne.s32.totalorder %s24, %s25
    %p36 = scmp.eq.s32.totalorder %s16, 0
    %p37 = por %p35, %p36
    %p38 = scmp.ne.s32.totalorder %s24, %s25
    %p39 = scmp.eq.s32.totalorder %s17, 1
    %p40 = por %p38, %p39
    %p42 = scmp.ne.s32.totalorder %s25, %s41
    %p43 = scmp.eq.s32.totalorder %s17, 0
    %p44 = por %p42, %p43
    %s46 = sadd.s32 %s45, 1
    %p49 = scmp.eq.s32.totalorder %s11, 1
    %p50 = scmp.ne.s32.totalorder %s45, %s47
    %p51 = scmp.eq.s32.totalorder %s11, 0
    %p52 = por %p50, %p51
    %p53 = scmp.ne.s32.totalorder %s45, %s47
    %p54 = scmp.eq.s32.totalorder %s16, 1
    %p55 = por %p53, %p54
    %p56 = scmp.ne.s32.totalorder %s47, %s48
    %p57 = scmp.eq.s32.totalorder %s16, 0
    %p58 = por %p56, %p57
    %p59 = scmp.ne.s32.totalorder %s47, %s48
    %p60 = scmp.eq.s32.totalorder %s17, 1
    %p61 = por %p59, %p60
    %p63 = scmp.ne.s32.totalorder %s48, %s62
    %p64 = scmp.eq.s32.totalorder %s17, 0
    %p65 = por %p63, %p64
    %s67 = sadd.s32 %s66, 1
    %p70 = scmp.eq.s32.totalorder %s11, 1
    %p71 = scmp.ne.s32.totalorder %s66, %s68
    %p72 = scmp.eq.s32.totalorder %s11, 0
    %p73 = por %p71, %p72
    %p74 = scmp.ne.s32.totalorder %s66, %s68
    %p75 = scmp.eq.s32.totalorder %s16, 1
    %p76 = por %p74, %p75
    %p77 = scmp.ne.s32.totalorder %s68, %s69
    %p78 = scmp.eq.s32.totalorder %s16, 0
    %p79 = por %p77, %p78
    %p80 = scmp.ne.s32.totalorder %s68, %s69
    %p81 = scmp.eq.s32.totalorder %s17, 1
    %p82 = por %p80, %p81
    %p84 = scmp.ne.s32.totalorder %s69, %s83
    %p85 = scmp.eq.s32.totalorder %s17, 0
    %p86 = por %p84, %p85
    %s88 = sadd.s32 %s87, 1
    %p91 = scmp.eq.s32.totalorder %s11, 1
    %p92 = scmp.ne.s32.totalorder %s87, %s89
    %p93 = scmp.eq.s32.totalorder %s11, 0
    %p94 = por %p92, %p93
    %p95 = scmp.ne.s32.totalorder %s87, %s89
    %p96 = scmp.eq.s32.totalorder %s16, 1
    %p97 = por %p95, %p96
    %p98 = scmp.ne.s32.totalorder %s89, %s90
    %p99 = scmp.eq.s32.totalorder %s16, 0
    %p100 = por %p98, %p99
    %p101 = scmp.ne.s32.totalorder %s89, %s90
    %p102 = scmp.eq.s32.totalorder %s17, 1
    %p103 = por %p101, %p102
    %p105 = scmp.ne.s32.totalorder %s90, %s104
    %p106 = scmp.eq.s32.totalorder %s17, 0
    %p107 = por %p105, %p106
    %s109 = sadd.s32 %s108, 1
    %p112 = scmp.eq.s32.totalorder %s11, 1
    %p113 = scmp.ne.s32.totalorder %s108, %s110
    %p114 = scmp.eq.s32.totalorder %s11, 0
    %p115 = por %p113, %p114
    %p116 = scmp.ne.s32.totalorder %s108, %s110
    %p117 = scmp.eq.s32.totalorder %s16, 1
    %p118 = por %p116, %p117
    %p119 = scmp.ne.s32.totalorder %s110, %s111
    %p120 = scmp.eq.s32.totalorder %s16, 0
    %p121 = por %p119, %p120
    %p122 = scmp.ne.s32.totalorder %s110, %s111
    %p123 = scmp.eq.s32.totalorder %s17, 1
    %p124 = por %p122, %p123
    %p126 = scmp.ne.s32.totalorder %s111, %s125
    %p127 = scmp.eq.s32.totalorder %s17, 0
    %p128 = por %p126, %p127
    %s129 = ssub.s32 %s11, %s18
    %p130 = scmp.eq.s32.totalorder %s129, 0
    %s132 = sadd.s32 %s131, 1
    %s133 = scalar_select %p130, %s131, %s132
    %p136 = pneg %p130
    %p137 = scmp.eq.s32.totalorder %s11, 1
    %p138 = por %p136, %p137
    %p139 = scmp.ne.s32.totalorder %s131, %s134
    %p140 = scmp.eq.s32.totalorder %s11, 0
    %p141 = por %p139, %p140
    %p142 = scmp.ne.s32.totalorder %s131, %s134
    %p143 = scmp.eq.s32.totalorder %s16, 1
    %p144 = por %p142, %p143
    %p145 = scmp.ne.s32.totalorder %s134, %s135
    %p146 = scmp.eq.s32.totalorder %s16, 0
    %p147 = por %p145, %p146
    %p148 = scmp.ne.s32.totalorder %s134, %s135
    %p149 = scmp.eq.s32.totalorder %s17, 1
    %p150 = por %p148, %p149
    %p152 = scmp.ne.s32.totalorder %s135, %s151
    %p153 = scmp.eq.s32.totalorder %s17, 0
    %p154 = por %p152, %p153
    %p155 = scmp.le.s32.totalorder 1, %s11
    %p156 = scmp.lt.s32.totalorder %s11, 3
    %p157 = pnand %p155, %p156
    %p158 = pneg %p157
    // Predicated region
    $region9: #{msdn_forward.3} parent=5 // pred_check
      _
    $region10: #{msdn_forward.3} parent=5 // pred_check_branch
      %160 = sbr.rel (%p157) target = $region12
    $region11: #{msdn_forward.3} parent=5 // pred_region
      %s161 = ssub.s32 %s11, 1
      // Predicated region
      $region13: #{msdn_forward.3} parent=11 // pred_check
        %p162 = pneg %p58
      $region14: #{msdn_forward.3} parent=11 // pred_check_branch
        %164 = sbr.rel (%p162) target = $region16
      $region15: #{msdn_forward.3} parent=11 // pred_region
        _
      $region16: #{msdn_forward.3} parent=11 // pred_fallthru
        _
      // Predicated region
      $region17: #{msdn_forward.3} parent=11 // pred_check
        %p165 = pneg %p79
      $region18: #{msdn_forward.3} parent=11 // pred_check_branch
        %167 = sbr.rel (%p165) target = $region20
      $region19: #{msdn_forward.3} parent=11 // pred_region
        _
      $region20: #{msdn_forward.3} parent=11 // pred_fallthru
        _
      // Predicated region
      $region21: #{msdn_forward.3} parent=11 // pred_check
        %p168 = pneg %p100
      $region22: #{msdn_forward.3} parent=11 // pred_check_branch
        %170 = sbr.rel (%p168) target = $region24
      $region23: #{msdn_forward.3} parent=11 // pred_region
        _
      $region24: #{msdn_forward.3} parent=11 // pred_fallthru
        _
      // Predicated region
      $region25: #{msdn_forward.3} parent=11 // pred_check
        %p171 = pneg %p121
      $region26: #{msdn_forward.3} parent=11 // pred_check_branch
        %173 = sbr.rel (%p171) target = $region28
      $region27: #{msdn_forward.3} parent=11 // pred_region
        _
      $region28: #{msdn_forward.3} parent=11 // pred_fallthru
        _
    $region12: #{msdn_forward.3} parent=5 // pred_fallthru
      _
    %p174 = scmp.lt.s32.totalorder %s11, 2
    // Predicated region
    $region29: #{msdn_forward.3} parent=5 // pred_check
      %p175 = pneg %p174
    $region30: #{msdn_forward.3} parent=5 // pred_check_branch
      %177 = sbr.rel (%p175) target = $region32
    $region31: #{msdn_forward.3} parent=5 // pred_region
      // Predicated region
      $region33: #{msdn_forward.3} parent=31 // pred_check
        %p178 = pneg %p31
      $region34: #{msdn_forward.3} parent=31 // pred_check_branch
        %180 = sbr.rel (%p178) target = $region36
      $region35: #{msdn_forward.3} parent=31 // pred_region
        %s181 = smul.u32 8, %s11
        %p182 = scmp.lt.s32.totalorder %s181, 15
        %s183 = scalar_select %p182, %s181, 15
        %s184 = smul.addr %s183, 8
        %s185 = scalar_lea.vmem %s0, %s184
        %s186 = smul.u32 8, %s11
      $region36: #{msdn_forward.3} parent=31 // pred_fallthru
        _
    $region32: #{msdn_forward.3} parent=5 // pred_fallthru
      _
    %p187 = scmp.le.s32.totalorder 1, %s11
    %p188 = scmp.lt.s32.totalorder %s11, 3
    %p189 = pnand %p187, %p188
    %p190 = pneg %p189
    // Predicated region
    $region37: #{msdn_forward.3} parent=5 // pred_check
      _
    $region38: #{msdn_forward.3} parent=5 // pred_check_branch
      %192 = sbr.rel (%p189) target = $region40
    $region39: #{msdn_forward.3} parent=5 // pred_region
      %s193 = ssub.s32 %s11, 1
      %s194 = smul.u32 8, %s16
      %p195 = scmp.lt.s32.totalorder %s194, 15
      %s196 = scalar_select %p195, %s194, 15
      %s197 = smul.addr %s196, 8
      %s198 = scalar_lea.vmem %s0, %s197
      %p199 = pneg %p37
      %p200 = pneg %p34
      %p201 = pneg %p58
      %p202 = pneg %p55
      %p203 = pneg %p79
      %p204 = pneg %p76
      %p205 = pneg %p100
      %p206 = pneg %p97
      %p207 = pneg %p121
      %p208 = pneg %p118
      %p209 = pneg %p147
      %p210 = pneg %p144
      %s211 = smul.u32 8, %s16
      %p212 = scmp.lt.s32.totalorder %s211, 15
      %s213 = scalar_select %p212, %s211, 15
      %s214 = smul.addr %s213, 4
      %s215 = scalar_lea.vmem %s5, %s214
      %s216 = smul.u32 8, %s16
      %p217 = scmp.lt.s32.totalorder %s216, 15
      %s218 = scalar_select %p217, %s216, 15
      %s219 = smul.addr %s218, 8
      %s220 = scalar_lea.vmem %s0, %s219
      %s221 = smul.u32 8, %s16
      %s222 = smul.u32 8, %s16
      %p223 = scmp.lt.s32.totalorder %s222, 15
      %s224 = scalar_select %p223, %s222, 15
      %s225 = smul.addr %s224, 4
      %s226 = scalar_lea.vmem %s5, %s225
      %s227 = smul.u32 8, %s16
      %v229 = vld [vmem:[%s1] sm:$0xff]
      %v230 = vld [vmem:[%s1 + $0x8] sm:$0xff]
      %v231 = vld [vmem:[%s1 + $0x10] sm:$0xff]
      %v232 = vld [vmem:[%s1 + $0x18] sm:$0xff]
      %v233 = vld [vmem:[%s1 + $0x20] sm:$0xff]
      %v234 = vld [vmem:[%s1 + $0x28] sm:$0xff]
      %v235 = vld [vmem:[%s1 + $0x30] sm:$0xff]
      %v236 = vld [vmem:[%s1 + $0x38] sm:$0xff]
      %v237 = vld [vmem:[%s1 + $0x40] sm:$0x1]
      %v238 = vld [vmem:[%s1 + $0x48] sm:$0x1]
      %v239 = vld [vmem:[%s1 + $0x50] sm:$0x1]
      %v240 = vld [vmem:[%s1 + $0x58] sm:$0x1]
      %v241 = vld [vmem:[%s1 + $0x60] sm:$0x1]
      %v242 = vld [vmem:[%s1 + $0x68] sm:$0x1]
      %v243 = vld [vmem:[%s1 + $0x70] sm:$0x1]
      %v244 = vld [vmem:[%s1 + $0x78] sm:$0x1]
      %v245 = vld [vmem:[%s220] sm:$0xff]
      %v246 = vld [vmem:[%s220 + $0x8] sm:$0xff]
      %v247 = vld [vmem:[%s220 + $0x10] sm:$0xff]
      %v248 = vld [vmem:[%s220 + $0x18] sm:$0xff]
      %v249 = vld [vmem:[%s220 + $0x20] sm:$0xff]
      %v250 = vld [vmem:[%s220 + $0x28] sm:$0xff]
      %v251 = vld [vmem:[%s220 + $0x30] sm:$0xff]
      %v252 = vld [vmem:[%s220 + $0x38] sm:$0xff]
      %v253 = vld [vmem:[%s2] sm:$0x3]
      %v254 = vld [vmem:[%s3] sm:$0x7]
      %255 = vrot.lane.b32.xlu0 %v245, 33
      %v256 = vpop.permute.xlu0 %255
      %257 = vrot.lane.b32.xlu0 %v246, 33
      %v258 = vpop.permute.xlu0 %257
      %259 = vrot.lane.b32.xlu0 %v247, 33
      %v260 = vpop.permute.xlu0 %259
      %261 = vrot.lane.b32.xlu0 %v248, 33
      %v262 = vpop.permute.xlu0 %261
      %263 = vrot.lane.b32.xlu0 %v249, 33
      %v264 = vpop.permute.xlu0 %263
      %265 = vrot.lane.b32.xlu0 %v250, 33
      %v266 = vpop.permute.xlu0 %265
      %267 = vrot.lane.b32.xlu0 %v251, 33
      %v268 = vpop.permute.xlu0 %267
      %269 = vrot.lane.b32.xlu0 %v252, 33
      %v270 = vpop.permute.xlu0 %269
      %v271 = vlaneseq
      %v272 = vand.u32 %v271, 127
      %vm273 = vcmp.lt.s32.totalorder %v272, 33
      %v274 = vsel %vm273, %v268, %v270
      %v275 = vsel %vm273, %v266, %v268
      %v276 = vsel %vm273, %v264, %v266
      %v277 = vsel %vm273, %v262, %v264
      %v278 = vsel %vm273, %v260, %v262
      %v279 = vsel %vm273, %v258, %v260
      %v280 = vsel %vm273, %v256, %v258
      %v281 = vsel %vm273, %v270, %v256
      %v282 = vlaneseq
      %v283 = vshrl.u32 %v282, 7
      %v284 = vsub.s32 0, %v283
      %v285 = vrot.slane %v229, %v284
      %v286 = vlaneseq
      %v287 = vshrl.u32 %v286, 7
      %v288 = vsub.s32 0, %v287
      %v289 = vrot.slane %v230, %v288
      %v290 = vlaneseq
      %v291 = vshrl.u32 %v290, 7
      %v292 = vsub.s32 0, %v291
      %v293 = vrot.slane %v231, %v292
      %v294 = vlaneseq
      %v295 = vshrl.u32 %v294, 7
      %v296 = vsub.s32 0, %v295
      %v297 = vrot.slane %v232, %v296
      %v298 = vlaneseq
      %v299 = vshrl.u32 %v298, 7
      %v300 = vsub.s32 0, %v299
      %v301 = vrot.slane %v233, %v300
      %v302 = vlaneseq
      %v303 = vshrl.u32 %v302, 7
      %v304 = vsub.s32 0, %v303
      %v305 = vrot.slane %v234, %v304
      %v306 = vlaneseq
      %v307 = vshrl.u32 %v306, 7
      %v308 = vsub.s32 0, %v307
      %v309 = vrot.slane %v235, %v308
      %v310 = vlaneseq
      %v311 = vshrl.u32 %v310, 7
      %v312 = vsub.s32 0, %v311
      %v313 = vrot.slane %v236, %v312
      %v314 = vmul.f32 %v281, %v285
      %v315 = vmul.f32 %v280, %v289
      %v316 = vmul.f32 %v279, %v293
      %v317 = vmul.f32 %v278, %v297
      %v318 = vmul.f32 %v277, %v301
      %v319 = vmul.f32 %v276, %v305
      %v320 = vmul.f32 %v275, %v309
      %v321 = vmul.f32 %v274, %v313
      %322 = vrot.lane.b32.xlu0 %v245, 32
      %v323 = vpop.permute.xlu0 %322
      %324 = vrot.lane.b32.xlu0 %v246, 32
      %v325 = vpop.permute.xlu0 %324
      %326 = vrot.lane.b32.xlu0 %v247, 32
      %v327 = vpop.permute.xlu0 %326
      %328 = vrot.lane.b32.xlu0 %v248, 32
      %v329 = vpop.permute.xlu0 %328
      %330 = vrot.lane.b32.xlu0 %v249, 32
      %v331 = vpop.permute.xlu0 %330
      %332 = vrot.lane.b32.xlu0 %v250, 32
      %v333 = vpop.permute.xlu0 %332
      %334 = vrot.lane.b32.xlu0 %v251, 32
      %v335 = vpop.permute.xlu0 %334
      %336 = vrot.lane.b32.xlu0 %v252, 32
      %v337 = vpop.permute.xlu0 %336
      %vm338 = vcmp.lt.s32.totalorder %v272, 32
      %v339 = vsel %vm338, %v335, %v337
      %v340 = vsel %vm338, %v333, %v335
      %v341 = vsel %vm338, %v331, %v333
      %v342 = vsel %vm338, %v329, %v331
      %v343 = vsel %vm338, %v327, %v329
      %v344 = vsel %vm338, %v325, %v327
      %v345 = vsel %vm338, %v323, %v325
      %v346 = vsel %vm338, %v337, %v323
      %v347 = vlaneseq
      %v348 = vshrl.u32 %v347, 7
      %v349 = vsub.s32 1, %v348
      %v350 = vrot.slane %v229, %v349
      %v351 = vlaneseq
      %v352 = vshrl.u32 %v351, 7
      %v353 = vsub.s32 1, %v352
      %v354 = vrot.slane %v230, %v353
      %v355 = vlaneseq
      %v356 = vshrl.u32 %v355, 7
      %v357 = vsub.s32 1, %v356
      %v358 = vrot.slane %v231, %v357
      %v359 = vlaneseq
      %v360 = vshrl.u32 %v359, 7
      %v361 = vsub.s32 1, %v360
      %v362 = vrot.slane %v232, %v361
      %v363 = vlaneseq
      %v364 = vshrl.u32 %v363, 7
      %v365 = vsub.s32 1, %v364
      %v366 = vrot.slane %v233, %v365
      %v367 = vlaneseq
      %v368 = vshrl.u32 %v367, 7
      %v369 = vsub.s32 1, %v368
      %v370 = vrot.slane %v234, %v369
      %v371 = vlaneseq
      %v372 = vshrl.u32 %v371, 7
      %v373 = vsub.s32 1, %v372
      %v374 = vrot.slane %v235, %v373
      %v375 = vlaneseq
      %v376 = vshrl.u32 %v375, 7
      %v377 = vsub.s32 1, %v376
      %v378 = vrot.slane %v236, %v377
      %v379 = vmul.f32 %v346, %v350
      %v380 = vmul.f32 %v345, %v354
      %v381 = vmul.f32 %v344, %v358
      %v382 = vmul.f32 %v343, %v362
      %v383 = vmul.f32 %v342, %v366
      %v384 = vmul.f32 %v341, %v370
      %v385 = vmul.f32 %v340, %v374
      %v386 = vmul.f32 %v339, %v378
      %387 = vrot.lane.b32.xlu0 %v245, 31
      %v388 = vpop.permute.xlu0 %387
      %389 = vrot.lane.b32.xlu0 %v246, 31
      %v390 = vpop.permute.xlu0 %389
      %391 = vrot.lane.b32.xlu0 %v247, 31
      %v392 = vpop.permute.xlu0 %391
      %393 = vrot.lane.b32.xlu0 %v248, 31
      %v394 = vpop.permute.xlu0 %393
      %395 = vrot.lane.b32.xlu0 %v249, 31
      %v396 = vpop.permute.xlu0 %395
      %397 = vrot.lane.b32.xlu0 %v250, 31
      %v398 = vpop.permute.xlu0 %397
      %399 = vrot.lane.b32.xlu0 %v251, 31
      %v400 = vpop.permute.xlu0 %399
      %401 = vrot.lane.b32.xlu0 %v252, 31
      %v402 = vpop.permute.xlu0 %401
      %vm403 = vcmp.lt.s32.totalorder %v272, 31
      %v404 = vsel %vm403, %v400, %v402
      %v405 = vsel %vm403, %v398, %v400
      %v406 = vsel %vm403, %v396, %v398
      %v407 = vsel %vm403, %v394, %v396
      %v408 = vsel %vm403, %v392, %v394
      %v409 = vsel %vm403, %v390, %v392
      %v410 = vsel %vm403, %v388, %v390
      %v411 = vsel %vm403, %v402, %v388
      %v412 = vlaneseq
      %v413 = vshrl.u32 %v412, 7
      %v414 = vsub.s32 2, %v413
      %v415 = vrot.slane %v229, %v414
      %v416 = vlaneseq
      %v417 = vshrl.u32 %v416, 7
      %v418 = vsub.s32 2, %v417
      %v419 = vrot.slane %v230, %v418
      %v420 = vlaneseq
      %v421 = vshrl.u32 %v420, 7
      %v422 = vsub.s32 2, %v421
      %v423 = vrot.slane %v231, %v422
      %v424 = vlaneseq
      %v425 = vshrl.u32 %v424, 7
      %v426 = vsub.s32 2, %v425
      %v427 = vrot.slane %v232, %v426
      %v428 = vlaneseq
      %v429 = vshrl.u32 %v428, 7
      %v430 = vsub.s32 2, %v429
      %v431 = vrot.slane %v233, %v430
      %v432 = vlaneseq
      %v433 = vshrl.u32 %v432, 7
      %v434 = vsub.s32 2, %v433
      %v435 = vrot.slane %v234, %v434
      %v436 = vlaneseq
      %v437 = vshrl.u32 %v436, 7
      %v438 = vsub.s32 2, %v437
      %v439 = vrot.slane %v235, %v438
      %v440 = vlaneseq
      %v441 = vshrl.u32 %v440, 7
      %v442 = vsub.s32 2, %v441
      %v443 = vrot.slane %v236, %v442
      %v444 = vmul.f32 %v411, %v415
      %v445 = vmul.f32 %v410, %v419
      %v446 = vmul.f32 %v409, %v423
      %v447 = vmul.f32 %v408, %v427
      %v448 = vmul.f32 %v407, %v431
      %v449 = vmul.f32 %v406, %v435
      %v450 = vmul.f32 %v405, %v439
      %v451 = vmul.f32 %v404, %v443
      %452 = vrot.lane.b32.xlu0 %v245, 1
      %v453 = vpop.permute.xlu0 %452
      %454 = vrot.lane.b32.xlu0 %v246, 1
      %v455 = vpop.permute.xlu0 %454
      %456 = vrot.lane.b32.xlu0 %v247, 1
      %v457 = vpop.permute.xlu0 %456
      %458 = vrot.lane.b32.xlu0 %v248, 1
      %v459 = vpop.permute.xlu0 %458
      %460 = vrot.lane.b32.xlu0 %v249, 1
      %v461 = vpop.permute.xlu0 %460
      %462 = vrot.lane.b32.xlu0 %v250, 1
      %v463 = vpop.permute.xlu0 %462
      %464 = vrot.lane.b32.xlu0 %v251, 1
      %v465 = vpop.permute.xlu0 %464
      %466 = vrot.lane.b32.xlu0 %v252, 1
      %v467 = vpop.permute.xlu0 %466
      %vm468 = vcmp.lt.s32.totalorder %v272, 1
      %v469 = vsel %vm468, %v465, %v467
      %v470 = vsel %vm468, %v463, %v465
      %v471 = vsel %vm468, %v461, %v463
      %v472 = vsel %vm468, %v459, %v461
      %v473 = vsel %vm468, %v457, %v459
      %v474 = vsel %vm468, %v455, %v457
      %v475 = vsel %vm468, %v453, %v455
      %v476 = vsel %vm468, %v467, %v453
      %v477 = vlaneseq
      %v478 = vshrl.u32 %v477, 7
      %v479 = vsub.s32 3, %v478
      %v480 = vrot.slane %v229, %v479
      %v481 = vlaneseq
      %v482 = vshrl.u32 %v481, 7
      %v483 = vsub.s32 3, %v482
      %v484 = vrot.slane %v230, %v483
      %v485 = vlaneseq
      %v486 = vshrl.u32 %v485, 7
      %v487 = vsub.s32 3, %v486
      %v488 = vrot.slane %v231, %v487
      %v489 = vlaneseq
      %v490 = vshrl.u32 %v489, 7
      %v491 = vsub.s32 3, %v490
      %v492 = vrot.slane %v232, %v491
      %v493 = vlaneseq
      %v494 = vshrl.u32 %v493, 7
      %v495 = vsub.s32 3, %v494
      %v496 = vrot.slane %v233, %v495
      %v497 = vlaneseq
      %v498 = vshrl.u32 %v497, 7
      %v499 = vsub.s32 3, %v498
      %v500 = vrot.slane %v234, %v499
      %v501 = vlaneseq
      %v502 = vshrl.u32 %v501, 7
      %v503 = vsub.s32 3, %v502
      %v504 = vrot.slane %v235, %v503
      %v505 = vlaneseq
      %v506 = vshrl.u32 %v505, 7
      %v507 = vsub.s32 3, %v506
      %v508 = vrot.slane %v236, %v507
      %v509 = vmul.f32 %v476, %v480
      %v510 = vmul.f32 %v475, %v484
      %v511 = vmul.f32 %v474, %v488
      %v512 = vmul.f32 %v473, %v492
      %v513 = vmul.f32 %v472, %v496
      %v514 = vmul.f32 %v471, %v500
      %v515 = vmul.f32 %v470, %v504
      %v516 = vmul.f32 %v469, %v508
      %517 = vrot.lane.b32.xlu0 %v245, 127
      %v518 = vpop.permute.xlu0 %517
      %519 = vrot.lane.b32.xlu0 %v246, 127
      %v520 = vpop.permute.xlu0 %519
      %521 = vrot.lane.b32.xlu0 %v247, 127
      %v522 = vpop.permute.xlu0 %521
      %523 = vrot.lane.b32.xlu0 %v248, 127
      %v524 = vpop.permute.xlu0 %523
      %525 = vrot.lane.b32.xlu0 %v249, 127
      %v526 = vpop.permute.xlu0 %525
      %527 = vrot.lane.b32.xlu0 %v250, 127
      %v528 = vpop.permute.xlu0 %527
      %529 = vrot.lane.b32.xlu0 %v251, 127
      %v530 = vpop.permute.xlu0 %529
      %531 = vrot.lane.b32.xlu0 %v252, 127
      %v532 = vpop.permute.xlu0 %531
      %vm533 = vcmp.lt.s32.totalorder %v272, 127
      %v534 = vsel %vm533, %v530, %v532
      %v535 = vsel %vm533, %v528, %v530
      %v536 = vsel %vm533, %v526, %v528
      %v537 = vsel %vm533, %v524, %v526
      %v538 = vsel %vm533, %v522, %v524
      %v539 = vsel %vm533, %v520, %v522
      %v540 = vsel %vm533, %v518, %v520
      %v541 = vsel %vm533, %v532, %v518
      %v542 = vlaneseq
      %v543 = vshrl.u32 %v542, 7
      %v544 = vsub.s32 5, %v543
      %v545 = vrot.slane %v229, %v544
      %v546 = vlaneseq
      %v547 = vshrl.u32 %v546, 7
      %v548 = vsub.s32 5, %v547
      %v549 = vrot.slane %v230, %v548
      %v550 = vlaneseq
      %v551 = vshrl.u32 %v550, 7
      %v552 = vsub.s32 5, %v551
      %v553 = vrot.slane %v231, %v552
      %v554 = vlaneseq
      %v555 = vshrl.u32 %v554, 7
      %v556 = vsub.s32 5, %v555
      %v557 = vrot.slane %v232, %v556
      %v558 = vlaneseq
      %v559 = vshrl.u32 %v558, 7
      %v560 = vsub.s32 5, %v559
      %v561 = vrot.slane %v233, %v560
      %v562 = vlaneseq
      %v563 = vshrl.u32 %v562, 7
      %v564 = vsub.s32 5, %v563
      %v565 = vrot.slane %v234, %v564
      %v566 = vlaneseq
      %v567 = vshrl.u32 %v566, 7
      %v568 = vsub.s32 5, %v567
      %v569 = vrot.slane %v235, %v568
      %v570 = vlaneseq
      %v571 = vshrl.u32 %v570, 7
      %v572 = vsub.s32 5, %v571
      %v573 = vrot.slane %v236, %v572
      %v574 = vmul.f32 %v540, %v545
      %v575 = vmul.f32 %v539, %v549
      %v576 = vmul.f32 %v538, %v553
      %v577 = vmul.f32 %v537, %v557
      %v578 = vmul.f32 %v536, %v561
      %v579 = vmul.f32 %v535, %v565
      %v580 = vmul.f32 %v534, %v569
      %v581 = vmul.f32 %v541, %v573
      %582 = vrot.lane.b32.xlu0 %v245, 97
      %v583 = vpop.permute.xlu0 %582
      %584 = vrot.lane.b32.xlu0 %v246, 97
      %v585 = vpop.permute.xlu0 %584
      %586 = vrot.lane.b32.xlu0 %v247, 97
      %v587 = vpop.permute.xlu0 %586
      %588 = vrot.lane.b32.xlu0 %v248, 97
      %v589 = vpop.permute.xlu0 %588
      %590 = vrot.lane.b32.xlu0 %v249, 97
      %v591 = vpop.permute.xlu0 %590
      %592 = vrot.lane.b32.xlu0 %v250, 97
      %v593 = vpop.permute.xlu0 %592
      %594 = vrot.lane.b32.xlu0 %v251, 97
      %v595 = vpop.permute.xlu0 %594
      %596 = vrot.lane.b32.xlu0 %v252, 97
      %v597 = vpop.permute.xlu0 %596
      %vm598 = vcmp.lt.s32.totalorder %v272, 97
      %v599 = vsel %vm598, %v595, %v597
      %v600 = vsel %vm598, %v593, %v595
      %v601 = vsel %vm598, %v591, %v593
      %v602 = vsel %vm598, %v589, %v591
      %v603 = vsel %vm598, %v587, %v589
      %v604 = vsel %vm598, %v585, %v587
      %v605 = vsel %vm598, %v583, %v585
      %v606 = vsel %vm598, %v597, %v583
      %v607 = vlaneseq
      %v608 = vshrl.u32 %v607, 7
      %v609 = vsub.s32 6, %v608
      %v610 = vrot.slane %v229, %v609
      %v611 = vlaneseq
      %v612 = vshrl.u32 %v611, 7
      %v613 = vsub.s32 6, %v612
      %v614 = vrot.slane %v230, %v613
      %v615 = vlaneseq
      %v616 = vshrl.u32 %v615, 7
      %v617 = vsub.s32 6, %v616
      %v618 = vrot.slane %v231, %v617
      %v619 = vlaneseq
      %v620 = vshrl.u32 %v619, 7
      %v621 = vsub.s32 6, %v620
      %v622 = vrot.slane %v232, %v621
      %v623 = vlaneseq
      %v624 = vshrl.u32 %v623, 7
      %v625 = vsub.s32 6, %v624
      %v626 = vrot.slane %v233, %v625
      %v627 = vlaneseq
      %v628 = vshrl.u32 %v627, 7
      %v629 = vsub.s32 6, %v628
      %v630 = vrot.slane %v234, %v629
      %v631 = vlaneseq
      %v632 = vshrl.u32 %v631, 7
      %v633 = vsub.s32 6, %v632
      %v634 = vrot.slane %v235, %v633
      %v635 = vlaneseq
      %v636 = vshrl.u32 %v635, 7
      %v637 = vsub.s32 6, %v636
      %v638 = vrot.slane %v236, %v637
      %v639 = vmul.f32 %v605, %v610
      %v640 = vmul.f32 %v604, %v614
      %v641 = vmul.f32 %v603, %v618
      %v642 = vmul.f32 %v602, %v622
      %v643 = vmul.f32 %v601, %v626
      %v644 = vmul.f32 %v600, %v630
      %v645 = vmul.f32 %v599, %v634
      %v646 = vmul.f32 %v606, %v638
      %647 = vrot.lane.b32.xlu0 %v245, 96
      %v648 = vpop.permute.xlu0 %647
      %649 = vrot.lane.b32.xlu0 %v246, 96
      %v650 = vpop.permute.xlu0 %649
      %651 = vrot.lane.b32.xlu0 %v247, 96
      %v652 = vpop.permute.xlu0 %651
      %653 = vrot.lane.b32.xlu0 %v248, 96
      %v654 = vpop.permute.xlu0 %653
      %655 = vrot.lane.b32.xlu0 %v249, 96
      %v656 = vpop.permute.xlu0 %655
      %657 = vrot.lane.b32.xlu0 %v250, 96
      %v658 = vpop.permute.xlu0 %657
      %659 = vrot.lane.b32.xlu0 %v251, 96
      %v660 = vpop.permute.xlu0 %659
      %661 = vrot.lane.b32.xlu0 %v252, 96
      %v662 = vpop.permute.xlu0 %661
      %vm663 = vcmp.lt.s32.totalorder %v272, 96
      %v664 = vsel %vm663, %v660, %v662
      %v665 = vsel %vm663, %v658, %v660
      %v666 = vsel %vm663, %v656, %v658
      %v667 = vsel %vm663, %v654, %v656
      %v668 = vsel %vm663, %v652, %v654
      %v669 = vsel %vm663, %v650, %v652
      %v670 = vsel %vm663, %v648, %v650
      %v671 = vsel %vm663, %v662, %v648
      %v672 = vlaneseq
      %v673 = vshrl.u32 %v672, 7
      %v674 = vsub.s32 7, %v673
      %v675 = vrot.slane %v229, %v674
      %v676 = vlaneseq
      %v677 = vshrl.u32 %v676, 7
      %v678 = vsub.s32 7, %v677
      %v679 = vrot.slane %v230, %v678
      %v680 = vlaneseq
      %v681 = vshrl.u32 %v680, 7
      %v682 = vsub.s32 7, %v681
      %v683 = vrot.slane %v231, %v682
      %v684 = vlaneseq
      %v685 = vshrl.u32 %v684, 7
      %v686 = vsub.s32 7, %v685
      %v687 = vrot.slane %v232, %v686
      %v688 = vlaneseq
      %v689 = vshrl.u32 %v688, 7
      %v690 = vsub.s32 7, %v689
      %v691 = vrot.slane %v233, %v690
      %v692 = vlaneseq
      %v693 = vshrl.u32 %v692, 7
      %v694 = vsub.s32 7, %v693
      %v695 = vrot.slane %v234, %v694
      %v696 = vlaneseq
      %v697 = vshrl.u32 %v696, 7
      %v698 = vsub.s32 7, %v697
      %v699 = vrot.slane %v235, %v698
      %v700 = vlaneseq
      %v701 = vshrl.u32 %v700, 7
      %v702 = vsub.s32 7, %v701
      %v703 = vrot.slane %v236, %v702
      %v704 = vmul.f32 %v670, %v675
      %v705 = vmul.f32 %v669, %v679
      %v706 = vmul.f32 %v668, %v683
      %v707 = vmul.f32 %v667, %v687
      %v708 = vmul.f32 %v666, %v691
      %v709 = vmul.f32 %v665, %v695
      %v710 = vmul.f32 %v664, %v699
      %v711 = vmul.f32 %v671, %v703
      %712 = vrot.lane.b32.xlu0 %v245, 95
      %v713 = vpop.permute.xlu0 %712
      %714 = vrot.lane.b32.xlu0 %v246, 95
      %v715 = vpop.permute.xlu0 %714
      %716 = vrot.lane.b32.xlu0 %v247, 95
      %v717 = vpop.permute.xlu0 %716
      %718 = vrot.lane.b32.xlu0 %v248, 95
      %v719 = vpop.permute.xlu0 %718
      %720 = vrot.lane.b32.xlu0 %v249, 95
      %v721 = vpop.permute.xlu0 %720
      %722 = vrot.lane.b32.xlu0 %v250, 95
      %v723 = vpop.permute.xlu0 %722
      %724 = vrot.lane.b32.xlu0 %v251, 95
      %v725 = vpop.permute.xlu0 %724
      %726 = vrot.lane.b32.xlu0 %v252, 95
      %v727 = vpop.permute.xlu0 %726
      %vm728 = vcmp.lt.s32.totalorder %v272, 95
      %v729 = vsel %vm728, %v725, %v727
      %v730 = vsel %vm728, %v723, %v725
      %v731 = vsel %vm728, %v721, %v723
      %v732 = vsel %vm728, %v719, %v721
      %v733 = vsel %vm728, %v717, %v719
      %v734 = vsel %vm728, %v715, %v717
      %v735 = vsel %vm728, %v713, %v715
      %v736 = vsel %vm728, %v727, %v713
      %v737 = vlaneseq
      %v738 = vshrl.u32 %v737, 7
      %v739 = vsub.s32 0, %v738
      %v740 = vrot.slane %v237, %v739
      %v741 = vlaneseq
      %v742 = vshrl.u32 %v741, 7
      %v743 = vsub.s32 0, %v742
      %v744 = vrot.slane %v238, %v743
      %v745 = vlaneseq
      %v746 = vshrl.u32 %v745, 7
      %v747 = vsub.s32 0, %v746
      %v748 = vrot.slane %v239, %v747
      %v749 = vlaneseq
      %v750 = vshrl.u32 %v749, 7
      %v751 = vsub.s32 0, %v750
      %v752 = vrot.slane %v240, %v751
      %v753 = vlaneseq
      %v754 = vshrl.u32 %v753, 7
      %v755 = vsub.s32 0, %v754
      %v756 = vrot.slane %v241, %v755
      %v757 = vlaneseq
      %v758 = vshrl.u32 %v757, 7
      %v759 = vsub.s32 0, %v758
      %v760 = vrot.slane %v242, %v759
      %v761 = vlaneseq
      %v762 = vshrl.u32 %v761, 7
      %v763 = vsub.s32 0, %v762
      %v764 = vrot.slane %v243, %v763
      %v765 = vlaneseq
      %v766 = vshrl.u32 %v765, 7
      %v767 = vsub.s32 0, %v766
      %v768 = vrot.slane %v244, %v767
      %v769 = vmul.f32 %v735, %v740
      %v770 = vmul.f32 %v734, %v744
      %v771 = vmul.f32 %v733, %v748
      %v772 = vmul.f32 %v732, %v752
      %v773 = vmul.f32 %v731, %v756
      %v774 = vmul.f32 %v730, %v760
      %v775 = vmul.f32 %v729, %v764
      %v776 = vmul.f32 %v736, %v768
      %v777 = vpack.c.bf16 %v379, %v314
      %v778 = vpack.c.bf16 %v380, %v315
      %v779 = vpack.c.bf16 %v381, %v316
      %v780 = vpack.c.bf16 %v382, %v317
      %v781 = vpack.c.bf16 %v383, %v318
      %v782 = vpack.c.bf16 %v384, %v319
      %v783 = vpack.c.bf16 %v385, %v320
      %v784 = vpack.c.bf16 %v386, %v321
      %v785 = vpack.c.bf16 %v509, %v444
      %v786 = vpack.c.bf16 %v510, %v445
      %v787 = vpack.c.bf16 %v511, %v446
      %v788 = vpack.c.bf16 %v512, %v447
      %v789 = vpack.c.bf16 %v513, %v448
      %v790 = vpack.c.bf16 %v514, %v449
      %v791 = vpack.c.bf16 %v515, %v450
      %v792 = vpack.c.bf16 %v516, %v451
      %v793 = vpack.c.bf16 %v574, %v245
      %v794 = vpack.c.bf16 %v575, %v246
      %v795 = vpack.c.bf16 %v576, %v247
      %v796 = vpack.c.bf16 %v577, %v248
      %v797 = vpack.c.bf16 %v578, %v249
      %v798 = vpack.c.bf16 %v579, %v250
      %v799 = vpack.c.bf16 %v580, %v251
      %v800 = vpack.c.bf16 %v581, %v252
      %v801 = vpack.c.bf16 %v704, %v639
      %v802 = vpack.c.bf16 %v705, %v640
      %v803 = vpack.c.bf16 %v706, %v641
      %v804 = vpack.c.bf16 %v707, %v642
      %v805 = vpack.c.bf16 %v708, %v643
      %v806 = vpack.c.bf16 %v709, %v644
      %v807 = vpack.c.bf16 %v710, %v645
      %v808 = vpack.c.bf16 %v711, %v646
      %v809 = vpack.c.bf16 %v769, %v769
      %v810 = vpack.c.bf16 %v770, %v770
      %v811 = vpack.c.bf16 %v771, %v771
      %v812 = vpack.c.bf16 %v772, %v772
      %v813 = vpack.c.bf16 %v773, %v773
      %v814 = vpack.c.bf16 %v774, %v774
      %v815 = vpack.c.bf16 %v775, %v775
      %v816 = vpack.c.bf16 %v776, %v776
      %818 = vset.pattern.permute.xlu0 0
      %819 = vperm.xlu0 %818, %v254
      %v820 = vpop.permute.xlu0 %819
      %vm822 = vcmask 588800
      %v824 = vsel %vm822, %v253, 0
      %vm826 = vcmask 1043456
      %v828 = vsel %vm826, %v809, 0
      %v831 = vsel %vm826, %v810, 0
      %v834 = vsel %vm826, %v811, 0
      %v837 = vsel %vm826, %v812, 0
      %v840 = vsel %vm826, %v813, 0
      %v843 = vsel %vm826, %v814, 0
      %v846 = vsel %vm826, %v815, 0
      %v849 = vsel %vm826, %v816, 0
      %851 = vmatprep.subr.bf16.mxu0 %v778
      %852 = vmatpush1.bf16.msra.mxu0 %v777
      %853 = vmatprep.subr.bf16.mxu0 %v786
      %854 = vmatpush1.bf16.msra.mxu0 %v785
      %855 = vmatprep.subr.bf16.mxu0 %v794
      %856 = vmatpush1.bf16.msra.mxu0 %v793
      %857 = vmatprep.subr.bf16.mxu0 %v802
      %858 = vmatpush1.bf16.msra.mxu0 %v801
      %859 = vmatprep.subr.bf16.mxu0 %v831
      %860 = vmatpush1.bf16.msra.mxu0 %v828
      %861 = vmatprep.subr.bf16.mxu0 0
      %862 = vmatpush1.bf16.msra.mxu0 0
      %863 = vmatprep.subr.bf16.mxu0 0
      %864 = vmatpush1.bf16.msra.mxu0 0
      %865 = vmatprep.subr.bf16.mxu0 0
      %866 = vmatpush1.bf16.msra.mxu0 0
      %867 = vmatprep.subr.bf16.mxu0 0
      %868 = vmatpush1.bf16.msra.mxu0 0
      %869 = vmatprep.subr.bf16.mxu0 0
      %870 = vmatpush1.bf16.msra.mxu0 0
      %871 = vmatprep.subr.bf16.mxu0 0
      %872 = vmatpush1.bf16.msra.mxu0 0
      %873 = vmatprep.subr.bf16.mxu0 0
      %874 = vmatpush1.bf16.msra.mxu0 0
      %875 = vmatprep.subr.bf16.mxu0 0
      %876 = vmatpush1.bf16.msra.mxu0 0
      %877 = vmatprep.subr.bf16.mxu0 0
      %878 = vmatpush1.bf16.msra.mxu0 0
      %879 = vmatprep.subr.bf16.mxu0 0
      %880 = vmatpush1.bf16.msra.mxu0 0
      %881 = vmatprep.subr.bf16.mxu0 0
      %882 = vmatpush1.bf16.msra.mxu0 0
      %883 = vmatprep.mubr.bf16.mxu0 0
      %884 = vmatmul.mubr.bf16.gmra.mrb[0].mxu0 %v824
      %v885 = vpop.f32.mrb[0].mxu0
      %v886 = vadd.f32 %v820, %v885
      %v887 = vpop.f32.mrb[0].mxu0
      %v888 = vadd.f32 %v820, %v887
      %v889 = vpop.f32.mrb[0].mxu0
      %v890 = vpop.f32.mrb[0].mxu0
      %891 = vdwg.mxu0
      %892 = vmatprep.subr.bf16.mxu0 %v780
      %893 = vmatpush1.bf16.msra.mxu0 %v779
      %894 = vmatprep.subr.bf16.mxu0 %v788
      %895 = vmatpush1.bf16.msra.mxu0 %v787
      %896 = vmatprep.subr.bf16.mxu0 %v796
      %897 = vmatpush1.bf16.msra.mxu0 %v795
      %898 = vmatprep.subr.bf16.mxu0 %v804
      %899 = vmatpush1.bf16.msra.mxu0 %v803
      %900 = vmatprep.subr.bf16.mxu0 %v837
      %901 = vmatpush1.bf16.msra.mxu0 %v834
      %902 = vmatprep.subr.bf16.mxu0 0
      %903 = vmatpush1.bf16.msra.mxu0 0
      %904 = vmatprep.subr.bf16.mxu0 0
      %905 = vmatpush1.bf16.msra.mxu0 0
      %906 = vmatprep.subr.bf16.mxu0 0
      %907 = vmatpush1.bf16.msra.mxu0 0
      %908 = vmatprep.subr.bf16.mxu0 0
      %909 = vmatpush1.bf16.msra.mxu0 0
      %910 = vmatprep.subr.bf16.mxu0 0
      %911 = vmatpush1.bf16.msra.mxu0 0
      %912 = vmatprep.subr.bf16.mxu0 0
      %913 = vmatpush1.bf16.msra.mxu0 0
      %914 = vmatprep.subr.bf16.mxu0 0
      %915 = vmatpush1.bf16.msra.mxu0 0
      %916 = vmatprep.subr.bf16.mxu0 0
      %917 = vmatpush1.bf16.msra.mxu0 0
      %918 = vmatprep.subr.bf16.mxu0 0
      %919 = vmatpush1.bf16.msra.mxu0 0
      %920 = vmatprep.subr.bf16.mxu0 0
      %921 = vmatpush1.bf16.msra.mxu0 0
      %922 = vmatprep.subr.bf16.mxu0 0
      %923 = vmatpush1.bf16.msra.mxu0 0
      %924 = vmatprep.mubr.bf16.mxu0 0
      %925 = vmatmul.mubr.bf16.gmra.mrb[0].mxu0 %v824
      %v926 = vpop.f32.mrb[0].mxu0
      %v927 = vadd.f32 %v820, %v926
      %v928 = vpop.f32.mrb[0].mxu0
      %v929 = vadd.f32 %v820, %v928
      %v930 = vpop.f32.mrb[0].mxu0
      %v931 = vpop.f32.mrb[0].mxu0
      %932 = vdwg.mxu0
      %933 = vmatprep.subr.bf16.mxu0 %v782
      %934 = vmatpush1.bf16.msra.mxu0 %v781
      %935 = vmatprep.subr.bf16.mxu0 %v790
      %936 = vmatpush1.bf16.msra.mxu0 %v789
      %937 = vmatprep.subr.bf16.mxu0 %v798
      %938 = vmatpush1.bf16.msra.mxu0 %v797
      %939 = vmatprep.subr.bf16.mxu0 %v806
      %940 = vmatpush1.bf16.msra.mxu0 %v805
      %941 = vmatprep.subr.bf16.mxu0 %v843
      %942 = vmatpush1.bf16.msra.mxu0 %v840
      %943 = vmatprep.subr.bf16.mxu0 0
      %944 = vmatpush1.bf16.msra.mxu0 0
      %945 = vmatprep.subr.bf16.mxu0 0
      %946 = vmatpush1.bf16.msra.mxu0 0
      %947 = vmatprep.subr.bf16.mxu0 0
      %948 = vmatpush1.bf16.msra.mxu0 0
      %949 = vmatprep.subr.bf16.mxu0 0
      %950 = vmatpush1.bf16.msra.mxu0 0
      %951 = vmatprep.subr.bf16.mxu0 0
      %952 = vmatpush1.bf16.msra.mxu0 0
      %953 = vmatprep.subr.bf16.mxu0 0
      %954 = vmatpush1.bf16.msra.mxu0 0
      %955 = vmatprep.subr.bf16.mxu0 0
      %956 = vmatpush1.bf16.msra.mxu0 0
      %957 = vmatprep.subr.bf16.mxu0 0
      %958 = vmatpush1.bf16.msra.mxu0 0
      %959 = vmatprep.subr.bf16.mxu0 0
      %960 = vmatpush1.bf16.msra.mxu0 0
      %961 = vmatprep.subr.bf16.mxu0 0
      %962 = vmatpush1.bf16.msra.mxu0 0
      %963 = vmatprep.subr.bf16.mxu0 0
      %964 = vmatpush1.bf16.msra.mxu0 0
      %965 = vmatprep.mubr.bf16.mxu0 0
      %966 = vmatmul.mubr.bf16.gmra.mrb[0].mxu0 %v824
      %v967 = vpop.f32.mrb[0].mxu0
      %v968 = vadd.f32 %v820, %v967
      %v969 = vpop.f32.mrb[0].mxu0
      %v970 = vadd.f32 %v820, %v969
      %v971 = vpop.f32.mrb[0].mxu0
      %v972 = vpop.f32.mrb[0].mxu0
      %973 = vdwg.mxu0
      %974 = vmatprep.subr.bf16.mxu0 %v784
      %975 = vmatpush1.bf16.msra.mxu0 %v783
      %976 = vmatprep.subr.bf16.mxu0 %v792
      %977 = vmatpush1.bf16.msra.mxu0 %v791
      %978 = vmatprep.subr.bf16.mxu0 %v800
      %979 = vmatpush1.bf16.msra.mxu0 %v799
      %980 = vmatprep.subr.bf16.mxu0 %v808
      %981 = vmatpush1.bf16.msra.mxu0 %v807
      %982 = vmatprep.subr.bf16.mxu0 %v849
      %983 = vmatpush1.bf16.msra.mxu0 %v846
      %984 = vmatprep.subr.bf16.mxu0 0
      %985 = vmatpush1.bf16.msra.mxu0 0
      %986 = vmatprep.subr.bf16.mxu0 0
      %987 = vmatpush1.bf16.msra.mxu0 0
      %988 = vmatprep.subr.bf16.mxu0 0
      %989 = vmatpush1.bf16.msra.mxu0 0
      %990 = vmatprep.subr.bf16.mxu0 0
      %991 = vmatpush1.bf16.msra.mxu0 0
      %992 = vmatprep.subr.bf16.mxu0 0
      %993 = vmatpush1.bf16.msra.mxu0 0
      %994 = vmatprep.subr.bf16.mxu0 0
      %995 = vmatpush1.bf16.msra.mxu0 0
      %996 = vmatprep.subr.bf16.mxu0 0
      %997 = vmatpush1.bf16.msra.mxu0 0
      %998 = vmatprep.subr.bf16.mxu0 0
      %999 = vmatpush1.bf16.msra.mxu0 0
      %1000 = vmatprep.subr.bf16.mxu0 0
      %1001 = vmatpush1.bf16.msra.mxu0 0
      %1002 = vmatprep.subr.bf16.mxu0 0
      %1003 = vmatpush1.bf16.msra.mxu0 0
      %1004 = vmatprep.subr.bf16.mxu0 0
      %1005 = vmatpush1.bf16.msra.mxu0 0
      %1006 = vmatprep.mubr.bf16.mxu0 0
      %1007 = vmatmul.mubr.bf16.gmra.mrb[0].mxu0 %v824
      %v1008 = vpop.f32.mrb[0].mxu0
      %v1009 = vadd.f32 %v820, %v1008
      %v1010 = vpop.f32.mrb[0].mxu0
      %v1011 = vadd.f32 %v820, %v1010
      %v1012 = vpop.f32.mrb[0].mxu0
      %v1013 = vpop.f32.mrb[0].mxu0
      %1014 = vdwg.mxu0
      %v1015 = vld [vmem:[%s4] sm:$0x7]
      %1017 = vset.pattern.permute.xlu0 0
      %1018 = vperm.xlu0 %1017, %v1015
      %v1019 = vpop.permute.xlu0 %1018
      %v1021 = vadd.f32 %v886, %v1019
      %v1022 = vadd.f32 %v888, %v1019
      %v1023 = vadd.f32 %v927, %v1019
      %v1024 = vadd.f32 %v929, %v1019
      %v1025 = vadd.f32 %v968, %v1019
      %v1026 = vadd.f32 %v970, %v1019
      %v1027 = vadd.f32 %v1009, %v1019
      %v1028 = vadd.f32 %v1011, %v1019
      %v1037 = vcombine.low %v1021, %v1022
      %v1038 = vcombine.low %v1023, %v1024
      %v1039 = vcombine.low %v1025, %v1026
      %v1040 = vcombine.low %v1027, %v1028
      %1045 = vst [vmem:[%s226] sm:$0x77] %v1037
      %1046 = vst [vmem:[%s226 + $0x8] sm:$0x77] %v1038
      %1047 = vst [vmem:[%s226 + $0x10] sm:$0x77] %v1039
      %1048 = vst [vmem:[%s226 + $0x18] sm:$0x77] %v1040
      %s1049 = smul.u32 8, %s16
      %p1050 = scmp.lt.s32.totalorder %s1049, 15
      %s1051 = scalar_select %p1050, %s1049, 15
      %s1052 = smul.addr %s1051, 4
      %s1053 = scalar_lea.vmem %s5, %s1052
      // Predicated region
      $region41: #{msdn_forward.3} parent=39 // pred_check
        %p1054 = pneg %p144
      $region42: #{msdn_forward.3} parent=39 // pred_check_branch
        %1056 = sbr.rel (%p1054) target = $region44
      $region43: #{msdn_forward.3} parent=39 // pred_region
        %s1057 = smul.u32 8, %s16
      $region44: #{msdn_forward.3} parent=39 // pred_fallthru
        _
    $region40: #{msdn_forward.3} parent=5 // pred_fallthru
      _
    %p1058 = scmp.le.s32.totalorder 2, %s11
    // Predicated region
    $region45: #{msdn_forward.3} parent=5 // pred_check
      %p1059 = pneg %p1058
    $region46: #{msdn_forward.3} parent=5 // pred_check_branch
      %1061 = sbr.rel (%p1059) target = $region48
    $region47: #{msdn_forward.3} parent=5 // pred_region
      %s1062 = ssub.s32 %s11, 2
      // Predicated region
      $region49: #{msdn_forward.3} parent=47 // pred_check
        %p1063 = pneg %p150
      $region50: #{msdn_forward.3} parent=47 // pred_check_branch
        %1065 = sbr.rel (%p1063) target = $region52
      $region51: #{msdn_forward.3} parent=47 // pred_region
        %s1066 = smul.u32 8, %s17
        %p1067 = scmp.lt.s32.totalorder %s1066, 15
        %s1068 = scalar_select %p1067, %s1066, 15
        %s1069 = smul.addr %s1068, 4
        %s1070 = scalar_lea.vmem %s5, %s1069
      $region52: #{msdn_forward.3} parent=47 // pred_fallthru
        _
    $region48: #{msdn_forward.3} parent=5 // pred_fallthru
      _
  $region6: #{msdn_forward.3} parent=0 // loop_footer
    %s15 = sadd.s32 1, %s11
  $region7: #{msdn_forward.3} parent=0 // loop_footer_branch
    %10 = sbr.rel target = $region3
  $region8: #{msdn_forward.3} parent=0 // loop_exit
    _

// kernel: msdn_forward.2
$region0: #{msdn_forward.2}
  #allocation0 [shape = 'u32[]', space=smem, size = 0x4, offset = 0x4, fixed_abs, tag = 'smem constant byte address 0x4 - core index']
  #allocation1 [shape = 'u32[144,128]{1,0:T(1,128)}', space=vmem, size = 0x12000, scoped, tag = 'internal scratch']
  %s0 = inlined_call_operand.vmem [shape: f32[8,512], index: 0, kind: input, shape index: {}]
  %s1 = inlined_call_operand.vmem [shape: f32[8,1], index: 1, kind: input, shape index: {}]
  %s2 = inlined_call_operand.vmem [shape: f32[9,256], index: 2, kind: input, shape index: {}]
  %s3 = inlined_call_operand.vmem [shape: bf16[8,72], index: 3, kind: input, shape index: {}]
  %s4 = inlined_call_operand.vmem [shape: f32[8,1], index: 4, kind: input, shape index: {}]
  %s5 = inlined_call_operand.vmem [shape: bf16[4,5,8,72], index: 5, kind: input, shape index: {}]
  %s6 = inlined_call_operand.vmem [shape: f32[4,5,8,1], index: 6, kind: input, shape index: {}]
  %s7 = inlined_call_operand.vmem [shape: bf16[2,8,8], index: 7, kind: input, shape index: {}]
  %s8 = inlined_call_operand.vmem [shape: f32[8,1], index: 8, kind: input, shape index: {}]
  %s9 = inlined_call_operand.vmem [shape: bf16[3,4,8], index: 9, kind: input, shape index: {}]
  %s10 = inlined_call_operand.vmem [shape: f32[3,4,1], index: 10, kind: input, shape index: {}]
  %s11 = inlined_call_operand.vmem [shape: bf16[8,4], index: 11, kind: input, shape index: {}]
  %s12 = inlined_call_operand.vmem [shape: f32[8,1], index: 12, kind: input, shape index: {}]
  %s13 = inlined_call_operand.vmem [shape: bf16[1,2,8,8], index: 13, kind: input, shape index: {}]
  %s14 = inlined_call_operand.vmem [shape: f32[1,8,1], index: 14, kind: input, shape index: {}]
  %s15 = inlined_call_operand.vmem [shape: bf16[8,72], index: 15, kind: input, shape index: {}]
  %s16 = inlined_call_operand.vmem [shape: f32[8,1], index: 16, kind: input, shape index: {}]
  %s17 = inlined_call_operand.vmem [shape: bf16[32,72], index: 17, kind: input, shape index: {}]
  %s18 = inlined_call_operand.vmem [shape: f32[32,1], index: 18, kind: input, shape index: {}]
  %s19 = inlined_call_operand.vmem [shape: f32[32,512], index: 19, kind: output, shape index: {}]
  %s20 = sld [smem:[#allocation0]]
  $region128: #{msdn_forward.2} parent=0
    _
  %s22 = ssub.s32 1, %s20
  %s23 = scalar_select 0, %s22, %s20
  $region1: #{msdn_forward.2} parent=0
    #allocation2 [shape = 'u8[65536]{0}', space=vmem, size = 0x10000, scoped, tag = 'output window, operand 0']
    loop: start=0, step=1, limit=4
    $region2: #{msdn_forward.2} parent=1 // loop_pre_header
      _
    $region3: #{msdn_forward.2} parent=1 // loop_header
      %s25 = sphi 0, %s29
      %p26 = scmp.ge.s32.totalorder %s25, 4
      %s35 = sphi 0, %s37
      %s38 = sphi 0, %s35
      %s39 = sphi 0, %s38
      %s55 = sphi 0, %s39
      %s59 = sphi 0, %s59
      %s61 = sphi 0, %s59
      %s62 = sphi 0, %s61
      %s76 = sphi 0, %s62
      %s80 = sphi 0, %s80
      %s82 = sphi 0, %s80
      %s83 = sphi 0, %s82
      %s97 = sphi 0, %s83
      %s101 = sphi 0, %s101
      %s103 = sphi 0, %s101
      %s104 = sphi 0, %s103
      %s118 = sphi 0, %s104
      %s122 = sphi 0, %s122
      %s124 = sphi 0, %s122
      %s125 = sphi 0, %s124
      %s139 = sphi 0, %s125
      %s143 = sphi 0, %s143
      %s145 = sphi 0, %s143
      %s146 = sphi 0, %s145
      %s160 = sphi 0, %s146
      %s164 = sphi 0, %s164
      %s166 = sphi 0, %s164
      %s167 = sphi 0, %s166
      %s181 = sphi 0, %s167
      %s185 = sphi 0, %s185
      %s187 = sphi 0, %s185
      %s188 = sphi 0, %s187
      %s202 = sphi 0, %s188
      %s206 = sphi 0, %s206
      %s208 = sphi 0, %s206
      %s209 = sphi 0, %s208
      %s223 = sphi 0, %s209
      %s227 = sphi 0, %s227
      %s229 = sphi 0, %s227
      %s230 = sphi 0, %s229
      %s244 = sphi 0, %s230
      %s248 = sphi 0, %s248
      %s250 = sphi 0, %s248
      %s251 = sphi 0, %s250
      %s265 = sphi 0, %s251
      %s269 = sphi 0, %s269
      %s271 = sphi 0, %s269
      %s272 = sphi 0, %s271
      %s286 = sphi 0, %s272
      %s290 = sphi 0, %s290
      %s292 = sphi 0, %s290
      %s293 = sphi 0, %s292
      %s307 = sphi 0, %s293
      %s311 = sphi 0, %s311
      %s313 = sphi 0, %s311
      %s314 = sphi 0, %s313
      %s328 = sphi 0, %s314
      %s332 = sphi 0, %s332
      %s334 = sphi 0, %s332
      %s335 = sphi 0, %s334
      %s349 = sphi 0, %s335
      %s353 = sphi 0, %s353
      %s355 = sphi 0, %s353
      %s356 = sphi 0, %s355
      %s370 = sphi 0, %s356
      %s374 = sphi 0, %s374
      %s376 = sphi 0, %s374
      %s377 = sphi 0, %s376
      %s391 = sphi 0, %s377
      %s395 = sphi 0, %s395
      %s397 = sphi 0, %s395
      %s398 = sphi 0, %s397
      %s412 = sphi 0, %s398
      %s416 = sphi 0, %s416
      %s418 = sphi 0, %s416
      %s419 = sphi 0, %s418
      %s433 = sphi 0, %s419
      %s439 = sphi 0, %s441
      %s442 = sphi 0, %s439
      %s443 = sphi 0, %s442
      %s459 = sphi 0, %s443
    $region4: #{msdn_forward.2} parent=1 // loop_header_branch
      %28 = sbr.rel (%p26) target = $region8
    $region5: #{msdn_forward.2} parent=1 // loop_body
      %s30 = ssub.s32 %s25, 1
      %s31 = ssub.s32 %s25, 2
      %s32 = sadd.s32 %s25, 1
      %s33 = ssub.s32 %s25, %s32
      %p34 = scmp.eq.s32.totalorder %s33, 0
      %s36 = sadd.s32 %s35, 1
      %s37 = scalar_select %p34, %s35, %s36
      %p40 = pneg %p34
      %p41 = scmp.eq.s32.totalorder %s25, 1
      %p42 = por %p40, %p41
      %p43 = scmp.ne.s32.totalorder %s35, %s38
      %p44 = scmp.eq.s32.totalorder %s25, 0
      %p45 = por %p43, %p44
      %p46 = scmp.ne.s32.totalorder %s35, %s38
      %p47 = scmp.eq.s32.totalorder %s30, 1
      %p48 = por %p46, %p47
      %p49 = scmp.ne.s32.totalorder %s38, %s39
      %p50 = scmp.eq.s32.totalorder %s30, 0
      %p51 = por %p49, %p50
      %p52 = scmp.ne.s32.totalorder %s38, %s39
      %p53 = scmp.eq.s32.totalorder %s31, 1
      %p54 = por %p52, %p53
      %p56 = scmp.ne.s32.totalorder %s39, %s55
      %p57 = scmp.eq.s32.totalorder %s31, 0
      %p58 = por %p56, %p57
      %s60 = sadd.s32 %s59, 1
      %p63 = scmp.eq.s32.totalorder %s25, 1
      %p64 = scmp.ne.s32.totalorder %s59, %s61
      %p65 = scmp.eq.s32.totalorder %s25, 0
      %p66 = por %p64, %p65
      %p67 = scmp.ne.s32.totalorder %s59, %s61
      %p68 = scmp.eq.s32.totalorder %s30, 1
      %p69 = por %p67, %p68
      %p70 = scmp.ne.s32.totalorder %s61, %s62
      %p71 = scmp.eq.s32.totalorder %s30, 0
      %p72 = por %p70, %p71
      %p73 = scmp.ne.s32.totalorder %s61, %s62
      %p74 = scmp.eq.s32.totalorder %s31, 1
      %p75 = por %p73, %p74
      %p77 = scmp.ne.s32.totalorder %s62, %s76
      %p78 = scmp.eq.s32.totalorder %s31, 0
      %p79 = por %p77, %p78
      %s81 = sadd.s32 %s80, 1
      %p84 = scmp.eq.s32.totalorder %s25, 1
      %p85 = scmp.ne.s32.totalorder %s80, %s82
      %p86 = scmp.eq.s32.totalorder %s25, 0
      %p87 = por %p85, %p86
      %p88 = scmp.ne.s32.totalorder %s80, %s82
      %p89 = scmp.eq.s32.totalorder %s30, 1
      %p90 = por %p88, %p89
      %p91 = scmp.ne.s32.totalorder %s82, %s83
      %p92 = scmp.eq.s32.totalorder %s30, 0
      %p93 = por %p91, %p92
      %p94 = scmp.ne.s32.totalorder %s82, %s83
      %p95 = scmp.eq.s32.totalorder %s31, 1
      %p96 = por %p94, %p95
      %p98 = scmp.ne.s32.totalorder %s83, %s97
      %p99 = scmp.eq.s32.totalorder %s31, 0
      %p100 = por %p98, %p99
      %s102 = sadd.s32 %s101, 1
      %p105 = scmp.eq.s32.totalorder %s25, 1
      %p106 = scmp.ne.s32.totalorder %s101, %s103
      %p107 = scmp.eq.s32.totalorder %s25, 0
      %p108 = por %p106, %p107
      %p109 = scmp.ne.s32.totalorder %s101, %s103
      %p110 = scmp.eq.s32.totalorder %s30, 1
      %p111 = por %p109, %p110
      %p112 = scmp.ne.s32.totalorder %s103, %s104
      %p113 = scmp.eq.s32.totalorder %s30, 0
      %p114 = por %p112, %p113
      %p115 = scmp.ne.s32.totalorder %s103, %s104
      %p116 = scmp.eq.s32.totalorder %s31, 1
      %p117 = por %p115, %p116
      %p119 = scmp.ne.s32.totalorder %s104, %s118
      %p120 = scmp.eq.s32.totalorder %s31, 0
      %p121 = por %p119, %p120
      %s123 = sadd.s32 %s122, 1
      %p126 = scmp.eq.s32.totalorder %s25, 1
      %p127 = scmp.ne.s32.totalorder %s122, %s124
      %p128 = scmp.eq.s32.totalorder %s25, 0
      %p129 = por %p127, %p128
      %p130 = scmp.ne.s32.totalorder %s122, %s124
      %p131 = scmp.eq.s32.totalorder %s30, 1
      %p132 = por %p130, %p131
      %p133 = scmp.ne.s32.totalorder %s124, %s125
      %p134 = scmp.eq.s32.totalorder %s30, 0
      %p135 = por %p133, %p134
      %p136 = scmp.ne.s32.totalorder %s124, %s125
      %p137 = scmp.eq.s32.totalorder %s31, 1
      %p138 = por %p136, %p137
      %p140 = scmp.ne.s32.totalorder %s125, %s139
      %p141 = scmp.eq.s32.totalorder %s31, 0
      %p142 = por %p140, %p141
      %s144 = sadd.s32 %s143, 1
      %p147 = scmp.eq.s32.totalorder %s25, 1
      %p148 = scmp.ne.s32.totalorder %s143, %s145
      %p149 = scmp.eq.s32.totalorder %s25, 0
      %p150 = por %p148, %p149
      %p151 = scmp.ne.s32.totalorder %s143, %s145
      %p152 = scmp.eq.s32.totalorder %s30, 1
      %p153 = por %p151, %p152
      %p154 = scmp.ne.s32.totalorder %s145, %s146
      %p155 = scmp.eq.s32.totalorder %s30, 0
      %p156 = por %p154, %p155
      %p157 = scmp.ne.s32.totalorder %s145, %s146
      %p158 = scmp.eq.s32.totalorder %s31, 1
      %p159 = por %p157, %p158
      %p161 = scmp.ne.s32.totalorder %s146, %s160
      %p162 = scmp.eq.s32.totalorder %s31, 0
      %p163 = por %p161, %p162
      %s165 = sadd.s32 %s164, 1
      %p168 = scmp.eq.s32.totalorder %s25, 1
      %p169 = scmp.ne.s32.totalorder %s164, %s166
      %p170 = scmp.eq.s32.totalorder %s25, 0
      %p171 = por %p169, %p170
      %p172 = scmp.ne.s32.totalorder %s164, %s166
      %p173 = scmp.eq.s32.totalorder %s30, 1
      %p174 = por %p172, %p173
      %p175 = scmp.ne.s32.totalorder %s166, %s167
      %p176 = scmp.eq.s32.totalorder %s30, 0
      %p177 = por %p175, %p176
      %p178 = scmp.ne.s32.totalorder %s166, %s167
      %p179 = scmp.eq.s32.totalorder %s31, 1
      %p180 = por %p178, %p179
      %p182 = scmp.ne.s32.totalorder %s167, %s181
      %p183 = scmp.eq.s32.totalorder %s31, 0
      %p184 = por %p182, %p183
      %s186 = sadd.s32 %s185, 1
      %p189 = scmp.eq.s32.totalorder %s25, 1
      %p190 = scmp.ne.s32.totalorder %s185, %s187
      %p191 = scmp.eq.s32.totalorder %s25, 0
      %p192 = por %p190, %p191
      %p193 = scmp.ne.s32.totalorder %s185, %s187
      %p194 = scmp.eq.s32.totalorder %s30, 1
      %p195 = por %p193, %p194
      %p196 = scmp.ne.s32.totalorder %s187, %s188
      %p197 = scmp.eq.s32.totalorder %s30, 0
      %p198 = por %p196, %p197
      %p199 = scmp.ne.s32.totalorder %s187, %s188
      %p200 = scmp.eq.s32.totalorder %s31, 1
      %p201 = por %p199, %p200
      %p203 = scmp.ne.s32.totalorder %s188, %s202
      %p204 = scmp.eq.s32.totalorder %s31, 0
      %p205 = por %p203, %p204
      %s207 = sadd.s32 %s206, 1
      %p210 = scmp.eq.s32.totalorder %s25, 1
      %p211 = scmp.ne.s32.totalorder %s206, %s208
      %p212 = scmp.eq.s32.totalorder %s25, 0
      %p213 = por %p211, %p212
      %p214 = scmp.ne.s32.totalorder %s206, %s208
      %p215 = scmp.eq.s32.totalorder %s30, 1
      %p216 = por %p214, %p215
      %p217 = scmp.ne.s32.totalorder %s208, %s209
      %p218 = scmp.eq.s32.totalorder %s30, 0
      %p219 = por %p217, %p218
      %p220 = scmp.ne.s32.totalorder %s208, %s209
      %p221 = scmp.eq.s32.totalorder %s31, 1
      %p222 = por %p220, %p221
      %p224 = scmp.ne.s32.totalorder %s209, %s223
      %p225 = scmp.eq.s32.totalorder %s31, 0
      %p226 = por %p224, %p225
      %s228 = sadd.s32 %s227, 1
      %p231 = scmp.eq.s32.totalorder %s25, 1
      %p232 = scmp.ne.s32.totalorder %s227, %s229
      %p233 = scmp.eq.s32.totalorder %s25, 0
      %p234 = por %p232, %p233
      %p235 = scmp.ne.s32.totalorder %s227, %s229
      %p236 = scmp.eq.s32.totalorder %s30, 1
      %p237 = por %p235, %p236
      %p238 = scmp.ne.s32.totalorder %s229, %s230
      %p239 = scmp.eq.s32.totalorder %s30, 0
      %p240 = por %p238, %p239
      %p241 = scmp.ne.s32.totalorder %s229, %s230
      %p242 = scmp.eq.s32.totalorder %s31, 1
      %p243 = por %p241, %p242
      %p245 = scmp.ne.s32.totalorder %s230, %s244
      %p246 = scmp.eq.s32.totalorder %s31, 0
      %p247 = por %p245, %p246
      %s249 = sadd.s32 %s248, 1
      %p252 = scmp.eq.s32.totalorder %s25, 1
      %p253 = scmp.ne.s32.totalorder %s248, %s250
      %p254 = scmp.eq.s32.totalorder %s25, 0
      %p255 = por %p253, %p254
      %p256 = scmp.ne.s32.totalorder %s248, %s250
      %p257 = scmp.eq.s32.totalorder %s30, 1
      %p258 = por %p256, %p257
      %p259 = scmp.ne.s32.totalorder %s250, %s251
      %p260 = scmp.eq.s32.totalorder %s30, 0
      %p261 = por %p259, %p260
      %p262 = scmp.ne.s32.totalorder %s250, %s251
      %p263 = scmp.eq.s32.totalorder %s31, 1
      %p264 = por %p262, %p263
      %p266 = scmp.ne.s32.totalorder %s251, %s265
      %p267 = scmp.eq.s32.totalorder %s31, 0
      %p268 = por %p266, %p267
      %s270 = sadd.s32 %s269, 1
      %p273 = scmp.eq.s32.totalorder %s25, 1
      %p274 = scmp.ne.s32.totalorder %s269, %s271
      %p275 = scmp.eq.s32.totalorder %s25, 0
      %p276 = por %p274, %p275
      %p277 = scmp.ne.s32.totalorder %s269, %s271
      %p278 = scmp.eq.s32.totalorder %s30, 1
      %p279 = por %p277, %p278
      %p280 = scmp.ne.s32.totalorder %s271, %s272
      %p281 = scmp.eq.s32.totalorder %s30, 0
      %p282 = por %p280, %p281
      %p283 = scmp.ne.s32.totalorder %s271, %s272
      %p284 = scmp.eq.s32.totalorder %s31, 1
      %p285 = por %p283, %p284
      %p287 = scmp.ne.s32.totalorder %s272, %s286
      %p288 = scmp.eq.s32.totalorder %s31, 0
      %p289 = por %p287, %p288
      %s291 = sadd.s32 %s290, 1
      %p294 = scmp.eq.s32.totalorder %s25, 1
      %p295 = scmp.ne.s32.totalorder %s290, %s292
      %p296 = scmp.eq.s32.totalorder %s25, 0
      %p297 = por %p295, %p296
      %p298 = scmp.ne.s32.totalorder %s290, %s292
      %p299 = scmp.eq.s32.totalorder %s30, 1
      %p300 = por %p298, %p299
      %p301 = scmp.ne.s32.totalorder %s292, %s293
      %p302 = scmp.eq.s32.totalorder %s30, 0
      %p303 = por %p301, %p302
      %p304 = scmp.ne.s32.totalorder %s292, %s293
      %p305 = scmp.eq.s32.totalorder %s31, 1
      %p306 = por %p304, %p305
      %p308 = scmp.ne.s32.totalorder %s293, %s307
      %p309 = scmp.eq.s32.totalorder %s31, 0
      %p310 = por %p308, %p309
      %s312 = sadd.s32 %s311, 1
      %p315 = scmp.eq.s32.totalorder %s25, 1
      %p316 = scmp.ne.s32.totalorder %s311, %s313
      %p317 = scmp.eq.s32.totalorder %s25, 0
      %p318 = por %p316, %p317
      %p319 = scmp.ne.s32.totalorder %s311, %s313
      %p320 = scmp.eq.s32.totalorder %s30, 1
      %p321 = por %p319, %p320
      %p322 = scmp.ne.s32.totalorder %s313, %s314
      %p323 = scmp.eq.s32.totalorder %s30, 0
      %p324 = por %p322, %p323
      %p325 = scmp.ne.s32.totalorder %s313, %s314
      %p326 = scmp.eq.s32.totalorder %s31, 1
      %p327 = por %p325, %p326
      %p329 = scmp.ne.s32.totalorder %s314, %s328
      %p330 = scmp.eq.s32.totalorder %s31, 0
      %p331 = por %p329, %p330
      %s333 = sadd.s32 %s332, 1
      %p336 = scmp.eq.s32.totalorder %s25, 1
      %p337 = scmp.ne.s32.totalorder %s332, %s334
      %p338 = scmp.eq.s32.totalorder %s25, 0
      %p339 = por %p337, %p338
      %p340 = scmp.ne.s32.totalorder %s332, %s334
      %p341 = scmp.eq.s32.totalorder %s30, 1
      %p342 = por %p340, %p341
      %p343 = scmp.ne.s32.totalorder %s334, %s335
      %p344 = scmp.eq.s32.totalorder %s30, 0
      %p345 = por %p343, %p344
      %p346 = scmp.ne.s32.totalorder %s334, %s335
      %p347 = scmp.eq.s32.totalorder %s31, 1
      %p348 = por %p346, %p347
      %p350 = scmp.ne.s32.totalorder %s335, %s349
      %p351 = scmp.eq.s32.totalorder %s31, 0
      %p352 = por %p350, %p351
      %s354 = sadd.s32 %s353, 1
      %p357 = scmp.eq.s32.totalorder %s25, 1
      %p358 = scmp.ne.s32.totalorder %s353, %s355
      %p359 = scmp.eq.s32.totalorder %s25, 0
      %p360 = por %p358, %p359
      %p361 = scmp.ne.s32.totalorder %s353, %s355
      %p362 = scmp.eq.s32.totalorder %s30, 1
      %p363 = por %p361, %p362
      %p364 = scmp.ne.s32.totalorder %s355, %s356
      %p365 = scmp.eq.s32.totalorder %s30, 0
      %p366 = por %p364, %p365
      %p367 = scmp.ne.s32.totalorder %s355, %s356
      %p368 = scmp.eq.s32.totalorder %s31, 1
      %p369 = por %p367, %p368
      %p371 = scmp.ne.s32.totalorder %s356, %s370
      %p372 = scmp.eq.s32.totalorder %s31, 0
      %p373 = por %p371, %p372
      %s375 = sadd.s32 %s374, 1
      %p378 = scmp.eq.s32.totalorder %s25, 1
      %p379 = scmp.ne.s32.totalorder %s374, %s376
      %p380 = scmp.eq.s32.totalorder %s25, 0
      %p381 = por %p379, %p380
      %p382 = scmp.ne.s32.totalorder %s374, %s376
      %p383 = scmp.eq.s32.totalorder %s30, 1
      %p384 = por %p382, %p383
      %p385 = scmp.ne.s32.totalorder %s376, %s377
      %p386 = scmp.eq.s32.totalorder %s30, 0
      %p387 = por %p385, %p386
      %p388 = scmp.ne.s32.totalorder %s376, %s377
      %p389 = scmp.eq.s32.totalorder %s31, 1
      %p390 = por %p388, %p389
      %p392 = scmp.ne.s32.totalorder %s377, %s391
      %p393 = scmp.eq.s32.totalorder %s31, 0
      %p394 = por %p392, %p393
      %s396 = sadd.s32 %s395, 1
      %p399 = scmp.eq.s32.totalorder %s25, 1
      %p400 = scmp.ne.s32.totalorder %s395, %s397
      %p401 = scmp.eq.s32.totalorder %s25, 0
      %p402 = por %p400, %p401
      %p403 = scmp.ne.s32.totalorder %s395, %s397
      %p404 = scmp.eq.s32.totalorder %s30, 1
      %p405 = por %p403, %p404
      %p406 = scmp.ne.s32.totalorder %s397, %s398
      %p407 = scmp.eq.s32.totalorder %s30, 0
      %p408 = por %p406, %p407
      %p409 = scmp.ne.s32.totalorder %s397, %s398
      %p410 = scmp.eq.s32.totalorder %s31, 1
      %p411 = por %p409, %p410
      %p413 = scmp.ne.s32.totalorder %s398, %s412
      %p414 = scmp.eq.s32.totalorder %s31, 0
      %p415 = por %p413, %p414
      %s417 = sadd.s32 %s416, 1
      %p420 = scmp.eq.s32.totalorder %s25, 1
      %p421 = scmp.ne.s32.totalorder %s416, %s418
      %p422 = scmp.eq.s32.totalorder %s25, 0
      %p423 = por %p421, %p422
      %p424 = scmp.ne.s32.totalorder %s416, %s418
      %p425 = scmp.eq.s32.totalorder %s30, 1
      %p426 = por %p424, %p425
      %p427 = scmp.ne.s32.totalorder %s418, %s419
      %p428 = scmp.eq.s32.totalorder %s30, 0
      %p429 = por %p427, %p428
      %p430 = scmp.ne.s32.totalorder %s418, %s419
      %p431 = scmp.eq.s32.totalorder %s31, 1
      %p432 = por %p430, %p431
      %p434 = scmp.ne.s32.totalorder %s419, %s433
      %p435 = scmp.eq.s32.totalorder %s31, 0
      %p436 = por %p434, %p435
      %s437 = ssub.s32 %s25, %s32
      %p438 = scmp.eq.s32.totalorder %s437, 0
      %s440 = sadd.s32 %s439, 1
      %s441 = scalar_select %p438, %s439, %s440
      %p444 = pneg %p438
      %p445 = scmp.eq.s32.totalorder %s25, 1
      %p446 = por %p444, %p445
      %p447 = scmp.ne.s32.totalorder %s439, %s442
      %p448 = scmp.eq.s32.totalorder %s25, 0
      %p449 = por %p447, %p448
      %p450 = scmp.ne.s32.totalorder %s439, %s442
      %p451 = scmp.eq.s32.totalorder %s30, 1
      %p452 = por %p450, %p451
      %p453 = scmp.ne.s32.totalorder %s442, %s443
      %p454 = scmp.eq.s32.totalorder %s30, 0
      %p455 = por %p453, %p454
      %p456 = scmp.ne.s32.totalorder %s442, %s443
      %p457 = scmp.eq.s32.totalorder %s31, 1
      %p458 = por %p456, %p457
      %p460 = scmp.ne.s32.totalorder %s443, %s459
      %p461 = scmp.eq.s32.totalorder %s31, 0
      %p462 = por %p460, %p461
      %p463 = scmp.le.s32.totalorder 1, %s25
      %p464 = scmp.lt.s32.totalorder %s25, 3
      %p465 = pnand %p463, %p464
      %p466 = pneg %p465
      // Predicated region
      $region9: #{msdn_forward.2} parent=5 // pred_check
        _
      $region10: #{msdn_forward.2} parent=5 // pred_check_branch
        %468 = sbr.rel (%p465) target = $region12
      $region11: #{msdn_forward.2} parent=5 // pred_region
        %s469 = ssub.s32 %s25, 1
        // Predicated region
        $region13: #{msdn_forward.2} parent=11 // pred_check
          %p470 = pneg %p72
        $region14: #{msdn_forward.2} parent=11 // pred_check_branch
          %472 = sbr.rel (%p470) target = $region16
        $region15: #{msdn_forward.2} parent=11 // pred_region
          _
        $region16: #{msdn_forward.2} parent=11 // pred_fallthru
          _
        // Predicated region
        $region17: #{msdn_forward.2} parent=11 // pred_check
          %p473 = pneg %p93
        $region18: #{msdn_forward.2} parent=11 // pred_check_branch
          %475 = sbr.rel (%p473) target = $region20
        $region19: #{msdn_forward.2} parent=11 // pred_region
          _
        $region20: #{msdn_forward.2} parent=11 // pred_fallthru
          _
        // Predicated region
        $region21: #{msdn_forward.2} parent=11 // pred_check
          %p476 = pneg %p114
        $region22: #{msdn_forward.2} parent=11 // pred_check_branch
          %478 = sbr.rel (%p476) target = $region24
        $region23: #{msdn_forward.2} parent=11 // pred_region
          _
        $region24: #{msdn_forward.2} parent=11 // pred_fallthru
          _
        // Predicated region
        $region25: #{msdn_forward.2} parent=11 // pred_check
          %p479 = pneg %p135
        $region26: #{msdn_forward.2} parent=11 // pred_check_branch
          %481 = sbr.rel (%p479) target = $region28
        $region27: #{msdn_forward.2} parent=11 // pred_region
          _
        $region28: #{msdn_forward.2} parent=11 // pred_fallthru
          _
        // Predicated region
        $region29: #{msdn_forward.2} parent=11 // pred_check
          %p482 = pneg %p156
        $region30: #{msdn_forward.2} parent=11 // pred_check_branch
          %484 = sbr.rel (%p482) target = $region32
        $region31: #{msdn_forward.2} parent=11 // pred_region
          _
        $region32: #{msdn_forward.2} parent=11 // pred_fallthru
          _
        // Predicated region
        $region33: #{msdn_forward.2} parent=11 // pred_check
          %p485 = pneg %p177
        $region34: #{msdn_forward.2} parent=11 // pred_check_branch
          %487 = sbr.rel (%p485) target = $region36
        $region35: #{msdn_forward.2} parent=11 // pred_region
          _
        $region36: #{msdn_forward.2} parent=11 // pred_fallthru
          _
        // Predicated region
        $region37: #{msdn_forward.2} parent=11 // pred_check
          %p488 = pneg %p198
        $region38: #{msdn_forward.2} parent=11 // pred_check_branch
          %490 = sbr.rel (%p488) target = $region40
        $region39: #{msdn_forward.2} parent=11 // pred_region
          _
        $region40: #{msdn_forward.2} parent=11 // pred_fallthru
          _
        // Predicated region
        $region41: #{msdn_forward.2} parent=11 // pred_check
          %p491 = pneg %p219
        $region42: #{msdn_forward.2} parent=11 // pred_check_branch
          %493 = sbr.rel (%p491) target = $region44
        $region43: #{msdn_forward.2} parent=11 // pred_region
          _
        $region44: #{msdn_forward.2} parent=11 // pred_fallthru
          _
        // Predicated region
        $region45: #{msdn_forward.2} parent=11 // pred_check
          %p494 = pneg %p240
        $region46: #{msdn_forward.2} parent=11 // pred_check_branch
          %496 = sbr.rel (%p494) target = $region48
        $region47: #{msdn_forward.2} parent=11 // pred_region
          _
        $region48: #{msdn_forward.2} parent=11 // pred_fallthru
          _
        // Predicated region
        $region49: #{msdn_forward.2} parent=11 // pred_check
          %p497 = pneg %p261
        $region50: #{msdn_forward.2} parent=11 // pred_check_branch
          %499 = sbr.rel (%p497) target = $region52
        $region51: #{msdn_forward.2} parent=11 // pred_region
          _
        $region52: #{msdn_forward.2} parent=11 // pred_fallthru
          _
        // Predicated region
        $region53: #{msdn_forward.2} parent=11 // pred_check
          %p500 = pneg %p282
        $region54: #{msdn_forward.2} parent=11 // pred_check_branch
          %502 = sbr.rel (%p500) target = $region56
        $region55: #{msdn_forward.2} parent=11 // pred_region
          _
        $region56: #{msdn_forward.2} parent=11 // pred_fallthru
          _
        // Predicated region
        $region57: #{msdn_forward.2} parent=11 // pred_check
          %p503 = pneg %p303
        $region58: #{msdn_forward.2} parent=11 // pred_check_branch
          %505 = sbr.rel (%p503) target = $region60
        $region59: #{msdn_forward.2} parent=11 // pred_region
          _
        $region60: #{msdn_forward.2} parent=11 // pred_fallthru
          _
        // Predicated region
        $region61: #{msdn_forward.2} parent=11 // pred_check
          %p506 = pneg %p324
        $region62: #{msdn_forward.2} parent=11 // pred_check_branch
          %508 = sbr.rel (%p506) target = $region64
        $region63: #{msdn_forward.2} parent=11 // pred_region
          _
        $region64: #{msdn_forward.2} parent=11 // pred_fallthru
          _
        // Predicated region
        $region65: #{msdn_forward.2} parent=11 // pred_check
          %p509 = pneg %p345
        $region66: #{msdn_forward.2} parent=11 // pred_check_branch
          %511 = sbr.rel (%p509) target = $region68
        $region67: #{msdn_forward.2} parent=11 // pred_region
          _
        $region68: #{msdn_forward.2} parent=11 // pred_fallthru
          _
        // Predicated region
        $region69: #{msdn_forward.2} parent=11 // pred_check
          %p512 = pneg %p366
        $region70: #{msdn_forward.2} parent=11 // pred_check_branch
          %514 = sbr.rel (%p512) target = $region72
        $region71: #{msdn_forward.2} parent=11 // pred_region
          _
        $region72: #{msdn_forward.2} parent=11 // pred_fallthru
          _
        // Predicated region
        $region73: #{msdn_forward.2} parent=11 // pred_check
          %p515 = pneg %p387
        $region74: #{msdn_forward.2} parent=11 // pred_check_branch
          %517 = sbr.rel (%p515) target = $region76
        $region75: #{msdn_forward.2} parent=11 // pred_region
          _
        $region76: #{msdn_forward.2} parent=11 // pred_fallthru
          _
        // Predicated region
        $region77: #{msdn_forward.2} parent=11 // pred_check
          %p518 = pneg %p408
        $region78: #{msdn_forward.2} parent=11 // pred_check_branch
          %520 = sbr.rel (%p518) target = $region80
        $region79: #{msdn_forward.2} parent=11 // pred_region
          _
        $region80: #{msdn_forward.2} parent=11 // pred_fallthru
          _
        // Predicated region
        $region81: #{msdn_forward.2} parent=11 // pred_check
          %p521 = pneg %p429
        $region82: #{msdn_forward.2} parent=11 // pred_check_branch
          %523 = sbr.rel (%p521) target = $region84
        $region83: #{msdn_forward.2} parent=11 // pred_region
          _
        $region84: #{msdn_forward.2} parent=11 // pred_fallthru
          _
      $region12: #{msdn_forward.2} parent=5 // pred_fallthru
        _
      %p524 = scmp.lt.s32.totalorder %s25, 2
      // Predicated region
      $region85: #{msdn_forward.2} parent=5 // pred_check
        %p525 = pneg %p524
      $region86: #{msdn_forward.2} parent=5 // pred_check_branch
        %527 = sbr.rel (%p525) target = $region88
      $region87: #{msdn_forward.2} parent=5 // pred_region
        // Predicated region
        $region89: #{msdn_forward.2} parent=87 // pred_check
          %p528 = pneg %p45
        $region90: #{msdn_forward.2} parent=87 // pred_check_branch
          %530 = sbr.rel (%p528) target = $region92
        $region91: #{msdn_forward.2} parent=87 // pred_region
          %s531 = smul.u32 2, %s25
          %p532 = scmp.lt.s32.totalorder %s531, 3
          %s533 = scalar_select %p532, %s531, 3
          %s534 = smul.addr %s533, 8
          %s535 = scalar_lea.vmem %s0, %s534
          %s536 = smul.u32 2, %s25
        $region92: #{msdn_forward.2} parent=87 // pred_fallthru
          _
      $region88: #{msdn_forward.2} parent=5 // pred_fallthru
        _
      %p537 = scmp.le.s32.totalorder 1, %s25
      %p538 = scmp.lt.s32.totalorder %s25, 3
      %p539 = pnand %p537, %p538
      %p540 = pneg %p539
      // Predicated region
      $region93: #{msdn_forward.2} parent=5 // pred_check
        _
      $region94: #{msdn_forward.2} parent=5 // pred_check_branch
        %542 = sbr.rel (%p539) target = $region96
      $region95: #{msdn_forward.2} parent=5 // pred_region
        %s543 = ssub.s32 %s25, 1
        %s544 = smul.u32 2, %s30
        %p545 = scmp.lt.s32.totalorder %s544, 3
        %s546 = scalar_select %p545, %s544, 3
        %s547 = smul.addr %s546, 8
        %s548 = scalar_lea.vmem %s0, %s547
        %p549 = pneg %p51
        %p550 = pneg %p48
        %p551 = pneg %p72
        %p552 = pneg %p69
        %p553 = pneg %p93
        %p554 = pneg %p90
        %p555 = pneg %p114
        %p556 = pneg %p111
        %p557 = pneg %p135
        %p558 = pneg %p132
        %p559 = pneg %p156
        %p560 = pneg %p153
        %p561 = pneg %p177
        %p562 = pneg %p174
        %p563 = pneg %p198
        %p564 = pneg %p195
        %p565 = pneg %p219
        %p566 = pneg %p216
        %p567 = pneg %p240
        %p568 = pneg %p237
        %p569 = pneg %p261
        %p570 = pneg %p258
        %p571 = pneg %p282
        %p572 = pneg %p279
        %p573 = pneg %p303
        %p574 = pneg %p300
        %p575 = pneg %p324
        %p576 = pneg %p321
        %p577 = pneg %p345
        %p578 = pneg %p342
        %p579 = pneg %p366
        %p580 = pneg %p363
        %p581 = pneg %p387
        %p582 = pneg %p384
        %p583 = pneg %p408
        %p584 = pneg %p405
        %p585 = pneg %p429
        %p586 = pneg %p426
        %p587 = pneg %p455
        %p588 = pneg %p452
        %s589 = sand.u32 %s442, 1
        %s590 = sand.u32 %s442, 1
        %s591 = smul.addr %s590, 64
        %s592 = scalar_lea.vmem [#allocation2], %s591
        %s593 = smul.u32 2, %s30
        %p594 = scmp.lt.s32.totalorder %s593, 3
        %s595 = scalar_select %p594, %s593, 3
        %s596 = smul.addr %s595, 8
        %s597 = scalar_lea.vmem %s0, %s596
        %s598 = smul.u32 2, %s30
        %s599 = smul.u32 2, %s30
        %v601 = vld [vmem:[%s2] sm:$0xff]
        %v602 = vld [vmem:[%s2 + $0x8] sm:$0xff]
        %v603 = vld [vmem:[%s2 + $0x10] sm:$0x1]
        %v604 = vld [vmem:[%s2 + $0x18] sm:$0x1]
        %v605 = vld [vmem:[%s597] sm:$0xff]
        %v606 = vld [vmem:[%s597 + $0x8] sm:$0xff]
        %v607 = vld [vmem:[%s1] sm:$0xff]
        %609 = vset.pattern.permute.xlu0 0
        %610 = vperm.xlu0 %609, %v607
        %v611 = vpop.permute.xlu0 %610
        %v613 = vsub.f32 %v605, %v611
        %v614 = vsub.f32 %v606, %v611
        %v615 = vld [vmem:[%s3] sm:$0xf]
        %v616 = vld [vmem:[%s4] sm:$0xff]
        %617 = vrot.lane.b32.xlu0 %v613, 17
        %v618 = vpop.permute.xlu0 %617
        %619 = vrot.lane.b32.xlu0 %v614, 17
        %v620 = vpop.permute.xlu0 %619
        %v621 = vlaneseq
        %v622 = vand.u32 %v621, 127
        %vm623 = vcmp.lt.s32.totalorder %v622, 17
        %v624 = vsel %vm623, %v618, %v620
        %v625 = vsel %vm623, %v620, %v618
        %v626 = vlaneseq
        %v627 = vshrl.u32 %v626, 7
        %v628 = vsub.s32 0, %v627
        %v629 = vrot.slane %v601, %v628
        %v630 = vlaneseq
        %v631 = vshrl.u32 %v630, 7
        %v632 = vsub.s32 0, %v631
        %v633 = vrot.slane %v602, %v632
        %v634 = vmul.f32 %v625, %v629
        %v635 = vmul.f32 %v624, %v633
        %636 = vrot.lane.b32.xlu0 %v613, 16
        %v637 = vpop.permute.xlu0 %636
        %638 = vrot.lane.b32.xlu0 %v614, 16
        %v639 = vpop.permute.xlu0 %638
        %vm640 = vcmp.lt.s32.totalorder %v622, 16
        %v641 = vsel %vm640, %v637, %v639
        %v642 = vsel %vm640, %v639, %v637
        %v643 = vlaneseq
        %v644 = vshrl.u32 %v643, 7
        %v645 = vsub.s32 1, %v644
        %v646 = vrot.slane %v601, %v645
        %v647 = vlaneseq
        %v648 = vshrl.u32 %v647, 7
        %v649 = vsub.s32 1, %v648
        %v650 = vrot.slane %v602, %v649
        %v651 = vmul.f32 %v642, %v646
        %v652 = vmul.f32 %v641, %v650
        %653 = vrot.lane.b32.xlu0 %v613, 15
        %v654 = vpop.permute.xlu0 %653
        %655 = vrot.lane.b32.xlu0 %v614, 15
        %v656 = vpop.permute.xlu0 %655
        %vm657 = vcmp.lt.s32.totalorder %v622, 15
        %v658 = vsel %vm657, %v654, %v656
        %v659 = vsel %vm657, %v656, %v654
        %v660 = vlaneseq
        %v661 = vshrl.u32 %v660, 7
        %v662 = vsub.s32 2, %v661
        %v663 = vrot.slane %v601, %v662
        %v664 = vlaneseq
        %v665 = vshrl.u32 %v664, 7
        %v666 = vsub.s32 2, %v665
        %v667 = vrot.slane %v602, %v666
        %v668 = vmul.f32 %v659, %v663
        %v669 = vmul.f32 %v658, %v667
        %670 = vrot.lane.b32.xlu0 %v613, 1
        %v671 = vpop.permute.xlu0 %670
        %672 = vrot.lane.b32.xlu0 %v614, 1
        %v673 = vpop.permute.xlu0 %672
        %vm674 = vcmp.lt.s32.totalorder %v622, 1
        %v675 = vsel %vm674, %v671, %v673
        %v676 = vsel %vm674, %v673, %v671
        %v677 = vlaneseq
        %v678 = vshrl.u32 %v677, 7
        %v679 = vsub.s32 3, %v678
        %v680 = vrot.slane %v601, %v679
        %v681 = vlaneseq
        %v682 = vshrl.u32 %v681, 7
        %v683 = vsub.s32 3, %v682
        %v684 = vrot.slane %v602, %v683
        %v685 = vmul.f32 %v676, %v680
        %v686 = vmul.f32 %v675, %v684
        %687 = vrot.lane.b32.xlu0 %v613, 127
        %v688 = vpop.permute.xlu0 %687
        %689 = vrot.lane.b32.xlu0 %v614, 127
        %v690 = vpop.permute.xlu0 %689
        %vm691 = vcmp.lt.s32.totalorder %v622, 127
        %v692 = vsel %vm691, %v688, %v690
        %v693 = vsel %vm691, %v690, %v688
        %v694 = vlaneseq
        %v695 = vshrl.u32 %v694, 7
        %v696 = vsub.s32 5, %v695
        %v697 = vrot.slane %v601, %v696
        %v698 = vlaneseq
        %v699 = vshrl.u32 %v698, 7
        %v700 = vsub.s32 5, %v699
        %v701 = vrot.slane %v602, %v700
        %v702 = vmul.f32 %v692, %v697
        %v703 = vmul.f32 %v693, %v701
        %704 = vrot.lane.b32.xlu0 %v613, 113
        %v705 = vpop.permute.xlu0 %704
        %706 = vrot.lane.b32.xlu0 %v614, 113
        %v707 = vpop.permute.xlu0 %706
        %vm708 = vcmp.lt.s32.totalorder %v622, 113
        %v709 = vsel %vm708, %v705, %v707
        %v710 = vsel %vm708, %v707, %v705
        %v711 = vlaneseq
        %v712 = vshrl.u32 %v711, 7
        %v713 = vsub.s32 6, %v712
        %v714 = vrot.slane %v601, %v713
        %v715 = vlaneseq
        %v716 = vshrl.u32 %v715, 7
        %v717 = vsub.s32 6, %v716
        %v718 = vrot.slane %v602, %v717
        %v719 = vmul.f32 %v709, %v714
        %v720 = vmul.f32 %v710, %v718
        %721 = vrot.lane.b32.xlu0 %v613, 112
        %v722 = vpop.permute.xlu0 %721
        %723 = vrot.lane.b32.xlu0 %v614, 112
        %v724 = vpop.permute.xlu0 %723
        %vm725 = vcmp.lt.s32.totalorder %v622, 112
        %v726 = vsel %vm725, %v722, %v724
        %v727 = vsel %vm725, %v724, %v722
        %v728 = vlaneseq
        %v729 = vshrl.u32 %v728, 7
        %v730 = vsub.s32 7, %v729
        %v731 = vrot.slane %v601, %v730
        %v732 = vlaneseq
        %v733 = vshrl.u32 %v732, 7
        %v734 = vsub.s32 7, %v733
        %v735 = vrot.slane %v602, %v734
        %v736 = vmul.f32 %v726, %v731
        %v737 = vmul.f32 %v727, %v735
        %738 = vrot.lane.b32.xlu0 %v613, 111
        %v739 = vpop.permute.xlu0 %738
        %740 = vrot.lane.b32.xlu0 %v614, 111
        %v741 = vpop.permute.xlu0 %740
        %vm742 = vcmp.lt.s32.totalorder %v622, 111
        %v743 = vsel %vm742, %v739, %v741
        %v744 = vsel %vm742, %v741, %v739
        %v745 = vlaneseq
        %v746 = vshrl.u32 %v745, 7
        %v747 = vsub.s32 0, %v746
        %v748 = vrot.slane %v603, %v747
        %v749 = vlaneseq
        %v750 = vshrl.u32 %v749, 7
        %v751 = vsub.s32 0, %v750
        %v752 = vrot.slane %v604, %v751
        %v753 = vmul.f32 %v743, %v748
        %v754 = vmul.f32 %v744, %v752
        %v755 = vpack.c.bf16 %v651, %v634
        %v756 = vpack.c.bf16 %v652, %v635
        %v757 = vpack.c.bf16 %v685, %v668
        %v758 = vpack.c.bf16 %v686, %v669
        %v759 = vpack.c.bf16 %v702, %v613
        %v760 = vpack.c.bf16 %v703, %v614
        %v761 = vpack.c.bf16 %v736, %v719
        %v762 = vpack.c.bf16 %v737, %v720
        %v763 = vpack.c.bf16 %v753, %v753
        %v764 = vpack.c.bf16 %v754, %v754
        %766 = vset.pattern.permute.xlu0 0
        %767 = vperm.xlu0 %766, %v616
        %v768 = vpop.permute.xlu0 %767
        %vm770 = vcmask 588800
        %v772 = vsel %vm770, %v615, 0
        %vm774 = vcmask 1043456
        %v776 = vsel %vm774, %v763, 0
        %v779 = vsel %vm774, %v764, 0
        %781 = vmatprep.subr.bf16.mxu0 %v756
        %782 = vmatpush1.bf16.msra.mxu0 %v755
        %783 = vmatprep.subr.bf16.mxu0 %v758
        %784 = vmatpush1.bf16.msra.mxu0 %v757
        %785 = vmatprep.subr.bf16.mxu0 %v760
        %786 = vmatpush1.bf16.msra.mxu0 %v759
        %787 = vmatprep.subr.bf16.mxu0 %v762
        %788 = vmatpush1.bf16.msra.mxu0 %v761
        %789 = vmatprep.subr.bf16.mxu0 %v779
        %790 = vmatpush1.bf16.msra.mxu0 %v776
        %791 = vmatprep.subr.bf16.mxu0 0
        %792 = vmatpush1.bf16.msra.mxu0 0
        %793 = vmatprep.subr.bf16.mxu0 0
        %794 = vmatpush1.bf16.msra.mxu0 0
        %795 = vmatprep.subr.bf16.mxu0 0
        %796 = vmatpush1.bf16.msra.mxu0 0
        %797 = vmatprep.subr.bf16.mxu0 0
        %798 = vmatpush1.bf16.msra.mxu0 0
        %799 = vmatprep.subr.bf16.mxu0 0
        %800 = vmatpush1.bf16.msra.mxu0 0
        %801 = vmatprep.subr.bf16.mxu0 0
        %802 = vmatpush1.bf16.msra.mxu0 0
        %803 = vmatprep.subr.bf16.mxu0 0
        %804 = vmatpush1.bf16.msra.mxu0 0
        %805 = vmatprep.subr.bf16.mxu0 0
        %806 = vmatpush1.bf16.msra.mxu0 0
        %807 = vmatprep.subr.bf16.mxu0 0
        %808 = vmatpush1.bf16.msra.mxu0 0
        %809 = vmatprep.subr.bf16.mxu0 0
        %810 = vmatpush1.bf16.msra.mxu0 0
        %811 = vmatprep.subr.bf16.mxu0 0
        %812 = vmatpush1.bf16.msra.mxu0 0
        %813 = vmatprep.mubr.bf16.mxu0 0
        %814 = vmatmul.mubr.bf16.gmra.mrb[0].mxu0 %v772
        %v815 = vpop.f32.mrb[0].mxu0
        %v816 = vadd.f32 %v768, %v815
        %v817 = vpop.f32.mrb[0].mxu0
        %v818 = vadd.f32 %v768, %v817
        %v819 = vpop.f32.mrb[0].mxu0
        %v820 = vpop.f32.mrb[0].mxu0
        %821 = vdwg.mxu0
        %v822 = vld [vmem:[%s5] sm:$0xf]
        %v823 = vld [vmem:[%s6] sm:$0xff]
        %824 = vrot.lane.b32.xlu0 %v816, 17
        %v825 = vpop.permute.xlu0 %824
        %826 = vrot.lane.b32.xlu0 %v818, 17
        %v827 = vpop.permute.xlu0 %826
        %v828 = vsel %vm623, %v825, %v827
        %v829 = vsel %vm623, %v827, %v825
        %v830 = vmul.f32 %v829, %v629
        %v831 = vmul.f32 %v828, %v633
        %832 = vrot.lane.b32.xlu0 %v816, 16
        %v833 = vpop.permute.xlu0 %832
        %834 = vrot.lane.b32.xlu0 %v818, 16
        %v835 = vpop.permute.xlu0 %834
        %v836 = vsel %vm640, %v833, %v835
        %v837 = vsel %vm640, %v835, %v833
        %v838 = vmul.f32 %v837, %v646
        %v839 = vmul.f32 %v836, %v650
        %840 = vrot.lane.b32.xlu0 %v816, 15
        %v841 = vpop.permute.xlu0 %840
        %842 = vrot.lane.b32.xlu0 %v818, 15
        %v843 = vpop.permute.xlu0 %842
        %v844 = vsel %vm657, %v841, %v843
        %v845 = vsel %vm657, %v843, %v841
        %v846 = vmul.f32 %v845, %v663
        %v847 = vmul.f32 %v844, %v667
        %848 = vrot.lane.b32.xlu0 %v816, 1
        %v849 = vpop.permute.xlu0 %848
        %850 = vrot.lane.b32.xlu0 %v818, 1
        %v851 = vpop.permute.xlu0 %850
        %v852 = vsel %vm674, %v849, %v851
        %v853 = vsel %vm674, %v851, %v849
        %v854 = vmul.f32 %v853, %v680
        %v855 = vmul.f32 %v852, %v684
        %856 = vrot.lane.b32.xlu0 %v816, 127
        %v857 = vpop.permute.xlu0 %856
        %858 = vrot.lane.b32.xlu0 %v818, 127
        %v859 = vpop.permute.xlu0 %858
        %v860 = vsel %vm691, %v857, %v859
        %v861 = vsel %vm691, %v859, %v857
        %v862 = vmul.f32 %v860, %v697
        %v863 = vmul.f32 %v861, %v701
        %864 = vrot.lane.b32.xlu0 %v816, 113
        %v865 = vpop.permute.xlu0 %864
        %866 = vrot.lane.b32.xlu0 %v818, 113
        %v867 = vpop.permute.xlu0 %866
        %v868 = vsel %vm708, %v865, %v867
        %v869 = vsel %vm708, %v867, %v865
        %v870 = vmul.f32 %v868, %v714
        %v871 = vmul.f32 %v869, %v718
        %872 = vrot.lane.b32.xlu0 %v816, 112
        %v873 = vpop.permute.xlu0 %872
        %874 = vrot.lane.b32.xlu0 %v818, 112
        %v875 = vpop.permute.xlu0 %874
        %v876 = vsel %vm725, %v873, %v875
        %v877 = vsel %vm725, %v875, %v873
        %v878 = vmul.f32 %v876, %v731
        %v879 = vmul.f32 %v877, %v735
        %880 = vrot.lane.b32.xlu0 %v816, 111
        %v881 = vpop.permute.xlu0 %880
        %882 = vrot.lane.b32.xlu0 %v818, 111
        %v883 = vpop.permute.xlu0 %882
        %v884 = vsel %vm742, %v881, %v883
        %v885 = vsel %vm742, %v883, %v881
        %v886 = vmul.f32 %v884, %v748
        %v887 = vmul.f32 %v885, %v752
        %v888 = vpack.c.bf16 %v838, %v830
        %v889 = vpack.c.bf16 %v839, %v831
        %v890 = vpack.c.bf16 %v854, %v846
        %v891 = vpack.c.bf16 %v855, %v847
        %v892 = vpack.c.bf16 %v862, %v816
        %v893 = vpack.c.bf16 %v863, %v818
        %v894 = vpack.c.bf16 %v878, %v870
        %v895 = vpack.c.bf16 %v879, %v871
        %v896 = vpack.c.bf16 %v886, %v886
        %v897 = vpack.c.bf16 %v887, %v887
        %899 = vset.pattern.permute.xlu0 0
        %900 = vperm.xlu0 %899, %v823
        %v901 = vpop.permute.xlu0 %900
        %v904 = vsel %vm770, %v822, 0
        %v907 = vsel %vm774, %v896, 0
        %v910 = vsel %vm774, %v897, 0
        %912 = vmatprep.subr.bf16.mxu0 %v889
        %913 = vmatpush1.bf16.msra.mxu0 %v888
        %914 = vmatprep.subr.bf16.mxu0 %v891
        %915 = vmatpush1.bf16.msra.mxu0 %v890
        %916 = vmatprep.subr.bf16.mxu0 %v893
        %917 = vmatpush1.bf16.msra.mxu0 %v892
        %918 = vmatprep.subr.bf16.mxu0 %v895
        %919 = vmatpush1.bf16.msra.mxu0 %v894
        %920 = vmatprep.subr.bf16.mxu0 %v910
        %921 = vmatpush1.bf16.msra.mxu0 %v907
        %922 = vmatprep.subr.bf16.mxu0 0
        %923 = vmatpush1.bf16.msra.mxu0 0
        %924 = vmatprep.subr.bf16.mxu0 0
        %925 = vmatpush1.bf16.msra.mxu0 0
        %926 = vmatprep.subr.bf16.mxu0 0
        %927 = vmatpush1.bf16.msra.mxu0 0
        %928 = vmatprep.subr.bf16.mxu0 0
        %929 = vmatpush1.bf16.msra.mxu0 0
        %930 = vmatprep.subr.bf16.mxu0 0
        %931 = vmatpush1.bf16.msra.mxu0 0
        %932 = vmatprep.subr.bf16.mxu0 0
        %933 = vmatpush1.bf16.msra.mxu0 0
        %934 = vmatprep.subr.bf16.mxu0 0
        %935 = vmatpush1.bf16.msra.mxu0 0
        %936 = vmatprep.subr.bf16.mxu0 0
        %937 = vmatpush1.bf16.msra.mxu0 0
        %938 = vmatprep.subr.bf16.mxu0 0
        %939 = vmatpush1.bf16.msra.mxu0 0
        %940 = vmatprep.subr.bf16.mxu0 0
        %941 = vmatpush1.bf16.msra.mxu0 0
        %942 = vmatprep.subr.bf16.mxu0 0
        %943 = vmatpush1.bf16.msra.mxu0 0
        %944 = vmatprep.mubr.bf16.mxu0 0
        %945 = vmatmul.mubr.bf16.gmra.mrb[0].mxu0 %v904
        %v946 = vpop.f32.mrb[0].mxu0
        %v947 = vadd.f32 %v901, %v946
        %v948 = vpop.f32.mrb[0].mxu0
        %v949 = vadd.f32 %v901, %v948
        %v950 = vpop.f32.mrb[0].mxu0
        %v951 = vpop.f32.mrb[0].mxu0
        %952 = vdwg.mxu0
        %v953 = vmax.f32 %v947, 0.0
        %v954 = vmax.f32 %v949, 0.0
        %s955 = scalar_lea.vmem %s5, 4
        %v956 = vld [vmem:[%s955] sm:$0xf]
        %s957 = scalar_lea.vmem %s6, 8
        %v958 = vld [vmem:[%s957] sm:$0xff]
        %959 = vrot.lane.b32.xlu0 %v953, 17
        %v960 = vpop.permute.xlu0 %959
        %961 = vrot.lane.b32.xlu0 %v954, 17
        %v962 = vpop.permute.xlu0 %961
        %v963 = vsel %vm623, %v960, %v962
        %v964 = vsel %vm623, %v962, %v960
        %v965 = vmul.f32 %v964, %v629
        %v966 = vmul.f32 %v963, %v633
        %967 = vrot.lane.b32.xlu0 %v953, 16
        %v968 = vpop.permute.xlu0 %967
        %969 = vrot.lane.b32.xlu0 %v954, 16
        %v970 = vpop.permute.xlu0 %969
        %v971 = vsel %vm640, %v968, %v970
        %v972 = vsel %vm640, %v970, %v968
        %v973 = vmul.f32 %v972, %v646
        %v974 = vmul.f32 %v971, %v650
        %975 = vrot.lane.b32.xlu0 %v953, 15
        %v976 = vpop.permute.xlu0 %975
        %977 = vrot.lane.b32.xlu0 %v954, 15
        %v978 = vpop.permute.xlu0 %977
        %v979 = vsel %vm657, %v976, %v978
        %v980 = vsel %vm657, %v978, %v976
        %v981 = vmul.f32 %v980, %v663
        %v982 = vmul.f32 %v979, %v667
        %983 = vrot.lane.b32.xlu0 %v953, 1
        %v984 = vpop.permute.xlu0 %983
        %985 = vrot.lane.b32.xlu0 %v954, 1
        %v986 = vpop.permute.xlu0 %985
        %v987 = vsel %vm674, %v984, %v986
        %v988 = vsel %vm674, %v986, %v984
        %v989 = vmul.f32 %v988, %v680
        %v990 = vmul.f32 %v987, %v684
        %991 = vrot.lane.b32.xlu0 %v953, 127
        %v992 = vpop.permute.xlu0 %991
        %993 = vrot.lane.b32.xlu0 %v954, 127
        %v994 = vpop.permute.xlu0 %993
        %v995 = vsel %vm691, %v992, %v994
        %v996 = vsel %vm691, %v994, %v992
        %v997 = vmul.f32 %v995, %v697
        %v998 = vmul.f32 %v996, %v701
        %999 = vrot.lane.b32.xlu0 %v953, 113
        %v1000 = vpop.permute.xlu0 %999
        %1001 = vrot.lane.b32.xlu0 %v954, 113
        %v1002 = vpop.permute.xlu0 %1001
        %v1003 = vsel %vm708, %v1000, %v1002
        %v1004 = vsel %vm708, %v1002, %v1000
        %v1005 = vmul.f32 %v1003, %v714
        %v1006 = vmul.f32 %v1004, %v718
        %1007 = vrot.lane.b32.xlu0 %v953, 112
        %v1008 = vpop.permute.xlu0 %1007
        %1009 = vrot.lane.b32.xlu0 %v954, 112
        %v1010 = vpop.permute.xlu0 %1009
        %v1011 = vsel %vm725, %v1008, %v1010
        %v1012 = vsel %vm725, %v1010, %v1008
        %v1013 = vmul.f32 %v1011, %v731
        %v1014 = vmul.f32 %v1012, %v735
        %1015 = vrot.lane.b32.xlu0 %v953, 111
        %v1016 = vpop.permute.xlu0 %1015
        %1017 = vrot.lane.b32.xlu0 %v954, 111
        %v1018 = vpop.permute.xlu0 %1017
        %v1019 = vsel %vm742, %v1016, %v1018
        %v1020 = vsel %vm742, %v1018, %v1016
        %v1021 = vmul.f32 %v1019, %v748
        %v1022 = vmul.f32 %v1020, %v752
        %v1023 = vpack.c.bf16 %v973, %v965
        %v1024 = vpack.c.bf16 %v974, %v966
        %v1025 = vpack.c.bf16 %v989, %v981
        %v1026 = vpack.c.bf16 %v990, %v982
        %v1027 = vpack.c.bf16 %v997, %v953
        %v1028 = vpack.c.bf16 %v998, %v954
        %v1029 = vpack.c.bf16 %v1013, %v1005
        %v1030 = vpack.c.bf16 %v1014, %v1006
        %v1031 = vpack.c.bf16 %v1021, %v1021
        %v1032 = vpack.c.bf16 %v1022, %v1022
        %1034 = vset.pattern.permute.xlu0 0
        %1035 = vperm.xlu0 %1034, %v958
        %v1036 = vpop.permute.xlu0 %1035
        %v1039 = vsel %vm770, %v956, 0
        %v1042 = vsel %vm774, %v1031, 0
        %v1045 = vsel %vm774, %v1032, 0
        %1047 = vmatprep.subr.bf16.mxu0 %v1024
        %1048 = vmatpush1.bf16.msra.mxu0 %v1023
        %1049 = vmatprep.subr.bf16.mxu0 %v1026
        %1050 = vmatpush1.bf16.msra.mxu0 %v1025
        %1051 = vmatprep.subr.bf16.mxu0 %v1028
        %1052 = vmatpush1.bf16.msra.mxu0 %v1027
        %1053 = vmatprep.subr.bf16.mxu0 %v1030
        %1054 = vmatpush1.bf16.msra.mxu0 %v1029
        %1055 = vmatprep.subr.bf16.mxu0 %v1045
        %1056 = vmatpush1.bf16.msra.mxu0 %v1042
        %1057 = vmatprep.subr.bf16.mxu0 0
        %1058 = vmatpush1.bf16.msra.mxu0 0
        %1059 = vmatprep.subr.bf16.mxu0 0
        %1060 = vmatpush1.bf16.msra.mxu0 0
        %1061 = vmatprep.subr.bf16.mxu0 0
        %1062 = vmatpush1.bf16.msra.mxu0 0
        %1063 = vmatprep.subr.bf16.mxu0 0
        %1064 = vmatpush1.bf16.msra.mxu0 0
        %1065 = vmatprep.subr.bf16.mxu0 0
        %1066 = vmatpush1.bf16.msra.mxu0 0
        %1067 = vmatprep.subr.bf16.mxu0 0
        %1068 = vmatpush1.bf16.msra.mxu0 0
        %1069 = vmatprep.subr.bf16.mxu0 0
        %1070 = vmatpush1.bf16.msra.mxu0 0
        %1071 = vmatprep.subr.bf16.mxu0 0
        %1072 = vmatpush1.bf16.msra.mxu0 0
        %1073 = vmatprep.subr.bf16.mxu0 0
        %1074 = vmatpush1.bf16.msra.mxu0 0
        %1075 = vmatprep.subr.bf16.mxu0 0
        %1076 = vmatpush1.bf16.msra.mxu0 0
        %1077 = vmatprep.subr.bf16.mxu0 0
        %1078 = vmatpush1.bf16.msra.mxu0 0
        %1079 = vmatprep.mubr.bf16.mxu0 0
        %1080 = vmatmul.mubr.bf16.gmra.mrb[0].mxu0 %v1039
        %v1081 = vpop.f32.mrb[0].mxu0
        %v1082 = vadd.f32 %v1036, %v1081
        %v1083 = vpop.f32.mrb[0].mxu0
        %v1084 = vadd.f32 %v1036, %v1083
        %v1085 = vpop.f32.mrb[0].mxu0
        %v1086 = vpop.f32.mrb[0].mxu0
        %1087 = vdwg.mxu0
        %v1088 = vadd.f32 %v816, %v1082
        %v1089 = vadd.f32 %v818, %v1084
        %s1090 = scalar_lea.vmem %s5, 8
        %v1091 = vld [vmem:[%s1090] sm:$0xf]
        %s1092 = scalar_lea.vmem %s6, 16
        %v1093 = vld [vmem:[%s1092] sm:$0xff]
        %1094 = vrot.lane.b32.xlu0 %v1088, 17
        %v1095 = vpop.permute.xlu0 %1094
        %1096 = vrot.lane.b32.xlu0 %v1089, 17
        %v1097 = vpop.permute.xlu0 %1096
        %v1098 = vsel %vm623, %v1095, %v1097
        %v1099 = vsel %vm623, %v1097, %v1095
        %v1100 = vmul.f32 %v1099, %v629
        %v1101 = vmul.f32 %v1098, %v633
        %1102 = vrot.lane.b32.xlu0 %v1088, 16
        %v1103 = vpop.permute.xlu0 %1102
        %1104 = vrot.lane.b32.xlu0 %v1089, 16
        %v1105 = vpop.permute.xlu0 %1104
        %v1106 = vsel %vm640, %v1103, %v1105
        %v1107 = vsel %vm640, %v1105, %v1103
        %v1108 = vmul.f32 %v1107, %v646
        %v1109 = vmul.f32 %v1106, %v650
        %1110 = vrot.lane.b32.xlu0 %v1088, 15
        %v1111 = vpop.permute.xlu0 %1110
        %1112 = vrot.lane.b32.xlu0 %v1089, 15
        %v1113 = vpop.permute.xlu0 %1112
        %v1114 = vsel %vm657, %v1111, %v1113
        %v1115 = vsel %vm657, %v1113, %v1111
        %v1116 = vmul.f32 %v1115, %v663
        %v1117 = vmul.f32 %v1114, %v667
        %1118 = vrot.lane.b32.xlu0 %v1088, 1
        %v1119 = vpop.permute.xlu0 %1118
        %1120 = vrot.lane.b32.xlu0 %v1089, 1
        %v1121 = vpop.permute.xlu0 %1120
        %v1122 = vsel %vm674, %v1119, %v1121
        %v1123 = vsel %vm674, %v1121, %v1119
        %v1124 = vmul.f32 %v1123, %v680
        %v1125 = vmul.f32 %v1122, %v684
        %1126 = vrot.lane.b32.xlu0 %v1088, 127
        %v1127 = vpop.permute.xlu0 %1126
        %1128 = vrot.lane.b32.xlu0 %v1089, 127
        %v1129 = vpop.permute.xlu0 %1128
        %v1130 = vsel %vm691, %v1127, %v1129
        %v1131 = vsel %vm691, %v1129, %v1127
        %v1132 = vmul.f32 %v1130, %v697
        %v1133 = vmul.f32 %v1131, %v701
        %1134 = vrot.lane.b32.xlu0 %v1088, 113
        %v1135 = vpop.permute.xlu0 %1134
        %1136 = vrot.lane.b32.xlu0 %v1089, 113
        %v1137 = vpop.permute.xlu0 %1136
        %v1138 = vsel %vm708, %v1135, %v1137
        %v1139 = vsel %vm708, %v1137, %v1135
        %v1140 = vmul.f32 %v1138, %v714
        %v1141 = vmul.f32 %v1139, %v718
        %1142 = vrot.lane.b32.xlu0 %v1088, 112
        %v1143 = vpop.permute.xlu0 %1142
        %1144 = vrot.lane.b32.xlu0 %v1089, 112
        %v1145 = vpop.permute.xlu0 %1144
        %v1146 = vsel %vm725, %v1143, %v1145
        %v1147 = vsel %vm725, %v1145, %v1143
        %v1148 = vmul.f32 %v1146, %v731
        %v1149 = vmul.f32 %v1147, %v735
        %1150 = vrot.lane.b32.xlu0 %v1088, 111
        %v1151 = vpop.permute.xlu0 %1150
        %1152 = vrot.lane.b32.xlu0 %v1089, 111
        %v1153 = vpop.permute.xlu0 %1152
        %v1154 = vsel %vm742, %v1151, %v1153
        %v1155 = vsel %vm742, %v1153, %v1151
        %v1156 = vmul.f32 %v1154, %v748
        %v1157 = vmul.f32 %v1155, %v752
        %v1158 = vpack.c.bf16 %v1108, %v1100
        %v1159 = vpack.c.bf16 %v1109, %v1101
        %v1160 = vpack.c.bf16 %v1124, %v1116
        %v1161 = vpack.c.bf16 %v1125, %v1117
        %v1162 = vpack.c.bf16 %v1132, %v1088
        %v1163 = vpack.c.bf16 %v1133, %v1089
        %v1164 = vpack.c.bf16 %v1148, %v1140
        %v1165 = vpack.c.bf16 %v1149, %v1141
        %v1166 = vpack.c.bf16 %v1156, %v1156
        %v1167 = vpack.c.bf16 %v1157, %v1157
        %1169 = vset.pattern.permute.xlu0 0
        %1170 = vperm.xlu0 %1169, %v1093
        %v1171 = vpop.permute.xlu0 %1170
        %v1174 = vsel %vm770, %v1091, 0
        %v1177 = vsel %vm774, %v1166, 0
        %v1180 = vsel %vm774, %v1167, 0
        %1182 = vmatprep.subr.bf16.mxu0 %v1159
        %1183 = vmatpush1.bf16.msra.mxu0 %v1158
        %1184 = vmatprep.subr.bf16.mxu0 %v1161
        %1185 = vmatpush1.bf16.msra.mxu0 %v1160
        %1186 = vmatprep.subr.bf16.mxu0 %v1163
        %1187 = vmatpush1.bf16.msra.mxu0 %v1162
        %1188 = vmatprep.subr.bf16.mxu0 %v1165
        %1189 = vmatpush1.bf16.msra.mxu0 %v1164
        %1190 = vmatprep.subr.bf16.mxu0 %v1180
        %1191 = vmatpush1.bf16.msra.mxu0 %v1177
        %1192 = vmatprep.subr.bf16.mxu0 0
        %1193 = vmatpush1.bf16.msra.mxu0 0
        %1194 = vmatprep.subr.bf16.mxu0 0
        %1195 = vmatpush1.bf16.msra.mxu0 0
        %1196 = vmatprep.subr.bf16.mxu0 0
        %1197 = vmatpush1.bf16.msra.mxu0 0
        %1198 = vmatprep.subr.bf16.mxu0 0
        %1199 = vmatpush1.bf16.msra.mxu0 0
        %1200 = vmatprep.subr.bf16.mxu0 0
        %1201 = vmatpush1.bf16.msra.mxu0 0
        %1202 = vmatprep.subr.bf16.mxu0 0
        %1203 = vmatpush1.bf16.msra.mxu0 0
        %1204 = vmatprep.subr.bf16.mxu0 0
        %1205 = vmatpush1.bf16.msra.mxu0 0
        %1206 = vmatprep.subr.bf16.mxu0 0
        %1207 = vmatpush1.bf16.msra.mxu0 0
        %1208 = vmatprep.subr.bf16.mxu0 0
        %1209 = vmatpush1.bf16.msra.mxu0 0
        %1210 = vmatprep.subr.bf16.mxu0 0
        %1211 = vmatpush1.bf16.msra.mxu0 0
        %1212 = vmatprep.subr.bf16.mxu0 0
        %1213 = vmatpush1.bf16.msra.mxu0 0
        %1214 = vmatprep.mubr.bf16.mxu0 0
        %1215 = vmatmul.mubr.bf16.gmra.mrb[0].mxu0 %v1174
        %v1216 = vpop.f32.mrb[0].mxu0
        %v1217 = vadd.f32 %v1171, %v1216
        %v1218 = vpop.f32.mrb[0].mxu0
        %v1219 = vadd.f32 %v1171, %v1218
        %v1220 = vpop.f32.mrb[0].mxu0
        %v1221 = vpop.f32.mrb[0].mxu0
        %1222 = vdwg.mxu0
        %v1223 = vmax.f32 %v1217, 0.0
        %v1224 = vmax.f32 %v1219, 0.0
        %s1225 = scalar_lea.vmem %s5, 12
        %v1226 = vld [vmem:[%s1225] sm:$0xf]
        %s1227 = scalar_lea.vmem %s6, 24
        %v1228 = vld [vmem:[%s1227] sm:$0xff]
        %1229 = vrot.lane.b32.xlu0 %v1223, 17
        %v1230 = vpop.permute.xlu0 %1229
        %1231 = vrot.lane.b32.xlu0 %v1224, 17
        %v1232 = vpop.permute.xlu0 %1231
        %v1233 = vsel %vm623, %v1230, %v1232
        %v1234 = vsel %vm623, %v1232, %v1230
        %v1235 = vmul.f32 %v1234, %v629
        %v1236 = vmul.f32 %v1233, %v633
        %1237 = vrot.lane.b32.xlu0 %v1223, 16
        %v1238 = vpop.permute.xlu0 %1237
        %1239 = vrot.lane.b32.xlu0 %v1224, 16
        %v1240 = vpop.permute.xlu0 %1239
        %v1241 = vsel %vm640, %v1238, %v1240
        %v1242 = vsel %vm640, %v1240, %v1238
        %v1243 = vmul.f32 %v1242, %v646
        %v1244 = vmul.f32 %v1241, %v650
        %1245 = vrot.lane.b32.xlu0 %v1223, 15
        %v1246 = vpop.permute.xlu0 %1245
        %1247 = vrot.lane.b32.xlu0 %v1224, 15
        %v1248 = vpop.permute.xlu0 %1247
        %v1249 = vsel %vm657, %v1246, %v1248
        %v1250 = vsel %vm657, %v1248, %v1246
        %v1251 = vmul.f32 %v1250, %v663
        %v1252 = vmul.f32 %v1249, %v667
        %1253 = vrot.lane.b32.xlu0 %v1223, 1
        %v1254 = vpop.permute.xlu0 %1253
        %1255 = vrot.lane.b32.xlu0 %v1224, 1
        %v1256 = vpop.permute.xlu0 %1255
        %v1257 = vsel %vm674, %v1254, %v1256
        %v1258 = vsel %vm674, %v1256, %v1254
        %v1259 = vmul.f32 %v1258, %v680
        %v1260 = vmul.f32 %v1257, %v684
        %1261 = vrot.lane.b32.xlu0 %v1223, 127
        %v1262 = vpop.permute.xlu0 %1261
        %1263 = vrot.lane.b32.xlu0 %v1224, 127
        %v1264 = vpop.permute.xlu0 %1263
        %v1265 = vsel %vm691, %v1262, %v1264
        %v1266 = vsel %vm691, %v1264, %v1262
        %v1267 = vmul.f32 %v1265, %v697
        %v1268 = vmul.f32 %v1266, %v701
        %1269 = vrot.lane.b32.xlu0 %v1223, 113
        %v1270 = vpop.permute.xlu0 %1269
        %1271 = vrot.lane.b32.xlu0 %v1224, 113
        %v1272 = vpop.permute.xlu0 %1271
        %v1273 = vsel %vm708, %v1270, %v1272
        %v1274 = vsel %vm708, %v1272, %v1270
        %v1275 = vmul.f32 %v1273, %v714
        %v1276 = vmul.f32 %v1274, %v718
        %1277 = vrot.lane.b32.xlu0 %v1223, 112
        %v1278 = vpop.permute.xlu0 %1277
        %1279 = vrot.lane.b32.xlu0 %v1224, 112
        %v1280 = vpop.permute.xlu0 %1279
        %v1281 = vsel %vm725, %v1278, %v1280
        %v1282 = vsel %vm725, %v1280, %v1278
        %v1283 = vmul.f32 %v1281, %v731
        %v1284 = vmul.f32 %v1282, %v735
        %1285 = vrot.lane.b32.xlu0 %v1223, 111
        %v1286 = vpop.permute.xlu0 %1285
        %1287 = vrot.lane.b32.xlu0 %v1224, 111
        %v1288 = vpop.permute.xlu0 %1287
        %v1289 = vsel %vm742, %v1286, %v1288
        %v1290 = vsel %vm742, %v1288, %v1286
        %v1291 = vmul.f32 %v1289, %v748
        %v1292 = vmul.f32 %v1290, %v752
        %v1293 = vpack.c.bf16 %v1243, %v1235
        %v1294 = vpack.c.bf16 %v1244, %v1236
        %v1295 = vpack.c.bf16 %v1259, %v1251
        %v1296 = vpack.c.bf16 %v1260, %v1252
        %v1297 = vpack.c.bf16 %v1267, %v1223
        %v1298 = vpack.c.bf16 %v1268, %v1224
        %v1299 = vpack.c.bf16 %v1283, %v1275
        %v1300 = vpack.c.bf16 %v1284, %v1276
        %v1301 = vpack.c.bf16 %v1291, %v1291
        %v1302 = vpack.c.bf16 %v1292, %v1292
        %1304 = vset.pattern.permute.xlu0 0
        %1305 = vperm.xlu0 %1304, %v1228
        %v1306 = vpop.permute.xlu0 %1305
        %v1309 = vsel %vm770, %v1226, 0
        %v1312 = vsel %vm774, %v1301, 0
        %v1315 = vsel %vm774, %v1302, 0
        %1317 = vmatprep.subr.bf16.mxu0 %v1294
        %1318 = vmatpush1.bf16.msra.mxu0 %v1293
        %1319 = vmatprep.subr.bf16.mxu0 %v1296
        %1320 = vmatpush1.bf16.msra.mxu0 %v1295
        %1321 = vmatprep.subr.bf16.mxu0 %v1298
        %1322 = vmatpush1.bf16.msra.mxu0 %v1297
        %1323 = vmatprep.subr.bf16.mxu0 %v1300
        %1324 = vmatpush1.bf16.msra.mxu0 %v1299
        %1325 = vmatprep.subr.bf16.mxu0 %v1315
        %1326 = vmatpush1.bf16.msra.mxu0 %v1312
        %1327 = vmatprep.subr.bf16.mxu0 0
        %1328 = vmatpush1.bf16.msra.mxu0 0
        %1329 = vmatprep.subr.bf16.mxu0 0
        %1330 = vmatpush1.bf16.msra.mxu0 0
        %1331 = vmatprep.subr.bf16.mxu0 0
        %1332 = vmatpush1.bf16.msra.mxu0 0
        %1333 = vmatprep.subr.bf16.mxu0 0
        %1334 = vmatpush1.bf16.msra.mxu0 0
        %1335 = vmatprep.subr.bf16.mxu0 0
        %1336 = vmatpush1.bf16.msra.mxu0 0
        %1337 = vmatprep.subr.bf16.mxu0 0
        %1338 = vmatpush1.bf16.msra.mxu0 0
        %1339 = vmatprep.subr.bf16.mxu0 0
        %1340 = vmatpush1.bf16.msra.mxu0 0
        %1341 = vmatprep.subr.bf16.mxu0 0
        %1342 = vmatpush1.bf16.msra.mxu0 0
        %1343 = vmatprep.subr.bf16.mxu0 0
        %1344 = vmatpush1.bf16.msra.mxu0 0
        %1345 = vmatprep.subr.bf16.mxu0 0
        %1346 = vmatpush1.bf16.msra.mxu0 0
        %1347 = vmatprep.subr.bf16.mxu0 0
        %1348 = vmatpush1.bf16.msra.mxu0 0
        %1349 = vmatprep.mubr.bf16.mxu0 0
        %1350 = vmatmul.mubr.bf16.gmra.mrb[0].mxu0 %v1309
        %v1351 = vpop.f32.mrb[0].mxu0
        %v1352 = vadd.f32 %v1306, %v1351
        %v1353 = vpop.f32.mrb[0].mxu0
        %v1354 = vadd.f32 %v1306, %v1353
        %v1355 = vpop.f32.mrb[0].mxu0
        %v1356 = vpop.f32.mrb[0].mxu0
        %1357 = vdwg.mxu0
        %v1358 = vadd.f32 %v1088, %v1352
        %v1359 = vadd.f32 %v1089, %v1354
        %s1360 = scalar_lea.vmem %s5, 16
        %v1361 = vld [vmem:[%s1360] sm:$0xf]
        %s1362 = scalar_lea.vmem %s6, 32
        %v1363 = vld [vmem:[%s1362] sm:$0xff]
        %1364 = vrot.lane.b32.xlu0 %v1358, 17
        %v1365 = vpop.permute.xlu0 %1364
        %1366 = vrot.lane.b32.xlu0 %v1359, 17
        %v1367 = vpop.permute.xlu0 %1366
        %v1368 = vsel %vm623, %v1365, %v1367
        %v1369 = vsel %vm623, %v1367, %v1365
        %v1370 = vmul.f32 %v1369, %v629
        %v1371 = vmul.f32 %v1368, %v633
        %1372 = vrot.lane.b32.xlu0 %v1358, 16
        %v1373 = vpop.permute.xlu0 %1372
        %1374 = vrot.lane.b32.xlu0 %v1359, 16
        %v1375 = vpop.permute.xlu0 %1374
        %v1376 = vsel %vm640, %v1373, %v1375
        %v1377 = vsel %vm640, %v1375, %v1373
        %v1378 = vmul.f32 %v1377, %v646
        %v1379 = vmul.f32 %v1376, %v650
        %1380 = vrot.lane.b32.xlu0 %v1358, 15
        %v1381 = vpop.permute.xlu0 %1380
        %1382 = vrot.lane.b32.xlu0 %v1359, 15
        %v1383 = vpop.permute.xlu0 %1382
        %v1384 = vsel %vm657, %v1381, %v1383
        %v1385 = vsel %vm657, %v1383, %v1381
        %v1386 = vmul.f32 %v1385, %v663
        %v1387 = vmul.f32 %v1384, %v667
        %1388 = vrot.lane.b32.xlu0 %v1358, 1
        %v1389 = vpop.permute.xlu0 %1388
        %1390 = vrot.lane.b32.xlu0 %v1359, 1
        %v1391 = vpop.permute.xlu0 %1390
        %v1392 = vsel %vm674, %v1389, %v1391
        %v1393 = vsel %vm674, %v1391, %v1389
        %v1394 = vmul.f32 %v1393, %v680
        %v1395 = vmul.f32 %v1392, %v684
        %1396 = vrot.lane.b32.xlu0 %v1358, 127
        %v1397 = vpop.permute.xlu0 %1396
        %1398 = vrot.lane.b32.xlu0 %v1359, 127
        %v1399 = vpop.permute.xlu0 %1398
        %v1400 = vsel %vm691, %v1397, %v1399
        %v1401 = vsel %vm691, %v1399, %v1397
        %v1402 = vmul.f32 %v1400, %v697
        %v1403 = vmul.f32 %v1401, %v701
        %1404 = vrot.lane.b32.xlu0 %v1358, 113
        %v1405 = vpop.permute.xlu0 %1404
        %1406 = vrot.lane.b32.xlu0 %v1359, 113
        %v1407 = vpop.permute.xlu0 %1406
        %v1408 = vsel %vm708, %v1405, %v1407
        %v1409 = vsel %vm708, %v1407, %v1405
        %v1410 = vmul.f32 %v1408, %v714
        %v1411 = vmul.f32 %v1409, %v718
        %1412 = vrot.lane.b32.xlu0 %v1358, 112
        %v1413 = vpop.permute.xlu0 %1412
        %1414 = vrot.lane.b32.xlu0 %v1359, 112
        %v1415 = vpop.permute.xlu0 %1414
        %v1416 = vsel %vm725, %v1413, %v1415
        %v1417 = vsel %vm725, %v1415, %v1413
        %v1418 = vmul.f32 %v1416, %v731
        %v1419 = vmul.f32 %v1417, %v735
        %1420 = vrot.lane.b32.xlu0 %v1358, 111
        %v1421 = vpop.permute.xlu0 %1420
        %1422 = vrot.lane.b32.xlu0 %v1359, 111
        %v1423 = vpop.permute.xlu0 %1422
        %v1424 = vsel %vm742, %v1421, %v1423
        %v1425 = vsel %vm742, %v1423, %v1421
        %v1426 = vmul.f32 %v1424, %v748
        %v1427 = vmul.f32 %v1425, %v752
        %v1428 = vpack.c.bf16 %v1378, %v1370
        %v1429 = vpack.c.bf16 %v1379, %v1371
        %v1430 = vpack.c.bf16 %v1394, %v1386
        %v1431 = vpack.c.bf16 %v1395, %v1387
        %v1432 = vpack.c.bf16 %v1402, %v1358
        %v1433 = vpack.c.bf16 %v1403, %v1359
        %v1434 = vpack.c.bf16 %v1418, %v1410
        %v1435 = vpack.c.bf16 %v1419, %v1411
        %v1436 = vpack.c.bf16 %v1426, %v1426
        %v1437 = vpack.c.bf16 %v1427, %v1427
        %1439 = vset.pattern.permute.xlu0 0
        %1440 = vperm.xlu0 %1439, %v1363
        %v1441 = vpop.permute.xlu0 %1440
        %v1444 = vsel %vm770, %v1361, 0
        %v1447 = vsel %vm774, %v1436, 0
        %v1450 = vsel %vm774, %v1437, 0
        %1452 = vmatprep.subr.bf16.mxu0 %v1429
        %1453 = vmatpush1.bf16.msra.mxu0 %v1428
        %1454 = vmatprep.subr.bf16.mxu0 %v1431
        %1455 = vmatpush1.bf16.msra.mxu0 %v1430
        %1456 = vmatprep.subr.bf16.mxu0 %v1433
        %1457 = vmatpush1.bf16.msra.mxu0 %v1432
        %1458 = vmatprep.subr.bf16.mxu0 %v1435
        %1459 = vmatpush1.bf16.msra.mxu0 %v1434
        %1460 = vmatprep.subr.bf16.mxu0 %v1450
        %1461 = vmatpush1.bf16.msra.mxu0 %v1447
        %1462 = vmatprep.subr.bf16.mxu0 0
        %1463 = vmatpush1.bf16.msra.mxu0 0
        %1464 = vmatprep.subr.bf16.mxu0 0
        %1465 = vmatpush1.bf16.msra.mxu0 0
        %1466 = vmatprep.subr.bf16.mxu0 0
        %1467 = vmatpush1.bf16.msra.mxu0 0
        %1468 = vmatprep.subr.bf16.mxu0 0
        %1469 = vmatpush1.bf16.msra.mxu0 0
        %1470 = vmatprep.subr.bf16.mxu0 0
        %1471 = vmatpush1.bf16.msra.mxu0 0
        %1472 = vmatprep.subr.bf16.mxu0 0
        %1473 = vmatpush1.bf16.msra.mxu0 0
        %1474 = vmatprep.subr.bf16.mxu0 0
        %1475 = vmatpush1.bf16.msra.mxu0 0
        %1476 = vmatprep.subr.bf16.mxu0 0
        %1477 = vmatpush1.bf16.msra.mxu0 0
        %1478 = vmatprep.subr.bf16.mxu0 0
        %1479 = vmatpush1.bf16.msra.mxu0 0
        %1480 = vmatprep.subr.bf16.mxu0 0
        %1481 = vmatpush1.bf16.msra.mxu0 0
        %1482 = vmatprep.subr.bf16.mxu0 0
        %1483 = vmatpush1.bf16.msra.mxu0 0
        %1484 = vmatprep.mubr.bf16.mxu0 0
        %1485 = vmatmul.mubr.bf16.gmra.mrb[0].mxu0 %v1444
        %v1486 = vpop.f32.mrb[0].mxu0
        %v1487 = vadd.f32 %v1441, %v1486
        %v1488 = vpop.f32.mrb[0].mxu0
        %v1489 = vadd.f32 %v1441, %v1488
        %v1490 = vpop.f32.mrb[0].mxu0
        %v1491 = vpop.f32.mrb[0].mxu0
        %1492 = vdwg.mxu0
        %v1493 = vadd.f32 %v816, %v1487
        %v1494 = vadd.f32 %v818, %v1489
        %s1495 = scalar_lea.vmem %s5, 20
        %v1496 = vld [vmem:[%s1495] sm:$0xf]
        %s1497 = scalar_lea.vmem %s6, 40
        %v1498 = vld [vmem:[%s1497] sm:$0xff]
        %1499 = vrot.lane.b32.xlu0 %v1493, 17
        %v1500 = vpop.permute.xlu0 %1499
        %1501 = vrot.lane.b32.xlu0 %v1494, 17
        %v1502 = vpop.permute.xlu0 %1501
        %v1503 = vsel %vm623, %v1500, %v1502
        %v1504 = vsel %vm623, %v1502, %v1500
        %v1505 = vmul.f32 %v1504, %v629
        %v1506 = vmul.f32 %v1503, %v633
        %1507 = vrot.lane.b32.xlu0 %v1493, 16
        %v1508 = vpop.permute.xlu0 %1507
        %1509 = vrot.lane.b32.xlu0 %v1494, 16
        %v1510 = vpop.permute.xlu0 %1509
        %v1511 = vsel %vm640, %v1508, %v1510
        %v1512 = vsel %vm640, %v1510, %v1508
        %v1513 = vmul.f32 %v1512, %v646
        %v1514 = vmul.f32 %v1511, %v650
        %1515 = vrot.lane.b32.xlu0 %v1493, 15
        %v1516 = vpop.permute.xlu0 %1515
        %1517 = vrot.lane.b32.xlu0 %v1494, 15
        %v1518 = vpop.permute.xlu0 %1517
        %v1519 = vsel %vm657, %v1516, %v1518
        %v1520 = vsel %vm657, %v1518, %v1516
        %v1521 = vmul.f32 %v1520, %v663
        %v1522 = vmul.f32 %v1519, %v667
        %1523 = vrot.lane.b32.xlu0 %v1493, 1
        %v1524 = vpop.permute.xlu0 %1523
        %1525 = vrot.lane.b32.xlu0 %v1494, 1
        %v1526 = vpop.permute.xlu0 %1525
        %v1527 = vsel %vm674, %v1524, %v1526
        %v1528 = vsel %vm674, %v1526, %v1524
        %v1529 = vmul.f32 %v1528, %v680
        %v1530 = vmul.f32 %v1527, %v684
        %1531 = vrot.lane.b32.xlu0 %v1493, 127
        %v1532 = vpop.permute.xlu0 %1531
        %1533 = vrot.lane.b32.xlu0 %v1494, 127
        %v1534 = vpop.permute.xlu0 %1533
        %v1535 = vsel %vm691, %v1532, %v1534
        %v1536 = vsel %vm691, %v1534, %v1532
        %v1537 = vmul.f32 %v1535, %v697
        %v1538 = vmul.f32 %v1536, %v701
        %1539 = vrot.lane.b32.xlu0 %v1493, 113
        %v1540 = vpop.permute.xlu0 %1539
        %1541 = vrot.lane.b32.xlu0 %v1494, 113
        %v1542 = vpop.permute.xlu0 %1541
        %v1543 = vsel %vm708, %v1540, %v1542
        %v1544 = vsel %vm708, %v1542, %v1540
        %v1545 = vmul.f32 %v1543, %v714
        %v1546 = vmul.f32 %v1544, %v718
        %1547 = vrot.lane.b32.xlu0 %v1493, 112
        %v1548 = vpop.permute.xlu0 %1547
        %1549 = vrot.lane.b32.xlu0 %v1494, 112
        %v1550 = vpop.permute.xlu0 %1549
        %v1551 = vsel %vm725, %v1548, %v1550
        %v1552 = vsel %vm725, %v1550, %v1548
        %v1553 = vmul.f32 %v1551, %v731
        %v1554 = vmul.f32 %v1552, %v735
        %1555 = vrot.lane.b32.xlu0 %v1493, 111
        %v1556 = vpop.permute.xlu0 %1555
        %1557 = vrot.lane.b32.xlu0 %v1494, 111
        %v1558 = vpop.permute.xlu0 %1557
        %v1559 = vsel %vm742, %v1556, %v1558
        %v1560 = vsel %vm742, %v1558, %v1556
        %v1561 = vmul.f32 %v1559, %v748
        %v1562 = vmul.f32 %v1560, %v752
        %v1563 = vpack.c.bf16 %v1513, %v1505
        %v1564 = vpack.c.bf16 %v1514, %v1506
        %v1565 = vpack.c.bf16 %v1529, %v1521
        %v1566 = vpack.c.bf16 %v1530, %v1522
        %v1567 = vpack.c.bf16 %v1537, %v1493
        %v1568 = vpack.c.bf16 %v1538, %v1494
        %v1569 = vpack.c.bf16 %v1553, %v1545
        %v1570 = vpack.c.bf16 %v1554, %v1546
        %v1571 = vpack.c.bf16 %v1561, %v1561
        %v1572 = vpack.c.bf16 %v1562, %v1562
        %1574 = vset.pattern.permute.xlu0 0
        %1575 = vperm.xlu0 %1574, %v1498
        %v1576 = vpop.permute.xlu0 %1575
        %v1579 = vsel %vm770, %v1496, 0
        %v1582 = vsel %vm774, %v1571, 0
        %v1585 = vsel %vm774, %v1572, 0
        %1587 = vmatprep.subr.bf16.mxu0 %v1564
        %1588 = vmatpush1.bf16.msra.mxu0 %v1563
        %1589 = vmatprep.subr.bf16.mxu0 %v1566
        %1590 = vmatpush1.bf16.msra.mxu0 %v1565
        %1591 = vmatprep.subr.bf16.mxu0 %v1568
        %1592 = vmatpush1.bf16.msra.mxu0 %v1567
        %1593 = vmatprep.subr.bf16.mxu0 %v1570
        %1594 = vmatpush1.bf16.msra.mxu0 %v1569
        %1595 = vmatprep.subr.bf16.mxu0 %v1585
        %1596 = vmatpush1.bf16.msra.mxu0 %v1582
        %1597 = vmatprep.subr.bf16.mxu0 0
        %1598 = vmatpush1.bf16.msra.mxu0 0
        %1599 = vmatprep.subr.bf16.mxu0 0
        %1600 = vmatpush1.bf16.msra.mxu0 0
        %1601 = vmatprep.subr.bf16.mxu0 0
        %1602 = vmatpush1.bf16.msra.mxu0 0
        %1603 = vmatprep.subr.bf16.mxu0 0
        %1604 = vmatpush1.bf16.msra.mxu0 0
        %1605 = vmatprep.subr.bf16.mxu0 0
        %1606 = vmatpush1.bf16.msra.mxu0 0
        %1607 = vmatprep.subr.bf16.mxu0 0
        %1608 = vmatpush1.bf16.msra.mxu0 0
        %1609 = vmatprep.subr.bf16.mxu0 0
        %1610 = vmatpush1.bf16.msra.mxu0 0
        %1611 = vmatprep.subr.bf16.mxu0 0
        %1612 = vmatpush1.bf16.msra.mxu0 0
        %1613 = vmatprep.subr.bf16.mxu0 0
        %1614 = vmatpush1.bf16.msra.mxu0 0
        %1615 = vmatprep.subr.bf16.mxu0 0
        %1616 = vmatpush1.bf16.msra.mxu0 0
        %1617 = vmatprep.subr.bf16.mxu0 0
        %1618 = vmatpush1.bf16.msra.mxu0 0
        %1619 = vmatprep.mubr.bf16.mxu0 0
        %1620 = vmatmul.mubr.bf16.gmra.mrb[0].mxu0 %v1579
        %v1621 = vpop.f32.mrb[0].mxu0
        %v1622 = vadd.f32 %v1576, %v1621
        %v1623 = vpop.f32.mrb[0].mxu0
        %v1624 = vadd.f32 %v1576, %v1623
        %v1625 = vpop.f32.mrb[0].mxu0
        %v1626 = vpop.f32.mrb[0].mxu0
        %1627 = vdwg.mxu0
        %v1628 = vmax.f32 %v1622, 0.0
        %v1629 = vmax.f32 %v1624, 0.0
        %s1630 = scalar_lea.vmem %s5, 24
        %v1631 = vld [vmem:[%s1630] sm:$0xf]
        %s1632 = scalar_lea.vmem %s6, 48
        %v1633 = vld [vmem:[%s1632] sm:$0xff]
        %1634 = vrot.lane.b32.xlu0 %v1628, 17
        %v1635 = vpop.permute.xlu0 %1634
        %1636 = vrot.lane.b32.xlu0 %v1629, 17
        %v1637 = vpop.permute.xlu0 %1636
        %v1638 = vsel %vm623, %v1635, %v1637
        %v1639 = vsel %vm623, %v1637, %v1635
        %v1640 = vmul.f32 %v1639, %v629
        %v1641 = vmul.f32 %v1638, %v633
        %1642 = vrot.lane.b32.xlu0 %v1628, 16
        %v1643 = vpop.permute.xlu0 %1642
        %1644 = vrot.lane.b32.xlu0 %v1629, 16
        %v1645 = vpop.permute.xlu0 %1644
        %v1646 = vsel %vm640, %v1643, %v1645
        %v1647 = vsel %vm640, %v1645, %v1643
        %v1648 = vmul.f32 %v1647, %v646
        %v1649 = vmul.f32 %v1646, %v650
        %1650 = vrot.lane.b32.xlu0 %v1628, 15
        %v1651 = vpop.permute.xlu0 %1650
        %1652 = vrot.lane.b32.xlu0 %v1629, 15
        %v1653 = vpop.permute.xlu0 %1652
        %v1654 = vsel %vm657, %v1651, %v1653
        %v1655 = vsel %vm657, %v1653, %v1651
        %v1656 = vmul.f32 %v1655, %v663
        %v1657 = vmul.f32 %v1654, %v667
        %1658 = vrot.lane.b32.xlu0 %v1628, 1
        %v1659 = vpop.permute.xlu0 %1658
        %1660 = vrot.lane.b32.xlu0 %v1629, 1
        %v1661 = vpop.permute.xlu0 %1660
        %v1662 = vsel %vm674, %v1659, %v1661
        %v1663 = vsel %vm674, %v1661, %v1659
        %v1664 = vmul.f32 %v1663, %v680
        %v1665 = vmul.f32 %v1662, %v684
        %1666 = vrot.lane.b32.xlu0 %v1628, 127
        %v1667 = vpop.permute.xlu0 %1666
        %1668 = vrot.lane.b32.xlu0 %v1629, 127
        %v1669 = vpop.permute.xlu0 %1668
        %v1670 = vsel %vm691, %v1667, %v1669
        %v1671 = vsel %vm691, %v1669, %v1667
        %v1672 = vmul.f32 %v1670, %v697
        %v1673 = vmul.f32 %v1671, %v701
        %1674 = vrot.lane.b32.xlu0 %v1628, 113
        %v1675 = vpop.permute.xlu0 %1674
        %1676 = vrot.lane.b32.xlu0 %v1629, 113
        %v1677 = vpop.permute.xlu0 %1676
        %v1678 = vsel %vm708, %v1675, %v1677
        %v1679 = vsel %vm708, %v1677, %v1675
        %v1680 = vmul.f32 %v1678, %v714
        %v1681 = vmul.f32 %v1679, %v718
        %1682 = vrot.lane.b32.xlu0 %v1628, 112
        %v1683 = vpop.permute.xlu0 %1682
        %1684 = vrot.lane.b32.xlu0 %v1629, 112
        %v1685 = vpop.permute.xlu0 %1684
        %v1686 = vsel %vm725, %v1683, %v1685
        %v1687 = vsel %vm725, %v1685, %v1683
        %v1688 = vmul.f32 %v1686, %v731
        %v1689 = vmul.f32 %v1687, %v735
        %1690 = vrot.lane.b32.xlu0 %v1628, 111
        %v1691 = vpop.permute.xlu0 %1690
        %1692 = vrot.lane.b32.xlu0 %v1629, 111
        %v1693 = vpop.permute.xlu0 %1692
        %v1694 = vsel %vm742, %v1691, %v1693
        %v1695 = vsel %vm742, %v1693, %v1691
        %v1696 = vmul.f32 %v1694, %v748
        %v1697 = vmul.f32 %v1695, %v752
        %v1698 = vpack.c.bf16 %v1648, %v1640
        %v1699 = vpack.c.bf16 %v1649, %v1641
        %v1700 = vpack.c.bf16 %v1664, %v1656
        %v1701 = vpack.c.bf16 %v1665, %v1657
        %v1702 = vpack.c.bf16 %v1672, %v1628
        %v1703 = vpack.c.bf16 %v1673, %v1629
        %v1704 = vpack.c.bf16 %v1688, %v1680
        %v1705 = vpack.c.bf16 %v1689, %v1681
        %v1706 = vpack.c.bf16 %v1696, %v1696
        %v1707 = vpack.c.bf16 %v1697, %v1697
        %1709 = vset.pattern.permute.xlu0 0
        %1710 = vperm.xlu0 %1709, %v1633
        %v1711 = vpop.permute.xlu0 %1710
        %v1714 = vsel %vm770, %v1631, 0
        %v1717 = vsel %vm774, %v1706, 0
        %v1720 = vsel %vm774, %v1707, 0
        %1722 = vmatprep.subr.bf16.mxu0 %v1699
        %1723 = vmatpush1.bf16.msra.mxu0 %v1698
        %1724 = vmatprep.subr.bf16.mxu0 %v1701
        %1725 = vmatpush1.bf16.msra.mxu0 %v1700
        %1726 = vmatprep.subr.bf16.mxu0 %v1703
        %1727 = vmatpush1.bf16.msra.mxu0 %v1702
        %1728 = vmatprep.subr.bf16.mxu0 %v1705
        %1729 = vmatpush1.bf16.msra.mxu0 %v1704
        %1730 = vmatprep.subr.bf16.mxu0 %v1720
        %1731 = vmatpush1.bf16.msra.mxu0 %v1717
        %1732 = vmatprep.subr.bf16.mxu0 0
        %1733 = vmatpush1.bf16.msra.mxu0 0
        %1734 = vmatprep.subr.bf16.mxu0 0
        %1735 = vmatpush1.bf16.msra.mxu0 0
        %1736 = vmatprep.subr.bf16.mxu0 0
        %1737 = vmatpush1.bf16.msra.mxu0 0
        %1738 = vmatprep.subr.bf16.mxu0 0
        %1739 = vmatpush1.bf16.msra.mxu0 0
        %1740 = vmatprep.subr.bf16.mxu0 0
        %1741 = vmatpush1.bf16.msra.mxu0 0
        %1742 = vmatprep.subr.bf16.mxu0 0
        %1743 = vmatpush1.bf16.msra.mxu0 0
        %1744 = vmatprep.subr.bf16.mxu0 0
        %1745 = vmatpush1.bf16.msra.mxu0 0
        %1746 = vmatprep.subr.bf16.mxu0 0
        %1747 = vmatpush1.bf16.msra.mxu0 0
        %1748 = vmatprep.subr.bf16.mxu0 0
        %1749 = vmatpush1.bf16.msra.mxu0 0
        %1750 = vmatprep.subr.bf16.mxu0 0
        %1751 = vmatpush1.bf16.msra.mxu0 0
        %1752 = vmatprep.subr.bf16.mxu0 0
        %1753 = vmatpush1.bf16.msra.mxu0 0
        %1754 = vmatprep.mubr.bf16.mxu0 0
        %1755 = vmatmul.mubr.bf16.gmra.mrb[0].mxu0 %v1714
        %v1756 = vpop.f32.mrb[0].mxu0
        %v1757 = vadd.f32 %v1711, %v1756
        %v1758 = vpop.f32.mrb[0].mxu0
        %v1759 = vadd.f32 %v1711, %v1758
        %v1760 = vpop.f32.mrb[0].mxu0
        %v1761 = vpop.f32.mrb[0].mxu0
        %1762 = vdwg.mxu0
        %v1763 = vadd.f32 %v1493, %v1757
        %v1764 = vadd.f32 %v1494, %v1759
        %s1765 = scalar_lea.vmem %s5, 28
        %v1766 = vld [vmem:[%s1765] sm:$0xf]
        %s1767 = scalar_lea.vmem %s6, 56
        %v1768 = vld [vmem:[%s1767] sm:$0xff]
        %1769 = vrot.lane.b32.xlu0 %v1763, 17
        %v1770 = vpop.permute.xlu0 %1769
        %1771 = vrot.lane.b32.xlu0 %v1764, 17
        %v1772 = vpop.permute.xlu0 %1771
        %v1773 = vsel %vm623, %v1770, %v1772
        %v1774 = vsel %vm623, %v1772, %v1770
        %v1775 = vmul.f32 %v1774, %v629
        %v1776 = vmul.f32 %v1773, %v633
        %1777 = vrot.lane.b32.xlu0 %v1763, 16
        %v1778 = vpop.permute.xlu0 %1777
        %1779 = vrot.lane.b32.xlu0 %v1764, 16
        %v1780 = vpop.permute.xlu0 %1779
        %v1781 = vsel %vm640, %v1778, %v1780
        %v1782 = vsel %vm640, %v1780, %v1778
        %v1783 = vmul.f32 %v1782, %v646
        %v1784 = vmul.f32 %v1781, %v650
        %1785 = vrot.lane.b32.xlu0 %v1763, 15
        %v1786 = vpop.permute.xlu0 %1785
        %1787 = vrot.lane.b32.xlu0 %v1764, 15
        %v1788 = vpop.permute.xlu0 %1787
        %v1789 = vsel %vm657, %v1786, %v1788
        %v1790 = vsel %vm657, %v1788, %v1786
        %v1791 = vmul.f32 %v1790, %v663
        %v1792 = vmul.f32 %v1789, %v667
        %1793 = vrot.lane.b32.xlu0 %v1763, 1
        %v1794 = vpop.permute.xlu0 %1793
        %1795 = vrot.lane.b32.xlu0 %v1764, 1
        %v1796 = vpop.permute.xlu0 %1795
        %v1797 = vsel %vm674, %v1794, %v1796
        %v1798 = vsel %vm674, %v1796, %v1794
        %v1799 = vmul.f32 %v1798, %v680
        %v1800 = vmul.f32 %v1797, %v684
        %1801 = vrot.lane.b32.xlu0 %v1763, 127
        %v1802 = vpop.permute.xlu0 %1801
        %1803 = vrot.lane.b32.xlu0 %v1764, 127
        %v1804 = vpop.permute.xlu0 %1803
        %v1805 = vsel %vm691, %v1802, %v1804
        %v1806 = vsel %vm691, %v1804, %v1802
        %v1807 = vmul.f32 %v1805, %v697
        %v1808 = vmul.f32 %v1806, %v701
        %1809 = vrot.lane.b32.xlu0 %v1763, 113
        %v1810 = vpop.permute.xlu0 %1809
        %1811 = vrot.lane.b32.xlu0 %v1764, 113
        %v1812 = vpop.permute.xlu0 %1811
        %v1813 = vsel %vm708, %v1810, %v1812
        %v1814 = vsel %vm708, %v1812, %v1810
        %v1815 = vmul.f32 %v1813, %v714
        %v1816 = vmul.f32 %v1814, %v718
        %1817 = vrot.lane.b32.xlu0 %v1763, 112
        %v1818 = vpop.permute.xlu0 %1817
        %1819 = vrot.lane.b32.xlu0 %v1764, 112
        %v1820 = vpop.permute.xlu0 %1819
        %v1821 = vsel %vm725, %v1818, %v1820
        %v1822 = vsel %vm725, %v1820, %v1818
        %v1823 = vmul.f32 %v1821, %v731
        %v1824 = vmul.f32 %v1822, %v735
        %1825 = vrot.lane.b32.xlu0 %v1763, 111
        %v1826 = vpop.permute.xlu0 %1825
        %1827 = vrot.lane.b32.xlu0 %v1764, 111
        %v1828 = vpop.permute.xlu0 %1827
        %v1829 = vsel %vm742, %v1826, %v1828
        %v1830 = vsel %vm742, %v1828, %v1826
        %v1831 = vmul.f32 %v1829, %v748
        %v1832 = vmul.f32 %v1830, %v752
        %v1833 = vpack.c.bf16 %v1783, %v1775
        %v1834 = vpack.c.bf16 %v1784, %v1776
        %v1835 = vpack.c.bf16 %v1799, %v1791
        %v1836 = vpack.c.bf16 %v1800, %v1792
        %v1837 = vpack.c.bf16 %v1807, %v1763
        %v1838 = vpack.c.bf16 %v1808, %v1764
        %v1839 = vpack.c.bf16 %v1823, %v1815
        %v1840 = vpack.c.bf16 %v1824, %v1816
        %v1841 = vpack.c.bf16 %v1831, %v1831
        %v1842 = vpack.c.bf16 %v1832, %v1832
        %1844 = vset.pattern.permute.xlu0 0
        %1845 = vperm.xlu0 %1844, %v1768
        %v1846 = vpop.permute.xlu0 %1845
        %v1849 = vsel %vm770, %v1766, 0
        %v1852 = vsel %vm774, %v1841, 0
        %v1855 = vsel %vm774, %v1842, 0
        %1857 = vmatprep.subr.bf16.mxu0 %v1834
        %1858 = vmatpush1.bf16.msra.mxu0 %v1833
        %1859 = vmatprep.subr.bf16.mxu0 %v1836
        %1860 = vmatpush1.bf16.msra.mxu0 %v1835
        %1861 = vmatprep.subr.bf16.mxu0 %v1838
        %1862 = vmatpush1.bf16.msra.mxu0 %v1837
        %1863 = vmatprep.subr.bf16.mxu0 %v1840
        %1864 = vmatpush1.bf16.msra.mxu0 %v1839
        %1865 = vmatprep.subr.bf16.mxu0 %v1855
        %1866 = vmatpush1.bf16.msra.mxu0 %v1852
        %1867 = vmatprep.subr.bf16.mxu0 0
        %1868 = vmatpush1.bf16.msra.mxu0 0
        %1869 = vmatprep.subr.bf16.mxu0 0
        %1870 = vmatpush1.bf16.msra.mxu0 0
        %1871 = vmatprep.subr.bf16.mxu0 0
        %1872 = vmatpush1.bf16.msra.mxu0 0
        %1873 = vmatprep.subr.bf16.mxu0 0
        %1874 = vmatpush1.bf16.msra.mxu0 0
        %1875 = vmatprep.subr.bf16.mxu0 0
        %1876 = vmatpush1.bf16.msra.mxu0 0
        %1877 = vmatprep.subr.bf16.mxu0 0
        %1878 = vmatpush1.bf16.msra.mxu0 0
        %1879 = vmatprep.subr.bf16.mxu0 0
        %1880 = vmatpush1.bf16.msra.mxu0 0
        %1881 = vmatprep.subr.bf16.mxu0 0
        %1882 = vmatpush1.bf16.msra.mxu0 0
        %1883 = vmatprep.subr.bf16.mxu0 0
        %1884 = vmatpush1.bf16.msra.mxu0 0
        %1885 = vmatprep.subr.bf16.mxu0 0
        %1886 = vmatpush1.bf16.msra.mxu0 0
        %1887 = vmatprep.subr.bf16.mxu0 0
        %1888 = vmatpush1.bf16.msra.mxu0 0
        %1889 = vmatprep.mubr.bf16.mxu0 0
        %1890 = vmatmul.mubr.bf16.gmra.mrb[0].mxu0 %v1849
        %v1891 = vpop.f32.mrb[0].mxu0
        %v1892 = vadd.f32 %v1846, %v1891
        %v1893 = vpop.f32.mrb[0].mxu0
        %v1894 = vadd.f32 %v1846, %v1893
        %v1895 = vpop.f32.mrb[0].mxu0
        %v1896 = vpop.f32.mrb[0].mxu0
        %1897 = vdwg.mxu0
        %v1898 = vmax.f32 %v1892, 0.0
        %v1899 = vmax.f32 %v1894, 0.0
        %s1900 = scalar_lea.vmem %s5, 32
        %v1901 = vld [vmem:[%s1900] sm:$0xf]
        %s1902 = scalar_lea.vmem %s6, 64
        %v1903 = vld [vmem:[%s1902] sm:$0xff]
        %1904 = vrot.lane.b32.xlu0 %v1898, 17
        %v1905 = vpop.permute.xlu0 %1904
        %1906 = vrot.lane.b32.xlu0 %v1899, 17
        %v1907 = vpop.permute.xlu0 %1906
        %v1908 = vsel %vm623, %v1905, %v1907
        %v1909 = vsel %vm623, %v1907, %v1905
        %v1910 = vmul.f32 %v1909, %v629
        %v1911 = vmul.f32 %v1908, %v633
        %1912 = vrot.lane.b32.xlu0 %v1898, 16
        %v1913 = vpop.permute.xlu0 %1912
        %1914 = vrot.lane.b32.xlu0 %v1899, 16
        %v1915 = vpop.permute.xlu0 %1914
        %v1916 = vsel %vm640, %v1913, %v1915
        %v1917 = vsel %vm640, %v1915, %v1913
        %v1918 = vmul.f32 %v1917, %v646
        %v1919 = vmul.f32 %v1916, %v650
        %1920 = vrot.lane.b32.xlu0 %v1898, 15
        %v1921 = vpop.permute.xlu0 %1920
        %1922 = vrot.lane.b32.xlu0 %v1899, 15
        %v1923 = vpop.permute.xlu0 %1922
        %v1924 = vsel %vm657, %v1921, %v1923
        %v1925 = vsel %vm657, %v1923, %v1921
        %v1926 = vmul.f32 %v1925, %v663
        %v1927 = vmul.f32 %v1924, %v667
        %1928 = vrot.lane.b32.xlu0 %v1898, 1
        %v1929 = vpop.permute.xlu0 %1928
        %1930 = vrot.lane.b32.xlu0 %v1899, 1
        %v1931 = vpop.permute.xlu0 %1930
        %v1932 = vsel %vm674, %v1929, %v1931
        %v1933 = vsel %vm674, %v1931, %v1929
        %v1934 = vmul.f32 %v1933, %v680
        %v1935 = vmul.f32 %v1932, %v684
        %1936 = vrot.lane.b32.xlu0 %v1898, 127
        %v1937 = vpop.permute.xlu0 %1936
        %1938 = vrot.lane.b32.xlu0 %v1899, 127
        %v1939 = vpop.permute.xlu0 %1938
        %v1940 = vsel %vm691, %v1937, %v1939
        %v1941 = vsel %vm691, %v1939, %v1937
        %v1942 = vmul.f32 %v1940, %v697
        %v1943 = vmul.f32 %v1941, %v701
        %1944 = vrot.lane.b32.xlu0 %v1898, 113
        %v1945 = vpop.permute.xlu0 %1944
        %1946 = vrot.lane.b32.xlu0 %v1899, 113
        %v1947 = vpop.permute.xlu0 %1946
        %v1948 = vsel %vm708, %v1945, %v1947
        %v1949 = vsel %vm708, %v1947, %v1945
        %v1950 = vmul.f32 %v1948, %v714
        %v1951 = vmul.f32 %v1949, %v718
        %1952 = vrot.lane.b32.xlu0 %v1898, 112
        %v1953 = vpop.permute.xlu0 %1952
        %1954 = vrot.lane.b32.xlu0 %v1899, 112
        %v1955 = vpop.permute.xlu0 %1954
        %v1956 = vsel %vm725, %v1953, %v1955
        %v1957 = vsel %vm725, %v1955, %v1953
        %v1958 = vmul.f32 %v1956, %v731
        %v1959 = vmul.f32 %v1957, %v735
        %1960 = vrot.lane.b32.xlu0 %v1898, 111
        %v1961 = vpop.permute.xlu0 %1960
        %1962 = vrot.lane.b32.xlu0 %v1899, 111
        %v1963 = vpop.permute.xlu0 %1962
        %v1964 = vsel %vm742, %v1961, %v1963
        %v1965 = vsel %vm742, %v1963, %v1961
        %v1966 = vmul.f32 %v1964, %v748
        %v1967 = vmul.f32 %v1965, %v752
        %v1968 = vpack.c.bf16 %v1918, %v1910
        %v1969 = vpack.c.bf16 %v1919, %v1911
        %v1970 = vpack.c.bf16 %v1934, %v1926
        %v1971 = vpack.c.bf16 %v1935, %v1927
        %v1972 = vpack.c.bf16 %v1942, %v1898
        %v1973 = vpack.c.bf16 %v1943, %v1899
        %v1974 = vpack.c.bf16 %v1958, %v1950
        %v1975 = vpack.c.bf16 %v1959, %v1951
        %v1976 = vpack.c.bf16 %v1966, %v1966
        %v1977 = vpack.c.bf16 %v1967, %v1967
        %1979 = vset.pattern.permute.xlu0 0
        %1980 = vperm.xlu0 %1979, %v1903
        %v1981 = vpop.permute.xlu0 %1980
        %v1984 = vsel %vm770, %v1901, 0
        %v1987 = vsel %vm774, %v1976, 0
        %v1990 = vsel %vm774, %v1977, 0
        %1992 = vmatprep.subr.bf16.mxu0 %v1969
        %1993 = vmatpush1.bf16.msra.mxu0 %v1968
        %1994 = vmatprep.subr.bf16.mxu0 %v1971
        %1995 = vmatpush1.bf16.msra.mxu0 %v1970
        %1996 = vmatprep.subr.bf16.mxu0 %v1973
        %1997 = vmatpush1.bf16.msra.mxu0 %v1972
        %1998 = vmatprep.subr.bf16.mxu0 %v1975
        %1999 = vmatpush1.bf16.msra.mxu0 %v1974
        %2000 = vmatprep.subr.bf16.mxu0 %v1990
        %2001 = vmatpush1.bf16.msra.mxu0 %v1987
        %2002 = vmatprep.subr.bf16.mxu0 0
        %2003 = vmatpush1.bf16.msra.mxu0 0
        %2004 = vmatprep.subr.bf16.mxu0 0
        %2005 = vmatpush1.bf16.msra.mxu0 0
        %2006 = vmatprep.subr.bf16.mxu0 0
        %2007 = vmatpush1.bf16.msra.mxu0 0
        %2008 = vmatprep.subr.bf16.mxu0 0
        %2009 = vmatpush1.bf16.msra.mxu0 0
        %2010 = vmatprep.subr.bf16.mxu0 0
        %2011 = vmatpush1.bf16.msra.mxu0 0
        %2012 = vmatprep.subr.bf16.mxu0 0
        %2013 = vmatpush1.bf16.msra.mxu0 0
        %2014 = vmatprep.subr.bf16.mxu0 0
        %2015 = vmatpush1.bf16.msra.mxu0 0
        %2016 = vmatprep.subr.bf16.mxu0 0
        %2017 = vmatpush1.bf16.msra.mxu0 0
        %2018 = vmatprep.subr.bf16.mxu0 0
        %2019 = vmatpush1.bf16.msra.mxu0 0
        %2020 = vmatprep.subr.bf16.mxu0 0
        %2021 = vmatpush1.bf16.msra.mxu0 0
        %2022 = vmatprep.subr.bf16.mxu0 0
        %2023 = vmatpush1.bf16.msra.mxu0 0
        %2024 = vmatprep.mubr.bf16.mxu0 0
        %2025 = vmatmul.mubr.bf16.gmra.mrb[0].mxu0 %v1984
        %v2026 = vpop.f32.mrb[0].mxu0
        %v2027 = vadd.f32 %v1981, %v2026
        %v2028 = vpop.f32.mrb[0].mxu0
        %v2029 = vadd.f32 %v1981, %v2028
        %v2030 = vpop.f32.mrb[0].mxu0
        %v2031 = vpop.f32.mrb[0].mxu0
        %2032 = vdwg.mxu0
        %v2033 = vadd.f32 %v1763, %v2027
        %v2034 = vadd.f32 %v1764, %v2029
        %s2035 = scalar_lea.vmem %s5, 36
        %v2036 = vld [vmem:[%s2035] sm:$0xf]
        %s2037 = scalar_lea.vmem %s6, 72
        %v2038 = vld [vmem:[%s2037] sm:$0xff]
        %2039 = vrot.lane.b32.xlu0 %v2033, 17
        %v2040 = vpop.permute.xlu0 %2039
        %2041 = vrot.lane.b32.xlu0 %v2034, 17
        %v2042 = vpop.permute.xlu0 %2041
        %v2043 = vsel %vm623, %v2040, %v2042
        %v2044 = vsel %vm623, %v2042, %v2040
        %v2045 = vmul.f32 %v2044, %v629
        %v2046 = vmul.f32 %v2043, %v633
        %2047 = vrot.lane.b32.xlu0 %v2033, 16
        %v2048 = vpop.permute.xlu0 %2047
        %2049 = vrot.lane.b32.xlu0 %v2034, 16
        %v2050 = vpop.permute.xlu0 %2049
        %v2051 = vsel %vm640, %v2048, %v2050
        %v2052 = vsel %vm640, %v2050, %v2048
        %v2053 = vmul.f32 %v2052, %v646
        %v2054 = vmul.f32 %v2051, %v650
        %2055 = vrot.lane.b32.xlu0 %v2033, 15
        %v2056 = vpop.permute.xlu0 %2055
        %2057 = vrot.lane.b32.xlu0 %v2034, 15
        %v2058 = vpop.permute.xlu0 %2057
        %v2059 = vsel %vm657, %v2056, %v2058
        %v2060 = vsel %vm657, %v2058, %v2056
        %v2061 = vmul.f32 %v2060, %v663
        %v2062 = vmul.f32 %v2059, %v667
        %2063 = vrot.lane.b32.xlu0 %v2033, 1
        %v2064 = vpop.permute.xlu0 %2063
        %2065 = vrot.lane.b32.xlu0 %v2034, 1
        %v2066 = vpop.permute.xlu0 %2065
        %v2067 = vsel %vm674, %v2064, %v2066
        %v2068 = vsel %vm674, %v2066, %v2064
        %v2069 = vmul.f32 %v2068, %v680
        %v2070 = vmul.f32 %v2067, %v684
        %2071 = vrot.lane.b32.xlu0 %v2033, 127
        %v2072 = vpop.permute.xlu0 %2071
        %2073 = vrot.lane.b32.xlu0 %v2034, 127
        %v2074 = vpop.permute.xlu0 %2073
        %v2075 = vsel %vm691, %v2072, %v2074
        %v2076 = vsel %vm691, %v2074, %v2072
        %v2077 = vmul.f32 %v2075, %v697
        %v2078 = vmul.f32 %v2076, %v701
        %2079 = vrot.lane.b32.xlu0 %v2033, 113
        %v2080 = vpop.permute.xlu0 %2079
        %2081 = vrot.lane.b32.xlu0 %v2034, 113
        %v2082 = vpop.permute.xlu0 %2081
        %v2083 = vsel %vm708, %v2080, %v2082
        %v2084 = vsel %vm708, %v2082, %v2080
        %v2085 = vmul.f32 %v2083, %v714
        %v2086 = vmul.f32 %v2084, %v718
        %2087 = vrot.lane.b32.xlu0 %v2033, 112
        %v2088 = vpop.permute.xlu0 %2087
        %2089 = vrot.lane.b32.xlu0 %v2034, 112
        %v2090 = vpop.permute.xlu0 %2089
        %v2091 = vsel %vm725, %v2088, %v2090
        %v2092 = vsel %vm725, %v2090, %v2088
        %v2093 = vmul.f32 %v2091, %v731
        %v2094 = vmul.f32 %v2092, %v735
        %2095 = vrot.lane.b32.xlu0 %v2033, 111
        %v2096 = vpop.permute.xlu0 %2095
        %2097 = vrot.lane.b32.xlu0 %v2034, 111
        %v2098 = vpop.permute.xlu0 %2097
        %v2099 = vsel %vm742, %v2096, %v2098
        %v2100 = vsel %vm742, %v2098, %v2096
        %v2101 = vmul.f32 %v2099, %v748
        %v2102 = vmul.f32 %v2100, %v752
        %v2103 = vpack.c.bf16 %v2053, %v2045
        %v2104 = vpack.c.bf16 %v2054, %v2046
        %v2105 = vpack.c.bf16 %v2069, %v2061
        %v2106 = vpack.c.bf16 %v2070, %v2062
        %v2107 = vpack.c.bf16 %v2077, %v2033
        %v2108 = vpack.c.bf16 %v2078, %v2034
        %v2109 = vpack.c.bf16 %v2093, %v2085
        %v2110 = vpack.c.bf16 %v2094, %v2086
        %v2111 = vpack.c.bf16 %v2101, %v2101
        %v2112 = vpack.c.bf16 %v2102, %v2102
        %2114 = vset.pattern.permute.xlu0 0
        %2115 = vperm.xlu0 %2114, %v2038
        %v2116 = vpop.permute.xlu0 %2115
        %v2119 = vsel %vm770, %v2036, 0
        %v2122 = vsel %vm774, %v2111, 0
        %v2125 = vsel %vm774, %v2112, 0
        %2127 = vmatprep.subr.bf16.mxu0 %v2104
        %2128 = vmatpush1.bf16.msra.mxu0 %v2103
        %2129 = vmatprep.subr.bf16.mxu0 %v2106
        %2130 = vmatpush1.bf16.msra.mxu0 %v2105
        %2131 = vmatprep.subr.bf16.mxu0 %v2108
        %2132 = vmatpush1.bf16.msra.mxu0 %v2107
        %2133 = vmatprep.subr.bf16.mxu0 %v2110
        %2134 = vmatpush1.bf16.msra.mxu0 %v2109
        %2135 = vmatprep.subr.bf16.mxu0 %v2125
        %2136 = vmatpush1.bf16.msra.mxu0 %v2122
        %2137 = vmatprep.subr.bf16.mxu0 0
        %2138 = vmatpush1.bf16.msra.mxu0 0
        %2139 = vmatprep.subr.bf16.mxu0 0
        %2140 = vmatpush1.bf16.msra.mxu0 0
        %2141 = vmatprep.subr.bf16.mxu0 0
        %2142 = vmatpush1.bf16.msra.mxu0 0
        %2143 = vmatprep.subr.bf16.mxu0 0
        %2144 = vmatpush1.bf16.msra.mxu0 0
        %2145 = vmatprep.subr.bf16.mxu0 0
        %2146 = vmatpush1.bf16.msra.mxu0 0
        %2147 = vmatprep.subr.bf16.mxu0 0
        %2148 = vmatpush1.bf16.msra.mxu0 0
        %2149 = vmatprep.subr.bf16.mxu0 0
        %2150 = vmatpush1.bf16.msra.mxu0 0
        %2151 = vmatprep.subr.bf16.mxu0 0
        %2152 = vmatpush1.bf16.msra.mxu0 0
        %2153 = vmatprep.subr.bf16.mxu0 0
        %2154 = vmatpush1.bf16.msra.mxu0 0
        %2155 = vmatprep.subr.bf16.mxu0 0
        %2156 = vmatpush1.bf16.msra.mxu0 0
        %2157 = vmatprep.subr.bf16.mxu0 0
        %2158 = vmatpush1.bf16.msra.mxu0 0
        %2159 = vmatprep.mubr.bf16.mxu0 0
        %2160 = vmatmul.mubr.bf16.gmra.mrb[0].mxu0 %v2119
        %v2161 = vpop.f32.mrb[0].mxu0
        %v2162 = vadd.f32 %v2116, %v2161
        %v2163 = vpop.f32.mrb[0].mxu0
        %v2164 = vadd.f32 %v2116, %v2163
        %v2165 = vpop.f32.mrb[0].mxu0
        %v2166 = vpop.f32.mrb[0].mxu0
        %2167 = vdwg.mxu0
        %v2168 = vadd.f32 %v1493, %v2162
        %v2169 = vadd.f32 %v1494, %v2164
        %v2170 = vld [vmem:[%s8] sm:$0xff]
        %v2171 = vld [vmem:[%s7] sm:$0xf]
        %v2172 = vpack.c.bf16 %v1493, %v1493
        %v2173 = vpack.c.bf16 %v1494, %v1494
        %vm2174 = vcmask 64512
        %v2176 = vsel %vm2174, %v2171, 0
        %v2179 = vsel %vm774, %v2172, 0
        %v2182 = vsel %vm774, %v2173, 0
        %2184 = vmatprep.subr.bf16.mxu0 %v2182
        %2185 = vmatpush1.bf16.msra.mxu0 %v2179
        %2186 = vmatprep.subr.bf16.mxu0 0
        %2187 = vmatpush1.bf16.msra.mxu0 0
        %2188 = vmatprep.subr.bf16.mxu0 0
        %2189 = vmatpush1.bf16.msra.mxu0 0
        %2190 = vmatprep.subr.bf16.mxu0 0
        %2191 = vmatpush1.bf16.msra.mxu0 0
        %2192 = vmatprep.subr.bf16.mxu0 0
        %2193 = vmatpush1.bf16.msra.mxu0 0
        %2194 = vmatprep.subr.bf16.mxu0 0
        %2195 = vmatpush1.bf16.msra.mxu0 0
        %2196 = vmatprep.subr.bf16.mxu0 0
        %2197 = vmatpush1.bf16.msra.mxu0 0
        %2198 = vmatprep.subr.bf16.mxu0 0
        %2199 = vmatpush1.bf16.msra.mxu0 0
        %2200 = vmatprep.subr.bf16.mxu0 0
        %2201 = vmatpush1.bf16.msra.mxu0 0
        %2202 = vmatprep.subr.bf16.mxu0 0
        %2203 = vmatpush1.bf16.msra.mxu0 0
        %2204 = vmatprep.subr.bf16.mxu0 0
        %2205 = vmatpush1.bf16.msra.mxu0 0
        %2206 = vmatprep.subr.bf16.mxu0 0
        %2207 = vmatpush1.bf16.msra.mxu0 0
        %2208 = vmatprep.subr.bf16.mxu0 0
        %2209 = vmatpush1.bf16.msra.mxu0 0
        %2210 = vmatprep.subr.bf16.mxu0 0
        %2211 = vmatpush1.bf16.msra.mxu0 0
        %2212 = vmatprep.subr.bf16.mxu0 0
        %2213 = vmatpush1.bf16.msra.mxu0 0
        %2214 = vmatprep.subr.bf16.mxu0 0
        %2215 = vmatpush1.bf16.msra.mxu0 0
        %2216 = vmatprep.mubr.bf16.mxu0 0
        %2217 = vmatmul.mubr.bf16.gmra.mrb[0].mxu0 %v2176
        %v2218 = vpop.f32.mrb[0].mxu0
        %v2219 = vadd.f32 0.0, %v2218
        %v2220 = vpop.f32.mrb[0].mxu0
        %v2221 = vadd.f32 0.0, %v2220
        %v2222 = vpop.f32.mrb[0].mxu0
        %v2223 = vpop.f32.mrb[0].mxu0
        %2224 = vdwg.mxu0
        %2226 = vset.pattern.permute.xlu0 0
        %2227 = vperm.xlu0 %2226, %v2170
        %v2228 = vpop.permute.xlu0 %2227
        %v2230 = vadd.f32 %v2228, %v2219
        %v2231 = vadd.f32 %v2228, %v2221
        %s2232 = scalar_lea.vmem %s7, 4
        %v2233 = vld [vmem:[%s2232] sm:$0xf]
        %v2234 = vpack.c.bf16 %v2168, %v2168
        %v2235 = vpack.c.bf16 %v2169, %v2169
        %v2237 = vsel %vm2174, %v2233, 0
        %v2240 = vsel %vm774, %v2234, 0
        %v2243 = vsel %vm774, %v2235, 0
        %2245 = vmatprep.subr.bf16.mxu0 %v2243
        %2246 = vmatpush1.bf16.msra.mxu0 %v2240
        %2247 = vmatprep.subr.bf16.mxu0 0
        %2248 = vmatpush1.bf16.msra.mxu0 0
        %2249 = vmatprep.subr.bf16.mxu0 0
        %2250 = vmatpush1.bf16.msra.mxu0 0
        %2251 = vmatprep.subr.bf16.mxu0 0
        %2252 = vmatpush1.bf16.msra.mxu0 0
        %2253 = vmatprep.subr.bf16.mxu0 0
        %2254 = vmatpush1.bf16.msra.mxu0 0
        %2255 = vmatprep.subr.bf16.mxu0 0
        %2256 = vmatpush1.bf16.msra.mxu0 0
        %2257 = vmatprep.subr.bf16.mxu0 0
        %2258 = vmatpush1.bf16.msra.mxu0 0
        %2259 = vmatprep.subr.bf16.mxu0 0
        %2260 = vmatpush1.bf16.msra.mxu0 0
        %2261 = vmatprep.subr.bf16.mxu0 0
        %2262 = vmatpush1.bf16.msra.mxu0 0
        %2263 = vmatprep.subr.bf16.mxu0 0
        %2264 = vmatpush1.bf16.msra.mxu0 0
        %2265 = vmatprep.subr.bf16.mxu0 0
        %2266 = vmatpush1.bf16.msra.mxu0 0
        %2267 = vmatprep.subr.bf16.mxu0 0
        %2268 = vmatpush1.bf16.msra.mxu0 0
        %2269 = vmatprep.subr.bf16.mxu0 0
        %2270 = vmatpush1.bf16.msra.mxu0 0
        %2271 = vmatprep.subr.bf16.mxu0 0
        %2272 = vmatpush1.bf16.msra.mxu0 0
        %2273 = vmatprep.subr.bf16.mxu0 0
        %2274 = vmatpush1.bf16.msra.mxu0 0
        %2275 = vmatprep.subr.bf16.mxu0 0
        %2276 = vmatpush1.bf16.msra.mxu0 0
        %2277 = vmatprep.mubr.bf16.mxu0 0
        %2278 = vmatmul.mubr.bf16.gmra.mrb[0].mxu0 %v2237
        %v2279 = vpop.f32.mrb[0].mxu0
        %v2280 = vadd.f32 0.0, %v2279
        %v2281 = vpop.f32.mrb[0].mxu0
        %v2282 = vadd.f32 0.0, %v2281
        %v2283 = vpop.f32.mrb[0].mxu0
        %v2284 = vpop.f32.mrb[0].mxu0
        %2285 = vdwg.mxu0
        %v2286 = vadd.f32 %v2230, %v2280
        %v2287 = vadd.f32 %v2231, %v2282
        %v2288 = vpack.c.bf16 %v2286, %v2286
        %v2289 = vpack.c.bf16 %v2287, %v2287
        %v2290 = vld [vmem:[%s9] sm:$0x3]
        %v2291 = vld [vmem:[%s10] sm:$0xf]
        %2293 = vset.pattern.permute.xlu0 0
        %2294 = vperm.xlu0 %2293, %v2291
        %v2295 = vpop.permute.xlu0 %2294
        %v2298 = vsel %vm2174, %v2290, 0
        %v2301 = vsel %vm774, %v2288, 0
        %v2304 = vsel %vm774, %v2289, 0
        %2306 = vmatprep.subr.bf16.mxu0 %v2304
        %2307 = vmatpush1.bf16.msra.mxu0 %v2301
        %2308 = vmatprep.subr.bf16.mxu0 0
        %2309 = vmatpush1.bf16.msra.mxu0 0
        %2310 = vmatprep.subr.bf16.mxu0 0
        %2311 = vmatpush1.bf16.msra.mxu0 0
        %2312 = vmatprep.subr.bf16.mxu0 0
        %2313 = vmatpush1.bf16.msra.mxu0 0
        %2314 = vmatprep.subr.bf16.mxu0 0
        %2315 = vmatpush1.bf16.msra.mxu0 0
        %2316 = vmatprep.subr.bf16.mxu0 0
        %2317 = vmatpush1.bf16.msra.mxu0 0
        %2318 = vmatprep.subr.bf16.mxu0 0
        %2319 = vmatpush1.bf16.msra.mxu0 0
        %2320 = vmatprep.subr.bf16.mxu0 0
        %2321 = vmatpush1.bf16.msra.mxu0 0
        %2322 = vmatprep.subr.bf16.mxu0 0
        %2323 = vmatpush1.bf16.msra.mxu0 0
        %2324 = vmatprep.subr.bf16.mxu0 0
        %2325 = vmatpush1.bf16.msra.mxu0 0
        %2326 = vmatprep.subr.bf16.mxu0 0
        %2327 = vmatpush1.bf16.msra.mxu0 0
        %2328 = vmatprep.subr.bf16.mxu0 0
        %2329 = vmatpush1.bf16.msra.mxu0 0
        %2330 = vmatprep.subr.bf16.mxu0 0
        %2331 = vmatpush1.bf16.msra.mxu0 0
        %2332 = vmatprep.subr.bf16.mxu0 0
        %2333 = vmatpush1.bf16.msra.mxu0 0
        %2334 = vmatprep.subr.bf16.mxu0 0
        %2335 = vmatpush1.bf16.msra.mxu0 0
        %2336 = vmatprep.subr.bf16.mxu0 0
        %2337 = vmatpush1.bf16.msra.mxu0 0
        %2338 = vmatprep.mubr.bf16.mxu0 0
        %2339 = vmatmul.mubr.bf16.gmra.mrb[0].mxu0 %v2298
        %v2340 = vpop.f32.mrb[0].mxu0
        %v2341 = vadd.f32 %v2295, %v2340
        %v2342 = vpop.f32.mrb[0].mxu0
        %v2343 = vadd.f32 %v2295, %v2342
        %v2344 = vpop.f32.mrb[0].mxu0
        %v2345 = vpop.f32.mrb[0].mxu0
        %2346 = vdwg.mxu0
        %s2347 = scalar_lea.vmem %s9, 2
        %v2348 = vld [vmem:[%s2347] sm:$0x3]
        %s2349 = scalar_lea.vmem %s10, 4
        %v2350 = vld [vmem:[%s2349] sm:$0xf]
        %2352 = vset.pattern.permute.xlu0 0
        %2353 = vperm.xlu0 %2352, %v2350
        %v2354 = vpop.permute.xlu0 %2353
        %v2357 = vsel %vm2174, %v2348, 0
        %2359 = vmatprep.subr.bf16.mxu0 %v2304
        %2360 = vmatpush1.bf16.msra.mxu0 %v2301
        %2361 = vmatprep.subr.bf16.mxu0 0
        %2362 = vmatpush1.bf16.msra.mxu0 0
        %2363 = vmatprep.subr.bf16.mxu0 0
        %2364 = vmatpush1.bf16.msra.mxu0 0
        %2365 = vmatprep.subr.bf16.mxu0 0
        %2366 = vmatpush1.bf16.msra.mxu0 0
        %2367 = vmatprep.subr.bf16.mxu0 0
        %2368 = vmatpush1.bf16.msra.mxu0 0
        %2369 = vmatprep.subr.bf16.mxu0 0
        %2370 = vmatpush1.bf16.msra.mxu0 0
        %2371 = vmatprep.subr.bf16.mxu0 0
        %2372 = vmatpush1.bf16.msra.mxu0 0
        %2373 = vmatprep.subr.bf16.mxu0 0
        %2374 = vmatpush1.bf16.msra.mxu0 0
        %2375 = vmatprep.subr.bf16.mxu0 0
        %2376 = vmatpush1.bf16.msra.mxu0 0
        %2377 = vmatprep.subr.bf16.mxu0 0
        %2378 = vmatpush1.bf16.msra.mxu0 0
        %2379 = vmatprep.subr.bf16.mxu0 0
        %2380 = vmatpush1.bf16.msra.mxu0 0
        %2381 = vmatprep.subr.bf16.mxu0 0
        %2382 = vmatpush1.bf16.msra.mxu0 0
        %2383 = vmatprep.subr.bf16.mxu0 0
        %2384 = vmatpush1.bf16.msra.mxu0 0
        %2385 = vmatprep.subr.bf16.mxu0 0
        %2386 = vmatpush1.bf16.msra.mxu0 0
        %2387 = vmatprep.subr.bf16.mxu0 0
        %2388 = vmatpush1.bf16.msra.mxu0 0
        %2389 = vmatprep.subr.bf16.mxu0 0
        %2390 = vmatpush1.bf16.msra.mxu0 0
        %2391 = vmatprep.mubr.bf16.mxu0 0
        %2392 = vmatmul.mubr.bf16.gmra.mrb[0].mxu0 %v2357
        %v2393 = vpop.f32.mrb[0].mxu0
        %v2394 = vadd.f32 %v2354, %v2393
        %v2395 = vpop.f32.mrb[0].mxu0
        %v2396 = vadd.f32 %v2354, %v2395
        %v2397 = vpop.f32.mrb[0].mxu0
        %v2398 = vpop.f32.mrb[0].mxu0
        %2399 = vdwg.mxu0
        %s2400 = scalar_lea.vmem %s9, 4
        %v2401 = vld [vmem:[%s2400] sm:$0x3]
        %s2402 = scalar_lea.vmem %s10, 8
        %v2403 = vld [vmem:[%s2402] sm:$0xf]
        %2405 = vset.pattern.permute.xlu0 0
        %2406 = vperm.xlu0 %2405, %v2403
        %v2407 = vpop.permute.xlu0 %2406
        %v2410 = vsel %vm2174, %v2401, 0
        %2412 = vmatprep.subr.bf16.mxu0 %v2304
        %2413 = vmatpush1.bf16.msra.mxu0 %v2301
        %2414 = vmatprep.subr.bf16.mxu0 0
        %2415 = vmatpush1.bf16.msra.mxu0 0
        %2416 = vmatprep.subr.bf16.mxu0 0
        %2417 = vmatpush1.bf16.msra.mxu0 0
        %2418 = vmatprep.subr.bf16.mxu0 0
        %2419 = vmatpush1.bf16.msra.mxu0 0
        %2420 = vmatprep.subr.bf16.mxu0 0
        %2421 = vmatpush1.bf16.msra.mxu0 0
        %2422 = vmatprep.subr.bf16.mxu0 0
        %2423 = vmatpush1.bf16.msra.mxu0 0
        %2424 = vmatprep.subr.bf16.mxu0 0
        %2425 = vmatpush1.bf16.msra.mxu0 0
        %2426 = vmatprep.subr.bf16.mxu0 0
        %2427 = vmatpush1.bf16.msra.mxu0 0
        %2428 = vmatprep.subr.bf16.mxu0 0
        %2429 = vmatpush1.bf16.msra.mxu0 0
        %2430 = vmatprep.subr.bf16.mxu0 0
        %2431 = vmatpush1.bf16.msra.mxu0 0
        %2432 = vmatprep.subr.bf16.mxu0 0
        %2433 = vmatpush1.bf16.msra.mxu0 0
        %2434 = vmatprep.subr.bf16.mxu0 0
        %2435 = vmatpush1.bf16.msra.mxu0 0
        %2436 = vmatprep.subr.bf16.mxu0 0
        %2437 = vmatpush1.bf16.msra.mxu0 0
        %2438 = vmatprep.subr.bf16.mxu0 0
        %2439 = vmatpush1.bf16.msra.mxu0 0
        %2440 = vmatprep.subr.bf16.mxu0 0
        %2441 = vmatpush1.bf16.msra.mxu0 0
        %2442 = vmatprep.subr.bf16.mxu0 0
        %2443 = vmatpush1.bf16.msra.mxu0 0
        %2444 = vmatprep.mubr.bf16.mxu0 0
        %2445 = vmatmul.mubr.bf16.gmra.mrb[0].mxu0 %v2410
        %v2446 = vpop.f32.mrb[0].mxu0
        %v2447 = vadd.f32 %v2407, %v2446
        %v2448 = vpop.f32.mrb[0].mxu0
        %v2449 = vadd.f32 %v2407, %v2448
        %v2450 = vpop.f32.mrb[0].mxu0
        %v2451 = vpop.f32.mrb[0].mxu0
        %2452 = vdwg.mxu0
        %2453 = vxpose.xlu0.b32.start [1/16] %v2341, 128
        %2454 = vxpose.xlu0.b32.cont [2/16] 0.0, 128
        %2455 = vxpose.xlu0.b32.cont [3/16] 0.0, 128
        %2456 = vxpose.xlu0.b32.cont [4/16] 0.0, 128
        %2457 = vxpose.xlu0.b32.cont [5/16] 0.0, 128
        %2458 = vxpose.xlu0.b32.cont [6/16] 0.0, 128
        %2459 = vxpose.xlu0.b32.cont [7/16] 0.0, 128
        %2460 = vxpose.xlu0.b32.cont [8/16] 0.0, 128
        %2461 = vxpose.xlu0.b32.cont [9/16] 0.0, 128
        %2462 = vxpose.xlu0.b32.cont [10/16] 0.0, 128
        %2463 = vxpose.xlu0.b32.cont [11/16] 0.0, 128
        %2464 = vxpose.xlu0.b32.cont [12/16] 0.0, 128
        %2465 = vxpose.xlu0.b32.cont [13/16] 0.0, 128
        %2466 = vxpose.xlu0.b32.cont [14/16] 0.0, 128
        %2467 = vxpose.xlu0.b32.cont [15/16] 0.0, 128
        %2468 = vxpose.xlu0.b32.end [16/16] 0.0, 128
        %v2469 = vpop.trf.xlu0
        %v2470 = vpop.trf.xlu0
        %v2471 = vpop.trf.xlu0
        %v2472 = vpop.trf.xlu0
        %v2473 = vpop.trf.xlu0
        %v2474 = vpop.trf.xlu0
        %v2475 = vpop.trf.xlu0
        %v2476 = vpop.trf.xlu0
        %v2477 = vpop.trf.xlu0
        %v2478 = vpop.trf.xlu0
        %v2479 = vpop.trf.xlu0
        %v2480 = vpop.trf.xlu0
        %v2481 = vpop.trf.xlu0
        %v2482 = vpop.trf.xlu0
        %v2483 = vpop.trf.xlu0
        %v2484 = vpop.trf.xlu0
        %2485 = vxpose.xlu0.b32.start [1/16] %v2343, 128
        %2486 = vxpose.xlu0.b32.cont [2/16] 0.0, 128
        %2487 = vxpose.xlu0.b32.cont [3/16] 0.0, 128
        %2488 = vxpose.xlu0.b32.cont [4/16] 0.0, 128
        %2489 = vxpose.xlu0.b32.cont [5/16] 0.0, 128
        %2490 = vxpose.xlu0.b32.cont [6/16] 0.0, 128
        %2491 = vxpose.xlu0.b32.cont [7/16] 0.0, 128
        %2492 = vxpose.xlu0.b32.cont [8/16] 0.0, 128
        %2493 = vxpose.xlu0.b32.cont [9/16] 0.0, 128
        %2494 = vxpose.xlu0.b32.cont [10/16] 0.0, 128
        %2495 = vxpose.xlu0.b32.cont [11/16] 0.0, 128
        %2496 = vxpose.xlu0.b32.cont [12/16] 0.0, 128
        %2497 = vxpose.xlu0.b32.cont [13/16] 0.0, 128
        %2498 = vxpose.xlu0.b32.cont [14/16] 0.0, 128
        %2499 = vxpose.xlu0.b32.cont [15/16] 0.0, 128
        %2500 = vxpose.xlu0.b32.end [16/16] 0.0, 128
        %v2501 = vpop.trf.xlu0
        %v2502 = vpop.trf.xlu0
        %v2503 = vpop.trf.xlu0
        %v2504 = vpop.trf.xlu0
        %v2505 = vpop.trf.xlu0
        %v2506 = vpop.trf.xlu0
        %v2507 = vpop.trf.xlu0
        %v2508 = vpop.trf.xlu0
        %v2509 = vpop.trf.xlu0
        %v2510 = vpop.trf.xlu0
        %v2511 = vpop.trf.xlu0
        %v2512 = vpop.trf.xlu0
        %v2513 = vpop.trf.xlu0
        %v2514 = vpop.trf.xlu0
        %v2515 = vpop.trf.xlu0
        %v2516 = vpop.trf.xlu0
        %v2517 = vpack.c.bf16 %v2470, %v2469
        %v2518 = vpack.c.bf16 %v2472, %v2471
        %v2519 = vpack.c.bf16 %v2474, %v2473
        %v2520 = vpack.c.bf16 %v2476, %v2475
        %v2521 = vpack.c.bf16 %v2478, %v2477
        %v2522 = vpack.c.bf16 %v2480, %v2479
        %v2523 = vpack.c.bf16 %v2482, %v2481
        %v2524 = vpack.c.bf16 %v2484, %v2483
        %v2525 = vpack.c.bf16 %v2502, %v2501
        %v2526 = vpack.c.bf16 %v2504, %v2503
        %v2527 = vpack.c.bf16 %v2506, %v2505
        %v2528 = vpack.c.bf16 %v2508, %v2507
        %v2529 = vpack.c.bf16 %v2510, %v2509
        %v2530 = vpack.c.bf16 %v2512, %v2511
        %v2531 = vpack.c.bf16 %v2514, %v2513
        %v2532 = vpack.c.bf16 %v2516, %v2515
        %v2533 = vpack.c.bf16 %v2394, %v2394
        %v2534 = vpack.c.bf16 %v2396, %v2396
        %vm2535 = vcmask 31744
        %v2537 = vsel %vm2535, %v2517, 0
        %v2540 = vsel %vm2535, %v2518, 0
        %v2543 = vsel %vm2535, %v2519, 0
        %v2546 = vsel %vm2535, %v2520, 0
        %v2549 = vsel %vm2535, %v2521, 0
        %v2552 = vsel %vm2535, %v2522, 0
        %v2555 = vsel %vm2535, %v2523, 0
        %v2558 = vsel %vm2535, %v2524, 0
        %v2561 = vsel %vm2535, %v2525, 0
        %v2564 = vsel %vm2535, %v2526, 0
        %v2567 = vsel %vm2535, %v2527, 0
        %v2570 = vsel %vm2535, %v2528, 0
        %v2573 = vsel %vm2535, %v2529, 0
        %v2576 = vsel %vm2535, %v2530, 0
        %v2579 = vsel %vm2535, %v2531, 0
        %v2582 = vsel %vm2535, %v2532, 0
        %vm2584 = vcmask 1041408
        %v2586 = vsel %vm2584, %v2533, 0
        %v2589 = vsel %vm2584, %v2534, 0
        %2591 = vmatprep.subr.bf16.mxu0 %v2589
        %2592 = vmatpush1.bf16.msra.mxu0 %v2586
        %2593 = vmatprep.subr.bf16.mxu0 0
        %2594 = vmatpush1.bf16.msra.mxu0 0
        %2595 = vmatprep.subr.bf16.mxu0 0
        %2596 = vmatpush1.bf16.msra.mxu0 0
        %2597 = vmatprep.subr.bf16.mxu0 0
        %2598 = vmatpush1.bf16.msra.mxu0 0
        %2599 = vmatprep.subr.bf16.mxu0 0
        %2600 = vmatpush1.bf16.msra.mxu0 0
        %2601 = vmatprep.subr.bf16.mxu0 0
        %2602 = vmatpush1.bf16.msra.mxu0 0
        %2603 = vmatprep.subr.bf16.mxu0 0
        %2604 = vmatpush1.bf16.msra.mxu0 0
        %2605 = vmatprep.subr.bf16.mxu0 0
        %2606 = vmatpush1.bf16.msra.mxu0 0
        %2607 = vmatprep.subr.bf16.mxu0 0
        %2608 = vmatpush1.bf16.msra.mxu0 0
        %2609 = vmatprep.subr.bf16.mxu0 0
        %2610 = vmatpush1.bf16.msra.mxu0 0
        %2611 = vmatprep.subr.bf16.mxu0 0
        %2612 = vmatpush1.bf16.msra.mxu0 0
        %2613 = vmatprep.subr.bf16.mxu0 0
        %2614 = vmatpush1.bf16.msra.mxu0 0
        %2615 = vmatprep.subr.bf16.mxu0 0
        %2616 = vmatpush1.bf16.msra.mxu0 0
        %2617 = vmatprep.subr.bf16.mxu0 0
        %2618 = vmatpush1.bf16.msra.mxu0 0
        %2619 = vmatprep.subr.bf16.mxu0 0
        %2620 = vmatpush1.bf16.msra.mxu0 0
        %2621 = vmatprep.subr.bf16.mxu0 0
        %2622 = vmatpush1.bf16.msra.mxu0 0
        %2623 = vmatprep.mubr.bf16.mxu0 0
        %2624 = vmatmul.mubr.bf16.gmra.mrb[0].mxu0 %v2537
        %v2625 = vpop.f32.mrb[0].mxu0
        %v2626 = vadd.f32 0.0, %v2625
        %v2627 = vpop.f32.mrb[0].mxu0
        %v2628 = vadd.f32 0.0, %v2627
        %v2629 = vpop.f32.mrb[0].mxu0
        %v2630 = vadd.f32 0.0, %v2629
        %v2631 = vpop.f32.mrb[0].mxu0
        %v2632 = vadd.f32 0.0, %v2631
        %2633 = vmatprep.mubr.bf16.mxu0 0
        %2634 = vmatmul.mubr.bf16.gmra.mrb[0].mxu0 %v2540
        %v2635 = vpop.f32.mrb[0].mxu0
        %v2636 = vadd.f32 0.0, %v2635
        %v2637 = vpop.f32.mrb[0].mxu0
        %v2638 = vadd.f32 0.0, %v2637
        %v2639 = vpop.f32.mrb[0].mxu0
        %v2640 = vadd.f32 0.0, %v2639
        %v2641 = vpop.f32.mrb[0].mxu0
        %v2642 = vadd.f32 0.0, %v2641
        %2643 = vmatprep.mubr.bf16.mxu0 0
        %2644 = vmatmul.mubr.bf16.gmra.mrb[0].mxu0 %v2543
        %v2645 = vpop.f32.mrb[0].mxu0
        %v2646 = vadd.f32 0.0, %v2645
        %v2647 = vpop.f32.mrb[0].mxu0
        %v2648 = vadd.f32 0.0, %v2647
        %v2649 = vpop.f32.mrb[0].mxu0
        %v2650 = vadd.f32 0.0, %v2649
        %v2651 = vpop.f32.mrb[0].mxu0
        %v2652 = vadd.f32 0.0, %v2651
        %2653 = vmatprep.mubr.bf16.mxu0 0
        %2654 = vmatmul.mubr.bf16.gmra.mrb[0].mxu0 %v2546
        %v2655 = vpop.f32.mrb[0].mxu0
        %v2656 = vadd.f32 0.0, %v2655
        %v2657 = vpop.f32.mrb[0].mxu0
        %v2658 = vadd.f32 0.0, %v2657
        %v2659 = vpop.f32.mrb[0].mxu0
        %v2660 = vadd.f32 0.0, %v2659
        %v2661 = vpop.f32.mrb[0].mxu0
        %v2662 = vadd.f32 0.0, %v2661
        %2663 = vmatprep.mubr.bf16.mxu0 0
        %2664 = vmatmul.mubr.bf16.gmra.mrb[0].mxu0 %v2549
        %v2665 = vpop.f32.mrb[0].mxu0
        %v2666 = vadd.f32 0.0, %v2665
        %v2667 = vpop.f32.mrb[0].mxu0
        %v2668 = vadd.f32 0.0, %v2667
        %v2669 = vpop.f32.mrb[0].mxu0
        %v2670 = vadd.f32 0.0, %v2669
        %v2671 = vpop.f32.mrb[0].mxu0
        %v2672 = vadd.f32 0.0, %v2671
        %2673 = vmatprep.mubr.bf16.mxu0 0
        %2674 = vmatmul.mubr.bf16.gmra.mrb[0].mxu0 %v2552
        %v2675 = vpop.f32.mrb[0].mxu0
        %v2676 = vadd.f32 0.0, %v2675
        %v2677 = vpop.f32.mrb[0].mxu0
        %v2678 = vadd.f32 0.0, %v2677
        %v2679 = vpop.f32.mrb[0].mxu0
        %v2680 = vadd.f32 0.0, %v2679
        %v2681 = vpop.f32.mrb[0].mxu0
        %v2682 = vadd.f32 0.0, %v2681
        %2683 = vmatprep.mubr.bf16.mxu0 0
        %2684 = vmatmul.mubr.bf16.gmra.mrb[0].mxu0 %v2555
        %v2685 = vpop.f32.mrb[0].mxu0
        %v2686 = vadd.f32 0.0, %v2685
        %v2687 = vpop.f32.mrb[0].mxu0
        %v2688 = vadd.f32 0.0, %v2687
        %v2689 = vpop.f32.mrb[0].mxu0
        %v2690 = vadd.f32 0.0, %v2689
        %v2691 = vpop.f32.mrb[0].mxu0
        %v2692 = vadd.f32 0.0, %v2691
        %2693 = vmatprep.mubr.bf16.mxu0 0
        %2694 = vmatmul.mubr.bf16.gmra.mrb[0].mxu0 %v2558
        %v2695 = vpop.f32.mrb[0].mxu0
        %v2696 = vadd.f32 0.0, %v2695
        %v2697 = vpop.f32.mrb[0].mxu0
        %v2698 = vadd.f32 0.0, %v2697
        %v2699 = vpop.f32.mrb[0].mxu0
        %v2700 = vadd.f32 0.0, %v2699
        %v2701 = vpop.f32.mrb[0].mxu0
        %v2702 = vadd.f32 0.0, %v2701
        %2703 = vmatprep.mubr.bf16.mxu0 0
        %2704 = vmatmul.mubr.bf16.gmra.mrb[0].mxu0 %v2561
        %v2705 = vpop.f32.mrb[0].mxu0
        %v2706 = vadd.f32 0.0, %v2705
        %v2707 = vpop.f32.mrb[0].mxu0
        %v2708 = vadd.f32 0.0, %v2707
        %v2709 = vpop.f32.mrb[0].mxu0
        %v2710 = vadd.f32 0.0, %v2709
        %v2711 = vpop.f32.mrb[0].mxu0
        %v2712 = vadd.f32 0.0, %v2711
        %2713 = vmatprep.mubr.bf16.mxu0 0
        %2714 = vmatmul.mubr.bf16.gmra.mrb[0].mxu0 %v2564
        %v2715 = vpop.f32.mrb[0].mxu0
        %v2716 = vadd.f32 0.0, %v2715
        %v2717 = vpop.f32.mrb[0].mxu0
        %v2718 = vadd.f32 0.0, %v2717
        %v2719 = vpop.f32.mrb[0].mxu0
        %v2720 = vadd.f32 0.0, %v2719
        %v2721 = vpop.f32.mrb[0].mxu0
        %v2722 = vadd.f32 0.0, %v2721
        %2723 = vmatprep.mubr.bf16.mxu0 0
        %2724 = vmatmul.mubr.bf16.gmra.mrb[0].mxu0 %v2567
        %v2725 = vpop.f32.mrb[0].mxu0
        %v2726 = vadd.f32 0.0, %v2725
        %v2727 = vpop.f32.mrb[0].mxu0
        %v2728 = vadd.f32 0.0, %v2727
        %v2729 = vpop.f32.mrb[0].mxu0
        %v2730 = vadd.f32 0.0, %v2729
        %v2731 = vpop.f32.mrb[0].mxu0
        %v2732 = vadd.f32 0.0, %v2731
        %2733 = vmatprep.mubr.bf16.mxu0 0
        %2734 = vmatmul.mubr.bf16.gmra.mrb[0].mxu0 %v2570
        %v2735 = vpop.f32.mrb[0].mxu0
        %v2736 = vadd.f32 0.0, %v2735
        %v2737 = vpop.f32.mrb[0].mxu0
        %v2738 = vadd.f32 0.0, %v2737
        %v2739 = vpop.f32.mrb[0].mxu0
        %v2740 = vadd.f32 0.0, %v2739
        %v2741 = vpop.f32.mrb[0].mxu0
        %v2742 = vadd.f32 0.0, %v2741
        %2743 = vmatprep.mubr.bf16.mxu0 0
        %2744 = vmatmul.mubr.bf16.gmra.mrb[0].mxu0 %v2573
        %v2745 = vpop.f32.mrb[0].mxu0
        %v2746 = vadd.f32 0.0, %v2745
        %v2747 = vpop.f32.mrb[0].mxu0
        %v2748 = vadd.f32 0.0, %v2747
        %v2749 = vpop.f32.mrb[0].mxu0
        %v2750 = vadd.f32 0.0, %v2749
        %v2751 = vpop.f32.mrb[0].mxu0
        %v2752 = vadd.f32 0.0, %v2751
        %2753 = vmatprep.mubr.bf16.mxu0 0
        %2754 = vmatmul.mubr.bf16.gmra.mrb[0].mxu0 %v2576
        %v2755 = vpop.f32.mrb[0].mxu0
        %v2756 = vadd.f32 0.0, %v2755
        %v2757 = vpop.f32.mrb[0].mxu0
        %v2758 = vadd.f32 0.0, %v2757
        %v2759 = vpop.f32.mrb[0].mxu0
        %v2760 = vadd.f32 0.0, %v2759
        %v2761 = vpop.f32.mrb[0].mxu0
        %v2762 = vadd.f32 0.0, %v2761
        %2763 = vmatprep.mubr.bf16.mxu0 0
        %2764 = vmatmul.mubr.bf16.gmra.mrb[0].mxu0 %v2579
        %v2765 = vpop.f32.mrb[0].mxu0
        %v2766 = vadd.f32 0.0, %v2765
        %v2767 = vpop.f32.mrb[0].mxu0
        %v2768 = vadd.f32 0.0, %v2767
        %v2769 = vpop.f32.mrb[0].mxu0
        %v2770 = vadd.f32 0.0, %v2769
        %v2771 = vpop.f32.mrb[0].mxu0
        %v2772 = vadd.f32 0.0, %v2771
        %2773 = vmatprep.mubr.bf16.mxu0 0
        %2774 = vmatmul.mubr.bf16.gmra.mrb[0].mxu0 %v2582
        %v2775 = vpop.f32.mrb[0].mxu0
        %v2776 = vadd.f32 0.0, %v2775
        %v2777 = vpop.f32.mrb[0].mxu0
        %v2778 = vadd.f32 0.0, %v2777
        %v2779 = vpop.f32.mrb[0].mxu0
        %v2780 = vadd.f32 0.0, %v2779
        %v2781 = vpop.f32.mrb[0].mxu0
        %v2782 = vadd.f32 0.0, %v2781
        %2783 = vdwg.mxu0
        %v2784 = vmax.f32 %v2626, %v2628
        %2785 = vmax.xlane.f32.xlu0 %v2784
        %v2786 = vpop.xlane.xlu0 %2785
        %v2787 = vmax.f32 %v2630, %v2632
        %2788 = vmax.xlane.f32.xlu0 %v2787
        %v2789 = vpop.xlane.xlu0 %2788
        %v2790 = vmax.f32 %v2636, %v2638
        %2791 = vmax.xlane.f32.xlu0 %v2790
        %v2792 = vpop.xlane.xlu0 %2791
        %v2793 = vmax.f32 %v2640, %v2642
        %2794 = vmax.xlane.f32.xlu0 %v2793
        %v2795 = vpop.xlane.xlu0 %2794
        %v2796 = vmax.f32 %v2646, %v2648
        %2797 = vmax.xlane.f32.xlu0 %v2796
        %v2798 = vpop.xlane.xlu0 %2797
        %v2799 = vmax.f32 %v2650, %v2652
        %2800 = vmax.xlane.f32.xlu0 %v2799
        %v2801 = vpop.xlane.xlu0 %2800
        %v2802 = vmax.f32 %v2656, %v2658
        %2803 = vmax.xlane.f32.xlu0 %v2802
        %v2804 = vpop.xlane.xlu0 %2803
        %v2805 = vmax.f32 %v2660, %v2662
        %2806 = vmax.xlane.f32.xlu0 %v2805
        %v2807 = vpop.xlane.xlu0 %2806
        %v2808 = vmax.f32 %v2666, %v2668
        %2809 = vmax.xlane.f32.xlu0 %v2808
        %v2810 = vpop.xlane.xlu0 %2809
        %v2811 = vmax.f32 %v2670, %v2672
        %2812 = vmax.xlane.f32.xlu0 %v2811
        %v2813 = vpop.xlane.xlu0 %2812
        %v2814 = vmax.f32 %v2676, %v2678
        %2815 = vmax.xlane.f32.xlu0 %v2814
        %v2816 = vpop.xlane.xlu0 %2815
        %v2817 = vmax.f32 %v2680, %v2682
        %2818 = vmax.xlane.f32.xlu0 %v2817
        %v2819 = vpop.xlane.xlu0 %2818
        %v2820 = vmax.f32 %v2686, %v2688
        %2821 = vmax.xlane.f32.xlu0 %v2820
        %v2822 = vpop.xlane.xlu0 %2821
        %v2823 = vmax.f32 %v2690, %v2692
        %2824 = vmax.xlane.f32.xlu0 %v2823
        %v2825 = vpop.xlane.xlu0 %2824
        %v2826 = vmax.f32 %v2696, %v2698
        %2827 = vmax.xlane.f32.xlu0 %v2826
        %v2828 = vpop.xlane.xlu0 %2827
        %v2829 = vmax.f32 %v2700, %v2702
        %2830 = vmax.xlane.f32.xlu0 %v2829
        %v2831 = vpop.xlane.xlu0 %2830
        %v2832 = vmax.f32 %v2706, %v2708
        %2833 = vmax.xlane.f32.xlu0 %v2832
        %v2834 = vpop.xlane.xlu0 %2833
        %v2835 = vmax.f32 %v2710, %v2712
        %2836 = vmax.xlane.f32.xlu0 %v2835
        %v2837 = vpop.xlane.xlu0 %2836
        %v2838 = vmax.f32 %v2716, %v2718
        %2839 = vmax.xlane.f32.xlu0 %v2838
        %v2840 = vpop.xlane.xlu0 %2839
        %v2841 = vmax.f32 %v2720, %v2722
        %2842 = vmax.xlane.f32.xlu0 %v2841
        %v2843 = vpop.xlane.xlu0 %2842
        %v2844 = vmax.f32 %v2726, %v2728
        %2845 = vmax.xlane.f32.xlu0 %v2844
        %v2846 = vpop.xlane.xlu0 %2845
        %v2847 = vmax.f32 %v2730, %v2732
        %2848 = vmax.xlane.f32.xlu0 %v2847
        %v2849 = vpop.xlane.xlu0 %2848
        %v2850 = vmax.f32 %v2736, %v2738
        %2851 = vmax.xlane.f32.xlu0 %v2850
        %v2852 = vpop.xlane.xlu0 %2851
        %v2853 = vmax.f32 %v2740, %v2742
        %2854 = vmax.xlane.f32.xlu0 %v2853
        %v2855 = vpop.xlane.xlu0 %2854
        %v2856 = vmax.f32 %v2746, %v2748
        %2857 = vmax.xlane.f32.xlu0 %v2856
        %v2858 = vpop.xlane.xlu0 %2857
        %v2859 = vmax.f32 %v2750, %v2752
        %2860 = vmax.xlane.f32.xlu0 %v2859
        %v2861 = vpop.xlane.xlu0 %2860
        %v2862 = vmax.f32 %v2756, %v2758
        %2863 = vmax.xlane.f32.xlu0 %v2862
        %v2864 = vpop.xlane.xlu0 %2863
        %v2865 = vmax.f32 %v2760, %v2762
        %2866 = vmax.xlane.f32.xlu0 %v2865
        %v2867 = vpop.xlane.xlu0 %2866
        %v2868 = vmax.f32 %v2766, %v2768
        %2869 = vmax.xlane.f32.xlu0 %v2868
        %v2870 = vpop.xlane.xlu0 %2869
        %v2871 = vmax.f32 %v2770, %v2772
        %2872 = vmax.xlane.f32.xlu0 %v2871
        %v2873 = vpop.xlane.xlu0 %2872
        %v2874 = vmax.f32 %v2776, %v2778
        %2875 = vmax.xlane.f32.xlu0 %v2874
        %v2876 = vpop.xlane.xlu0 %2875
        %v2877 = vmax.f32 %v2780, %v2782
        %2878 = vmax.xlane.f32.xlu0 %v2877
        %v2879 = vpop.xlane.xlu0 %2878
        %v2880 = vsub.f32 %v2626, %v2786
        %v2881 = vsub.f32 %v2628, %v2786
        %v2882 = vsub.f32 %v2630, %v2789
        %v2883 = vsub.f32 %v2632, %v2789
        %v2884 = vsub.f32 %v2636, %v2792
        %v2885 = vsub.f32 %v2638, %v2792
        %v2886 = vsub.f32 %v2640, %v2795
        %v2887 = vsub.f32 %v2642, %v2795
        %v2888 = vsub.f32 %v2646, %v2798
        %v2889 = vsub.f32 %v2648, %v2798
        %v2890 = vsub.f32 %v2650, %v2801
        %v2891 = vsub.f32 %v2652, %v2801
        %v2892 = vsub.f32 %v2656, %v2804
        %v2893 = vsub.f32 %v2658, %v2804
        %v2894 = vsub.f32 %v2660, %v2807
        %v2895 = vsub.f32 %v2662, %v2807
        %v2896 = vsub.f32 %v2666, %v2810
        %v2897 = vsub.f32 %v2668, %v2810
        %v2898 = vsub.f32 %v2670, %v2813
        %v2899 = vsub.f32 %v2672, %v2813
        %v2900 = vsub.f32 %v2676, %v2816
        %v2901 = vsub.f32 %v2678, %v2816
        %v2902 = vsub.f32 %v2680, %v2819
        %v2903 = vsub.f32 %v2682, %v2819
        %v2904 = vsub.f32 %v2686, %v2822
        %v2905 = vsub.f32 %v2688, %v2822
        %v2906 = vsub.f32 %v2690, %v2825
        %v2907 = vsub.f32 %v2692, %v2825
        %v2908 = vsub.f32 %v2696, %v2828
        %v2909 = vsub.f32 %v2698, %v2828
        %v2910 = vsub.f32 %v2700, %v2831
        %v2911 = vsub.f32 %v2702, %v2831
        %v2912 = vsub.f32 %v2706, %v2834
        %v2913 = vsub.f32 %v2708, %v2834
        %v2914 = vsub.f32 %v2710, %v2837
        %v2915 = vsub.f32 %v2712, %v2837
        %v2916 = vsub.f32 %v2716, %v2840
        %v2917 = vsub.f32 %v2718, %v2840
        %v2918 = vsub.f32 %v2720, %v2843
        %v2919 = vsub.f32 %v2722, %v2843
        %v2920 = vsub.f32 %v2726, %v2846
        %v2921 = vsub.f32 %v2728, %v2846
        %v2922 = vsub.f32 %v2730, %v2849
        %v2923 = vsub.f32 %v2732, %v2849
        %v2924 = vsub.f32 %v2736, %v2852
        %v2925 = vsub.f32 %v2738, %v2852
        %v2926 = vsub.f32 %v2740, %v2855
        %v2927 = vsub.f32 %v2742, %v2855
        %v2928 = vsub.f32 %v2746, %v2858
        %v2929 = vsub.f32 %v2748, %v2858
        %v2930 = vsub.f32 %v2750, %v2861
        %v2931 = vsub.f32 %v2752, %v2861
        %v2932 = vsub.f32 %v2756, %v2864
        %v2933 = vsub.f32 %v2758, %v2864
        %v2934 = vsub.f32 %v2760, %v2867
        %v2935 = vsub.f32 %v2762, %v2867
        %v2936 = vsub.f32 %v2766, %v2870
        %v2937 = vsub.f32 %v2768, %v2870
        %v2938 = vsub.f32 %v2770, %v2873
        %v2939 = vsub.f32 %v2772, %v2873
        %v2940 = vsub.f32 %v2776, %v2876
        %v2941 = vsub.f32 %v2778, %v2876
        %v2942 = vsub.f32 %v2780, %v2879
        %v2943 = vsub.f32 %v2782, %v2879
        %v2944 = vmul.f32 %v2880, 1.442695
        %v2945 = vpow.pop %v2944
        %v2946 = vmul.f32 %v2881, 1.442695
        %v2947 = vpow.pop %v2946
        %v2948 = vmul.f32 %v2882, 1.442695
        %v2949 = vpow.pop %v2948
        %v2950 = vmul.f32 %v2883, 1.442695
        %v2951 = vpow.pop %v2950
        %v2952 = vmul.f32 %v2884, 1.442695
        %v2953 = vpow.pop %v2952
        %v2954 = vmul.f32 %v2885, 1.442695
        %v2955 = vpow.pop %v2954
        %v2956 = vmul.f32 %v2886, 1.442695
        %v2957 = vpow.pop %v2956
        %v2958 = vmul.f32 %v2887, 1.442695
        %v2959 = vpow.pop %v2958
        %v2960 = vmul.f32 %v2888, 1.442695
        %v2961 = vpow.pop %v2960
        %v2962 = vmul.f32 %v2889, 1.442695
        %v2963 = vpow.pop %v2962
        %v2964 = vmul.f32 %v2890, 1.442695
        %v2965 = vpow.pop %v2964
        %v2966 = vmul.f32 %v2891, 1.442695
        %v2967 = vpow.pop %v2966
        %v2968 = vmul.f32 %v2892, 1.442695
        %v2969 = vpow.pop %v2968
        %v2970 = vmul.f32 %v2893, 1.442695
        %v2971 = vpow.pop %v2970
        %v2972 = vmul.f32 %v2894, 1.442695
        %v2973 = vpow.pop %v2972
        %v2974 = vmul.f32 %v2895, 1.442695
        %v2975 = vpow.pop %v2974
        %v2976 = vmul.f32 %v2896, 1.442695
        %v2977 = vpow.pop %v2976
        %v2978 = vmul.f32 %v2897, 1.442695
        %v2979 = vpow.pop %v2978
        %v2980 = vmul.f32 %v2898, 1.442695
        %v2981 = vpow.pop %v2980
        %v2982 = vmul.f32 %v2899, 1.442695
        %v2983 = vpow.pop %v2982
        %v2984 = vmul.f32 %v2900, 1.442695
        %v2985 = vpow.pop %v2984
        %v2986 = vmul.f32 %v2901, 1.442695
        %v2987 = vpow.pop %v2986
        %v2988 = vmul.f32 %v2902, 1.442695
        %v2989 = vpow.pop %v2988
        %v2990 = vmul.f32 %v2903, 1.442695
        %v2991 = vpow.pop %v2990
        %v2992 = vmul.f32 %v2904, 1.442695
        %v2993 = vpow.pop %v2992
        %v2994 = vmul.f32 %v2905, 1.442695
        %v2995 = vpow.pop %v2994
        %v2996 = vmul.f32 %v2906, 1.442695
        %v2997 = vpow.pop %v2996
        %v2998 = vmul.f32 %v2907, 1.442695
        %v2999 = vpow.pop %v2998
        %v3000 = vmul.f32 %v2908, 1.442695
        %v3001 = vpow.pop %v3000
        %v3002 = vmul.f32 %v2909, 1.442695
        %v3003 = vpow.pop %v3002
        %v3004 = vmul.f32 %v2910, 1.442695
        %v3005 = vpow.pop %v3004
        %v3006 = vmul.f32 %v2911, 1.442695
        %v3007 = vpow.pop %v3006
        %v3008 = vmul.f32 %v2912, 1.442695
        %v3009 = vpow.pop %v3008
        %v3010 = vmul.f32 %v2913, 1.442695
        %v3011 = vpow.pop %v3010
        %v3012 = vmul.f32 %v2914, 1.442695
        %v3013 = vpow.pop %v3012
        %v3014 = vmul.f32 %v2915, 1.442695
        %v3015 = vpow.pop %v3014
        %v3016 = vmul.f32 %v2916, 1.442695
        %v3017 = vpow.pop %v3016
        %v3018 = vmul.f32 %v2917, 1.442695
        %v3019 = vpow.pop %v3018
        %v3020 = vmul.f32 %v2918, 1.442695
        %v3021 = vpow.pop %v3020
        %v3022 = vmul.f32 %v2919, 1.442695
        %v3023 = vpow.pop %v3022
        %v3024 = vmul.f32 %v2920, 1.442695
        %v3025 = vpow.pop %v3024
        %v3026 = vmul.f32 %v2921, 1.442695
        %v3027 = vpow.pop %v3026
        %v3028 = vmul.f32 %v2922, 1.442695
        %v3029 = vpow.pop %v3028
        %v3030 = vmul.f32 %v2923, 1.442695
        %v3031 = vpow.pop %v3030
        %v3032 = vmul.f32 %v2924, 1.442695
        %v3033 = vpow.pop %v3032
        %v3034 = vmul.f32 %v2925, 1.442695
        %v3035 = vpow.pop %v3034
        %v3036 = vmul.f32 %v2926, 1.442695
        %v3037 = vpow.pop %v3036
        %v3038 = vmul.f32 %v2927, 1.442695
        %v3039 = vpow.pop %v3038
        %v3040 = vmul.f32 %v2928, 1.442695
        %v3041 = vpow.pop %v3040
        %v3042 = vmul.f32 %v2929, 1.442695
        %v3043 = vpow.pop %v3042
        %v3044 = vmul.f32 %v2930, 1.442695
        %v3045 = vpow.pop %v3044
        %v3046 = vmul.f32 %v2931, 1.442695
        %v3047 = vpow.pop %v3046
        %v3048 = vmul.f32 %v2932, 1.442695
        %v3049 = vpow.pop %v3048
        %v3050 = vmul.f32 %v2933, 1.442695
        %v3051 = vpow.pop %v3050
        %v3052 = vmul.f32 %v2934, 1.442695
        %v3053 = vpow.pop %v3052
        %v3054 = vmul.f32 %v2935, 1.442695
        %v3055 = vpow.pop %v3054
        %v3056 = vmul.f32 %v2936, 1.442695
        %v3057 = vpow.pop %v3056
        %v3058 = vmul.f32 %v2937, 1.442695
        %v3059 = vpow.pop %v3058
        %v3060 = vmul.f32 %v2938, 1.442695
        %v3061 = vpow.pop %v3060
        %v3062 = vmul.f32 %v2939, 1.442695
        %v3063 = vpow.pop %v3062
        %v3064 = vmul.f32 %v2940, 1.442695
        %v3065 = vpow.pop %v3064
        %v3066 = vmul.f32 %v2941, 1.442695
        %v3067 = vpow.pop %v3066
        %v3068 = vmul.f32 %v2942, 1.442695
        %v3069 = vpow.pop %v3068
        %v3070 = vmul.f32 %v2943, 1.442695
        %v3071 = vpow.pop %v3070
        %v3072 = vadd.f32 %v2945, %v2947
        %3073 = vadd.xlane.f32.xlu0 %v3072
        %v3074 = vpop.xlane.xlu0 %3073
        %v3075 = vadd.f32 %v2949, %v2951
        %3076 = vadd.xlane.f32.xlu0 %v3075
        %v3077 = vpop.xlane.xlu0 %3076
        %v3078 = vadd.f32 %v2953, %v2955
        %3079 = vadd.xlane.f32.xlu0 %v3078
        %v3080 = vpop.xlane.xlu0 %3079
        %v3081 = vadd.f32 %v2957, %v2959
        %3082 = vadd.xlane.f32.xlu0 %v3081
        %v3083 = vpop.xlane.xlu0 %3082
        %v3084 = vadd.f32 %v2961, %v2963
        %3085 = vadd.xlane.f32.xlu0 %v3084
        %v3086 = vpop.xlane.xlu0 %3085
        %v3087 = vadd.f32 %v2965, %v2967
        %3088 = vadd.xlane.f32.xlu0 %v3087
        %v3089 = vpop.xlane.xlu0 %3088
        %v3090 = vadd.f32 %v2969, %v2971
        %3091 = vadd.xlane.f32.xlu0 %v3090
        %v3092 = vpop.xlane.xlu0 %3091
        %v3093 = vadd.f32 %v2973, %v2975
        %3094 = vadd.xlane.f32.xlu0 %v3093
        %v3095 = vpop.xlane.xlu0 %3094
        %v3096 = vadd.f32 %v2977, %v2979
        %3097 = vadd.xlane.f32.xlu0 %v3096
        %v3098 = vpop.xlane.xlu0 %3097
        %v3099 = vadd.f32 %v2981, %v2983
        %3100 = vadd.xlane.f32.xlu0 %v3099
        %v3101 = vpop.xlane.xlu0 %3100
        %v3102 = vadd.f32 %v2985, %v2987
        %3103 = vadd.xlane.f32.xlu0 %v3102
        %v3104 = vpop.xlane.xlu0 %3103
        %v3105 = vadd.f32 %v2989, %v2991
        %3106 = vadd.xlane.f32.xlu0 %v3105
        %v3107 = vpop.xlane.xlu0 %3106
        %v3108 = vadd.f32 %v2993, %v2995
        %3109 = vadd.xlane.f32.xlu0 %v3108
        %v3110 = vpop.xlane.xlu0 %3109
        %v3111 = vadd.f32 %v2997, %v2999
        %3112 = vadd.xlane.f32.xlu0 %v3111
        %v3113 = vpop.xlane.xlu0 %3112
        %v3114 = vadd.f32 %v3001, %v3003
        %3115 = vadd.xlane.f32.xlu0 %v3114
        %v3116 = vpop.xlane.xlu0 %3115
        %v3117 = vadd.f32 %v3005, %v3007
        %3118 = vadd.xlane.f32.xlu0 %v3117
        %v3119 = vpop.xlane.xlu0 %3118
        %v3120 = vadd.f32 %v3009, %v3011
        %3121 = vadd.xlane.f32.xlu0 %v3120
        %v3122 = vpop.xlane.xlu0 %3121
        %v3123 = vadd.f32 %v3013, %v3015
        %3124 = vadd.xlane.f32.xlu0 %v3123
        %v3125 = vpop.xlane.xlu0 %3124
        %v3126 = vadd.f32 %v3017, %v3019
        %3127 = vadd.xlane.f32.xlu0 %v3126
        %v3128 = vpop.xlane.xlu0 %3127
        %v3129 = vadd.f32 %v3021, %v3023
        %3130 = vadd.xlane.f32.xlu0 %v3129
        %v3131 = vpop.xlane.xlu0 %3130
        %v3132 = vadd.f32 %v3025, %v3027
        %3133 = vadd.xlane.f32.xlu0 %v3132
        %v3134 = vpop.xlane.xlu0 %3133
        %v3135 = vadd.f32 %v3029, %v3031
        %3136 = vadd.xlane.f32.xlu0 %v3135
        %v3137 = vpop.xlane.xlu0 %3136
        %v3138 = vadd.f32 %v3033, %v3035
        %3139 = vadd.xlane.f32.xlu0 %v3138
        %v3140 = vpop.xlane.xlu0 %3139
        %v3141 = vadd.f32 %v3037, %v3039
        %3142 = vadd.xlane.f32.xlu0 %v3141
        %v3143 = vpop.xlane.xlu0 %3142
        %v3144 = vadd.f32 %v3041, %v3043
        %3145 = vadd.xlane.f32.xlu0 %v3144
        %v3146 = vpop.xlane.xlu0 %3145
        %v3147 = vadd.f32 %v3045, %v3047
        %3148 = vadd.xlane.f32.xlu0 %v3147
        %v3149 = vpop.xlane.xlu0 %3148
        %v3150 = vadd.f32 %v3049, %v3051
        %3151 = vadd.xlane.f32.xlu0 %v3150
        %v3152 = vpop.xlane.xlu0 %3151
        %v3153 = vadd.f32 %v3053, %v3055
        %3154 = vadd.xlane.f32.xlu0 %v3153
        %v3155 = vpop.xlane.xlu0 %3154
        %v3156 = vadd.f32 %v3057, %v3059
        %3157 = vadd.xlane.f32.xlu0 %v3156
        %v3158 = vpop.xlane.xlu0 %3157
        %v3159 = vadd.f32 %v3061, %v3063
        %3160 = vadd.xlane.f32.xlu0 %v3159
        %v3161 = vpop.xlane.xlu0 %3160
        %v3162 = vadd.f32 %v3065, %v3067
        %3163 = vadd.xlane.f32.xlu0 %v3162
        %v3164 = vpop.xlane.xlu0 %3163
        %v3165 = vadd.f32 %v3069, %v3071
        %3166 = vadd.xlane.f32.xlu0 %v3165
        %v3167 = vpop.xlane.xlu0 %3166
        %v3168 = vrcp.pop %v3074
        %v3169 = vrcp.pop %v3077
        %v3170 = vrcp.pop %v3080
        %v3171 = vrcp.pop %v3083
        %v3172 = vrcp.pop %v3086
        %v3173 = vrcp.pop %v3089
        %v3174 = vrcp.pop %v3092
        %v3175 = vrcp.pop %v3095
        %v3176 = vrcp.pop %v3098
        %v3177 = vrcp.pop %v3101
        %v3178 = vrcp.pop %v3104
        %v3179 = vrcp.pop %v3107
        %v3180 = vrcp.pop %v3110
        %v3181 = vrcp.pop %v3113
        %v3182 = vrcp.pop %v3116
        %v3183 = vrcp.pop %v3119
        %v3184 = vrcp.pop %v3122
        %v3185 = vrcp.pop %v3125
        %v3186 = vrcp.pop %v3128
        %v3187 = vrcp.pop %v3131
        %v3188 = vrcp.pop %v3134
        %v3189 = vrcp.pop %v3137
        %v3190 = vrcp.pop %v3140
        %v3191 = vrcp.pop %v3143
        %v3192 = vrcp.pop %v3146
        %v3193 = vrcp.pop %v3149
        %v3194 = vrcp.pop %v3152
        %v3195 = vrcp.pop %v3155
        %v3196 = vrcp.pop %v3158
        %v3197 = vrcp.pop %v3161
        %v3198 = vrcp.pop %v3164
        %v3199 = vrcp.pop %v3167
        %v3200 = vmul.f32 %v2945, %v3168
        %v3201 = vmul.f32 %v2947, %v3168
        %v3202 = vmul.f32 %v2949, %v3169
        %v3203 = vmul.f32 %v2951, %v3169
        %v3204 = vmul.f32 %v2953, %v3170
        %v3205 = vmul.f32 %v2955, %v3170
        %v3206 = vmul.f32 %v2957, %v3171
        %v3207 = vmul.f32 %v2959, %v3171
        %v3208 = vmul.f32 %v2961, %v3172
        %v3209 = vmul.f32 %v2963, %v3172
        %v3210 = vmul.f32 %v2965, %v3173
        %v3211 = vmul.f32 %v2967, %v3173
        %v3212 = vmul.f32 %v2969, %v3174
        %v3213 = vmul.f32 %v2971, %v3174
        %v3214 = vmul.f32 %v2973, %v3175
        %v3215 = vmul.f32 %v2975, %v3175
        %v3216 = vmul.f32 %v2977, %v3176
        %v3217 = vmul.f32 %v2979, %v3176
        %v3218 = vmul.f32 %v2981, %v3177
        %v3219 = vmul.f32 %v2983, %v3177
        %v3220 = vmul.f32 %v2985, %v3178
        %v3221 = vmul.f32 %v2987, %v3178
        %v3222 = vmul.f32 %v2989, %v3179
        %v3223 = vmul.f32 %v2991, %v3179
        %v3224 = vmul.f32 %v2993, %v3180
        %v3225 = vmul.f32 %v2995, %v3180
        %v3226 = vmul.f32 %v2997, %v3181
        %v3227 = vmul.f32 %v2999, %v3181
        %v3228 = vmul.f32 %v3001, %v3182
        %v3229 = vmul.f32 %v3003, %v3182
        %v3230 = vmul.f32 %v3005, %v3183
        %v3231 = vmul.f32 %v3007, %v3183
        %v3232 = vmul.f32 %v3009, %v3184
        %v3233 = vmul.f32 %v3011, %v3184
        %v3234 = vmul.f32 %v3013, %v3185
        %v3235 = vmul.f32 %v3015, %v3185
        %v3236 = vmul.f32 %v3017, %v3186
        %v3237 = vmul.f32 %v3019, %v3186
        %v3238 = vmul.f32 %v3021, %v3187
        %v3239 = vmul.f32 %v3023, %v3187
        %v3240 = vmul.f32 %v3025, %v3188
        %v3241 = vmul.f32 %v3027, %v3188
        %v3242 = vmul.f32 %v3029, %v3189
        %v3243 = vmul.f32 %v3031, %v3189
        %v3244 = vmul.f32 %v3033, %v3190
        %v3245 = vmul.f32 %v3035, %v3190
        %v3246 = vmul.f32 %v3037, %v3191
        %v3247 = vmul.f32 %v3039, %v3191
        %v3248 = vmul.f32 %v3041, %v3192
        %v3249 = vmul.f32 %v3043, %v3192
        %v3250 = vmul.f32 %v3045, %v3193
        %v3251 = vmul.f32 %v3047, %v3193
        %v3252 = vmul.f32 %v3049, %v3194
        %v3253 = vmul.f32 %v3051, %v3194
        %v3254 = vmul.f32 %v3053, %v3195
        %v3255 = vmul.f32 %v3055, %v3195
        %v3256 = vmul.f32 %v3057, %v3196
        %v3257 = vmul.f32 %v3059, %v3196
        %v3258 = vmul.f32 %v3061, %v3197
        %v3259 = vmul.f32 %v3063, %v3197
        %v3260 = vmul.f32 %v3065, %v3198
        %v3261 = vmul.f32 %v3067, %v3198
        %v3262 = vmul.f32 %v3069, %v3199
        %v3263 = vmul.f32 %v3071, %v3199
        %v3264 = vpack.c.bf16 %v2447, %v2447
        %v3265 = vpack.c.bf16 %v2449, %v2449
        %v3266 = vpack.c.bf16 %v3202, %v3200
        %v3267 = vpack.c.bf16 %v3203, %v3201
        %v3268 = vpack.c.bf16 %v3206, %v3204
        %v3269 = vpack.c.bf16 %v3207, %v3205
        %v3270 = vpack.c.bf16 %v3210, %v3208
        %v3271 = vpack.c.bf16 %v3211, %v3209
        %v3272 = vpack.c.bf16 %v3214, %v3212
        %v3273 = vpack.c.bf16 %v3215, %v3213
        %v3274 = vpack.c.bf16 %v3218, %v3216
        %v3275 = vpack.c.bf16 %v3219, %v3217
        %v3276 = vpack.c.bf16 %v3222, %v3220
        %v3277 = vpack.c.bf16 %v3223, %v3221
        %v3278 = vpack.c.bf16 %v3226, %v3224
        %v3279 = vpack.c.bf16 %v3227, %v3225
        %v3280 = vpack.c.bf16 %v3230, %v3228
        %v3281 = vpack.c.bf16 %v3231, %v3229
        %v3282 = vpack.c.bf16 %v3234, %v3232
        %v3283 = vpack.c.bf16 %v3235, %v3233
        %v3284 = vpack.c.bf16 %v3238, %v3236
        %v3285 = vpack.c.bf16 %v3239, %v3237
        %v3286 = vpack.c.bf16 %v3242, %v3240
        %v3287 = vpack.c.bf16 %v3243, %v3241
        %v3288 = vpack.c.bf16 %v3246, %v3244
        %v3289 = vpack.c.bf16 %v3247, %v3245
        %v3290 = vpack.c.bf16 %v3250, %v3248
        %v3291 = vpack.c.bf16 %v3251, %v3249
        %v3292 = vpack.c.bf16 %v3254, %v3252
        %v3293 = vpack.c.bf16 %v3255, %v3253
        %v3294 = vpack.c.bf16 %v3258, %v3256
        %v3295 = vpack.c.bf16 %v3259, %v3257
        %v3296 = vpack.c.bf16 %v3262, %v3260
        %v3297 = vpack.c.bf16 %v3263, %v3261
        %3298 = vmatprep.subr.bf16.mxu0 %v3267
        %3299 = vmatpush1.bf16.xpose.msra.mxu0 %v3266
        %3300 = vmatprep.subr.bf16.mxu0 %v3269
        %3301 = vmatpush1.bf16.xpose.msra.mxu0 %v3268
        %3302 = vmatprep.subr.bf16.mxu0 %v3271
        %3303 = vmatpush1.bf16.xpose.msra.mxu0 %v3270
        %3304 = vmatprep.subr.bf16.mxu0 %v3273
        %3305 = vmatpush1.bf16.xpose.msra.mxu0 %v3272
        %3306 = vmatprep.subr.bf16.mxu0 %v3275
        %3307 = vmatpush1.bf16.xpose.msra.mxu0 %v3274
        %3308 = vmatprep.subr.bf16.mxu0 %v3277
        %3309 = vmatpush1.bf16.xpose.msra.mxu0 %v3276
        %3310 = vmatprep.subr.bf16.mxu0 %v3279
        %3311 = vmatpush1.bf16.xpose.msra.mxu0 %v3278
        %3312 = vmatprep.subr.bf16.mxu0 %v3281
        %3313 = vmatpush1.bf16.xpose.msra.mxu0 %v3280
        %3314 = vmatprep.subr.bf16.mxu0 %v3283
        %3315 = vmatpush1.bf16.xpose.msra.mxu0 %v3282
        %3316 = vmatprep.subr.bf16.mxu0 %v3285
        %3317 = vmatpush1.bf16.xpose.msra.mxu0 %v3284
        %3318 = vmatprep.subr.bf16.mxu0 %v3287
        %3319 = vmatpush1.bf16.xpose.msra.mxu0 %v3286
        %3320 = vmatprep.subr.bf16.mxu0 %v3289
        %3321 = vmatpush1.bf16.xpose.msra.mxu0 %v3288
        %3322 = vmatprep.subr.bf16.mxu0 %v3291
        %3323 = vmatpush1.bf16.xpose.msra.mxu0 %v3290
        %3324 = vmatprep.subr.bf16.mxu0 %v3293
        %3325 = vmatpush1.bf16.xpose.msra.mxu0 %v3292
        %3326 = vmatprep.subr.bf16.mxu0 %v3295
        %3327 = vmatpush1.bf16.xpose.msra.mxu0 %v3294
        %3328 = vmatprep.subr.bf16.mxu0 %v3297
        %3329 = vmatpush1.bf16.xpose.msra.mxu0 %v3296
        %3330 = vmatprep.mubr.bf16.mxu0 %v3265
        %3331 = vmatmul.mubr.bf16.gmra.mrb[0].mxu0 %v3264
        %v3332 = vpop.f32.mrb[0].mxu0
        %v3333 = vadd.f32 0.0, %v3332
        %v3334 = vpop.f32.mrb[0].mxu0
        %v3335 = vadd.f32 0.0, %v3334
        %v3336 = vpop.f32.mrb[0].mxu0
        %v3337 = vpop.f32.mrb[0].mxu0
        %3338 = vdwg.mxu0
        %v3339 = vld [vmem:[%s11] sm:$0xf]
        %v3340 = vpack.c.bf16 %v3333, %v3333
        %v3341 = vpack.c.bf16 %v3335, %v3335
        %v3342 = vld [vmem:[%s12] sm:$0xff]
        %3344 = vset.pattern.permute.xlu0 0
        %3345 = vperm.xlu0 %3344, %v3342
        %v3346 = vpop.permute.xlu0 %3345
        %v3349 = vsel %vm2535, %v3339, 0
        %v3352 = vsel %vm2584, %v3340, 0
        %v3355 = vsel %vm2584, %v3341, 0
        %3357 = vmatprep.subr.bf16.mxu0 %v3355
        %3358 = vmatpush1.bf16.msra.mxu0 %v3352
        %3359 = vmatprep.subr.bf16.mxu0 0
        %3360 = vmatpush1.bf16.msra.mxu0 0
        %3361 = vmatprep.subr.bf16.mxu0 0
        %3362 = vmatpush1.bf16.msra.mxu0 0
        %3363 = vmatprep.subr.bf16.mxu0 0
        %3364 = vmatpush1.bf16.msra.mxu0 0
        %3365 = vmatprep.subr.bf16.mxu0 0
        %3366 = vmatpush1.bf16.msra.mxu0 0
        %3367 = vmatprep.subr.bf16.mxu0 0
        %3368 = vmatpush1.bf16.msra.mxu0 0
        %3369 = vmatprep.subr.bf16.mxu0 0
        %3370 = vmatpush1.bf16.msra.mxu0 0
        %3371 = vmatprep.subr.bf16.mxu0 0
        %3372 = vmatpush1.bf16.msra.mxu0 0
        %3373 = vmatprep.subr.bf16.mxu0 0
        %3374 = vmatpush1.bf16.msra.mxu0 0
        %3375 = vmatprep.subr.bf16.mxu0 0
        %3376 = vmatpush1.bf16.msra.mxu0 0
        %3377 = vmatprep.subr.bf16.mxu0 0
        %3378 = vmatpush1.bf16.msra.mxu0 0
        %3379 = vmatprep.subr.bf16.mxu0 0
        %3380 = vmatpush1.bf16.msra.mxu0 0
        %3381 = vmatprep.subr.bf16.mxu0 0
        %3382 = vmatpush1.bf16.msra.mxu0 0
        %3383 = vmatprep.subr.bf16.mxu0 0
        %3384 = vmatpush1.bf16.msra.mxu0 0
        %3385 = vmatprep.subr.bf16.mxu0 0
        %3386 = vmatpush1.bf16.msra.mxu0 0
        %3387 = vmatprep.subr.bf16.mxu0 0
        %3388 = vmatpush1.bf16.msra.mxu0 0
        %3389 = vmatprep.mubr.bf16.mxu0 0
        %3390 = vmatmul.mubr.bf16.gmra.mrb[0].mxu0 %v3349
        %v3391 = vpop.f32.mrb[0].mxu0
        %v3392 = vadd.f32 %v3346, %v3391
        %v3393 = vpop.f32.mrb[0].mxu0
        %v3394 = vadd.f32 %v3346, %v3393
        %v3395 = vpop.f32.mrb[0].mxu0
        %v3396 = vpop.f32.mrb[0].mxu0
        %3397 = vdwg.mxu0
        %v3398 = vadd.f32 %v2286, %v3392
        %v3399 = vadd.f32 %v2287, %v3394
        %s3400 = scalar_lea.vmem %s5, 40
        %v3401 = vld [vmem:[%s3400] sm:$0xf]
        %s3402 = scalar_lea.vmem %s6, 80
        %v3403 = vld [vmem:[%s3402] sm:$0xff]
        %3404 = vrot.lane.b32.xlu0 %v3398, 17
        %v3405 = vpop.permute.xlu0 %3404
        %3406 = vrot.lane.b32.xlu0 %v3399, 17
        %v3407 = vpop.permute.xlu0 %3406
        %v3408 = vsel %vm623, %v3405, %v3407
        %v3409 = vsel %vm623, %v3407, %v3405
        %v3410 = vmul.f32 %v3409, %v629
        %v3411 = vmul.f32 %v3408, %v633
        %3412 = vrot.lane.b32.xlu0 %v3398, 16
        %v3413 = vpop.permute.xlu0 %3412
        %3414 = vrot.lane.b32.xlu0 %v3399, 16
        %v3415 = vpop.permute.xlu0 %3414
        %v3416 = vsel %vm640, %v3413, %v3415
        %v3417 = vsel %vm640, %v3415, %v3413
        %v3418 = vmul.f32 %v3417, %v646
        %v3419 = vmul.f32 %v3416, %v650
        %3420 = vrot.lane.b32.xlu0 %v3398, 15
        %v3421 = vpop.permute.xlu0 %3420
        %3422 = vrot.lane.b32.xlu0 %v3399, 15
        %v3423 = vpop.permute.xlu0 %3422
        %v3424 = vsel %vm657, %v3421, %v3423
        %v3425 = vsel %vm657, %v3423, %v3421
        %v3426 = vmul.f32 %v3425, %v663
        %v3427 = vmul.f32 %v3424, %v667
        %3428 = vrot.lane.b32.xlu0 %v3398, 1
        %v3429 = vpop.permute.xlu0 %3428
        %3430 = vrot.lane.b32.xlu0 %v3399, 1
        %v3431 = vpop.permute.xlu0 %3430
        %v3432 = vsel %vm674, %v3429, %v3431
        %v3433 = vsel %vm674, %v3431, %v3429
        %v3434 = vmul.f32 %v3433, %v680
        %v3435 = vmul.f32 %v3432, %v684
        %3436 = vrot.lane.b32.xlu0 %v3398, 127
        %v3437 = vpop.permute.xlu0 %3436
        %3438 = vrot.lane.b32.xlu0 %v3399, 127
        %v3439 = vpop.permute.xlu0 %3438
        %v3440 = vsel %vm691, %v3437, %v3439
        %v3441 = vsel %vm691, %v3439, %v3437
        %v3442 = vmul.f32 %v3440, %v697
        %v3443 = vmul.f32 %v3441, %v701
        %3444 = vrot.lane.b32.xlu0 %v3398, 113
        %v3445 = vpop.permute.xlu0 %3444
        %3446 = vrot.lane.b32.xlu0 %v3399, 113
        %v3447 = vpop.permute.xlu0 %3446
        %v3448 = vsel %vm708, %v3445, %v3447
        %v3449 = vsel %vm708, %v3447, %v3445
        %v3450 = vmul.f32 %v3448, %v714
        %v3451 = vmul.f32 %v3449, %v718
        %3452 = vrot.lane.b32.xlu0 %v3398, 112
        %v3453 = vpop.permute.xlu0 %3452
        %3454 = vrot.lane.b32.xlu0 %v3399, 112
        %v3455 = vpop.permute.xlu0 %3454
        %v3456 = vsel %vm725, %v3453, %v3455
        %v3457 = vsel %vm725, %v3455, %v3453
        %v3458 = vmul.f32 %v3456, %v731
        %v3459 = vmul.f32 %v3457, %v735
        %3460 = vrot.lane.b32.xlu0 %v3398, 111
        %v3461 = vpop.permute.xlu0 %3460
        %3462 = vrot.lane.b32.xlu0 %v3399, 111
        %v3463 = vpop.permute.xlu0 %3462
        %v3464 = vsel %vm742, %v3461, %v3463
        %v3465 = vsel %vm742, %v3463, %v3461
        %v3466 = vmul.f32 %v3464, %v748
        %v3467 = vmul.f32 %v3465, %v752
        %v3468 = vpack.c.bf16 %v3418, %v3410
        %v3469 = vpack.c.bf16 %v3419, %v3411
        %v3470 = vpack.c.bf16 %v3434, %v3426
        %v3471 = vpack.c.bf16 %v3435, %v3427
        %v3472 = vpack.c.bf16 %v3442, %v3398
        %v3473 = vpack.c.bf16 %v3443, %v3399
        %v3474 = vpack.c.bf16 %v3458, %v3450
        %v3475 = vpack.c.bf16 %v3459, %v3451
        %v3476 = vpack.c.bf16 %v3466, %v3466
        %v3477 = vpack.c.bf16 %v3467, %v3467
        %3479 = vset.pattern.permute.xlu0 0
        %3480 = vperm.xlu0 %3479, %v3403
        %v3481 = vpop.permute.xlu0 %3480
        %v3484 = vsel %vm770, %v3401, 0
        %v3487 = vsel %vm774, %v3476, 0
        %v3490 = vsel %vm774, %v3477, 0
        %3492 = vmatprep.subr.bf16.mxu0 %v3469
        %3493 = vmatpush1.bf16.msra.mxu0 %v3468
        %3494 = vmatprep.subr.bf16.mxu0 %v3471
        %3495 = vmatpush1.bf16.msra.mxu0 %v3470
        %3496 = vmatprep.subr.bf16.mxu0 %v3473
        %3497 = vmatpush1.bf16.msra.mxu0 %v3472
        %3498 = vmatprep.subr.bf16.mxu0 %v3475
        %3499 = vmatpush1.bf16.msra.mxu0 %v3474
        %3500 = vmatprep.subr.bf16.mxu0 %v3490
        %3501 = vmatpush1.bf16.msra.mxu0 %v3487
        %3502 = vmatprep.subr.bf16.mxu0 0
        %3503 = vmatpush1.bf16.msra.mxu0 0
        %3504 = vmatprep.subr.bf16.mxu0 0
        %3505 = vmatpush1.bf16.msra.mxu0 0
        %3506 = vmatprep.subr.bf16.mxu0 0
        %3507 = vmatpush1.bf16.msra.mxu0 0
        %3508 = vmatprep.subr.bf16.mxu0 0
        %3509 = vmatpush1.bf16.msra.mxu0 0
        %3510 = vmatprep.subr.bf16.mxu0 0
        %3511 = vmatpush1.bf16.msra.mxu0 0
        %3512 = vmatprep.subr.bf16.mxu0 0
        %3513 = vmatpush1.bf16.msra.mxu0 0
        %3514 = vmatprep.subr.bf16.mxu0 0
        %3515 = vmatpush1.bf16.msra.mxu0 0
        %3516 = vmatprep.subr.bf16.mxu0 0
        %3517 = vmatpush1.bf16.msra.mxu0 0
        %3518 = vmatprep.subr.bf16.mxu0 0
        %3519 = vmatpush1.bf16.msra.mxu0 0
        %3520 = vmatprep.subr.bf16.mxu0 0
        %3521 = vmatpush1.bf16.msra.mxu0 0
        %3522 = vmatprep.subr.bf16.mxu0 0
        %3523 = vmatpush1.bf16.msra.mxu0 0
        %3524 = vmatprep.mubr.bf16.mxu0 0
        %3525 = vmatmul.mubr.bf16.gmra.mrb[0].mxu0 %v3484
        %v3526 = vpop.f32.mrb[0].mxu0
        %v3527 = vadd.f32 %v3481, %v3526
        %v3528 = vpop.f32.mrb[0].mxu0
        %v3529 = vadd.f32 %v3481, %v3528
        %v3530 = vpop.f32.mrb[0].mxu0
        %v3531 = vpop.f32.mrb[0].mxu0
        %3532 = vdwg.mxu0
        %v3533 = vmax.f32 %v3527, 0.0
        %v3534 = vmax.f32 %v3529, 0.0
        %s3535 = scalar_lea.vmem %s5, 44
        %v3536 = vld [vmem:[%s3535] sm:$0xf]
        %s3537 = scalar_lea.vmem %s6, 88
        %v3538 = vld [vmem:[%s3537] sm:$0xff]
        %3539 = vrot.lane.b32.xlu0 %v3533, 17
        %v3540 = vpop.permute.xlu0 %3539
        %3541 = vrot.lane.b32.xlu0 %v3534, 17
        %v3542 = vpop.permute.xlu0 %3541
        %v3543 = vsel %vm623, %v3540, %v3542
        %v3544 = vsel %vm623, %v3542, %v3540
        %v3545 = vmul.f32 %v3544, %v629
        %v3546 = vmul.f32 %v3543, %v633
        %3547 = vrot.lane.b32.xlu0 %v3533, 16
        %v3548 = vpop.permute.xlu0 %3547
        %3549 = vrot.lane.b32.xlu0 %v3534, 16
        %v3550 = vpop.permute.xlu0 %3549
        %v3551 = vsel %vm640, %v3548, %v3550
        %v3552 = vsel %vm640, %v3550, %v3548
        %v3553 = vmul.f32 %v3552, %v646
        %v3554 = vmul.f32 %v3551, %v650
        %3555 = vrot.lane.b32.xlu0 %v3533, 15
        %v3556 = vpop.permute.xlu0 %3555
        %3557 = vrot.lane.b32.xlu0 %v3534, 15
        %v3558 = vpop.permute.xlu0 %3557
        %v3559 = vsel %vm657, %v3556, %v3558
        %v3560 = vsel %vm657, %v3558, %v3556
        %v3561 = vmul.f32 %v3560, %v663
        %v3562 = vmul.f32 %v3559, %v667
        %3563 = vrot.lane.b32.xlu0 %v3533, 1
        %v3564 = vpop.permute.xlu0 %3563
        %3565 = vrot.lane.b32.xlu0 %v3534, 1
        %v3566 = vpop.permute.xlu0 %3565
        %v3567 = vsel %vm674, %v3564, %v3566
        %v3568 = vsel %vm674, %v3566, %v3564
        %v3569 = vmul.f32 %v3568, %v680
        %v3570 = vmul.f32 %v3567, %v684
        %3571 = vrot.lane.b32.xlu0 %v3533, 127
        %v3572 = vpop.permute.xlu0 %3571
        %3573 = vrot.lane.b32.xlu0 %v3534, 127
        %v3574 = vpop.permute.xlu0 %3573
        %v3575 = vsel %vm691, %v3572, %v3574
        %v3576 = vsel %vm691, %v3574, %v3572
        %v3577 = vmul.f32 %v3575, %v697
        %v3578 = vmul.f32 %v3576, %v701
        %3579 = vrot.lane.b32.xlu0 %v3533, 113
        %v3580 = vpop.permute.xlu0 %3579
        %3581 = vrot.lane.b32.xlu0 %v3534, 113
        %v3582 = vpop.permute.xlu0 %3581
        %v3583 = vsel %vm708, %v3580, %v3582
        %v3584 = vsel %vm708, %v3582, %v3580
        %v3585 = vmul.f32 %v3583, %v714
        %v3586 = vmul.f32 %v3584, %v718
        %3587 = vrot.lane.b32.xlu0 %v3533, 112
        %v3588 = vpop.permute.xlu0 %3587
        %3589 = vrot.lane.b32.xlu0 %v3534, 112
        %v3590 = vpop.permute.xlu0 %3589
        %v3591 = vsel %vm725, %v3588, %v3590
        %v3592 = vsel %vm725, %v3590, %v3588
        %v3593 = vmul.f32 %v3591, %v731
        %v3594 = vmul.f32 %v3592, %v735
        %3595 = vrot.lane.b32.xlu0 %v3533, 111
        %v3596 = vpop.permute.xlu0 %3595
        %3597 = vrot.lane.b32.xlu0 %v3534, 111
        %v3598 = vpop.permute.xlu0 %3597
        %v3599 = vsel %vm742, %v3596, %v3598
        %v3600 = vsel %vm742, %v3598, %v3596
        %v3601 = vmul.f32 %v3599, %v748
        %v3602 = vmul.f32 %v3600, %v752
        %v3603 = vpack.c.bf16 %v3553, %v3545
        %v3604 = vpack.c.bf16 %v3554, %v3546
        %v3605 = vpack.c.bf16 %v3569, %v3561
        %v3606 = vpack.c.bf16 %v3570, %v3562
        %v3607 = vpack.c.bf16 %v3577, %v3533
        %v3608 = vpack.c.bf16 %v3578, %v3534
        %v3609 = vpack.c.bf16 %v3593, %v3585
        %v3610 = vpack.c.bf16 %v3594, %v3586
        %v3611 = vpack.c.bf16 %v3601, %v3601
        %v3612 = vpack.c.bf16 %v3602, %v3602
        %3614 = vset.pattern.permute.xlu0 0
        %3615 = vperm.xlu0 %3614, %v3538
        %v3616 = vpop.permute.xlu0 %3615
        %v3619 = vsel %vm770, %v3536, 0
        %v3622 = vsel %vm774, %v3611, 0
        %v3625 = vsel %vm774, %v3612, 0
        %3627 = vmatprep.subr.bf16.mxu0 %v3604
        %3628 = vmatpush1.bf16.msra.mxu0 %v3603
        %3629 = vmatprep.subr.bf16.mxu0 %v3606
        %3630 = vmatpush1.bf16.msra.mxu0 %v3605
        %3631 = vmatprep.subr.bf16.mxu0 %v3608
        %3632 = vmatpush1.bf16.msra.mxu0 %v3607
        %3633 = vmatprep.subr.bf16.mxu0 %v3610
        %3634 = vmatpush1.bf16.msra.mxu0 %v3609
        %3635 = vmatprep.subr.bf16.mxu0 %v3625
        %3636 = vmatpush1.bf16.msra.mxu0 %v3622
        %3637 = vmatprep.subr.bf16.mxu0 0
        %3638 = vmatpush1.bf16.msra.mxu0 0
        %3639 = vmatprep.subr.bf16.mxu0 0
        %3640 = vmatpush1.bf16.msra.mxu0 0
        %3641 = vmatprep.subr.bf16.mxu0 0
        %3642 = vmatpush1.bf16.msra.mxu0 0
        %3643 = vmatprep.subr.bf16.mxu0 0
        %3644 = vmatpush1.bf16.msra.mxu0 0
        %3645 = vmatprep.subr.bf16.mxu0 0
        %3646 = vmatpush1.bf16.msra.mxu0 0
        %3647 = vmatprep.subr.bf16.mxu0 0
        %3648 = vmatpush1.bf16.msra.mxu0 0
        %3649 = vmatprep.subr.bf16.mxu0 0
        %3650 = vmatpush1.bf16.msra.mxu0 0
        %3651 = vmatprep.subr.bf16.mxu0 0
        %3652 = vmatpush1.bf16.msra.mxu0 0
        %3653 = vmatprep.subr.bf16.mxu0 0
        %3654 = vmatpush1.bf16.msra.mxu0 0
        %3655 = vmatprep.subr.bf16.mxu0 0
        %3656 = vmatpush1.bf16.msra.mxu0 0
        %3657 = vmatprep.subr.bf16.mxu0 0
        %3658 = vmatpush1.bf16.msra.mxu0 0
        %3659 = vmatprep.mubr.bf16.mxu0 0
        %3660 = vmatmul.mubr.bf16.gmra.mrb[0].mxu0 %v3619
        %v3661 = vpop.f32.mrb[0].mxu0
        %v3662 = vadd.f32 %v3616, %v3661
        %v3663 = vpop.f32.mrb[0].mxu0
        %v3664 = vadd.f32 %v3616, %v3663
        %v3665 = vpop.f32.mrb[0].mxu0
        %v3666 = vpop.f32.mrb[0].mxu0
        %3667 = vdwg.mxu0
        %v3668 = vadd.f32 %v3398, %v3662
        %v3669 = vadd.f32 %v3399, %v3664
        %s3670 = scalar_lea.vmem %s5, 48
        %v3671 = vld [vmem:[%s3670] sm:$0xf]
        %s3672 = scalar_lea.vmem %s6, 96
        %v3673 = vld [vmem:[%s3672] sm:$0xff]
        %3674 = vrot.lane.b32.xlu0 %v3668, 17
        %v3675 = vpop.permute.xlu0 %3674
        %3676 = vrot.lane.b32.xlu0 %v3669, 17
        %v3677 = vpop.permute.xlu0 %3676
        %v3678 = vsel %vm623, %v3675, %v3677
        %v3679 = vsel %vm623, %v3677, %v3675
        %v3680 = vmul.f32 %v3679, %v629
        %v3681 = vmul.f32 %v3678, %v633
        %3682 = vrot.lane.b32.xlu0 %v3668, 16
        %v3683 = vpop.permute.xlu0 %3682
        %3684 = vrot.lane.b32.xlu0 %v3669, 16
        %v3685 = vpop.permute.xlu0 %3684
        %v3686 = vsel %vm640, %v3683, %v3685
        %v3687 = vsel %vm640, %v3685, %v3683
        %v3688 = vmul.f32 %v3687, %v646
        %v3689 = vmul.f32 %v3686, %v650
        %3690 = vrot.lane.b32.xlu0 %v3668, 15
        %v3691 = vpop.permute.xlu0 %3690
        %3692 = vrot.lane.b32.xlu0 %v3669, 15
        %v3693 = vpop.permute.xlu0 %3692
        %v3694 = vsel %vm657, %v3691, %v3693
        %v3695 = vsel %vm657, %v3693, %v3691
        %v3696 = vmul.f32 %v3695, %v663
        %v3697 = vmul.f32 %v3694, %v667
        %3698 = vrot.lane.b32.xlu0 %v3668, 1
        %v3699 = vpop.permute.xlu0 %3698
        %3700 = vrot.lane.b32.xlu0 %v3669, 1
        %v3701 = vpop.permute.xlu0 %3700
        %v3702 = vsel %vm674, %v3699, %v3701
        %v3703 = vsel %vm674, %v3701, %v3699
        %v3704 = vmul.f32 %v3703, %v680
        %v3705 = vmul.f32 %v3702, %v684
        %3706 = vrot.lane.b32.xlu0 %v3668, 127
        %v3707 = vpop.permute.xlu0 %3706
        %3708 = vrot.lane.b32.xlu0 %v3669, 127
        %v3709 = vpop.permute.xlu0 %3708
        %v3710 = vsel %vm691, %v3707, %v3709
        %v3711 = vsel %vm691, %v3709, %v3707
        %v3712 = vmul.f32 %v3710, %v697
        %v3713 = vmul.f32 %v3711, %v701
        %3714 = vrot.lane.b32.xlu0 %v3668, 113
        %v3715 = vpop.permute.xlu0 %3714
        %3716 = vrot.lane.b32.xlu0 %v3669, 113
        %v3717 = vpop.permute.xlu0 %3716
        %v3718 = vsel %vm708, %v3715, %v3717
        %v3719 = vsel %vm708, %v3717, %v3715
        %v3720 = vmul.f32 %v3718, %v714
        %v3721 = vmul.f32 %v3719, %v718
        %3722 = vrot.lane.b32.xlu0 %v3668, 112
        %v3723 = vpop.permute.xlu0 %3722
        %3724 = vrot.lane.b32.xlu0 %v3669, 112
        %v3725 = vpop.permute.xlu0 %3724
        %v3726 = vsel %vm725, %v3723, %v3725
        %v3727 = vsel %vm725, %v3725, %v3723
        %v3728 = vmul.f32 %v3726, %v731
        %v3729 = vmul.f32 %v3727, %v735
        %3730 = vrot.lane.b32.xlu0 %v3668, 111
        %v3731 = vpop.permute.xlu0 %3730
        %3732 = vrot.lane.b32.xlu0 %v3669, 111
        %v3733 = vpop.permute.xlu0 %3732
        %v3734 = vsel %vm742, %v3731, %v3733
        %v3735 = vsel %vm742, %v3733, %v3731
        %v3736 = vmul.f32 %v3734, %v748
        %v3737 = vmul.f32 %v3735, %v752
        %v3738 = vpack.c.bf16 %v3688, %v3680
        %v3739 = vpack.c.bf16 %v3689, %v3681
        %v3740 = vpack.c.bf16 %v3704, %v3696
        %v3741 = vpack.c.bf16 %v3705, %v3697
        %v3742 = vpack.c.bf16 %v3712, %v3668
        %v3743 = vpack.c.bf16 %v3713, %v3669
        %v3744 = vpack.c.bf16 %v3728, %v3720
        %v3745 = vpack.c.bf16 %v3729, %v3721
        %v3746 = vpack.c.bf16 %v3736, %v3736
        %v3747 = vpack.c.bf16 %v3737, %v3737
        %3749 = vset.pattern.permute.xlu0 0
        %3750 = vperm.xlu0 %3749, %v3673
        %v3751 = vpop.permute.xlu0 %3750
        %v3754 = vsel %vm770, %v3671, 0
        %v3757 = vsel %vm774, %v3746, 0
        %v3760 = vsel %vm774, %v3747, 0
        %3762 = vmatprep.subr.bf16.mxu0 %v3739
        %3763 = vmatpush1.bf16.msra.mxu0 %v3738
        %3764 = vmatprep.subr.bf16.mxu0 %v3741
        %3765 = vmatpush1.bf16.msra.mxu0 %v3740
        %3766 = vmatprep.subr.bf16.mxu0 %v3743
        %3767 = vmatpush1.bf16.msra.mxu0 %v3742
        %3768 = vmatprep.subr.bf16.mxu0 %v3745
        %3769 = vmatpush1.bf16.msra.mxu0 %v3744
        %3770 = vmatprep.subr.bf16.mxu0 %v3760
        %3771 = vmatpush1.bf16.msra.mxu0 %v3757
        %3772 = vmatprep.subr.bf16.mxu0 0
        %3773 = vmatpush1.bf16.msra.mxu0 0
        %3774 = vmatprep.subr.bf16.mxu0 0
        %3775 = vmatpush1.bf16.msra.mxu0 0
        %3776 = vmatprep.subr.bf16.mxu0 0
        %3777 = vmatpush1.bf16.msra.mxu0 0
        %3778 = vmatprep.subr.bf16.mxu0 0
        %3779 = vmatpush1.bf16.msra.mxu0 0
        %3780 = vmatprep.subr.bf16.mxu0 0
        %3781 = vmatpush1.bf16.msra.mxu0 0
        %3782 = vmatprep.subr.bf16.mxu0 0
        %3783 = vmatpush1.bf16.msra.mxu0 0
        %3784 = vmatprep.subr.bf16.mxu0 0
        %3785 = vmatpush1.bf16.msra.mxu0 0
        %3786 = vmatprep.subr.bf16.mxu0 0
        %3787 = vmatpush1.bf16.msra.mxu0 0
        %3788 = vmatprep.subr.bf16.mxu0 0
        %3789 = vmatpush1.bf16.msra.mxu0 0
        %3790 = vmatprep.subr.bf16.mxu0 0
        %3791 = vmatpush1.bf16.msra.mxu0 0
        %3792 = vmatprep.subr.bf16.mxu0 0
        %3793 = vmatpush1.bf16.msra.mxu0 0
        %3794 = vmatprep.mubr.bf16.mxu0 0
        %3795 = vmatmul.mubr.bf16.gmra.mrb[0].mxu0 %v3754
        %v3796 = vpop.f32.mrb[0].mxu0
        %v3797 = vadd.f32 %v3751, %v3796
        %v3798 = vpop.f32.mrb[0].mxu0
        %v3799 = vadd.f32 %v3751, %v3798
        %v3800 = vpop.f32.mrb[0].mxu0
        %v3801 = vpop.f32.mrb[0].mxu0
        %3802 = vdwg.mxu0
        %v3803 = vmax.f32 %v3797, 0.0
        %v3804 = vmax.f32 %v3799, 0.0
        %s3805 = scalar_lea.vmem %s5, 52
        %v3806 = vld [vmem:[%s3805] sm:$0xf]
        %s3807 = scalar_lea.vmem %s6, 104
        %v3808 = vld [vmem:[%s3807] sm:$0xff]
        %3809 = vrot.lane.b32.xlu0 %v3803, 17
        %v3810 = vpop.permute.xlu0 %3809
        %3811 = vrot.lane.b32.xlu0 %v3804, 17
        %v3812 = vpop.permute.xlu0 %3811
        %v3813 = vsel %vm623, %v3810, %v3812
        %v3814 = vsel %vm623, %v3812, %v3810
        %v3815 = vmul.f32 %v3814, %v629
        %v3816 = vmul.f32 %v3813, %v633
        %3817 = vrot.lane.b32.xlu0 %v3803, 16
        %v3818 = vpop.permute.xlu0 %3817
        %3819 = vrot.lane.b32.xlu0 %v3804, 16
        %v3820 = vpop.permute.xlu0 %3819
        %v3821 = vsel %vm640, %v3818, %v3820
        %v3822 = vsel %vm640, %v3820, %v3818
        %v3823 = vmul.f32 %v3822, %v646
        %v3824 = vmul.f32 %v3821, %v650
        %3825 = vrot.lane.b32.xlu0 %v3803, 15
        %v3826 = vpop.permute.xlu0 %3825
        %3827 = vrot.lane.b32.xlu0 %v3804, 15
        %v3828 = vpop.permute.xlu0 %3827
        %v3829 = vsel %vm657, %v3826, %v3828
        %v3830 = vsel %vm657, %v3828, %v3826
        %v3831 = vmul.f32 %v3830, %v663
        %v3832 = vmul.f32 %v3829, %v667
        %3833 = vrot.lane.b32.xlu0 %v3803, 1
        %v3834 = vpop.permute.xlu0 %3833
        %3835 = vrot.lane.b32.xlu0 %v3804, 1
        %v3836 = vpop.permute.xlu0 %3835
        %v3837 = vsel %vm674, %v3834, %v3836
        %v3838 = vsel %vm674, %v3836, %v3834
        %v3839 = vmul.f32 %v3838, %v680
        %v3840 = vmul.f32 %v3837, %v684
        %3841 = vrot.lane.b32.xlu0 %v3803, 127
        %v3842 = vpop.permute.xlu0 %3841
        %3843 = vrot.lane.b32.xlu0 %v3804, 127
        %v3844 = vpop.permute.xlu0 %3843
        %v3845 = vsel %vm691, %v3842, %v3844
        %v3846 = vsel %vm691, %v3844, %v3842
        %v3847 = vmul.f32 %v3845, %v697
        %v3848 = vmul.f32 %v3846, %v701
        %3849 = vrot.lane.b32.xlu0 %v3803, 113
        %v3850 = vpop.permute.xlu0 %3849
        %3851 = vrot.lane.b32.xlu0 %v3804, 113
        %v3852 = vpop.permute.xlu0 %3851
        %v3853 = vsel %vm708, %v3850, %v3852
        %v3854 = vsel %vm708, %v3852, %v3850
        %v3855 = vmul.f32 %v3853, %v714
        %v3856 = vmul.f32 %v3854, %v718
        %3857 = vrot.lane.b32.xlu0 %v3803, 112
        %v3858 = vpop.permute.xlu0 %3857
        %3859 = vrot.lane.b32.xlu0 %v3804, 112
        %v3860 = vpop.permute.xlu0 %3859
        %v3861 = vsel %vm725, %v3858, %v3860
        %v3862 = vsel %vm725, %v3860, %v3858
        %v3863 = vmul.f32 %v3861, %v731
        %v3864 = vmul.f32 %v3862, %v735
        %3865 = vrot.lane.b32.xlu0 %v3803, 111
        %v3866 = vpop.permute.xlu0 %3865
        %3867 = vrot.lane.b32.xlu0 %v3804, 111
        %v3868 = vpop.permute.xlu0 %3867
        %v3869 = vsel %vm742, %v3866, %v3868
        %v3870 = vsel %vm742, %v3868, %v3866
        %v3871 = vmul.f32 %v3869, %v748
        %v3872 = vmul.f32 %v3870, %v752
        %v3873 = vpack.c.bf16 %v3823, %v3815
        %v3874 = vpack.c.bf16 %v3824, %v3816
        %v3875 = vpack.c.bf16 %v3839, %v3831
        %v3876 = vpack.c.bf16 %v3840, %v3832
        %v3877 = vpack.c.bf16 %v3847, %v3803
        %v3878 = vpack.c.bf16 %v3848, %v3804
        %v3879 = vpack.c.bf16 %v3863, %v3855
        %v3880 = vpack.c.bf16 %v3864, %v3856
        %v3881 = vpack.c.bf16 %v3871, %v3871
        %v3882 = vpack.c.bf16 %v3872, %v3872
        %3884 = vset.pattern.permute.xlu0 0
        %3885 = vperm.xlu0 %3884, %v3808
        %v3886 = vpop.permute.xlu0 %3885
        %v3889 = vsel %vm770, %v3806, 0
        %v3892 = vsel %vm774, %v3881, 0
        %v3895 = vsel %vm774, %v3882, 0
        %3897 = vmatprep.subr.bf16.mxu0 %v3874
        %3898 = vmatpush1.bf16.msra.mxu0 %v3873
        %3899 = vmatprep.subr.bf16.mxu0 %v3876
        %3900 = vmatpush1.bf16.msra.mxu0 %v3875
        %3901 = vmatprep.subr.bf16.mxu0 %v3878
        %3902 = vmatpush1.bf16.msra.mxu0 %v3877
        %3903 = vmatprep.subr.bf16.mxu0 %v3880
        %3904 = vmatpush1.bf16.msra.mxu0 %v3879
        %3905 = vmatprep.subr.bf16.mxu0 %v3895
        %3906 = vmatpush1.bf16.msra.mxu0 %v3892
        %3907 = vmatprep.subr.bf16.mxu0 0
        %3908 = vmatpush1.bf16.msra.mxu0 0
        %3909 = vmatprep.subr.bf16.mxu0 0
        %3910 = vmatpush1.bf16.msra.mxu0 0
        %3911 = vmatprep.subr.bf16.mxu0 0
        %3912 = vmatpush1.bf16.msra.mxu0 0
        %3913 = vmatprep.subr.bf16.mxu0 0
        %3914 = vmatpush1.bf16.msra.mxu0 0
        %3915 = vmatprep.subr.bf16.mxu0 0
        %3916 = vmatpush1.bf16.msra.mxu0 0
        %3917 = vmatprep.subr.bf16.mxu0 0
        %3918 = vmatpush1.bf16.msra.mxu0 0
        %3919 = vmatprep.subr.bf16.mxu0 0
        %3920 = vmatpush1.bf16.msra.mxu0 0
        %3921 = vmatprep.subr.bf16.mxu0 0
        %3922 = vmatpush1.bf16.msra.mxu0 0
        %3923 = vmatprep.subr.bf16.mxu0 0
        %3924 = vmatpush1.bf16.msra.mxu0 0
        %3925 = vmatprep.subr.bf16.mxu0 0
        %3926 = vmatpush1.bf16.msra.mxu0 0
        %3927 = vmatprep.subr.bf16.mxu0 0
        %3928 = vmatpush1.bf16.msra.mxu0 0
        %3929 = vmatprep.mubr.bf16.mxu0 0
        %3930 = vmatmul.mubr.bf16.gmra.mrb[0].mxu0 %v3889
        %v3931 = vpop.f32.mrb[0].mxu0
        %v3932 = vadd.f32 %v3886, %v3931
        %v3933 = vpop.f32.mrb[0].mxu0
        %v3934 = vadd.f32 %v3886, %v3933
        %v3935 = vpop.f32.mrb[0].mxu0
        %v3936 = vpop.f32.mrb[0].mxu0
        %3937 = vdwg.mxu0
        %v3938 = vadd.f32 %v3668, %v3932
        %v3939 = vadd.f32 %v3669, %v3934
        %s3940 = scalar_lea.vmem %s5, 56
        %v3941 = vld [vmem:[%s3940] sm:$0xf]
        %s3942 = scalar_lea.vmem %s6, 112
        %v3943 = vld [vmem:[%s3942] sm:$0xff]
        %3944 = vrot.lane.b32.xlu0 %v3938, 17
        %v3945 = vpop.permute.xlu0 %3944
        %3946 = vrot.lane.b32.xlu0 %v3939, 17
        %v3947 = vpop.permute.xlu0 %3946
        %v3948 = vsel %vm623, %v3945, %v3947
        %v3949 = vsel %vm623, %v3947, %v3945
        %v3950 = vmul.f32 %v3949, %v629
        %v3951 = vmul.f32 %v3948, %v633
        %3952 = vrot.lane.b32.xlu0 %v3938, 16
        %v3953 = vpop.permute.xlu0 %3952
        %3954 = vrot.lane.b32.xlu0 %v3939, 16
        %v3955 = vpop.permute.xlu0 %3954
        %v3956 = vsel %vm640, %v3953, %v3955
        %v3957 = vsel %vm640, %v3955, %v3953
        %v3958 = vmul.f32 %v3957, %v646
        %v3959 = vmul.f32 %v3956, %v650
        %3960 = vrot.lane.b32.xlu0 %v3938, 15
        %v3961 = vpop.permute.xlu0 %3960
        %3962 = vrot.lane.b32.xlu0 %v3939, 15
        %v3963 = vpop.permute.xlu0 %3962
        %v3964 = vsel %vm657, %v3961, %v3963
        %v3965 = vsel %vm657, %v3963, %v3961
        %v3966 = vmul.f32 %v3965, %v663
        %v3967 = vmul.f32 %v3964, %v667
        %3968 = vrot.lane.b32.xlu0 %v3938, 1
        %v3969 = vpop.permute.xlu0 %3968
        %3970 = vrot.lane.b32.xlu0 %v3939, 1
        %v3971 = vpop.permute.xlu0 %3970
        %v3972 = vsel %vm674, %v3969, %v3971
        %v3973 = vsel %vm674, %v3971, %v3969
        %v3974 = vmul.f32 %v3973, %v680
        %v3975 = vmul.f32 %v3972, %v684
        %3976 = vrot.lane.b32.xlu0 %v3938, 127
        %v3977 = vpop.permute.xlu0 %3976
        %3978 = vrot.lane.b32.xlu0 %v3939, 127
        %v3979 = vpop.permute.xlu0 %3978
        %v3980 = vsel %vm691, %v3977, %v3979
        %v3981 = vsel %vm691, %v3979, %v3977
        %v3982 = vmul.f32 %v3980, %v697
        %v3983 = vmul.f32 %v3981, %v701
        %3984 = vrot.lane.b32.xlu0 %v3938, 113
        %v3985 = vpop.permute.xlu0 %3984
        %3986 = vrot.lane.b32.xlu0 %v3939, 113
        %v3987 = vpop.permute.xlu0 %3986
        %v3988 = vsel %vm708, %v3985, %v3987
        %v3989 = vsel %vm708, %v3987, %v3985
        %v3990 = vmul.f32 %v3988, %v714
        %v3991 = vmul.f32 %v3989, %v718
        %3992 = vrot.lane.b32.xlu0 %v3938, 112
        %v3993 = vpop.permute.xlu0 %3992
        %3994 = vrot.lane.b32.xlu0 %v3939, 112
        %v3995 = vpop.permute.xlu0 %3994
        %v3996 = vsel %vm725, %v3993, %v3995
        %v3997 = vsel %vm725, %v3995, %v3993
        %v3998 = vmul.f32 %v3996, %v731
        %v3999 = vmul.f32 %v3997, %v735
        %4000 = vrot.lane.b32.xlu0 %v3938, 111
        %v4001 = vpop.permute.xlu0 %4000
        %4002 = vrot.lane.b32.xlu0 %v3939, 111
        %v4003 = vpop.permute.xlu0 %4002
        %v4004 = vsel %vm742, %v4001, %v4003
        %v4005 = vsel %vm742, %v4003, %v4001
        %v4006 = vmul.f32 %v4004, %v748
        %v4007 = vmul.f32 %v4005, %v752
        %v4008 = vpack.c.bf16 %v3958, %v3950
        %v4009 = vpack.c.bf16 %v3959, %v3951
        %v4010 = vpack.c.bf16 %v3974, %v3966
        %v4011 = vpack.c.bf16 %v3975, %v3967
        %v4012 = vpack.c.bf16 %v3982, %v3938
        %v4013 = vpack.c.bf16 %v3983, %v3939
        %v4014 = vpack.c.bf16 %v3998, %v3990
        %v4015 = vpack.c.bf16 %v3999, %v3991
        %v4016 = vpack.c.bf16 %v4006, %v4006
        %v4017 = vpack.c.bf16 %v4007, %v4007
        %4019 = vset.pattern.permute.xlu0 0
        %4020 = vperm.xlu0 %4019, %v3943
        %v4021 = vpop.permute.xlu0 %4020
        %v4024 = vsel %vm770, %v3941, 0
        %v4027 = vsel %vm774, %v4016, 0
        %v4030 = vsel %vm774, %v4017, 0
        %4032 = vmatprep.subr.bf16.mxu0 %v4009
        %4033 = vmatpush1.bf16.msra.mxu0 %v4008
        %4034 = vmatprep.subr.bf16.mxu0 %v4011
        %4035 = vmatpush1.bf16.msra.mxu0 %v4010
        %4036 = vmatprep.subr.bf16.mxu0 %v4013
        %4037 = vmatpush1.bf16.msra.mxu0 %v4012
        %4038 = vmatprep.subr.bf16.mxu0 %v4015
        %4039 = vmatpush1.bf16.msra.mxu0 %v4014
        %4040 = vmatprep.subr.bf16.mxu0 %v4030
        %4041 = vmatpush1.bf16.msra.mxu0 %v4027
        %4042 = vmatprep.subr.bf16.mxu0 0
        %4043 = vmatpush1.bf16.msra.mxu0 0
        %4044 = vmatprep.subr.bf16.mxu0 0
        %4045 = vmatpush1.bf16.msra.mxu0 0
        %4046 = vmatprep.subr.bf16.mxu0 0
        %4047 = vmatpush1.bf16.msra.mxu0 0
        %4048 = vmatprep.subr.bf16.mxu0 0
        %4049 = vmatpush1.bf16.msra.mxu0 0
        %4050 = vmatprep.subr.bf16.mxu0 0
        %4051 = vmatpush1.bf16.msra.mxu0 0
        %4052 = vmatprep.subr.bf16.mxu0 0
        %4053 = vmatpush1.bf16.msra.mxu0 0
        %4054 = vmatprep.subr.bf16.mxu0 0
        %4055 = vmatpush1.bf16.msra.mxu0 0
        %4056 = vmatprep.subr.bf16.mxu0 0
        %4057 = vmatpush1.bf16.msra.mxu0 0
        %4058 = vmatprep.subr.bf16.mxu0 0
        %4059 = vmatpush1.bf16.msra.mxu0 0
        %4060 = vmatprep.subr.bf16.mxu0 0
        %4061 = vmatpush1.bf16.msra.mxu0 0
        %4062 = vmatprep.subr.bf16.mxu0 0
        %4063 = vmatpush1.bf16.msra.mxu0 0
        %4064 = vmatprep.mubr.bf16.mxu0 0
        %4065 = vmatmul.mubr.bf16.gmra.mrb[0].mxu0 %v4024
        %v4066 = vpop.f32.mrb[0].mxu0
        %v4067 = vadd.f32 %v4021, %v4066
        %v4068 = vpop.f32.mrb[0].mxu0
        %v4069 = vadd.f32 %v4021, %v4068
        %v4070 = vpop.f32.mrb[0].mxu0
        %v4071 = vpop.f32.mrb[0].mxu0
        %4072 = vdwg.mxu0
        %v4073 = vadd.f32 %v3398, %v4067
        %v4074 = vadd.f32 %v3399, %v4069
        %v4075 = vld [vmem:[%s13] sm:$0xf]
        %v4076 = vpack.c.bf16 %v4073, %v4073
        %v4077 = vpack.c.bf16 %v4074, %v4074
        %s4078 = scalar_lea.vmem %s13, 4
        %v4079 = vld [vmem:[%s4078] sm:$0xf]
        %v4080 = vpack.c.bf16 %v3398, %v3398
        %v4081 = vpack.c.bf16 %v3399, %v3399
        %v4083 = vsel %vm2174, %v4079, 0
        %v4086 = vsel %vm774, %v4080, 0
        %v4089 = vsel %vm774, %v4081, 0
        %4091 = vmatprep.subr.bf16.mxu0 %v4089
        %4092 = vmatpush1.bf16.msra.mxu0 %v4086
        %4093 = vmatprep.subr.bf16.mxu0 0
        %4094 = vmatpush1.bf16.msra.mxu0 0
        %4095 = vmatprep.subr.bf16.mxu0 0
        %4096 = vmatpush1.bf16.msra.mxu0 0
        %4097 = vmatprep.subr.bf16.mxu0 0
        %4098 = vmatpush1.bf16.msra.mxu0 0
        %4099 = vmatprep.subr.bf16.mxu0 0
        %4100 = vmatpush1.bf16.msra.mxu0 0
        %4101 = vmatprep.subr.bf16.mxu0 0
        %4102 = vmatpush1.bf16.msra.mxu0 0
        %4103 = vmatprep.subr.bf16.mxu0 0
        %4104 = vmatpush1.bf16.msra.mxu0 0
        %4105 = vmatprep.subr.bf16.mxu0 0
        %4106 = vmatpush1.bf16.msra.mxu0 0
        %4107 = vmatprep.subr.bf16.mxu0 0
        %4108 = vmatpush1.bf16.msra.mxu0 0
        %4109 = vmatprep.subr.bf16.mxu0 0
        %4110 = vmatpush1.bf16.msra.mxu0 0
        %4111 = vmatprep.subr.bf16.mxu0 0
        %4112 = vmatpush1.bf16.msra.mxu0 0
        %4113 = vmatprep.subr.bf16.mxu0 0
        %4114 = vmatpush1.bf16.msra.mxu0 0
        %4115 = vmatprep.subr.bf16.mxu0 0
        %4116 = vmatpush1.bf16.msra.mxu0 0
        %4117 = vmatprep.subr.bf16.mxu0 0
        %4118 = vmatpush1.bf16.msra.mxu0 0
        %4119 = vmatprep.subr.bf16.mxu0 0
        %4120 = vmatpush1.bf16.msra.mxu0 0
        %4121 = vmatprep.subr.bf16.mxu0 0
        %4122 = vmatpush1.bf16.msra.mxu0 0
        %4123 = vmatprep.mubr.bf16.mxu0 0
        %4124 = vmatmul.mubr.bf16.gmra.mrb[0].mxu0 %v4083
        %v4125 = vpop.f32.mrb[0].mxu0
        %v4126 = vadd.f32 0.0, %v4125
        %v4127 = vpop.f32.mrb[0].mxu0
        %v4128 = vadd.f32 0.0, %v4127
        %v4129 = vpop.f32.mrb[0].mxu0
        %v4130 = vpop.f32.mrb[0].mxu0
        %4131 = vdwg.mxu0
        %v4133 = vsel %vm2174, %v4075, 0
        %v4136 = vsel %vm774, %v4076, 0
        %v4139 = vsel %vm774, %v4077, 0
        %4141 = vmatprep.subr.bf16.mxu0 %v4139
        %4142 = vmatpush1.bf16.msra.mxu0 %v4136
        %4143 = vmatprep.subr.bf16.mxu0 0
        %4144 = vmatpush1.bf16.msra.mxu0 0
        %4145 = vmatprep.subr.bf16.mxu0 0
        %4146 = vmatpush1.bf16.msra.mxu0 0
        %4147 = vmatprep.subr.bf16.mxu0 0
        %4148 = vmatpush1.bf16.msra.mxu0 0
        %4149 = vmatprep.subr.bf16.mxu0 0
        %4150 = vmatpush1.bf16.msra.mxu0 0
        %4151 = vmatprep.subr.bf16.mxu0 0
        %4152 = vmatpush1.bf16.msra.mxu0 0
        %4153 = vmatprep.subr.bf16.mxu0 0
        %4154 = vmatpush1.bf16.msra.mxu0 0
        %4155 = vmatprep.subr.bf16.mxu0 0
        %4156 = vmatpush1.bf16.msra.mxu0 0
        %4157 = vmatprep.subr.bf16.mxu0 0
        %4158 = vmatpush1.bf16.msra.mxu0 0
        %4159 = vmatprep.subr.bf16.mxu0 0
        %4160 = vmatpush1.bf16.msra.mxu0 0
        %4161 = vmatprep.subr.bf16.mxu0 0
        %4162 = vmatpush1.bf16.msra.mxu0 0
        %4163 = vmatprep.subr.bf16.mxu0 0
        %4164 = vmatpush1.bf16.msra.mxu0 0
        %4165 = vmatprep.subr.bf16.mxu0 0
        %4166 = vmatpush1.bf16.msra.mxu0 0
        %4167 = vmatprep.subr.bf16.mxu0 0
        %4168 = vmatpush1.bf16.msra.mxu0 0
        %4169 = vmatprep.subr.bf16.mxu0 0
        %4170 = vmatpush1.bf16.msra.mxu0 0
        %4171 = vmatprep.subr.bf16.mxu0 0
        %4172 = vmatpush1.bf16.msra.mxu0 0
        %4173 = vmatprep.mubr.bf16.mxu0 0
        %4174 = vmatmul.mubr.bf16.gmra.mrb[0].mxu0 %v4133
        %v4175 = vpop.f32.mrb[0].mxu0
        %v4176 = vadd.f32 %v4126, %v4175
        %v4177 = vpop.f32.mrb[0].mxu0
        %v4178 = vadd.f32 %v4128, %v4177
        %v4179 = vpop.f32.mrb[0].mxu0
        %v4180 = vpop.f32.mrb[0].mxu0
        %4181 = vdwg.mxu0
        %v4182 = vld [vmem:[%s14] sm:$0xff]
        %4184 = vset.pattern.permute.xlu0 0
        %4185 = vperm.xlu0 %4184, %v4182
        %v4186 = vpop.permute.xlu0 %4185
        %v4188 = vadd.f32 %v4176, %v4186
        %v4189 = vadd.f32 %v4178, %v4186
        %s4190 = scalar_lea.vmem %s5, 60
        %v4191 = vld [vmem:[%s4190] sm:$0xf]
        %s4192 = scalar_lea.vmem %s6, 120
        %v4193 = vld [vmem:[%s4192] sm:$0xff]
        %4194 = vrot.lane.b32.xlu0 %v4188, 17
        %v4195 = vpop.permute.xlu0 %4194
        %4196 = vrot.lane.b32.xlu0 %v4189, 17
        %v4197 = vpop.permute.xlu0 %4196
        %v4198 = vsel %vm623, %v4195, %v4197
        %v4199 = vsel %vm623, %v4197, %v4195
        %v4200 = vmul.f32 %v4199, %v629
        %v4201 = vmul.f32 %v4198, %v633
        %4202 = vrot.lane.b32.xlu0 %v4188, 16
        %v4203 = vpop.permute.xlu0 %4202
        %4204 = vrot.lane.b32.xlu0 %v4189, 16
        %v4205 = vpop.permute.xlu0 %4204
        %v4206 = vsel %vm640, %v4203, %v4205
        %v4207 = vsel %vm640, %v4205, %v4203
        %v4208 = vmul.f32 %v4207, %v646
        %v4209 = vmul.f32 %v4206, %v650
        %4210 = vrot.lane.b32.xlu0 %v4188, 15
        %v4211 = vpop.permute.xlu0 %4210
        %4212 = vrot.lane.b32.xlu0 %v4189, 15
        %v4213 = vpop.permute.xlu0 %4212
        %v4214 = vsel %vm657, %v4211, %v4213
        %v4215 = vsel %vm657, %v4213, %v4211
        %v4216 = vmul.f32 %v4215, %v663
        %v4217 = vmul.f32 %v4214, %v667
        %4218 = vrot.lane.b32.xlu0 %v4188, 1
        %v4219 = vpop.permute.xlu0 %4218
        %4220 = vrot.lane.b32.xlu0 %v4189, 1
        %v4221 = vpop.permute.xlu0 %4220
        %v4222 = vsel %vm674, %v4219, %v4221
        %v4223 = vsel %vm674, %v4221, %v4219
        %v4224 = vmul.f32 %v4223, %v680
        %v4225 = vmul.f32 %v4222, %v684
        %4226 = vrot.lane.b32.xlu0 %v4188, 127
        %v4227 = vpop.permute.xlu0 %4226
        %4228 = vrot.lane.b32.xlu0 %v4189, 127
        %v4229 = vpop.permute.xlu0 %4228
        %v4230 = vsel %vm691, %v4227, %v4229
        %v4231 = vsel %vm691, %v4229, %v4227
        %v4232 = vmul.f32 %v4230, %v697
        %v4233 = vmul.f32 %v4231, %v701
        %4234 = vrot.lane.b32.xlu0 %v4188, 113
        %v4235 = vpop.permute.xlu0 %4234
        %4236 = vrot.lane.b32.xlu0 %v4189, 113
        %v4237 = vpop.permute.xlu0 %4236
        %v4238 = vsel %vm708, %v4235, %v4237
        %v4239 = vsel %vm708, %v4237, %v4235
        %v4240 = vmul.f32 %v4238, %v714
        %v4241 = vmul.f32 %v4239, %v718
        %4242 = vrot.lane.b32.xlu0 %v4188, 112
        %v4243 = vpop.permute.xlu0 %4242
        %4244 = vrot.lane.b32.xlu0 %v4189, 112
        %v4245 = vpop.permute.xlu0 %4244
        %v4246 = vsel %vm725, %v4243, %v4245
        %v4247 = vsel %vm725, %v4245, %v4243
        %v4248 = vmul.f32 %v4246, %v731
        %v4249 = vmul.f32 %v4247, %v735
        %4250 = vrot.lane.b32.xlu0 %v4188, 111
        %v4251 = vpop.permute.xlu0 %4250
        %4252 = vrot.lane.b32.xlu0 %v4189, 111
        %v4253 = vpop.permute.xlu0 %4252
        %v4254 = vsel %vm742, %v4251, %v4253
        %v4255 = vsel %vm742, %v4253, %v4251
        %v4256 = vmul.f32 %v4254, %v748
        %v4257 = vmul.f32 %v4255, %v752
        %v4258 = vpack.c.bf16 %v4208, %v4200
        %v4259 = vpack.c.bf16 %v4209, %v4201
        %v4260 = vpack.c.bf16 %v4224, %v4216
        %v4261 = vpack.c.bf16 %v4225, %v4217
        %v4262 = vpack.c.bf16 %v4232, %v4188
        %v4263 = vpack.c.bf16 %v4233, %v4189
        %v4264 = vpack.c.bf16 %v4248, %v4240
        %v4265 = vpack.c.bf16 %v4249, %v4241
        %v4266 = vpack.c.bf16 %v4256, %v4256
        %v4267 = vpack.c.bf16 %v4257, %v4257
        %4269 = vset.pattern.permute.xlu0 0
        %4270 = vperm.xlu0 %4269, %v4193
        %v4271 = vpop.permute.xlu0 %4270
        %v4274 = vsel %vm770, %v4191, 0
        %v4277 = vsel %vm774, %v4266, 0
        %v4280 = vsel %vm774, %v4267, 0
        %4282 = vmatprep.subr.bf16.mxu0 %v4259
        %4283 = vmatpush1.bf16.msra.mxu0 %v4258
        %4284 = vmatprep.subr.bf16.mxu0 %v4261
        %4285 = vmatpush1.bf16.msra.mxu0 %v4260
        %4286 = vmatprep.subr.bf16.mxu0 %v4263
        %4287 = vmatpush1.bf16.msra.mxu0 %v4262
        %4288 = vmatprep.subr.bf16.mxu0 %v4265
        %4289 = vmatpush1.bf16.msra.mxu0 %v4264
        %4290 = vmatprep.subr.bf16.mxu0 %v4280
        %4291 = vmatpush1.bf16.msra.mxu0 %v4277
        %4292 = vmatprep.subr.bf16.mxu0 0
        %4293 = vmatpush1.bf16.msra.mxu0 0
        %4294 = vmatprep.subr.bf16.mxu0 0
        %4295 = vmatpush1.bf16.msra.mxu0 0
        %4296 = vmatprep.subr.bf16.mxu0 0
        %4297 = vmatpush1.bf16.msra.mxu0 0
        %4298 = vmatprep.subr.bf16.mxu0 0
        %4299 = vmatpush1.bf16.msra.mxu0 0
        %4300 = vmatprep.subr.bf16.mxu0 0
        %4301 = vmatpush1.bf16.msra.mxu0 0
        %4302 = vmatprep.subr.bf16.mxu0 0
        %4303 = vmatpush1.bf16.msra.mxu0 0
        %4304 = vmatprep.subr.bf16.mxu0 0
        %4305 = vmatpush1.bf16.msra.mxu0 0
        %4306 = vmatprep.subr.bf16.mxu0 0
        %4307 = vmatpush1.bf16.msra.mxu0 0
        %4308 = vmatprep.subr.bf16.mxu0 0
        %4309 = vmatpush1.bf16.msra.mxu0 0
        %4310 = vmatprep.subr.bf16.mxu0 0
        %4311 = vmatpush1.bf16.msra.mxu0 0
        %4312 = vmatprep.subr.bf16.mxu0 0
        %4313 = vmatpush1.bf16.msra.mxu0 0
        %4314 = vmatprep.mubr.bf16.mxu0 0
        %4315 = vmatmul.mubr.bf16.gmra.mrb[0].mxu0 %v4274
        %v4316 = vpop.f32.mrb[0].mxu0
        %v4317 = vadd.f32 %v4271, %v4316
        %v4318 = vpop.f32.mrb[0].mxu0
        %v4319 = vadd.f32 %v4271, %v4318
        %v4320 = vpop.f32.mrb[0].mxu0
        %v4321 = vpop.f32.mrb[0].mxu0
        %4322 = vdwg.mxu0
        %v4323 = vmax.f32 %v4317, 0.0
        %v4324 = vmax.f32 %v4319, 0.0
        %s4325 = scalar_lea.vmem %s5, 64
        %v4326 = vld [vmem:[%s4325] sm:$0xf]
        %s4327 = scalar_lea.vmem %s6, 128
        %v4328 = vld [vmem:[%s4327] sm:$0xff]
        %4329 = vrot.lane.b32.xlu0 %v4323, 17
        %v4330 = vpop.permute.xlu0 %4329
        %4331 = vrot.lane.b32.xlu0 %v4324, 17
        %v4332 = vpop.permute.xlu0 %4331
        %v4333 = vsel %vm623, %v4330, %v4332
        %v4334 = vsel %vm623, %v4332, %v4330
        %v4335 = vmul.f32 %v4334, %v629
        %v4336 = vmul.f32 %v4333, %v633
        %4337 = vrot.lane.b32.xlu0 %v4323, 16
        %v4338 = vpop.permute.xlu0 %4337
        %4339 = vrot.lane.b32.xlu0 %v4324, 16
        %v4340 = vpop.permute.xlu0 %4339
        %v4341 = vsel %vm640, %v4338, %v4340
        %v4342 = vsel %vm640, %v4340, %v4338
        %v4343 = vmul.f32 %v4342, %v646
        %v4344 = vmul.f32 %v4341, %v650
        %4345 = vrot.lane.b32.xlu0 %v4323, 15
        %v4346 = vpop.permute.xlu0 %4345
        %4347 = vrot.lane.b32.xlu0 %v4324, 15
        %v4348 = vpop.permute.xlu0 %4347
        %v4349 = vsel %vm657, %v4346, %v4348
        %v4350 = vsel %vm657, %v4348, %v4346
        %v4351 = vmul.f32 %v4350, %v663
        %v4352 = vmul.f32 %v4349, %v667
        %4353 = vrot.lane.b32.xlu0 %v4323, 1
        %v4354 = vpop.permute.xlu0 %4353
        %4355 = vrot.lane.b32.xlu0 %v4324, 1
        %v4356 = vpop.permute.xlu0 %4355
        %v4357 = vsel %vm674, %v4354, %v4356
        %v4358 = vsel %vm674, %v4356, %v4354
        %v4359 = vmul.f32 %v4358, %v680
        %v4360 = vmul.f32 %v4357, %v684
        %4361 = vrot.lane.b32.xlu0 %v4323, 127
        %v4362 = vpop.permute.xlu0 %4361
        %4363 = vrot.lane.b32.xlu0 %v4324, 127
        %v4364 = vpop.permute.xlu0 %4363
        %v4365 = vsel %vm691, %v4362, %v4364
        %v4366 = vsel %vm691, %v4364, %v4362
        %v4367 = vmul.f32 %v4365, %v697
        %v4368 = vmul.f32 %v4366, %v701
        %4369 = vrot.lane.b32.xlu0 %v4323, 113
        %v4370 = vpop.permute.xlu0 %4369
        %4371 = vrot.lane.b32.xlu0 %v4324, 113
        %v4372 = vpop.permute.xlu0 %4371
        %v4373 = vsel %vm708, %v4370, %v4372
        %v4374 = vsel %vm708, %v4372, %v4370
        %v4375 = vmul.f32 %v4373, %v714
        %v4376 = vmul.f32 %v4374, %v718
        %4377 = vrot.lane.b32.xlu0 %v4323, 112
        %v4378 = vpop.permute.xlu0 %4377
        %4379 = vrot.lane.b32.xlu0 %v4324, 112
        %v4380 = vpop.permute.xlu0 %4379
        %v4381 = vsel %vm725, %v4378, %v4380
        %v4382 = vsel %vm725, %v4380, %v4378
        %v4383 = vmul.f32 %v4381, %v731
        %v4384 = vmul.f32 %v4382, %v735
        %4385 = vrot.lane.b32.xlu0 %v4323, 111
        %v4386 = vpop.permute.xlu0 %4385
        %4387 = vrot.lane.b32.xlu0 %v4324, 111
        %v4388 = vpop.permute.xlu0 %4387
        %v4389 = vsel %vm742, %v4386, %v4388
        %v4390 = vsel %vm742, %v4388, %v4386
        %v4391 = vmul.f32 %v4389, %v748
        %v4392 = vmul.f32 %v4390, %v752
        %v4393 = vpack.c.bf16 %v4343, %v4335
        %v4394 = vpack.c.bf16 %v4344, %v4336
        %v4395 = vpack.c.bf16 %v4359, %v4351
        %v4396 = vpack.c.bf16 %v4360, %v4352
        %v4397 = vpack.c.bf16 %v4367, %v4323
        %v4398 = vpack.c.bf16 %v4368, %v4324
        %v4399 = vpack.c.bf16 %v4383, %v4375
        %v4400 = vpack.c.bf16 %v4384, %v4376
        %v4401 = vpack.c.bf16 %v4391, %v4391
        %v4402 = vpack.c.bf16 %v4392, %v4392
        %4404 = vset.pattern.permute.xlu0 0
        %4405 = vperm.xlu0 %4404, %v4328
        %v4406 = vpop.permute.xlu0 %4405
        %v4409 = vsel %vm770, %v4326, 0
        %v4412 = vsel %vm774, %v4401, 0
        %v4415 = vsel %vm774, %v4402, 0
        %4417 = vmatprep.subr.bf16.mxu0 %v4394
        %4418 = vmatpush1.bf16.msra.mxu0 %v4393
        %4419 = vmatprep.subr.bf16.mxu0 %v4396
        %4420 = vmatpush1.bf16.msra.mxu0 %v4395
        %4421 = vmatprep.subr.bf16.mxu0 %v4398
        %4422 = vmatpush1.bf16.msra.mxu0 %v4397
        %4423 = vmatprep.subr.bf16.mxu0 %v4400
        %4424 = vmatpush1.bf16.msra.mxu0 %v4399
        %4425 = vmatprep.subr.bf16.mxu0 %v4415
        %4426 = vmatpush1.bf16.msra.mxu0 %v4412
        %4427 = vmatprep.subr.bf16.mxu0 0
        %4428 = vmatpush1.bf16.msra.mxu0 0
        %4429 = vmatprep.subr.bf16.mxu0 0
        %4430 = vmatpush1.bf16.msra.mxu0 0
        %4431 = vmatprep.subr.bf16.mxu0 0
        %4432 = vmatpush1.bf16.msra.mxu0 0
        %4433 = vmatprep.subr.bf16.mxu0 0
        %4434 = vmatpush1.bf16.msra.mxu0 0
        %4435 = vmatprep.subr.bf16.mxu0 0
        %4436 = vmatpush1.bf16.msra.mxu0 0
        %4437 = vmatprep.subr.bf16.mxu0 0
        %4438 = vmatpush1.bf16.msra.mxu0 0
        %4439 = vmatprep.subr.bf16.mxu0 0
        %4440 = vmatpush1.bf16.msra.mxu0 0
        %4441 = vmatprep.subr.bf16.mxu0 0
        %4442 = vmatpush1.bf16.msra.mxu0 0
        %4443 = vmatprep.subr.bf16.mxu0 0
        %4444 = vmatpush1.bf16.msra.mxu0 0
        %4445 = vmatprep.subr.bf16.mxu0 0
        %4446 = vmatpush1.bf16.msra.mxu0 0
        %4447 = vmatprep.subr.bf16.mxu0 0
        %4448 = vmatpush1.bf16.msra.mxu0 0
        %4449 = vmatprep.mubr.bf16.mxu0 0
        %4450 = vmatmul.mubr.bf16.gmra.mrb[0].mxu0 %v4409
        %v4451 = vpop.f32.mrb[0].mxu0
        %v4452 = vadd.f32 %v4406, %v4451
        %v4453 = vpop.f32.mrb[0].mxu0
        %v4454 = vadd.f32 %v4406, %v4453
        %v4455 = vpop.f32.mrb[0].mxu0
        %v4456 = vpop.f32.mrb[0].mxu0
        %4457 = vdwg.mxu0
        %v4458 = vadd.f32 %v4188, %v4452
        %v4459 = vadd.f32 %v4189, %v4454
        %s4460 = scalar_lea.vmem %s5, 68
        %v4461 = vld [vmem:[%s4460] sm:$0xf]
        %s4462 = scalar_lea.vmem %s6, 136
        %v4463 = vld [vmem:[%s4462] sm:$0xff]
        %4464 = vrot.lane.b32.xlu0 %v4458, 17
        %v4465 = vpop.permute.xlu0 %4464
        %4466 = vrot.lane.b32.xlu0 %v4459, 17
        %v4467 = vpop.permute.xlu0 %4466
        %v4468 = vsel %vm623, %v4465, %v4467
        %v4469 = vsel %vm623, %v4467, %v4465
        %v4470 = vmul.f32 %v4469, %v629
        %v4471 = vmul.f32 %v4468, %v633
        %4472 = vrot.lane.b32.xlu0 %v4458, 16
        %v4473 = vpop.permute.xlu0 %4472
        %4474 = vrot.lane.b32.xlu0 %v4459, 16
        %v4475 = vpop.permute.xlu0 %4474
        %v4476 = vsel %vm640, %v4473, %v4475
        %v4477 = vsel %vm640, %v4475, %v4473
        %v4478 = vmul.f32 %v4477, %v646
        %v4479 = vmul.f32 %v4476, %v650
        %4480 = vrot.lane.b32.xlu0 %v4458, 15
        %v4481 = vpop.permute.xlu0 %4480
        %4482 = vrot.lane.b32.xlu0 %v4459, 15
        %v4483 = vpop.permute.xlu0 %4482
        %v4484 = vsel %vm657, %v4481, %v4483
        %v4485 = vsel %vm657, %v4483, %v4481
        %v4486 = vmul.f32 %v4485, %v663
        %v4487 = vmul.f32 %v4484, %v667
        %4488 = vrot.lane.b32.xlu0 %v4458, 1
        %v4489 = vpop.permute.xlu0 %4488
        %4490 = vrot.lane.b32.xlu0 %v4459, 1
        %v4491 = vpop.permute.xlu0 %4490
        %v4492 = vsel %vm674, %v4489, %v4491
        %v4493 = vsel %vm674, %v4491, %v4489
        %v4494 = vmul.f32 %v4493, %v680
        %v4495 = vmul.f32 %v4492, %v684
        %4496 = vrot.lane.b32.xlu0 %v4458, 127
        %v4497 = vpop.permute.xlu0 %4496
        %4498 = vrot.lane.b32.xlu0 %v4459, 127
        %v4499 = vpop.permute.xlu0 %4498
        %v4500 = vsel %vm691, %v4497, %v4499
        %v4501 = vsel %vm691, %v4499, %v4497
        %v4502 = vmul.f32 %v4500, %v697
        %v4503 = vmul.f32 %v4501, %v701
        %4504 = vrot.lane.b32.xlu0 %v4458, 113
        %v4505 = vpop.permute.xlu0 %4504
        %4506 = vrot.lane.b32.xlu0 %v4459, 113
        %v4507 = vpop.permute.xlu0 %4506
        %v4508 = vsel %vm708, %v4505, %v4507
        %v4509 = vsel %vm708, %v4507, %v4505
        %v4510 = vmul.f32 %v4508, %v714
        %v4511 = vmul.f32 %v4509, %v718
        %4512 = vrot.lane.b32.xlu0 %v4458, 112
        %v4513 = vpop.permute.xlu0 %4512
        %4514 = vrot.lane.b32.xlu0 %v4459, 112
        %v4515 = vpop.permute.xlu0 %4514
        %v4516 = vsel %vm725, %v4513, %v4515
        %v4517 = vsel %vm725, %v4515, %v4513
        %v4518 = vmul.f32 %v4516, %v731
        %v4519 = vmul.f32 %v4517, %v735
        %4520 = vrot.lane.b32.xlu0 %v4458, 111
        %v4521 = vpop.permute.xlu0 %4520
        %4522 = vrot.lane.b32.xlu0 %v4459, 111
        %v4523 = vpop.permute.xlu0 %4522
        %v4524 = vsel %vm742, %v4521, %v4523
        %v4525 = vsel %vm742, %v4523, %v4521
        %v4526 = vmul.f32 %v4524, %v748
        %v4527 = vmul.f32 %v4525, %v752
        %v4528 = vpack.c.bf16 %v4478, %v4470
        %v4529 = vpack.c.bf16 %v4479, %v4471
        %v4530 = vpack.c.bf16 %v4494, %v4486
        %v4531 = vpack.c.bf16 %v4495, %v4487
        %v4532 = vpack.c.bf16 %v4502, %v4458
        %v4533 = vpack.c.bf16 %v4503, %v4459
        %v4534 = vpack.c.bf16 %v4518, %v4510
        %v4535 = vpack.c.bf16 %v4519, %v4511
        %v4536 = vpack.c.bf16 %v4526, %v4526
        %v4537 = vpack.c.bf16 %v4527, %v4527
        %4539 = vset.pattern.permute.xlu0 0
        %4540 = vperm.xlu0 %4539, %v4463
        %v4541 = vpop.permute.xlu0 %4540
        %v4544 = vsel %vm770, %v4461, 0
        %v4547 = vsel %vm774, %v4536, 0
        %v4550 = vsel %vm774, %v4537, 0
        %4552 = vmatprep.subr.bf16.mxu0 %v4529
        %4553 = vmatpush1.bf16.msra.mxu0 %v4528
        %4554 = vmatprep.subr.bf16.mxu0 %v4531
        %4555 = vmatpush1.bf16.msra.mxu0 %v4530
        %4556 = vmatprep.subr.bf16.mxu0 %v4533
        %4557 = vmatpush1.bf16.msra.mxu0 %v4532
        %4558 = vmatprep.subr.bf16.mxu0 %v4535
        %4559 = vmatpush1.bf16.msra.mxu0 %v4534
        %4560 = vmatprep.subr.bf16.mxu0 %v4550
        %4561 = vmatpush1.bf16.msra.mxu0 %v4547
        %4562 = vmatprep.subr.bf16.mxu0 0
        %4563 = vmatpush1.bf16.msra.mxu0 0
        %4564 = vmatprep.subr.bf16.mxu0 0
        %4565 = vmatpush1.bf16.msra.mxu0 0
        %4566 = vmatprep.subr.bf16.mxu0 0
        %4567 = vmatpush1.bf16.msra.mxu0 0
        %4568 = vmatprep.subr.bf16.mxu0 0
        %4569 = vmatpush1.bf16.msra.mxu0 0
        %4570 = vmatprep.subr.bf16.mxu0 0
        %4571 = vmatpush1.bf16.msra.mxu0 0
        %4572 = vmatprep.subr.bf16.mxu0 0
        %4573 = vmatpush1.bf16.msra.mxu0 0
        %4574 = vmatprep.subr.bf16.mxu0 0
        %4575 = vmatpush1.bf16.msra.mxu0 0
        %4576 = vmatprep.subr.bf16.mxu0 0
        %4577 = vmatpush1.bf16.msra.mxu0 0
        %4578 = vmatprep.subr.bf16.mxu0 0
        %4579 = vmatpush1.bf16.msra.mxu0 0
        %4580 = vmatprep.subr.bf16.mxu0 0
        %4581 = vmatpush1.bf16.msra.mxu0 0
        %4582 = vmatprep.subr.bf16.mxu0 0
        %4583 = vmatpush1.bf16.msra.mxu0 0
        %4584 = vmatprep.mubr.bf16.mxu0 0
        %4585 = vmatmul.mubr.bf16.gmra.mrb[0].mxu0 %v4544
        %v4586 = vpop.f32.mrb[0].mxu0
        %v4587 = vadd.f32 %v4541, %v4586
        %v4588 = vpop.f32.mrb[0].mxu0
        %v4589 = vadd.f32 %v4541, %v4588
        %v4590 = vpop.f32.mrb[0].mxu0
        %v4591 = vpop.f32.mrb[0].mxu0
        %4592 = vdwg.mxu0
        %v4593 = vmax.f32 %v4587, 0.0
        %v4594 = vmax.f32 %v4589, 0.0
        %s4595 = scalar_lea.vmem %s5, 72
        %v4596 = vld [vmem:[%s4595] sm:$0xf]
        %s4597 = scalar_lea.vmem %s6, 144
        %v4598 = vld [vmem:[%s4597] sm:$0xff]
        %4599 = vrot.lane.b32.xlu0 %v4593, 17
        %v4600 = vpop.permute.xlu0 %4599
        %4601 = vrot.lane.b32.xlu0 %v4594, 17
        %v4602 = vpop.permute.xlu0 %4601
        %v4603 = vsel %vm623, %v4600, %v4602
        %v4604 = vsel %vm623, %v4602, %v4600
        %v4605 = vmul.f32 %v4604, %v629
        %v4606 = vmul.f32 %v4603, %v633
        %4607 = vrot.lane.b32.xlu0 %v4593, 16
        %v4608 = vpop.permute.xlu0 %4607
        %4609 = vrot.lane.b32.xlu0 %v4594, 16
        %v4610 = vpop.permute.xlu0 %4609
        %v4611 = vsel %vm640, %v4608, %v4610
        %v4612 = vsel %vm640, %v4610, %v4608
        %v4613 = vmul.f32 %v4612, %v646
        %v4614 = vmul.f32 %v4611, %v650
        %4615 = vrot.lane.b32.xlu0 %v4593, 15
        %v4616 = vpop.permute.xlu0 %4615
        %4617 = vrot.lane.b32.xlu0 %v4594, 15
        %v4618 = vpop.permute.xlu0 %4617
        %v4619 = vsel %vm657, %v4616, %v4618
        %v4620 = vsel %vm657, %v4618, %v4616
        %v4621 = vmul.f32 %v4620, %v663
        %v4622 = vmul.f32 %v4619, %v667
        %4623 = vrot.lane.b32.xlu0 %v4593, 1
        %v4624 = vpop.permute.xlu0 %4623
        %4625 = vrot.lane.b32.xlu0 %v4594, 1
        %v4626 = vpop.permute.xlu0 %4625
        %v4627 = vsel %vm674, %v4624, %v4626
        %v4628 = vsel %vm674, %v4626, %v4624
        %v4629 = vmul.f32 %v4628, %v680
        %v4630 = vmul.f32 %v4627, %v684
        %4631 = vrot.lane.b32.xlu0 %v4593, 127
        %v4632 = vpop.permute.xlu0 %4631
        %4633 = vrot.lane.b32.xlu0 %v4594, 127
        %v4634 = vpop.permute.xlu0 %4633
        %v4635 = vsel %vm691, %v4632, %v4634
        %v4636 = vsel %vm691, %v4634, %v4632
        %v4637 = vmul.f32 %v4635, %v697
        %v4638 = vmul.f32 %v4636, %v701
        %4639 = vrot.lane.b32.xlu0 %v4593, 113
        %v4640 = vpop.permute.xlu0 %4639
        %4641 = vrot.lane.b32.xlu0 %v4594, 113
        %v4642 = vpop.permute.xlu0 %4641
        %v4643 = vsel %vm708, %v4640, %v4642
        %v4644 = vsel %vm708, %v4642, %v4640
        %v4645 = vmul.f32 %v4643, %v714
        %v4646 = vmul.f32 %v4644, %v718
        %4647 = vrot.lane.b32.xlu0 %v4593, 112
        %v4648 = vpop.permute.xlu0 %4647
        %4649 = vrot.lane.b32.xlu0 %v4594, 112
        %v4650 = vpop.permute.xlu0 %4649
        %v4651 = vsel %vm725, %v4648, %v4650
        %v4652 = vsel %vm725, %v4650, %v4648
        %v4653 = vmul.f32 %v4651, %v731
        %v4654 = vmul.f32 %v4652, %v735
        %4655 = vrot.lane.b32.xlu0 %v4593, 111
        %v4656 = vpop.permute.xlu0 %4655
        %4657 = vrot.lane.b32.xlu0 %v4594, 111
        %v4658 = vpop.permute.xlu0 %4657
        %v4659 = vsel %vm742, %v4656, %v4658
        %v4660 = vsel %vm742, %v4658, %v4656
        %v4661 = vmul.f32 %v4659, %v748
        %v4662 = vmul.f32 %v4660, %v752
        %v4663 = vpack.c.bf16 %v4613, %v4605
        %v4664 = vpack.c.bf16 %v4614, %v4606
        %v4665 = vpack.c.bf16 %v4629, %v4621
        %v4666 = vpack.c.bf16 %v4630, %v4622
        %v4667 = vpack.c.bf16 %v4637, %v4593
        %v4668 = vpack.c.bf16 %v4638, %v4594
        %v4669 = vpack.c.bf16 %v4653, %v4645
        %v4670 = vpack.c.bf16 %v4654, %v4646
        %v4671 = vpack.c.bf16 %v4661, %v4661
        %v4672 = vpack.c.bf16 %v4662, %v4662
        %4674 = vset.pattern.permute.xlu0 0
        %4675 = vperm.xlu0 %4674, %v4598
        %v4676 = vpop.permute.xlu0 %4675
        %v4679 = vsel %vm770, %v4596, 0
        %v4682 = vsel %vm774, %v4671, 0
        %v4685 = vsel %vm774, %v4672, 0
        %4687 = vmatprep.subr.bf16.mxu0 %v4664
        %4688 = vmatpush1.bf16.msra.mxu0 %v4663
        %4689 = vmatprep.subr.bf16.mxu0 %v4666
        %4690 = vmatpush1.bf16.msra.mxu0 %v4665
        %4691 = vmatprep.subr.bf16.mxu0 %v4668
        %4692 = vmatpush1.bf16.msra.mxu0 %v4667
        %4693 = vmatprep.subr.bf16.mxu0 %v4670
        %4694 = vmatpush1.bf16.msra.mxu0 %v4669
        %4695 = vmatprep.subr.bf16.mxu0 %v4685
        %4696 = vmatpush1.bf16.msra.mxu0 %v4682
        %4697 = vmatprep.subr.bf16.mxu0 0
        %4698 = vmatpush1.bf16.msra.mxu0 0
        %4699 = vmatprep.subr.bf16.mxu0 0
        %4700 = vmatpush1.bf16.msra.mxu0 0
        %4701 = vmatprep.subr.bf16.mxu0 0
        %4702 = vmatpush1.bf16.msra.mxu0 0
        %4703 = vmatprep.subr.bf16.mxu0 0
        %4704 = vmatpush1.bf16.msra.mxu0 0
        %4705 = vmatprep.subr.bf16.mxu0 0
        %4706 = vmatpush1.bf16.msra.mxu0 0
        %4707 = vmatprep.subr.bf16.mxu0 0
        %4708 = vmatpush1.bf16.msra.mxu0 0
        %4709 = vmatprep.subr.bf16.mxu0 0
        %4710 = vmatpush1.bf16.msra.mxu0 0
        %4711 = vmatprep.subr.bf16.mxu0 0
        %4712 = vmatpush1.bf16.msra.mxu0 0
        %4713 = vmatprep.subr.bf16.mxu0 0
        %4714 = vmatpush1.bf16.msra.mxu0 0
        %4715 = vmatprep.subr.bf16.mxu0 0
        %4716 = vmatpush1.bf16.msra.mxu0 0
        %4717 = vmatprep.subr.bf16.mxu0 0
        %4718 = vmatpush1.bf16.msra.mxu0 0
        %4719 = vmatprep.mubr.bf16.mxu0 0
        %4720 = vmatmul.mubr.bf16.gmra.mrb[0].mxu0 %v4679
        %v4721 = vpop.f32.mrb[0].mxu0
        %v4722 = vadd.f32 %v4676, %v4721
        %v4723 = vpop.f32.mrb[0].mxu0
        %v4724 = vadd.f32 %v4676, %v4723
        %v4725 = vpop.f32.mrb[0].mxu0
        %v4726 = vpop.f32.mrb[0].mxu0
        %4727 = vdwg.mxu0
        %v4728 = vadd.f32 %v4458, %v4722
        %v4729 = vadd.f32 %v4459, %v4724
        %s4730 = scalar_lea.vmem %s5, 76
        %v4731 = vld [vmem:[%s4730] sm:$0xf]
        %s4732 = scalar_lea.vmem %s6, 152
        %v4733 = vld [vmem:[%s4732] sm:$0xff]
        %4734 = vrot.lane.b32.xlu0 %v4728, 17
        %v4735 = vpop.permute.xlu0 %4734
        %4736 = vrot.lane.b32.xlu0 %v4729, 17
        %v4737 = vpop.permute.xlu0 %4736
        %v4738 = vsel %vm623, %v4735, %v4737
        %v4739 = vsel %vm623, %v4737, %v4735
        %v4740 = vmul.f32 %v4739, %v629
        %v4741 = vmul.f32 %v4738, %v633
        %4742 = vrot.lane.b32.xlu0 %v4728, 16
        %v4743 = vpop.permute.xlu0 %4742
        %4744 = vrot.lane.b32.xlu0 %v4729, 16
        %v4745 = vpop.permute.xlu0 %4744
        %v4746 = vsel %vm640, %v4743, %v4745
        %v4747 = vsel %vm640, %v4745, %v4743
        %v4748 = vmul.f32 %v4747, %v646
        %v4749 = vmul.f32 %v4746, %v650
        %4750 = vrot.lane.b32.xlu0 %v4728, 15
        %v4751 = vpop.permute.xlu0 %4750
        %4752 = vrot.lane.b32.xlu0 %v4729, 15
        %v4753 = vpop.permute.xlu0 %4752
        %v4754 = vsel %vm657, %v4751, %v4753
        %v4755 = vsel %vm657, %v4753, %v4751
        %v4756 = vmul.f32 %v4755, %v663
        %v4757 = vmul.f32 %v4754, %v667
        %4758 = vrot.lane.b32.xlu0 %v4728, 1
        %v4759 = vpop.permute.xlu0 %4758
        %4760 = vrot.lane.b32.xlu0 %v4729, 1
        %v4761 = vpop.permute.xlu0 %4760
        %v4762 = vsel %vm674, %v4759, %v4761
        %v4763 = vsel %vm674, %v4761, %v4759
        %v4764 = vmul.f32 %v4763, %v680
        %v4765 = vmul.f32 %v4762, %v684
        %4766 = vrot.lane.b32.xlu0 %v4728, 127
        %v4767 = vpop.permute.xlu0 %4766
        %4768 = vrot.lane.b32.xlu0 %v4729, 127
        %v4769 = vpop.permute.xlu0 %4768
        %v4770 = vsel %vm691, %v4767, %v4769
        %v4771 = vsel %vm691, %v4769, %v4767
        %v4772 = vmul.f32 %v4770, %v697
        %v4773 = vmul.f32 %v4771, %v701
        %4774 = vrot.lane.b32.xlu0 %v4728, 113
        %v4775 = vpop.permute.xlu0 %4774
        %4776 = vrot.lane.b32.xlu0 %v4729, 113
        %v4777 = vpop.permute.xlu0 %4776
        %v4778 = vsel %vm708, %v4775, %v4777
        %v4779 = vsel %vm708, %v4777, %v4775
        %v4780 = vmul.f32 %v4778, %v714
        %v4781 = vmul.f32 %v4779, %v718
        %4782 = vrot.lane.b32.xlu0 %v4728, 112
        %v4783 = vpop.permute.xlu0 %4782
        %4784 = vrot.lane.b32.xlu0 %v4729, 112
        %v4785 = vpop.permute.xlu0 %4784
        %v4786 = vsel %vm725, %v4783, %v4785
        %v4787 = vsel %vm725, %v4785, %v4783
        %v4788 = vmul.f32 %v4786, %v731
        %v4789 = vmul.f32 %v4787, %v735
        %4790 = vrot.lane.b32.xlu0 %v4728, 111
        %v4791 = vpop.permute.xlu0 %4790
        %4792 = vrot.lane.b32.xlu0 %v4729, 111
        %v4793 = vpop.permute.xlu0 %4792
        %v4794 = vsel %vm742, %v4791, %v4793
        %v4795 = vsel %vm742, %v4793, %v4791
        %v4796 = vmul.f32 %v4794, %v748
        %v4797 = vmul.f32 %v4795, %v752
        %v4798 = vpack.c.bf16 %v4748, %v4740
        %v4799 = vpack.c.bf16 %v4749, %v4741
        %v4800 = vpack.c.bf16 %v4764, %v4756
        %v4801 = vpack.c.bf16 %v4765, %v4757
        %v4802 = vpack.c.bf16 %v4772, %v4728
        %v4803 = vpack.c.bf16 %v4773, %v4729
        %v4804 = vpack.c.bf16 %v4788, %v4780
        %v4805 = vpack.c.bf16 %v4789, %v4781
        %v4806 = vpack.c.bf16 %v4796, %v4796
        %v4807 = vpack.c.bf16 %v4797, %v4797
        %4809 = vset.pattern.permute.xlu0 0
        %4810 = vperm.xlu0 %4809, %v4733
        %v4811 = vpop.permute.xlu0 %4810
        %v4814 = vsel %vm770, %v4731, 0
        %v4817 = vsel %vm774, %v4806, 0
        %v4820 = vsel %vm774, %v4807, 0
        %4822 = vmatprep.subr.bf16.mxu0 %v4799
        %4823 = vmatpush1.bf16.msra.mxu0 %v4798
        %4824 = vmatprep.subr.bf16.mxu0 %v4801
        %4825 = vmatpush1.bf16.msra.mxu0 %v4800
        %4826 = vmatprep.subr.bf16.mxu0 %v4803
        %4827 = vmatpush1.bf16.msra.mxu0 %v4802
        %4828 = vmatprep.subr.bf16.mxu0 %v4805
        %4829 = vmatpush1.bf16.msra.mxu0 %v4804
        %4830 = vmatprep.subr.bf16.mxu0 %v4820
        %4831 = vmatpush1.bf16.msra.mxu0 %v4817
        %4832 = vmatprep.subr.bf16.mxu0 0
        %4833 = vmatpush1.bf16.msra.mxu0 0
        %4834 = vmatprep.subr.bf16.mxu0 0
        %4835 = vmatpush1.bf16.msra.mxu0 0
        %4836 = vmatprep.subr.bf16.mxu0 0
        %4837 = vmatpush1.bf16.msra.mxu0 0
        %4838 = vmatprep.subr.bf16.mxu0 0
        %4839 = vmatpush1.bf16.msra.mxu0 0
        %4840 = vmatprep.subr.bf16.mxu0 0
        %4841 = vmatpush1.bf16.msra.mxu0 0
        %4842 = vmatprep.subr.bf16.mxu0 0
        %4843 = vmatpush1.bf16.msra.mxu0 0
        %4844 = vmatprep.subr.bf16.mxu0 0
        %4845 = vmatpush1.bf16.msra.mxu0 0
        %4846 = vmatprep.subr.bf16.mxu0 0
        %4847 = vmatpush1.bf16.msra.mxu0 0
        %4848 = vmatprep.subr.bf16.mxu0 0
        %4849 = vmatpush1.bf16.msra.mxu0 0
        %4850 = vmatprep.subr.bf16.mxu0 0
        %4851 = vmatpush1.bf16.msra.mxu0 0
        %4852 = vmatprep.subr.bf16.mxu0 0
        %4853 = vmatpush1.bf16.msra.mxu0 0
        %4854 = vmatprep.mubr.bf16.mxu0 0
        %4855 = vmatmul.mubr.bf16.gmra.mrb[0].mxu0 %v4814
        %v4856 = vpop.f32.mrb[0].mxu0
        %v4857 = vadd.f32 %v4811, %v4856
        %v4858 = vpop.f32.mrb[0].mxu0
        %v4859 = vadd.f32 %v4811, %v4858
        %v4860 = vpop.f32.mrb[0].mxu0
        %v4861 = vpop.f32.mrb[0].mxu0
        %4862 = vdwg.mxu0
        %v4863 = vadd.f32 %v4188, %v4857
        %v4864 = vadd.f32 %v4189, %v4859
        %v4865 = vld [vmem:[%s15] sm:$0xf]
        %v4866 = vld [vmem:[%s16] sm:$0xff]
        %4867 = vrot.lane.b32.xlu0 %v4863, 17
        %v4868 = vpop.permute.xlu0 %4867
        %4869 = vrot.lane.b32.xlu0 %v4864, 17
        %v4870 = vpop.permute.xlu0 %4869
        %v4871 = vsel %vm623, %v4868, %v4870
        %v4872 = vsel %vm623, %v4870, %v4868
        %v4873 = vmul.f32 %v4872, %v629
        %v4874 = vmul.f32 %v4871, %v633
        %4875 = vrot.lane.b32.xlu0 %v4863, 16
        %v4876 = vpop.permute.xlu0 %4875
        %4877 = vrot.lane.b32.xlu0 %v4864, 16
        %v4878 = vpop.permute.xlu0 %4877
        %v4879 = vsel %vm640, %v4876, %v4878
        %v4880 = vsel %vm640, %v4878, %v4876
        %v4881 = vmul.f32 %v4880, %v646
        %v4882 = vmul.f32 %v4879, %v650
        %4883 = vrot.lane.b32.xlu0 %v4863, 15
        %v4884 = vpop.permute.xlu0 %4883
        %4885 = vrot.lane.b32.xlu0 %v4864, 15
        %v4886 = vpop.permute.xlu0 %4885
        %v4887 = vsel %vm657, %v4884, %v4886
        %v4888 = vsel %vm657, %v4886, %v4884
        %v4889 = vmul.f32 %v4888, %v663
        %v4890 = vmul.f32 %v4887, %v667
        %4891 = vrot.lane.b32.xlu0 %v4863, 1
        %v4892 = vpop.permute.xlu0 %4891
        %4893 = vrot.lane.b32.xlu0 %v4864, 1
        %v4894 = vpop.permute.xlu0 %4893
        %v4895 = vsel %vm674, %v4892, %v4894
        %v4896 = vsel %vm674, %v4894, %v4892
        %v4897 = vmul.f32 %v4896, %v680
        %v4898 = vmul.f32 %v4895, %v684
        %4899 = vrot.lane.b32.xlu0 %v4863, 127
        %v4900 = vpop.permute.xlu0 %4899
        %4901 = vrot.lane.b32.xlu0 %v4864, 127
        %v4902 = vpop.permute.xlu0 %4901
        %v4903 = vsel %vm691, %v4900, %v4902
        %v4904 = vsel %vm691, %v4902, %v4900
        %v4905 = vmul.f32 %v4903, %v697
        %v4906 = vmul.f32 %v4904, %v701
        %4907 = vrot.lane.b32.xlu0 %v4863, 113
        %v4908 = vpop.permute.xlu0 %4907
        %4909 = vrot.lane.b32.xlu0 %v4864, 113
        %v4910 = vpop.permute.xlu0 %4909
        %v4911 = vsel %vm708, %v4908, %v4910
        %v4912 = vsel %vm708, %v4910, %v4908
        %v4913 = vmul.f32 %v4911, %v714
        %v4914 = vmul.f32 %v4912, %v718
        %4915 = vrot.lane.b32.xlu0 %v4863, 112
        %v4916 = vpop.permute.xlu0 %4915
        %4917 = vrot.lane.b32.xlu0 %v4864, 112
        %v4918 = vpop.permute.xlu0 %4917
        %v4919 = vsel %vm725, %v4916, %v4918
        %v4920 = vsel %vm725, %v4918, %v4916
        %v4921 = vmul.f32 %v4919, %v731
        %v4922 = vmul.f32 %v4920, %v735
        %4923 = vrot.lane.b32.xlu0 %v4863, 111
        %v4924 = vpop.permute.xlu0 %4923
        %4925 = vrot.lane.b32.xlu0 %v4864, 111
        %v4926 = vpop.permute.xlu0 %4925
        %v4927 = vsel %vm742, %v4924, %v4926
        %v4928 = vsel %vm742, %v4926, %v4924
        %v4929 = vmul.f32 %v4927, %v748
        %v4930 = vmul.f32 %v4928, %v752
        %v4931 = vpack.c.bf16 %v4881, %v4873
        %v4932 = vpack.c.bf16 %v4882, %v4874
        %v4933 = vpack.c.bf16 %v4897, %v4889
        %v4934 = vpack.c.bf16 %v4898, %v4890
        %v4935 = vpack.c.bf16 %v4905, %v4863
        %v4936 = vpack.c.bf16 %v4906, %v4864
        %v4937 = vpack.c.bf16 %v4921, %v4913
        %v4938 = vpack.c.bf16 %v4922, %v4914
        %v4939 = vpack.c.bf16 %v4929, %v4929
        %v4940 = vpack.c.bf16 %v4930, %v4930
        %4942 = vset.pattern.permute.xlu0 0
        %4943 = vperm.xlu0 %4942, %v4866
        %v4944 = vpop.permute.xlu0 %4943
        %v4947 = vsel %vm770, %v4865, 0
        %v4950 = vsel %vm774, %v4939, 0
        %v4953 = vsel %vm774, %v4940, 0
        %4955 = vmatprep.subr.bf16.mxu0 %v4932
        %4956 = vmatpush1.bf16.msra.mxu0 %v4931
        %4957 = vmatprep.subr.bf16.mxu0 %v4934
        %4958 = vmatpush1.bf16.msra.mxu0 %v4933
        %4959 = vmatprep.subr.bf16.mxu0 %v4936
        %4960 = vmatpush1.bf16.msra.mxu0 %v4935
        %4961 = vmatprep.subr.bf16.mxu0 %v4938
        %4962 = vmatpush1.bf16.msra.mxu0 %v4937
        %4963 = vmatprep.subr.bf16.mxu0 %v4953
        %4964 = vmatpush1.bf16.msra.mxu0 %v4950
        %4965 = vmatprep.subr.bf16.mxu0 0
        %4966 = vmatpush1.bf16.msra.mxu0 0
        %4967 = vmatprep.subr.bf16.mxu0 0
        %4968 = vmatpush1.bf16.msra.mxu0 0
        %4969 = vmatprep.subr.bf16.mxu0 0
        %4970 = vmatpush1.bf16.msra.mxu0 0
        %4971 = vmatprep.subr.bf16.mxu0 0
        %4972 = vmatpush1.bf16.msra.mxu0 0
        %4973 = vmatprep.subr.bf16.mxu0 0
        %4974 = vmatpush1.bf16.msra.mxu0 0
        %4975 = vmatprep.subr.bf16.mxu0 0
        %4976 = vmatpush1.bf16.msra.mxu0 0
        %4977 = vmatprep.subr.bf16.mxu0 0
        %4978 = vmatpush1.bf16.msra.mxu0 0
        %4979 = vmatprep.subr.bf16.mxu0 0
        %4980 = vmatpush1.bf16.msra.mxu0 0
        %4981 = vmatprep.subr.bf16.mxu0 0
        %4982 = vmatpush1.bf16.msra.mxu0 0
        %4983 = vmatprep.subr.bf16.mxu0 0
        %4984 = vmatpush1.bf16.msra.mxu0 0
        %4985 = vmatprep.subr.bf16.mxu0 0
        %4986 = vmatpush1.bf16.msra.mxu0 0
        %4987 = vmatprep.mubr.bf16.mxu0 0
        %4988 = vmatmul.mubr.bf16.gmra.mrb[0].mxu0 %v4947
        %v4989 = vpop.f32.mrb[0].mxu0
        %v4990 = vadd.f32 %v4944, %v4989
        %v4991 = vpop.f32.mrb[0].mxu0
        %v4992 = vadd.f32 %v4944, %v4991
        %v4993 = vpop.f32.mrb[0].mxu0
        %v4994 = vpop.f32.mrb[0].mxu0
        %4995 = vdwg.mxu0
        %v4996 = vadd.f32 %v816, %v4990
        %v4997 = vadd.f32 %v818, %v4992
        %v4998 = vld [vmem:[%s17] sm:$0xf]
        %v4999 = vld [vmem:[%s17 + $0x4] sm:$0xf]
        %v5000 = vld [vmem:[%s17 + $0x8] sm:$0xf]
        %v5001 = vld [vmem:[%s17 + $0xc] sm:$0xf]
        %v5002 = vld [vmem:[%s18] sm:$0xff]
        %v5003 = vld [vmem:[%s18 + $0x8] sm:$0xff]
        %v5004 = vld [vmem:[%s18 + $0x10] sm:$0xff]
        %v5005 = vld [vmem:[%s18 + $0x18] sm:$0xff]
        %5006 = vrot.lane.b32.xlu0 %v4996, 17
        %v5007 = vpop.permute.xlu0 %5006
        %5008 = vrot.lane.b32.xlu0 %v4997, 17
        %v5009 = vpop.permute.xlu0 %5008
        %v5010 = vsel %vm623, %v5007, %v5009
        %v5011 = vsel %vm623, %v5009, %v5007
        %v5012 = vmul.f32 %v5011, %v629
        %v5013 = vmul.f32 %v5010, %v633
        %5014 = vrot.lane.b32.xlu0 %v4996, 16
        %v5015 = vpop.permute.xlu0 %5014
        %5016 = vrot.lane.b32.xlu0 %v4997, 16
        %v5017 = vpop.permute.xlu0 %5016
        %v5018 = vsel %vm640, %v5015, %v5017
        %v5019 = vsel %vm640, %v5017, %v5015
        %v5020 = vmul.f32 %v5019, %v646
        %v5021 = vmul.f32 %v5018, %v650
        %5022 = vrot.lane.b32.xlu0 %v4996, 15
        %v5023 = vpop.permute.xlu0 %5022
        %5024 = vrot.lane.b32.xlu0 %v4997, 15
        %v5025 = vpop.permute.xlu0 %5024
        %v5026 = vsel %vm657, %v5023, %v5025
        %v5027 = vsel %vm657, %v5025, %v5023
        %v5028 = vmul.f32 %v5027, %v663
        %v5029 = vmul.f32 %v5026, %v667
        %5030 = vrot.lane.b32.xlu0 %v4996, 1
        %v5031 = vpop.permute.xlu0 %5030
        %5032 = vrot.lane.b32.xlu0 %v4997, 1
        %v5033 = vpop.permute.xlu0 %5032
        %v5034 = vsel %vm674, %v5031, %v5033
        %v5035 = vsel %vm674, %v5033, %v5031
        %v5036 = vmul.f32 %v5035, %v680
        %v5037 = vmul.f32 %v5034, %v684
        %5038 = vrot.lane.b32.xlu0 %v4996, 127
        %v5039 = vpop.permute.xlu0 %5038
        %5040 = vrot.lane.b32.xlu0 %v4997, 127
        %v5041 = vpop.permute.xlu0 %5040
        %v5042 = vsel %vm691, %v5039, %v5041
        %v5043 = vsel %vm691, %v5041, %v5039
        %v5044 = vmul.f32 %v5042, %v697
        %v5045 = vmul.f32 %v5043, %v701
        %5046 = vrot.lane.b32.xlu0 %v4996, 113
        %v5047 = vpop.permute.xlu0 %5046
        %5048 = vrot.lane.b32.xlu0 %v4997, 113
        %v5049 = vpop.permute.xlu0 %5048
        %v5050 = vsel %vm708, %v5047, %v5049
        %v5051 = vsel %vm708, %v5049, %v5047
        %v5052 = vmul.f32 %v5050, %v714
        %v5053 = vmul.f32 %v5051, %v718
        %5054 = vrot.lane.b32.xlu0 %v4996, 112
        %v5055 = vpop.permute.xlu0 %5054
        %5056 = vrot.lane.b32.xlu0 %v4997, 112
        %v5057 = vpop.permute.xlu0 %5056
        %v5058 = vsel %vm725, %v5055, %v5057
        %v5059 = vsel %vm725, %v5057, %v5055
        %v5060 = vmul.f32 %v5058, %v731
        %v5061 = vmul.f32 %v5059, %v735
        %5062 = vrot.lane.b32.xlu0 %v4996, 111
        %v5063 = vpop.permute.xlu0 %5062
        %5064 = vrot.lane.b32.xlu0 %v4997, 111
        %v5065 = vpop.permute.xlu0 %5064
        %v5066 = vsel %vm742, %v5063, %v5065
        %v5067 = vsel %vm742, %v5065, %v5063
        %v5068 = vmul.f32 %v5066, %v748
        %v5069 = vmul.f32 %v5067, %v752
        %v5070 = vpack.c.bf16 %v5020, %v5012
        %v5071 = vpack.c.bf16 %v5021, %v5013
        %v5072 = vpack.c.bf16 %v5036, %v5028
        %v5073 = vpack.c.bf16 %v5037, %v5029
        %v5074 = vpack.c.bf16 %v5044, %v4996
        %v5075 = vpack.c.bf16 %v5045, %v4997
        %v5076 = vpack.c.bf16 %v5060, %v5052
        %v5077 = vpack.c.bf16 %v5061, %v5053
        %v5078 = vpack.c.bf16 %v5068, %v5068
        %v5079 = vpack.c.bf16 %v5069, %v5069
        %5081 = vset.pattern.permute.xlu0 0
        %5082 = vperm.xlu0 %5081, %v5002
        %v5083 = vpop.permute.xlu0 %5082
        %5086 = vset.pattern.permute.xlu0 0
        %5087 = vperm.xlu0 %5086, %v5003
        %v5088 = vpop.permute.xlu0 %5087
        %5091 = vset.pattern.permute.xlu0 0
        %5092 = vperm.xlu0 %5091, %v5004
        %v5093 = vpop.permute.xlu0 %5092
        %5096 = vset.pattern.permute.xlu0 0
        %5097 = vperm.xlu0 %5096, %v5005
        %v5098 = vpop.permute.xlu0 %5097
        %v5104 = vunpack.c.l.b16 %v4998
        %v5105 = vunpack.c.l.b16 %v4999
        %v5106 = vunpack.c.l.b16 %v5000
        %v5107 = vunpack.c.l.b16 %v5001
        %v5108 = vpack.c.b16 %v5105, %v5104
        %v5109 = vpack.c.b16 %v5107, %v5106
        %v5111 = vsel %vm770, %v5108, 0
        %v5114 = vsel %vm770, %v5109, 0
        %v5117 = vsel %vm774, %v5078, 0
        %v5120 = vsel %vm774, %v5079, 0
        %5122 = vmatprep.subr.bf16.mxu0 %v5071
        %5123 = vmatpush1.bf16.msra.mxu0 %v5070
        %5124 = vmatprep.subr.bf16.mxu0 %v5073
        %5125 = vmatpush1.bf16.msra.mxu0 %v5072
        %5126 = vmatprep.subr.bf16.mxu0 %v5075
        %5127 = vmatpush1.bf16.msra.mxu0 %v5074
        %5128 = vmatprep.subr.bf16.mxu0 %v5077
        %5129 = vmatpush1.bf16.msra.mxu0 %v5076
        %5130 = vmatprep.subr.bf16.mxu0 %v5120
        %5131 = vmatpush1.bf16.msra.mxu0 %v5117
        %5132 = vmatprep.subr.bf16.mxu0 0
        %5133 = vmatpush1.bf16.msra.mxu0 0
        %5134 = vmatprep.subr.bf16.mxu0 0
        %5135 = vmatpush1.bf16.msra.mxu0 0
        %5136 = vmatprep.subr.bf16.mxu0 0
        %5137 = vmatpush1.bf16.msra.mxu0 0
        %5138 = vmatprep.subr.bf16.mxu0 0
        %5139 = vmatpush1.bf16.msra.mxu0 0
        %5140 = vmatprep.subr.bf16.mxu0 0
        %5141 = vmatpush1.bf16.msra.mxu0 0
        %5142 = vmatprep.subr.bf16.mxu0 0
        %5143 = vmatpush1.bf16.msra.mxu0 0
        %5144 = vmatprep.subr.bf16.mxu0 0
        %5145 = vmatpush1.bf16.msra.mxu0 0
        %5146 = vmatprep.subr.bf16.mxu0 0
        %5147 = vmatpush1.bf16.msra.mxu0 0
        %5148 = vmatprep.subr.bf16.mxu0 0
        %5149 = vmatpush1.bf16.msra.mxu0 0
        %5150 = vmatprep.subr.bf16.mxu0 0
        %5151 = vmatpush1.bf16.msra.mxu0 0
        %5152 = vmatprep.subr.bf16.mxu0 0
        %5153 = vmatpush1.bf16.msra.mxu0 0
        %5154 = vmatprep.mubr.bf16.mxu0 0
        %5155 = vmatmul.mubr.bf16.gmra.mrb[0].mxu0 %v5111
        %v5156 = vpop.f32.mrb[0].mxu0
        %v5157 = vadd.f32 %v5083, %v5156
        %v5158 = vpop.f32.mrb[0].mxu0
        %v5159 = vadd.f32 %v5083, %v5158
        %v5160 = vpop.f32.mrb[0].mxu0
        %v5161 = vadd.f32 %v5088, %v5160
        %v5162 = vpop.f32.mrb[0].mxu0
        %v5163 = vadd.f32 %v5088, %v5162
        %5164 = vmatprep.mubr.bf16.mxu0 0
        %5165 = vmatmul.mubr.bf16.gmra.mrb[0].mxu0 %v5114
        %v5166 = vpop.f32.mrb[0].mxu0
        %v5167 = vadd.f32 %v5093, %v5166
        %v5168 = vpop.f32.mrb[0].mxu0
        %v5169 = vadd.f32 %v5093, %v5168
        %v5170 = vpop.f32.mrb[0].mxu0
        %v5171 = vadd.f32 %v5098, %v5170
        %v5172 = vpop.f32.mrb[0].mxu0
        %v5173 = vadd.f32 %v5098, %v5172
        %5174 = vdwg.mxu0
        %5175 = vst [vmem:[%s592] sm:$0xff] %v5157
        %5176 = vst [vmem:[%s592 + $0x8] sm:$0xff] %v5159
        %5177 = vst [vmem:[%s592 + $0x10] sm:$0xff] %v5161
        %5178 = vst [vmem:[%s592 + $0x18] sm:$0xff] %v5163
        %5179 = vst [vmem:[%s592 + $0x20] sm:$0xff] %v5167
        %5180 = vst [vmem:[%s592 + $0x28] sm:$0xff] %v5169
        %5181 = vst [vmem:[%s592 + $0x30] sm:$0xff] %v5171
        %5182 = vst [vmem:[%s592 + $0x38] sm:$0xff] %v5173
        %s5183 = sand.u32 %s442, 1
        %s5184 = sand.u32 %s442, 1
        %s5185 = smul.addr %s5184, 64
        %s5186 = scalar_lea.vmem [#allocation2], %s5185
        // Predicated region
        $region97: #{msdn_forward.2} parent=95 // pred_check
          %p5187 = pneg %p452
        $region98: #{msdn_forward.2} parent=95 // pred_check_branch
          %5189 = sbr.rel (%p5187) target = $region100
        $region99: #{msdn_forward.2} parent=95 // pred_region
          %s5190 = smul.u32 2, %s30
          %s5191 = smul.addr %s5190, 8
          %s5192 = scalar_lea.vmem %s19, %s5191
          // Predicated region
          $region101: #{msdn_forward.2} parent=99 // pred_check
            _
          $region102: #{msdn_forward.2} parent=99 // pred_check_branch
            %5194 = sbr.rel (0) target = $region104
          $region103: #{msdn_forward.2} parent=99 // pred_region
            // Predicated region
            $region105: #{msdn_forward.2} parent=103 // pred_check
              _
            $region106: #{msdn_forward.2} parent=103 // pred_check_branch
              %5196 = sbr.rel (0) target = $region108
            $region107: #{msdn_forward.2} parent=103 // pred_region
              loop: start=0, step=1, limit=1
              $region109: #{msdn_forward.2} parent=107 // loop_pre_header
                _
              $region110: #{msdn_forward.2} parent=107 // loop_header
                %s5198 = sphi 0, %s5202
                %p5199 = scmp.ge.s32.totalorder %s5198, 1
                %s5203 = sphi %s5186, %s5186
                %s5204 = sphi %s5192, %s5192
              $region111: #{msdn_forward.2} parent=107 // loop_header_branch
                %5201 = sbr.rel (%p5199) target = $region115
              $region112: #{msdn_forward.2} parent=107 // loop_body
                %v5205 = vld [vmem:[%s5203] sm:$0xff]
                %5206 = vst [vmem:[%s5204] sm:$0xff] %v5205
                %v5207 = vld [vmem:[%s5203 + $0x8] sm:$0xff]
                %5208 = vst [vmem:[%s5204 + $0x8] sm:$0xff] %v5207
                %v5209 = vld [vmem:[%s5203 + $0x10] sm:$0xff]
                %5210 = vst [vmem:[%s5204 + $0x20] sm:$0xff] %v5209
                %v5211 = vld [vmem:[%s5203 + $0x18] sm:$0xff]
                %5212 = vst [vmem:[%s5204 + $0x28] sm:$0xff] %v5211
                %v5213 = vld [vmem:[%s5203 + $0x20] sm:$0xff]
                %5214 = vst [vmem:[%s5204 + $0x40] sm:$0xff] %v5213
                %v5215 = vld [vmem:[%s5203 + $0x28] sm:$0xff]
                %5216 = vst [vmem:[%s5204 + $0x48] sm:$0xff] %v5215
                %v5217 = vld [vmem:[%s5203 + $0x30] sm:$0xff]
                %5218 = vst [vmem:[%s5204 + $0x60] sm:$0xff] %v5217
                %v5219 = vld [vmem:[%s5203 + $0x38] sm:$0xff]
                %5220 = vst [vmem:[%s5204 + $0x68] sm:$0xff] %v5219
              $region113: #{msdn_forward.2} parent=107 // loop_footer
                %s5202 = sadd.s32 1, %s5198
              $region114: #{msdn_forward.2} parent=107 // loop_footer_branch
                %5197 = sbr.rel target = $region110
              $region115: #{msdn_forward.2} parent=107 // loop_exit
                _
            $region108: #{msdn_forward.2} parent=103 // pred_fallthru
              _
            // Predicated region
            $region116: #{msdn_forward.2} parent=103 // pred_check
              _
            $region117: #{msdn_forward.2} parent=103 // pred_check_branch
              %5222 = sbr.rel target = $region119
            $region118: #{msdn_forward.2} parent=103 // pred_region
              _
            $region119: #{msdn_forward.2} parent=103 // pred_fallthru
              _
          $region104: #{msdn_forward.2} parent=99 // pred_fallthru
            _
          %5223 = vnop
        $region100: #{msdn_forward.2} parent=95 // pred_fallthru
          _
      $region96: #{msdn_forward.2} parent=5 // pred_fallthru
        _
      %p5224 = scmp.le.s32.totalorder 2, %s25
      // Predicated region
      $region120: #{msdn_forward.2} parent=5 // pred_check
        %p5225 = pneg %p5224
      $region121: #{msdn_forward.2} parent=5 // pred_check_branch
        %5227 = sbr.rel (%p5225) target = $region123
      $region122: #{msdn_forward.2} parent=5 // pred_region
        %s5228 = ssub.s32 %s25, 2
        // Predicated region
        $region124: #{msdn_forward.2} parent=122 // pred_check
          %p5229 = pneg %p458
        $region125: #{msdn_forward.2} parent=122 // pred_check_branch
          %5231 = sbr.rel (%p5229) target = $region127
        $region126: #{msdn_forward.2} parent=122 // pred_region
          %s5232 = sand.u32 %s443, 1
          %s5233 = sand.u32 %s443, 1
          %s5234 = smul.addr %s5233, 64
          %s5235 = scalar_lea.vmem [#allocation2], %s5234
        $region127: #{msdn_forward.2} parent=122 // pred_fallthru
          _
      $region123: #{msdn_forward.2} parent=5 // pred_fallthru
        _
    $region6: #{msdn_forward.2} parent=1 // loop_footer
      %s29 = sadd.s32 1, %s25
    $region7: #{msdn_forward.2} parent=1 // loop_footer_branch
      %24 = sbr.rel target = $region3
    $region8: #{msdn_forward.2} parent=1 // loop_exit
      _

</llo_original>
